<compile_context>
chip_gen: v7x
topology: tpu7x:2x2x1
jax: 0.10.0
libtpu: 0.0.40
codegen_flags: <defaults>
</compile_context>

<pallas_src>
import functools

import jax
import jax.numpy as jnp
from jax.experimental import pallas as pl
from jax.experimental.pallas import tpu as pltpu


def _round_up(x, m):
    return ((x + m - 1) // m) * m


# ----------------------------------------------------------------------------
# In-kernel routing on flat 128-lane slabs
# ----------------------------------------------------------------------------
def _routing(u_caps, *, no, fo, nofo_p, routing_steps):
    """Dynamic routing over a list of Ni per-input-cap slabs.

    u_caps : list of Ni f32 arrays of shape (TB, nofo_p) (flat lane layout;
             lanes >= no*fo are zero padding).
    Returns v_flat (TB, nofo_p) f32.
    """
    ni = len(u_caps)
    tb = u_caps[0].shape[0]
    f32 = jnp.float32

    # Constant 0/1 group-indicator matrices mapping flat lanes <-> output caps.
    # g[j, o] = 1 iff lane j belongs to output capsule o (padded lanes: none).
    lane = jax.lax.broadcasted_iota(jnp.int32, (nofo_p, no), 0)
    grp = jax.lax.broadcasted_iota(jnp.int32, (nofo_p, no), 1)
    g = jnp.where((lane >= grp * fo) & (lane < grp * fo + fo), 1.0, 0.0).astype(f32)
    lane_t = jax.lax.broadcasted_iota(jnp.int32, (no, nofo_p), 1)
    grp_t = jax.lax.broadcasted_iota(jnp.int32, (no, nofo_p), 0)
    gt = jnp.where((lane_t >= grp_t * fo) & (lane_t < grp_t * fo + fo),
                   1.0, 0.0).astype(f32)

    def squash(s_flat):
        # sq[b, o] = ||s_o||^2 via an MXU segment-sum against the indicator.
        sq = jnp.dot(s_flat * s_flat, g, preferred_element_type=f32)      # (TB, no)
        # squash factor ||s||^2/(1+||s||^2)/||s|| = sqrt(sq)/(1+sq);
        # rsqrt & approx reciprocal run on the EUP slot.
        # (No epsilon: matches the torch reference; sq == 0 gives NaN there too.)
        factor = sq * jax.lax.rsqrt(sq) * pl.reciprocal(sq + 1.0, approx=True)
        factor_flat = jnp.dot(factor, gt, preferred_element_type=f32)     # (TB, nofo_p)
        return factor_flat * s_flat

    # ---- iteration 0 (peeled): logits == 0  =>  c == 1/Ni  =>  s = mean_i u_i
    s_flat = u_caps[0]
    for i in range(1, ni):
        s_flat = s_flat + u_caps[i]
    v_flat = squash(s_flat * f32(1.0 / ni))

    # ---- remaining iterations ------------------------------------------------
    if routing_steps > 1:
        logits = [jnp.zeros((tb, no), f32) for _ in range(ni)]
    for _ in range(1, routing_steps):
        # logits update from the previous v (segment-sum over Fo via the MXU).
        for i in range(ni):
            logits[i] = logits[i] + jnp.dot(u_caps[i] * v_flat, g,
                                            preferred_element_type=f32)
        # softmax over INPUT caps (the unrolled list axis), per (row, output cap).
        m = logits[0]
        for i in range(1, ni):
            m = jnp.maximum(m, logits[i])
        e = [jnp.exp(logits[i] - m) for i in range(ni)]
        denom = e[0]
        for i in range(1, ni):
            denom = denom + e[i]
        inv_denom = pl.reciprocal(denom, approx=True)                     # (TB, no)
        # s = sum_i c_i * u_i, with c_i broadcast across the Fo lanes via gt (MXU).
        s_flat = jnp.zeros((tb, nofo_p), f32)
        for i in range(ni):
            c_flat = jnp.dot(e[i] * inv_denom, gt, preferred_element_type=f32)
            s_flat = s_flat + c_flat * u_caps[i]
        v_flat = squash(s_flat)
        # (the torch module's logits update after the final v is dead code -> skipped)
    return v_flat


# ----------------------------------------------------------------------------
# Kernels (one batch tile of TB rows per grid step)
# ----------------------------------------------------------------------------
def _caps_kernel_fused(x_ref, w_ref, v_ref, u_ref, *, ni, no, fo, nofo_p,
                       routing_steps):
    """Block-diagonal transform + routing.

    x_ref : (TB, Ni*Fi)          VMEM in  (lane-dense)
    w_ref : (Ni*Fi, Ni*nofo_p)   VMEM in  (block-diagonal weights, constant block)
    v_ref : (TB, nofo_p)         VMEM out (lane-dense)
    u_ref : (TB, Ni*nofo_p)      VMEM out (lane-dense, written exactly once)
    """
    u_slab = jnp.dot(x_ref[...], w_ref[...],
                     preferred_element_type=jnp.float32)      # (TB, Ni*nofo_p) f32
    u_ref[...] = u_slab.astype(u_ref.dtype)                   # single unmasked store
    u_caps = [u_slab[:, i * nofo_p:(i + 1) * nofo_p] for i in range(ni)]
    v_flat = _routing(u_caps, no=no, fo=fo, nofo_p=nofo_p,
                      routing_steps=routing_steps)
    v_ref[...] = v_flat.astype(v_ref.dtype)


def _caps_kernel_percap(x_ref, w_ref, v_ref, u_ref, *, no, fo, nofo_p,
                        routing_steps):
    """Per-input-cap transform (fallback when the block-diagonal slab is too large).

    x_ref : (Ni, TB, Fi)       VMEM in
    w_ref : (Ni, Fi, nofo_p)   VMEM in
    v_ref : (TB, nofo_p)       VMEM out
    u_ref : (TB, Ni*nofo_p)    VMEM out (single lane-dense store)
    """
    ni = x_ref.shape[0]
    u_caps = [jnp.dot(x_ref[i], w_ref[i], preferred_element_type=jnp.float32)
              for i in range(ni)]
    u_ref[...] = jnp.concatenate(u_caps, axis=-1).astype(u_ref.dtype)
    v_flat = _routing(u_caps, no=no, fo=fo, nofo_p=nofo_p,
                      routing_steps=routing_steps)
    v_ref[...] = v_flat.astype(v_ref.dtype)


# ----------------------------------------------------------------------------
# Wrapper
# ----------------------------------------------------------------------------
def _default_batch_tile():
    # ~256 on v5e (16 MiB default scoped VMEM), ~512 elsewhere (v6e 32/128 MiB,
    # v7x 32/64 MiB) — both well inside the explicit vmem limit set below.
    try:
        kind = jax.devices()[0].device_kind.lower()
    except Exception:
        return 256
    return 256 if "v5" in kind else 512


def specto_caps_forward(x, weights, routing_steps=3, *, batch_tile=None,
                        matmul_dtype=None, u_dtype=None, fuse_matmul=None):
    """Forward of SpectoCapsLayer.

    x       : (B, input_caps, input_filters)
    weights : (input_caps, output_caps, input_filters, output_filters)
    Returns (v_j (B, No, Fo), u_dash (B, Ni, No, Fo)), same as the torch module.

    batch_tile  : batch rows per grid step (None = pick per TPU generation).
    matmul_dtype: e.g. jnp.bfloat16 to run the MXU transform in bf16 (f32 acc).
    u_dtype     : dtype of the stored u_dash (bf16 halves the dominant HBM
                  writeback); default x.dtype.  v / routing math stay f32.
    fuse_matmul : force/disable the block-diagonal single-matmul path
                  (None = auto by weight-slab size).
    """
    assert routing_steps >= 1
    b, ni, fi = x.shape
    ni_w, no, fi_w, fo = weights.shape
    assert ni == ni_w and fi == fi_w and b >= 1
    nofo = no * fo
    nofo_p = _round_up(nofo, 128)                    # keep every store lane-dense
    in_dtype = jnp.dtype(matmul_dtype) if matmul_dtype is not None else x.dtype
    u_out_dtype = jnp.dtype(u_dtype) if u_dtype is not None else x.dtype
    v_out_dtype = x.dtype
    in_item = jnp.dtype(in_dtype).itemsize
    out_item = max(jnp.dtype(u_out_dtype).itemsize, jnp.dtype(v_out_dtype).itemsize)

    if fuse_matmul is None:
        # Block-diagonal weights grow as Ni^2; only fuse while the slab stays small.
        fuse_matmul = (ni * fi) * (ni * nofo_p) * in_item <= (8 << 20)

    # ---- weights -------------------------------------------------------------
    # (Ni, No, Fi, Fo) -> (Ni, Fi, No*Fo) (+ lane padding to nofo_p)
    w_caps = jnp.transpose(weights, (0, 2, 1, 3)).reshape(ni, fi, nofo)
    if nofo_p != nofo:
        w_caps = jnp.pad(w_caps, ((0, 0), (0, 0), (0, nofo_p - nofo)))
    w_caps = w_caps.astype(in_dtype)
    if fuse_matmul:
        # Block-diagonal (Ni*Fi, Ni*nofo_p): block (i, i) holds W[i].
        eye = jnp.eye(ni, dtype=in_dtype)
        w_in = jnp.einsum("ifk,ij->ifjk", w_caps, eye).reshape(ni * fi, ni * nofo_p)
    else:
        w_in = w_caps

    # ---- batch tiling --------------------------------------------------------
    if batch_tile is None:
        batch_tile = _default_batch_tile()
    tb = max(8, min(int(batch_tile), _round_up(b, 8)))
    tb = _round_up(tb, 8)
    # Prefer >= 4 grid steps (>= 2 per TensorCore on v7x megacore) once each step
    # still gets a reasonably large tile.
    if b >= 4 * 128 and pl.cdiv(b, tb) < 4:
        tb = _round_up(pl.cdiv(b, 4), 8)

    def vmem_need(tile):
        x_blk = (tile * ni * fi if fuse_matmul else ni * tile * fi) * in_item
        w_blk = int(w_in.shape[0]) * int(w_in.shape[1]) * in_item
        u_blk = tile * ni * nofo_p * out_item
        v_blk = tile * nofo_p * out_item
        live = (ni + 8) * tile * nofo_p * 4          # in-kernel f32 routing values
        return 2 * (x_blk + w_blk + u_blk + v_blk) + live

    while tb > 64 and vmem_need(tb) > (40 << 20):    # stay well under v7x's 64 MiB
        tb = max(64, _round_up(tb // 2, 8))

    bp = _round_up(b, tb)
    n_steps = bp // tb
    vmem_limit = int(min(max(vmem_need(tb) * 5 // 4 + (2 << 20), 32 << 20), 56 << 20))

    # ---- inputs --------------------------------------------------------------
    if fuse_matmul:
        x_in = x.reshape(b, ni * fi).astype(in_dtype)         # free contiguous reshape
        if bp != b:
            x_in = jnp.pad(x_in, ((0, bp - b), (0, 0)), mode="edge")
    else:
        x_in = jnp.transpose(x, (1, 0, 2)).astype(in_dtype)   # (Ni, B, Fi)
        if bp != b:
            x_in = jnp.pad(x_in, ((0, 0), (0, bp - b), (0, 0)), mode="edge")

    # ---- pallas call ---------------------------------------------------------
    def make_call(single_buffer_w):
        w_kwargs = dict(pipeline_mode=pl.Buffered(1)) if single_buffer_w else {}
        if fuse_matmul:
            kern = functools.partial(_caps_kernel_fused, ni=ni, no=no, fo=fo,
                                     nofo_p=nofo_p, routing_steps=routing_steps)
            x_spec = pl.BlockSpec((tb, ni * fi), lambda bb: (bb, 0))
            w_spec = pl.BlockSpec((ni * fi, ni * nofo_p), lambda bb: (0, 0),
                                  **w_kwargs)
        else:
            kern = functools.partial(_caps_kernel_percap, no=no, fo=fo,
                                     nofo_p=nofo_p, routing_steps=routing_steps)
            x_spec = pl.BlockSpec((ni, tb, fi), lambda bb: (0, bb, 0))
            w_spec = pl.BlockSpec((ni, fi, nofo_p), lambda bb: (0, 0, 0),
                                  **w_kwargs)
        return pl.pallas_call(
            kern,
            out_shape=(
                jax.ShapeDtypeStruct((bp, nofo_p), v_out_dtype),        # v_j
                jax.ShapeDtypeStruct((bp, ni * nofo_p), u_out_dtype),   # u_dash
            ),
            grid=(n_steps,),
            in_specs=[x_spec, w_spec],
            out_specs=(
                pl.BlockSpec((tb, nofo_p), lambda bb: (bb, 0)),
                pl.BlockSpec((tb, ni * nofo_p), lambda bb: (bb, 0)),
            ),
            compiler_params=pltpu.CompilerParams(
                dimension_semantics=("parallel",),
                vmem_limit_bytes=vmem_limit),
        )

    try:
        # Weights have a constant block index -> a second pipeline buffer is waste.
        v_flat, u_flat = make_call(True)(x_in, w_in)
    except Exception:
        # pl.Buffered(1) not supported on this jax version: default double buffering.
        v_flat, u_flat = make_call(False)(x_in, w_in)

    # Free / contiguous reshapes back to the torch module's output layout.
    v_j = v_flat[:b, :nofo].reshape(b, no, fo)
    u_dash = u_flat[:b].reshape(b, ni, nofo_p)[:, :, :nofo].reshape(b, ni, no, fo)
    return v_j, u_dash


# ----------------------------------------------------------------------------
# Pure-JAX reference (transcription of the PyTorch SpectoCapsLayer.forward)
# ----------------------------------------------------------------------------
def _reference_forward(x, weights, routing_steps=3):
    u = jnp.einsum("bif,ijfo->bijo", x, weights)               # (B, Ni, No, Fo)
    logits = jnp.zeros(u.shape[:3], jnp.float32)               # (B, Ni, No)
    v = u
    for _ in range(routing_steps):
        c = jax.nn.softmax(logits, axis=1)[..., None]          # softmax over input caps
        s = jnp.sum(c * u, axis=1, keepdims=True)              # (B, 1, No, Fo)
        sq = jnp.sum(s * s, axis=-1, keepdims=True)
        v = sq / (sq + 1.0) * s / jnp.sqrt(sq)
        logits = logits + jnp.sum(u * v, axis=-1)
    return jnp.squeeze(v, axis=1), u


if __name__ == "__main__":
    # Small shapes consistent with the module (No*Fo = 128 -> lane-dense outputs):
    # batch=2, input_caps=8, output_caps=4, input_filters=16, output_filters=32.
    B, NI, NO, FI, FO = 2, 8, 4, 16, 32
    key = jax.random.PRNGKey(0)
    kx, kw = jax.random.split(key)
    x = jax.random.normal(kx, (B, NI, FI), dtype=jnp.float32)
    weights = jax.random.normal(kw, (NI, NO, FI, FO), dtype=jnp.float32)

    v_exp, u_exp = _reference_forward(x, weights, routing_steps=3)

    # Fused block-diagonal path (default for small Ni*Fi).
    v_j, u_dash = specto_caps_forward(x, weights, routing_steps=3)
    jax.block_until_ready((v_j, u_dash))
    assert v_j.shape == (B, NO, FO) and u_dash.shape == (B, NI, NO, FO)
    assert jnp.allclose(u_dash, u_exp, atol=2e-3, rtol=2e-3)
    # v uses approx EUP reciprocals inside routing -> slightly looser tolerance.
    assert jnp.allclose(v_j, v_exp, atol=1e-2, rtol=1e-2)

    # Per-input-cap fallback path (used when the block-diag slab would be too big).
    v_j2, u_dash2 = specto_caps_forward(x, weights, routing_steps=3,
                                        fuse_matmul=False)
    jax.block_until_ready((v_j2, u_dash2))
    assert jnp.allclose(u_dash2, u_exp, atol=2e-3, rtol=2e-3)
    assert jnp.allclose(v_j2, v_exp, atol=1e-2, rtol=1e-2)

    print("KERNEL_OK")
</pallas_src>

<mosaic_0001>
module attributes {stable_mosaic.version = 11 : i64} {
  func.func @_caps_kernel_fused(%arg0: i32, %arg1: memref<8x128xf32, #tpu.memory_space<vmem>>, %arg2: memref<128x1024xf32, #tpu.memory_space<vmem>>, %arg3: memref<8x128xf32, #tpu.memory_space<vmem>>, %arg4: memref<8x1024xf32, #tpu.memory_space<vmem>>) attributes {dimension_semantics = [#tpu.dimension_semantics<parallel>], iteration_bounds = array<i64: 1>, scalar_prefetch = 0 : i64, scratch_operands = 0 : i64, tpu.core_type = #tpu.core_type<tc>, window_params = [{transform_indices = @transform_0, window_bounds = array<i64: 8, 128>}, {pipeline_mode = #tpu.pipeline_mode<synchronous>, transform_indices = @transform_1, window_bounds = array<i64: 128, 1024>}, {transform_indices = @transform_2, window_bounds = array<i64: 8, 128>}, {transform_indices = @transform_3, window_bounds = array<i64: 8, 1024>}]} {
    %c0 = arith.constant 0 : index
    %c0_0 = arith.constant 0 : index
    %0 = vector.load %arg1[%c0, %c0_0] : memref<8x128xf32, #tpu.memory_space<vmem>>, vector<8x128xf32>
    %c0_1 = arith.constant 0 : index
    %c0_2 = arith.constant 0 : index
    %1 = vector.load %arg2[%c0_1, %c0_2] : memref<128x1024xf32, #tpu.memory_space<vmem>>, vector<128x1024xf32>
    %cst = arith.constant dense<0.000000e+00> : vector<8x1024xf32>
    %2 = tpu.matmul %0, %1, %cst {dimension_numbers = #tpu.dot_dimension_numbers<[1], [0], [0], [1], [0, 0, 1, 1], [], []>} : vector<8x128xf32>, vector<128x1024xf32>, vector<8x1024xf32> -> vector<8x1024xf32>
    %c0_3 = arith.constant 0 : index
    %c0_4 = arith.constant 0 : index
    %3 = vector.load %arg4[%c0_3, %c0_4] : memref<8x1024xf32, #tpu.memory_space<vmem>>, vector<8x1024xf32>
    tpu.vector_store %arg4[%c0_3, %c0_4], %2 {strides = array<i32>} : memref<8x1024xf32, #tpu.memory_space<vmem>>, vector<8x1024xf32>,
    %4 = vector.extract_strided_slice %2 {offsets = [0, 0], sizes = [8, 128], strides = [1, 1]} : vector<8x1024xf32> to vector<8x128xf32>
    %5 = vector.extract_strided_slice %2 {offsets = [0, 128], sizes = [8, 128], strides = [1, 1]} : vector<8x1024xf32> to vector<8x128xf32>
    %6 = vector.extract_strided_slice %2 {offsets = [0, 256], sizes = [8, 128], strides = [1, 1]} : vector<8x1024xf32> to vector<8x128xf32>
    %7 = vector.extract_strided_slice %2 {offsets = [0, 384], sizes = [8, 128], strides = [1, 1]} : vector<8x1024xf32> to vector<8x128xf32>
    %8 = vector.extract_strided_slice %2 {offsets = [0, 512], sizes = [8, 128], strides = [1, 1]} : vector<8x1024xf32> to vector<8x128xf32>
    %9 = vector.extract_strided_slice %2 {offsets = [0, 640], sizes = [8, 128], strides = [1, 1]} : vector<8x1024xf32> to vector<8x128xf32>
    %10 = vector.extract_strided_slice %2 {offsets = [0, 768], sizes = [8, 128], strides = [1, 1]} : vector<8x1024xf32> to vector<8x128xf32>
    %11 = vector.extract_strided_slice %2 {offsets = [0, 896], sizes = [8, 128], strides = [1, 1]} : vector<8x1024xf32> to vector<8x128xf32>
    %12 = tpu.iota {dimensions = array<i32: 0>} : vector<128x4xi32>
    %13 = tpu.iota {dimensions = array<i32: 1>} : vector<128x4xi32>
    %c32_i32 = arith.constant 32 : i32
    %14 = vector.broadcast %c32_i32 : i32 to vector<128x4xi32>
    %15 = arith.muli %13, %14 : vector<128x4xi32>
    %16 = arith.cmpi sge, %12, %15 : vector<128x4xi32>
    %c32_i32_5 = arith.constant 32 : i32
    %17 = vector.broadcast %c32_i32_5 : i32 to vector<128x4xi32>
    %18 = arith.muli %13, %17 : vector<128x4xi32>
    %c32_i32_6 = arith.constant 32 : i32
    %19 = vector.broadcast %c32_i32_6 : i32 to vector<128x4xi32>
    %20 = arith.addi %18, %19 : vector<128x4xi32>
    %21 = arith.cmpi slt, %12, %20 : vector<128x4xi32>
    %22 = arith.andi %16, %21 : vector<128x4xi1>
    %cst_7 = arith.constant 1.000000e+00 : f32
    %cst_8 = arith.constant 0.000000e+00 : f32
    %23 = vector.broadcast %cst_7 : f32 to vector<128x4xf32>
    %24 = vector.broadcast %cst_8 : f32 to vector<128x4xf32>
    %25 = arith.select %22, %23, %24 : vector<128x4xi1>, vector<128x4xf32>
    %26 = tpu.iota {dimensions = array<i32: 1>} : vector<4x128xi32>
    %27 = tpu.iota {dimensions = array<i32: 0>} : vector<4x128xi32>
    %c32_i32_9 = arith.constant 32 : i32
    %28 = vector.broadcast %c32_i32_9 : i32 to vector<4x128xi32>
    %29 = arith.muli %27, %28 : vector<4x128xi32>
    %30 = arith.cmpi sge, %26, %29 : vector<4x128xi32>
    %c32_i32_10 = arith.constant 32 : i32
    %31 = vector.broadcast %c32_i32_10 : i32 to vector<4x128xi32>
    %32 = arith.muli %27, %31 : vector<4x128xi32>
    %c32_i32_11 = arith.constant 32 : i32
    %33 = vector.broadcast %c32_i32_11 : i32 to vector<4x128xi32>
    %34 = arith.addi %32, %33 : vector<4x128xi32>
    %35 = arith.cmpi slt, %26, %34 : vector<4x128xi32>
    %36 = arith.andi %30, %35 : vector<4x128xi1>
    %cst_12 = arith.constant 1.000000e+00 : f32
    %cst_13 = arith.constant 0.000000e+00 : f32
    %37 = vector.broadcast %cst_12 : f32 to vector<4x128xf32>
    %38 = vector.broadcast %cst_13 : f32 to vector<4x128xf32>
    %39 = arith.select %36, %37, %38 : vector<4x128xi1>, vector<4x128xf32>
    %40 = arith.addf %4, %5 : vector<8x128xf32>
    %41 = arith.addf %40, %6 : vector<8x128xf32>
    %42 = arith.addf %41, %7 : vector<8x128xf32>
    %43 = arith.addf %42, %8 : vector<8x128xf32>
    %44 = arith.addf %43, %9 : vector<8x128xf32>
    %45 = arith.addf %44, %10 : vector<8x128xf32>
    %46 = arith.addf %45, %11 : vector<8x128xf32>
    %cst_14 = arith.constant 1.250000e-01 : f32
    %47 = vector.broadcast %cst_14 : f32 to vector<8x128xf32>
    %48 = arith.mulf %46, %47 : vector<8x128xf32>
    %49 = arith.mulf %48, %48 : vector<8x128xf32>
    %cst_15 = arith.constant dense<0.000000e+00> : vector<8x4xf32>
    %50 = tpu.matmul %49, %25, %cst_15 {dimension_numbers = #tpu.dot_dimension_numbers<[1], [0], [0], [1], [0, 0, 1, 1], [], []>} : vector<8x128xf32>, vector<128x4xf32>, vector<8x4xf32> -> vector<8x4xf32>
    %51 = math.rsqrt %50 : vector<8x4xf32>
    %52 = arith.mulf %50, %51 : vector<8x4xf32>
    %cst_16 = arith.constant 1.000000e+00 : f32
    %53 = vector.broadcast %cst_16 : f32 to vector<8x4xf32>
    %54 = arith.addf %50, %53 : vector<8x4xf32>
    %55 = tpu.reciprocal %54 {approx = true} : vector<8x4xf32> -> vector<8x4xf32>
    %56 = arith.mulf %52, %55 : vector<8x4xf32>
    %cst_17 = arith.constant dense<0.000000e+00> : vector<8x128xf32>
    %57 = tpu.matmul %56, %39, %cst_17 {dimension_numbers = #tpu.dot_dimension_numbers<[1], [0], [0], [1], [0, 0, 1, 1], [], []>} : vector<8x4xf32>, vector<4x128xf32>, vector<8x128xf32> -> vector<8x128xf32>
    %58 = arith.mulf %57, %48 : vector<8x128xf32>
    %cst_18 = arith.constant 0.000000e+00 : f32
    %59 = vector.broadcast %cst_18 : f32 to vector<8x4xf32>
    %cst_19 = arith.constant 0.000000e+00 : f32
    %60 = vector.broadcast %cst_19 : f32 to vector<8x4xf32>
    %cst_20 = arith.constant 0.000000e+00 : f32
    %61 = vector.broadcast %cst_20 : f32 to vector<8x4xf32>
    %cst_21 = arith.constant 0.000000e+00 : f32
    %62 = vector.broadcast %cst_21 : f32 to vector<8x4xf32>
    %cst_22 = arith.constant 0.000000e+00 : f32
    %63 = vector.broadcast %cst_22 : f32 to vector<8x4xf32>
    %cst_23 = arith.constant 0.000000e+00 : f32
    %64 = vector.broadcast %cst_23 : f32 to vector<8x4xf32>
    %cst_24 = arith.constant 0.000000e+00 : f32
    %65 = vector.broadcast %cst_24 : f32 to vector<8x4xf32>
    %cst_25 = arith.constant 0.000000e+00 : f32
    %66 = vector.broadcast %cst_25 : f32 to vector<8x4xf32>
    %67 = arith.mulf %4, %58 : vector<8x128xf32>
    %cst_26 = arith.constant dense<0.000000e+00> : vector<8x4xf32>
    %68 = tpu.matmul %67, %25, %cst_26 {dimension_numbers = #tpu.dot_dimension_numbers<[1], [0], [0], [1], [0, 0, 1, 1], [], []>} : vector<8x128xf32>, vector<128x4xf32>, vector<8x4xf32> -> vector<8x4xf32>
    %69 = arith.addf %59, %68 : vector<8x4xf32>
    %70 = arith.mulf %5, %58 : vector<8x128xf32>
    %cst_27 = arith.constant dense<0.000000e+00> : vector<8x4xf32>
    %71 = tpu.matmul %70, %25, %cst_27 {dimension_numbers = #tpu.dot_dimension_numbers<[1], [0], [0], [1], [0, 0, 1, 1], [], []>} : vector<8x128xf32>, vector<128x4xf32>, vector<8x4xf32> -> vector<8x4xf32>
    %72 = arith.addf %60, %71 : vector<8x4xf32>
    %73 = arith.mulf %6, %58 : vector<8x128xf32>
    %cst_28 = arith.constant dense<0.000000e+00> : vector<8x4xf32>
    %74 = tpu.matmul %73, %25, %cst_28 {dimension_numbers = #tpu.dot_dimension_numbers<[1], [0], [0], [1], [0, 0, 1, 1], [], []>} : vector<8x128xf32>, vector<128x4xf32>, vector<8x4xf32> -> vector<8x4xf32>
    %75 = arith.addf %61, %74 : vector<8x4xf32>
    %76 = arith.mulf %7, %58 : vector<8x128xf32>
    %cst_29 = arith.constant dense<0.000000e+00> : vector<8x4xf32>
    %77 = tpu.matmul %76, %25, %cst_29 {dimension_numbers = #tpu.dot_dimension_numbers<[1], [0], [0], [1], [0, 0, 1, 1], [], []>} : vector<8x128xf32>, vector<128x4xf32>, vector<8x4xf32> -> vector<8x4xf32>
    %78 = arith.addf %62, %77 : vector<8x4xf32>
    %79 = arith.mulf %8, %58 : vector<8x128xf32>
    %cst_30 = arith.constant dense<0.000000e+00> : vector<8x4xf32>
    %80 = tpu.matmul %79, %25, %cst_30 {dimension_numbers = #tpu.dot_dimension_numbers<[1], [0], [0], [1], [0, 0, 1, 1], [], []>} : vector<8x128xf32>, vector<128x4xf32>, vector<8x4xf32> -> vector<8x4xf32>
    %81 = arith.addf %63, %80 : vector<8x4xf32>
    %82 = arith.mulf %9, %58 : vector<8x128xf32>
    %cst_31 = arith.constant dense<0.000000e+00> : vector<8x4xf32>
    %83 = tpu.matmul %82, %25, %cst_31 {dimension_numbers = #tpu.dot_dimension_numbers<[1], [0], [0], [1], [0, 0, 1, 1], [], []>} : vector<8x128xf32>, vector<128x4xf32>, vector<8x4xf32> -> vector<8x4xf32>
    %84 = arith.addf %64, %83 : vector<8x4xf32>
    %85 = arith.mulf %10, %58 : vector<8x128xf32>
    %cst_32 = arith.constant dense<0.000000e+00> : vector<8x4xf32>
    %86 = tpu.matmul %85, %25, %cst_32 {dimension_numbers = #tpu.dot_dimension_numbers<[1], [0], [0], [1], [0, 0, 1, 1], [], []>} : vector<8x128xf32>, vector<128x4xf32>, vector<8x4xf32> -> vector<8x4xf32>
    %87 = arith.addf %65, %86 : vector<8x4xf32>
    %88 = arith.mulf %11, %58 : vector<8x128xf32>
    %cst_33 = arith.constant dense<0.000000e+00> : vector<8x4xf32>
    %89 = tpu.matmul %88, %25, %cst_33 {dimension_numbers = #tpu.dot_dimension_numbers<[1], [0], [0], [1], [0, 0, 1, 1], [], []>} : vector<8x128xf32>, vector<128x4xf32>, vector<8x4xf32> -> vector<8x4xf32>
    %90 = arith.addf %66, %89 : vector<8x4xf32>
    %91 = arith.maximumf %69, %72 : vector<8x4xf32>
    %92 = arith.maximumf %91, %75 : vector<8x4xf32>
    %93 = arith.maximumf %92, %78 : vector<8x4xf32>
    %94 = arith.maximumf %93, %81 : vector<8x4xf32>
    %95 = arith.maximumf %94, %84 : vector<8x4xf32>
    %96 = arith.maximumf %95, %87 : vector<8x4xf32>
    %97 = arith.maximumf %96, %90 : vector<8x4xf32>
    %98 = arith.subf %69, %97 : vector<8x4xf32>
    %99 = math.exp %98 : vector<8x4xf32>
    %100 = arith.subf %72, %97 : vector<8x4xf32>
    %101 = math.exp %100 : vector<8x4xf32>
    %102 = arith.subf %75, %97 : vector<8x4xf32>
    %103 = math.exp %102 : vector<8x4xf32>
    %104 = arith.subf %78, %97 : vector<8x4xf32>
    %105 = math.exp %104 : vector<8x4xf32>
    %106 = arith.subf %81, %97 : vector<8x4xf32>
    %107 = math.exp %106 : vector<8x4xf32>
    %108 = arith.subf %84, %97 : vector<8x4xf32>
    %109 = math.exp %108 : vector<8x4xf32>
    %110 = arith.subf %87, %97 : vector<8x4xf32>
    %111 = math.exp %110 : vector<8x4xf32>
    %112 = arith.subf %90, %97 : vector<8x4xf32>
    %113 = math.exp %112 : vector<8x4xf32>
    %114 = arith.addf %99, %101 : vector<8x4xf32>
    %115 = arith.addf %114, %103 : vector<8x4xf32>
    %116 = arith.addf %115, %105 : vector<8x4xf32>
    %117 = arith.addf %116, %107 : vector<8x4xf32>
    %118 = arith.addf %117, %109 : vector<8x4xf32>
    %119 = arith.addf %118, %111 : vector<8x4xf32>
    %120 = arith.addf %119, %113 : vector<8x4xf32>
    %121 = tpu.reciprocal %120 {approx = true} : vector<8x4xf32> -> vector<8x4xf32>
    %cst_34 = arith.constant 0.000000e+00 : f32
    %122 = vector.broadcast %cst_34 : f32 to vector<8x128xf32>
    %123 = arith.mulf %99, %121 : vector<8x4xf32>
    %cst_35 = arith.constant dense<0.000000e+00> : vector<8x128xf32>
    %124 = tpu.matmul %123, %39, %cst_35 {dimension_numbers = #tpu.dot_dimension_numbers<[1], [0], [0], [1], [0, 0, 1, 1], [], []>} : vector<8x4xf32>, vector<4x128xf32>, vector<8x128xf32> -> vector<8x128xf32>
    %125 = arith.mulf %124, %4 : vector<8x128xf32>
    %126 = arith.addf %122, %125 : vector<8x128xf32>
    %127 = arith.mulf %101, %121 : vector<8x4xf32>
    %cst_36 = arith.constant dense<0.000000e+00> : vector<8x128xf32>
    %128 = tpu.matmul %127, %39, %cst_36 {dimension_numbers = #tpu.dot_dimension_numbers<[1], [0], [0], [1], [0, 0, 1, 1], [], []>} : vector<8x4xf32>, vector<4x128xf32>, vector<8x128xf32> -> vector<8x128xf32>
    %129 = arith.mulf %128, %5 : vector<8x128xf32>
    %130 = arith.addf %126, %129 : vector<8x128xf32>
    %131 = arith.mulf %103, %121 : vector<8x4xf32>
    %cst_37 = arith.constant dense<0.000000e+00> : vector<8x128xf32>
    %132 = tpu.matmul %131, %39, %cst_37 {dimension_numbers = #tpu.dot_dimension_numbers<[1], [0], [0], [1], [0, 0, 1, 1], [], []>} : vector<8x4xf32>, vector<4x128xf32>, vector<8x128xf32> -> vector<8x128xf32>
    %133 = arith.mulf %132, %6 : vector<8x128xf32>
    %134 = arith.addf %130, %133 : vector<8x128xf32>
    %135 = arith.mulf %105, %121 : vector<8x4xf32>
    %cst_38 = arith.constant dense<0.000000e+00> : vector<8x128xf32>
    %136 = tpu.matmul %135, %39, %cst_38 {dimension_numbers = #tpu.dot_dimension_numbers<[1], [0], [0], [1], [0, 0, 1, 1], [], []>} : vector<8x4xf32>, vector<4x128xf32>, vector<8x128xf32> -> vector<8x128xf32>
    %137 = arith.mulf %136, %7 : vector<8x128xf32>
    %138 = arith.addf %134, %137 : vector<8x128xf32>
    %139 = arith.mulf %107, %121 : vector<8x4xf32>
    %cst_39 = arith.constant dense<0.000000e+00> : vector<8x128xf32>
    %140 = tpu.matmul %139, %39, %cst_39 {dimension_numbers = #tpu.dot_dimension_numbers<[1], [0], [0], [1], [0, 0, 1, 1], [], []>} : vector<8x4xf32>, vector<4x128xf32>, vector<8x128xf32> -> vector<8x128xf32>
    %141 = arith.mulf %140, %8 : vector<8x128xf32>
    %142 = arith.addf %138, %141 : vector<8x128xf32>
    %143 = arith.mulf %109, %121 : vector<8x4xf32>
    %cst_40 = arith.constant dense<0.000000e+00> : vector<8x128xf32>
    %144 = tpu.matmul %143, %39, %cst_40 {dimension_numbers = #tpu.dot_dimension_numbers<[1], [0], [0], [1], [0, 0, 1, 1], [], []>} : vector<8x4xf32>, vector<4x128xf32>, vector<8x128xf32> -> vector<8x128xf32>
    %145 = arith.mulf %144, %9 : vector<8x128xf32>
    %146 = arith.addf %142, %145 : vector<8x128xf32>
    %147 = arith.mulf %111, %121 : vector<8x4xf32>
    %cst_41 = arith.constant dense<0.000000e+00> : vector<8x128xf32>
    %148 = tpu.matmul %147, %39, %cst_41 {dimension_numbers = #tpu.dot_dimension_numbers<[1], [0], [0], [1], [0, 0, 1, 1], [], []>} : vector<8x4xf32>, vector<4x128xf32>, vector<8x128xf32> -> vector<8x128xf32>
    %149 = arith.mulf %148, %10 : vector<8x128xf32>
    %150 = arith.addf %146, %149 : vector<8x128xf32>
    %151 = arith.mulf %113, %121 : vector<8x4xf32>
    %cst_42 = arith.constant dense<0.000000e+00> : vector<8x128xf32>
    %152 = tpu.matmul %151, %39, %cst_42 {dimension_numbers = #tpu.dot_dimension_numbers<[1], [0], [0], [1], [0, 0, 1, 1], [], []>} : vector<8x4xf32>, vector<4x128xf32>, vector<8x128xf32> -> vector<8x128xf32>
    %153 = arith.mulf %152, %11 : vector<8x128xf32>
    %154 = arith.addf %150, %153 : vector<8x128xf32>
    %155 = arith.mulf %154, %154 : vector<8x128xf32>
    %cst_43 = arith.constant dense<0.000000e+00> : vector<8x4xf32>
    %156 = tpu.matmul %155, %25, %cst_43 {dimension_numbers = #tpu.dot_dimension_numbers<[1], [0], [0], [1], [0, 0, 1, 1], [], []>} : vector<8x128xf32>, vector<128x4xf32>, vector<8x4xf32> -> vector<8x4xf32>
    %157 = math.rsqrt %156 : vector<8x4xf32>
    %158 = arith.mulf %156, %157 : vector<8x4xf32>
    %cst_44 = arith.constant 1.000000e+00 : f32
    %159 = vector.broadcast %cst_44 : f32 to vector<8x4xf32>
    %160 = arith.addf %156, %159 : vector<8x4xf32>
    %161 = tpu.reciprocal %160 {approx = true} : vector<8x4xf32> -> vector<8x4xf32>
    %162 = arith.mulf %158, %161 : vector<8x4xf32>
    %cst_45 = arith.constant dense<0.000000e+00> : vector<8x128xf32>
    %163 = tpu.matmul %162, %39, %cst_45 {dimension_numbers = #tpu.dot_dimension_numbers<[1], [0], [0], [1], [0, 0, 1, 1], [], []>} : vector<8x4xf32>, vector<4x128xf32>, vector<8x128xf32> -> vector<8x128xf32>
    %164 = arith.mulf %163, %154 : vector<8x128xf32>
    %165 = arith.mulf %4, %164 : vector<8x128xf32>
    %cst_46 = arith.constant dense<0.000000e+00> : vector<8x4xf32>
    %166 = tpu.matmul %165, %25, %cst_46 {dimension_numbers = #tpu.dot_dimension_numbers<[1], [0], [0], [1], [0, 0, 1, 1], [], []>} : vector<8x128xf32>, vector<128x4xf32>, vector<8x4xf32> -> vector<8x4xf32>
    %167 = arith.addf %69, %166 : vector<8x4xf32>
    %168 = arith.mulf %5, %164 : vector<8x128xf32>
    %cst_47 = arith.constant dense<0.000000e+00> : vector<8x4xf32>
    %169 = tpu.matmul %168, %25, %cst_47 {dimension_numbers = #tpu.dot_dimension_numbers<[1], [0], [0], [1], [0, 0, 1, 1], [], []>} : vector<8x128xf32>, vector<128x4xf32>, vector<8x4xf32> -> vector<8x4xf32>
    %170 = arith.addf %72, %169 : vector<8x4xf32>
    %171 = arith.mulf %6, %164 : vector<8x128xf32>
    %cst_48 = arith.constant dense<0.000000e+00> : vector<8x4xf32>
    %172 = tpu.matmul %171, %25, %cst_48 {dimension_numbers = #tpu.dot_dimension_numbers<[1], [0], [0], [1], [0, 0, 1, 1], [], []>} : vector<8x128xf32>, vector<128x4xf32>, vector<8x4xf32> -> vector<8x4xf32>
    %173 = arith.addf %75, %172 : vector<8x4xf32>
    %174 = arith.mulf %7, %164 : vector<8x128xf32>
    %cst_49 = arith.constant dense<0.000000e+00> : vector<8x4xf32>
    %175 = tpu.matmul %174, %25, %cst_49 {dimension_numbers = #tpu.dot_dimension_numbers<[1], [0], [0], [1], [0, 0, 1, 1], [], []>} : vector<8x128xf32>, vector<128x4xf32>, vector<8x4xf32> -> vector<8x4xf32>
    %176 = arith.addf %78, %175 : vector<8x4xf32>
    %177 = arith.mulf %8, %164 : vector<8x128xf32>
    %cst_50 = arith.constant dense<0.000000e+00> : vector<8x4xf32>
    %178 = tpu.matmul %177, %25, %cst_50 {dimension_numbers = #tpu.dot_dimension_numbers<[1], [0], [0], [1], [0, 0, 1, 1], [], []>} : vector<8x128xf32>, vector<128x4xf32>, vector<8x4xf32> -> vector<8x4xf32>
    %179 = arith.addf %81, %178 : vector<8x4xf32>
    %180 = arith.mulf %9, %164 : vector<8x128xf32>
    %cst_51 = arith.constant dense<0.000000e+00> : vector<8x4xf32>
    %181 = tpu.matmul %180, %25, %cst_51 {dimension_numbers = #tpu.dot_dimension_numbers<[1], [0], [0], [1], [0, 0, 1, 1], [], []>} : vector<8x128xf32>, vector<128x4xf32>, vector<8x4xf32> -> vector<8x4xf32>
    %182 = arith.addf %84, %181 : vector<8x4xf32>
    %183 = arith.mulf %10, %164 : vector<8x128xf32>
    %cst_52 = arith.constant dense<0.000000e+00> : vector<8x4xf32>
    %184 = tpu.matmul %183, %25, %cst_52 {dimension_numbers = #tpu.dot_dimension_numbers<[1], [0], [0], [1], [0, 0, 1, 1], [], []>} : vector<8x128xf32>, vector<128x4xf32>, vector<8x4xf32> -> vector<8x4xf32>
    %185 = arith.addf %87, %184 : vector<8x4xf32>
    %186 = arith.mulf %11, %164 : vector<8x128xf32>
    %cst_53 = arith.constant dense<0.000000e+00> : vector<8x4xf32>
    %187 = tpu.matmul %186, %25, %cst_53 {dimension_numbers = #tpu.dot_dimension_numbers<[1], [0], [0], [1], [0, 0, 1, 1], [], []>} : vector<8x128xf32>, vector<128x4xf32>, vector<8x4xf32> -> vector<8x4xf32>
    %188 = arith.addf %90, %187 : vector<8x4xf32>
    %189 = arith.maximumf %167, %170 : vector<8x4xf32>
    %190 = arith.maximumf %189, %173 : vector<8x4xf32>
    %191 = arith.maximumf %190, %176 : vector<8x4xf32>
    %192 = arith.maximumf %191, %179 : vector<8x4xf32>
    %193 = arith.maximumf %192, %182 : vector<8x4xf32>
    %194 = arith.maximumf %193, %185 : vector<8x4xf32>
    %195 = arith.maximumf %194, %188 : vector<8x4xf32>
    %196 = arith.subf %167, %195 : vector<8x4xf32>
    %197 = math.exp %196 : vector<8x4xf32>
    %198 = arith.subf %170, %195 : vector<8x4xf32>
    %199 = math.exp %198 : vector<8x4xf32>
    %200 = arith.subf %173, %195 : vector<8x4xf32>
    %201 = math.exp %200 : vector<8x4xf32>
    %202 = arith.subf %176, %195 : vector<8x4xf32>
    %203 = math.exp %202 : vector<8x4xf32>
    %204 = arith.subf %179, %195 : vector<8x4xf32>
    %205 = math.exp %204 : vector<8x4xf32>
    %206 = arith.subf %182, %195 : vector<8x4xf32>
    %207 = math.exp %206 : vector<8x4xf32>
    %208 = arith.subf %185, %195 : vector<8x4xf32>
    %209 = math.exp %208 : vector<8x4xf32>
    %210 = arith.subf %188, %195 : vector<8x4xf32>
    %211 = math.exp %210 : vector<8x4xf32>
    %212 = arith.addf %197, %199 : vector<8x4xf32>
    %213 = arith.addf %212, %201 : vector<8x4xf32>
    %214 = arith.addf %213, %203 : vector<8x4xf32>
    %215 = arith.addf %214, %205 : vector<8x4xf32>
    %216 = arith.addf %215, %207 : vector<8x4xf32>
    %217 = arith.addf %216, %209 : vector<8x4xf32>
    %218 = arith.addf %217, %211 : vector<8x4xf32>
    %219 = tpu.reciprocal %218 {approx = true} : vector<8x4xf32> -> vector<8x4xf32>
    %cst_54 = arith.constant 0.000000e+00 : f32
    %220 = vector.broadcast %cst_54 : f32 to vector<8x128xf32>
    %221 = arith.mulf %197, %219 : vector<8x4xf32>
    %cst_55 = arith.constant dense<0.000000e+00> : vector<8x128xf32>
    %222 = tpu.matmul %221, %39, %cst_55 {dimension_numbers = #tpu.dot_dimension_numbers<[1], [0], [0], [1], [0, 0, 1, 1], [], []>} : vector<8x4xf32>, vector<4x128xf32>, vector<8x128xf32> -> vector<8x128xf32>
    %223 = arith.mulf %222, %4 : vector<8x128xf32>
    %224 = arith.addf %220, %223 : vector<8x128xf32>
    %225 = arith.mulf %199, %219 : vector<8x4xf32>
    %cst_56 = arith.constant dense<0.000000e+00> : vector<8x128xf32>
    %226 = tpu.matmul %225, %39, %cst_56 {dimension_numbers = #tpu.dot_dimension_numbers<[1], [0], [0], [1], [0, 0, 1, 1], [], []>} : vector<8x4xf32>, vector<4x128xf32>, vector<8x128xf32> -> vector<8x128xf32>
    %227 = arith.mulf %226, %5 : vector<8x128xf32>
    %228 = arith.addf %224, %227 : vector<8x128xf32>
    %229 = arith.mulf %201, %219 : vector<8x4xf32>
    %cst_57 = arith.constant dense<0.000000e+00> : vector<8x128xf32>
    %230 = tpu.matmul %229, %39, %cst_57 {dimension_numbers = #tpu.dot_dimension_numbers<[1], [0], [0], [1], [0, 0, 1, 1], [], []>} : vector<8x4xf32>, vector<4x128xf32>, vector<8x128xf32> -> vector<8x128xf32>
    %231 = arith.mulf %230, %6 : vector<8x128xf32>
    %232 = arith.addf %228, %231 : vector<8x128xf32>
    %233 = arith.mulf %203, %219 : vector<8x4xf32>
    %cst_58 = arith.constant dense<0.000000e+00> : vector<8x128xf32>
    %234 = tpu.matmul %233, %39, %cst_58 {dimension_numbers = #tpu.dot_dimension_numbers<[1], [0], [0], [1], [0, 0, 1, 1], [], []>} : vector<8x4xf32>, vector<4x128xf32>, vector<8x128xf32> -> vector<8x128xf32>
    %235 = arith.mulf %234, %7 : vector<8x128xf32>
    %236 = arith.addf %232, %235 : vector<8x128xf32>
    %237 = arith.mulf %205, %219 : vector<8x4xf32>
    %cst_59 = arith.constant dense<0.000000e+00> : vector<8x128xf32>
    %238 = tpu.matmul %237, %39, %cst_59 {dimension_numbers = #tpu.dot_dimension_numbers<[1], [0], [0], [1], [0, 0, 1, 1], [], []>} : vector<8x4xf32>, vector<4x128xf32>, vector<8x128xf32> -> vector<8x128xf32>
    %239 = arith.mulf %238, %8 : vector<8x128xf32>
    %240 = arith.addf %236, %239 : vector<8x128xf32>
    %241 = arith.mulf %207, %219 : vector<8x4xf32>
    %cst_60 = arith.constant dense<0.000000e+00> : vector<8x128xf32>
    %242 = tpu.matmul %241, %39, %cst_60 {dimension_numbers = #tpu.dot_dimension_numbers<[1], [0], [0], [1], [0, 0, 1, 1], [], []>} : vector<8x4xf32>, vector<4x128xf32>, vector<8x128xf32> -> vector<8x128xf32>
    %243 = arith.mulf %242, %9 : vector<8x128xf32>
    %244 = arith.addf %240, %243 : vector<8x128xf32>
    %245 = arith.mulf %209, %219 : vector<8x4xf32>
    %cst_61 = arith.constant dense<0.000000e+00> : vector<8x128xf32>
    %246 = tpu.matmul %245, %39, %cst_61 {dimension_numbers = #tpu.dot_dimension_numbers<[1], [0], [0], [1], [0, 0, 1, 1], [], []>} : vector<8x4xf32>, vector<4x128xf32>, vector<8x128xf32> -> vector<8x128xf32>
    %247 = arith.mulf %246, %10 : vector<8x128xf32>
    %248 = arith.addf %244, %247 : vector<8x128xf32>
    %249 = arith.mulf %211, %219 : vector<8x4xf32>
    %cst_62 = arith.constant dense<0.000000e+00> : vector<8x128xf32>
    %250 = tpu.matmul %249, %39, %cst_62 {dimension_numbers = #tpu.dot_dimension_numbers<[1], [0], [0], [1], [0, 0, 1, 1], [], []>} : vector<8x4xf32>, vector<4x128xf32>, vector<8x128xf32> -> vector<8x128xf32>
    %251 = arith.mulf %250, %11 : vector<8x128xf32>
    %252 = arith.addf %248, %251 : vector<8x128xf32>
    %253 = arith.mulf %252, %252 : vector<8x128xf32>
    %cst_63 = arith.constant dense<0.000000e+00> : vector<8x4xf32>
    %254 = tpu.matmul %253, %25, %cst_63 {dimension_numbers = #tpu.dot_dimension_numbers<[1], [0], [0], [1], [0, 0, 1, 1], [], []>} : vector<8x128xf32>, vector<128x4xf32>, vector<8x4xf32> -> vector<8x4xf32>
    %255 = math.rsqrt %254 : vector<8x4xf32>
    %256 = arith.mulf %254, %255 : vector<8x4xf32>
    %cst_64 = arith.constant 1.000000e+00 : f32
    %257 = vector.broadcast %cst_64 : f32 to vector<8x4xf32>
    %258 = arith.addf %254, %257 : vector<8x4xf32>
    %259 = tpu.reciprocal %258 {approx = true} : vector<8x4xf32> -> vector<8x4xf32>
    %260 = arith.mulf %256, %259 : vector<8x4xf32>
    %cst_65 = arith.constant dense<0.000000e+00> : vector<8x128xf32>
    %261 = tpu.matmul %260, %39, %cst_65 {dimension_numbers = #tpu.dot_dimension_numbers<[1], [0], [0], [1], [0, 0, 1, 1], [], []>} : vector<8x4xf32>, vector<4x128xf32>, vector<8x128xf32> -> vector<8x128xf32>
    %262 = arith.mulf %261, %252 : vector<8x128xf32>
    %c0_66 = arith.constant 0 : index
    %c0_67 = arith.constant 0 : index
    %263 = vector.load %arg3[%c0_66, %c0_67] : memref<8x128xf32, #tpu.memory_space<vmem>>, vector<8x128xf32>
    tpu.vector_store %arg3[%c0_66, %c0_67], %262 {strides = array<i32>} : memref<8x128xf32, #tpu.memory_space<vmem>>, vector<8x128xf32>,
    return
  }
  func.func @transform_0(%arg0: i32) -> (i32, i32) {
    %c0_i32 = arith.constant 0 : i32
    %c0_i32_0 = arith.constant 0 : i32
    return %arg0, %c0_i32 : i32, i32
  }
  func.func @transform_1(%arg0: i32) -> (i32, i32) {
    %c0_i32 = arith.constant 0 : i32
    %c0_i32_0 = arith.constant 0 : i32
    %c0_i32_1 = arith.constant 0 : i32
    return %c0_i32, %c0_i32_0 : i32, i32
  }
  func.func @transform_2(%arg0: i32) -> (i32, i32) {
    %c0_i32 = arith.constant 0 : i32
    %c0_i32_0 = arith.constant 0 : i32
    return %arg0, %c0_i32 : i32, i32
  }
  func.func @transform_3(%arg0: i32) -> (i32, i32) {
    %c0_i32 = arith.constant 0 : i32
    %c0_i32_0 = arith.constant 0 : i32
    return %arg0, %c0_i32 : i32, i32
  }
}

module attributes {stable_mosaic.version = 11 : i64} {
  func.func @_caps_kernel_fused(%arg0: i32, %arg1: memref<8x128xf32, #tpu.memory_space<vmem>>, %arg2: memref<128x1024xf32, #tpu.memory_space<vmem>>, %arg3: memref<8x128xf32, #tpu.memory_space<vmem>>, %arg4: memref<8x1024xf32, #tpu.memory_space<vmem>>) attributes {dimension_semantics = [#tpu.dimension_semantics<parallel>], iteration_bounds = array<i64: 1>, scalar_prefetch = 0 : i64, scratch_operands = 0 : i64, tpu.core_type = #tpu.core_type<tc>, window_params = [{transform_indices = @transform_0, window_bounds = array<i64: 8, 128>}, {pipeline_mode = #tpu.pipeline_mode<synchronous>, transform_indices = @transform_1, window_bounds = array<i64: 128, 1024>}, {transform_indices = @transform_2, window_bounds = array<i64: 8, 128>}, {transform_indices = @transform_3, window_bounds = array<i64: 8, 1024>}]} {
    %c0 = arith.constant 0 : index
    %c0_0 = arith.constant 0 : index
    %0 = vector.load %arg1[%c0, %c0_0] : memref<8x128xf32, #tpu.memory_space<vmem>>, vector<8x128xf32>
    %c0_1 = arith.constant 0 : index
    %c0_2 = arith.constant 0 : index
    %1 = vector.load %arg2[%c0_1, %c0_2] : memref<128x1024xf32, #tpu.memory_space<vmem>>, vector<128x1024xf32>
    %cst = arith.constant dense<0.000000e+00> : vector<8x1024xf32>
    %2 = tpu.matmul %0, %1, %cst {dimension_numbers = #tpu.dot_dimension_numbers<[1], [0], [0], [1], [0, 0, 1, 1], [], []>} : vector<8x128xf32>, vector<128x1024xf32>, vector<8x1024xf32> -> vector<8x1024xf32>
    %c0_3 = arith.constant 0 : index
    %c0_4 = arith.constant 0 : index
    %3 = vector.load %arg4[%c0_3, %c0_4] : memref<8x1024xf32, #tpu.memory_space<vmem>>, vector<8x1024xf32>
    tpu.vector_store %arg4[%c0_3, %c0_4], %2 {strides = array<i32>} : memref<8x1024xf32, #tpu.memory_space<vmem>>, vector<8x1024xf32>,
    %4 = vector.extract_strided_slice %2 {offsets = [0, 0], sizes = [8, 128], strides = [1, 1]} : vector<8x1024xf32> to vector<8x128xf32>
    %5 = vector.extract_strided_slice %2 {offsets = [0, 128], sizes = [8, 128], strides = [1, 1]} : vector<8x1024xf32> to vector<8x128xf32>
    %6 = vector.extract_strided_slice %2 {offsets = [0, 256], sizes = [8, 128], strides = [1, 1]} : vector<8x1024xf32> to vector<8x128xf32>
    %7 = vector.extract_strided_slice %2 {offsets = [0, 384], sizes = [8, 128], strides = [1, 1]} : vector<8x1024xf32> to vector<8x128xf32>
    %8 = vector.extract_strided_slice %2 {offsets = [0, 512], sizes = [8, 128], strides = [1, 1]} : vector<8x1024xf32> to vector<8x128xf32>
    %9 = vector.extract_strided_slice %2 {offsets = [0, 640], sizes = [8, 128], strides = [1, 1]} : vector<8x1024xf32> to vector<8x128xf32>
    %10 = vector.extract_strided_slice %2 {offsets = [0, 768], sizes = [8, 128], strides = [1, 1]} : vector<8x1024xf32> to vector<8x128xf32>
    %11 = vector.extract_strided_slice %2 {offsets = [0, 896], sizes = [8, 128], strides = [1, 1]} : vector<8x1024xf32> to vector<8x128xf32>
    %12 = tpu.iota {dimensions = array<i32: 0>} : vector<128x4xi32>
    %13 = tpu.iota {dimensions = array<i32: 1>} : vector<128x4xi32>
    %c32_i32 = arith.constant 32 : i32
    %14 = vector.broadcast %c32_i32 : i32 to vector<128x4xi32>
    %15 = arith.muli %13, %14 : vector<128x4xi32>
    %16 = arith.cmpi sge, %12, %15 : vector<128x4xi32>
    %c32_i32_5 = arith.constant 32 : i32
    %17 = vector.broadcast %c32_i32_5 : i32 to vector<128x4xi32>
    %18 = arith.muli %13, %17 : vector<128x4xi32>
    %c32_i32_6 = arith.constant 32 : i32
    %19 = vector.broadcast %c32_i32_6 : i32 to vector<128x4xi32>
    %20 = arith.addi %18, %19 : vector<128x4xi32>
    %21 = arith.cmpi slt, %12, %20 : vector<128x4xi32>
    %22 = arith.andi %16, %21 : vector<128x4xi1>
    %cst_7 = arith.constant 1.000000e+00 : f32
    %cst_8 = arith.constant 0.000000e+00 : f32
    %23 = vector.broadcast %cst_7 : f32 to vector<128x4xf32>
    %24 = vector.broadcast %cst_8 : f32 to vector<128x4xf32>
    %25 = arith.select %22, %23, %24 : vector<128x4xi1>, vector<128x4xf32>
    %26 = tpu.iota {dimensions = array<i32: 1>} : vector<4x128xi32>
    %27 = tpu.iota {dimensions = array<i32: 0>} : vector<4x128xi32>
    %c32_i32_9 = arith.constant 32 : i32
    %28 = vector.broadcast %c32_i32_9 : i32 to vector<4x128xi32>
    %29 = arith.muli %27, %28 : vector<4x128xi32>
    %30 = arith.cmpi sge, %26, %29 : vector<4x128xi32>
    %c32_i32_10 = arith.constant 32 : i32
    %31 = vector.broadcast %c32_i32_10 : i32 to vector<4x128xi32>
    %32 = arith.muli %27, %31 : vector<4x128xi32>
    %c32_i32_11 = arith.constant 32 : i32
    %33 = vector.broadcast %c32_i32_11 : i32 to vector<4x128xi32>
    %34 = arith.addi %32, %33 : vector<4x128xi32>
    %35 = arith.cmpi slt, %26, %34 : vector<4x128xi32>
    %36 = arith.andi %30, %35 : vector<4x128xi1>
    %cst_12 = arith.constant 1.000000e+00 : f32
    %cst_13 = arith.constant 0.000000e+00 : f32
    %37 = vector.broadcast %cst_12 : f32 to vector<4x128xf32>
    %38 = vector.broadcast %cst_13 : f32 to vector<4x128xf32>
    %39 = arith.select %36, %37, %38 : vector<4x128xi1>, vector<4x128xf32>
    %40 = arith.addf %4, %5 : vector<8x128xf32>
    %41 = arith.addf %40, %6 : vector<8x128xf32>
    %42 = arith.addf %41, %7 : vector<8x128xf32>
    %43 = arith.addf %42, %8 : vector<8x128xf32>
    %44 = arith.addf %43, %9 : vector<8x128xf32>
    %45 = arith.addf %44, %10 : vector<8x128xf32>
    %46 = arith.addf %45, %11 : vector<8x128xf32>
    %cst_14 = arith.constant 1.250000e-01 : f32
    %47 = vector.broadcast %cst_14 : f32 to vector<8x128xf32>
    %48 = arith.mulf %46, %47 : vector<8x128xf32>
    %49 = arith.mulf %48, %48 : vector<8x128xf32>
    %cst_15 = arith.constant dense<0.000000e+00> : vector<8x4xf32>
    %50 = tpu.matmul %49, %25, %cst_15 {dimension_numbers = #tpu.dot_dimension_numbers<[1], [0], [0], [1], [0, 0, 1, 1], [], []>} : vector<8x128xf32>, vector<128x4xf32>, vector<8x4xf32> -> vector<8x4xf32>
    %51 = math.rsqrt %50 : vector<8x4xf32>
    %52 = arith.mulf %50, %51 : vector<8x4xf32>
    %cst_16 = arith.constant 1.000000e+00 : f32
    %53 = vector.broadcast %cst_16 : f32 to vector<8x4xf32>
    %54 = arith.addf %50, %53 : vector<8x4xf32>
    %55 = tpu.reciprocal %54 {approx = true} : vector<8x4xf32> -> vector<8x4xf32>
    %56 = arith.mulf %52, %55 : vector<8x4xf32>
    %cst_17 = arith.constant dense<0.000000e+00> : vector<8x128xf32>
    %57 = tpu.matmul %56, %39, %cst_17 {dimension_numbers = #tpu.dot_dimension_numbers<[1], [0], [0], [1], [0, 0, 1, 1], [], []>} : vector<8x4xf32>, vector<4x128xf32>, vector<8x128xf32> -> vector<8x128xf32>
    %58 = arith.mulf %57, %48 : vector<8x128xf32>
    %cst_18 = arith.constant 0.000000e+00 : f32
    %59 = vector.broadcast %cst_18 : f32 to vector<8x4xf32>
    %cst_19 = arith.constant 0.000000e+00 : f32
    %60 = vector.broadcast %cst_19 : f32 to vector<8x4xf32>
    %cst_20 = arith.constant 0.000000e+00 : f32
    %61 = vector.broadcast %cst_20 : f32 to vector<8x4xf32>
    %cst_21 = arith.constant 0.000000e+00 : f32
    %62 = vector.broadcast %cst_21 : f32 to vector<8x4xf32>
    %cst_22 = arith.constant 0.000000e+00 : f32
    %63 = vector.broadcast %cst_22 : f32 to vector<8x4xf32>
    %cst_23 = arith.constant 0.000000e+00 : f32
    %64 = vector.broadcast %cst_23 : f32 to vector<8x4xf32>
    %cst_24 = arith.constant 0.000000e+00 : f32
    %65 = vector.broadcast %cst_24 : f32 to vector<8x4xf32>
    %cst_25 = arith.constant 0.000000e+00 : f32
    %66 = vector.broadcast %cst_25 : f32 to vector<8x4xf32>
    %67 = arith.mulf %4, %58 : vector<8x128xf32>
    %cst_26 = arith.constant dense<0.000000e+00> : vector<8x4xf32>
    %68 = tpu.matmul %67, %25, %cst_26 {dimension_numbers = #tpu.dot_dimension_numbers<[1], [0], [0], [1], [0, 0, 1, 1], [], []>} : vector<8x128xf32>, vector<128x4xf32>, vector<8x4xf32> -> vector<8x4xf32>
    %69 = arith.addf %59, %68 : vector<8x4xf32>
    %70 = arith.mulf %5, %58 : vector<8x128xf32>
    %cst_27 = arith.constant dense<0.000000e+00> : vector<8x4xf32>
    %71 = tpu.matmul %70, %25, %cst_27 {dimension_numbers = #tpu.dot_dimension_numbers<[1], [0], [0], [1], [0, 0, 1, 1], [], []>} : vector<8x128xf32>, vector<128x4xf32>, vector<8x4xf32> -> vector<8x4xf32>
    %72 = arith.addf %60, %71 : vector<8x4xf32>
    %73 = arith.mulf %6, %58 : vector<8x128xf32>
    %cst_28 = arith.constant dense<0.000000e+00> : vector<8x4xf32>
    %74 = tpu.matmul %73, %25, %cst_28 {dimension_numbers = #tpu.dot_dimension_numbers<[1], [0], [0], [1], [0, 0, 1, 1], [], []>} : vector<8x128xf32>, vector<128x4xf32>, vector<8x4xf32> -> vector<8x4xf32>
    %75 = arith.addf %61, %74 : vector<8x4xf32>
    %76 = arith.mulf %7, %58 : vector<8x128xf32>
    %cst_29 = arith.constant dense<0.000000e+00> : vector<8x4xf32>
    %77 = tpu.matmul %76, %25, %cst_29 {dimension_numbers = #tpu.dot_dimension_numbers<[1], [0], [0], [1], [0, 0, 1, 1], [], []>} : vector<8x128xf32>, vector<128x4xf32>, vector<8x4xf32> -> vector<8x4xf32>
    %78 = arith.addf %62, %77 : vector<8x4xf32>
    %79 = arith.mulf %8, %58 : vector<8x128xf32>
    %cst_30 = arith.constant dense<0.000000e+00> : vector<8x4xf32>
    %80 = tpu.matmul %79, %25, %cst_30 {dimension_numbers = #tpu.dot_dimension_numbers<[1], [0], [0], [1], [0, 0, 1, 1], [], []>} : vector<8x128xf32>, vector<128x4xf32>, vector<8x4xf32> -> vector<8x4xf32>
    %81 = arith.addf %63, %80 : vector<8x4xf32>
    %82 = arith.mulf %9, %58 : vector<8x128xf32>
    %cst_31 = arith.constant dense<0.000000e+00> : vector<8x4xf32>
    %83 = tpu.matmul %82, %25, %cst_31 {dimension_numbers = #tpu.dot_dimension_numbers<[1], [0], [0], [1], [0, 0, 1, 1], [], []>} : vector<8x128xf32>, vector<128x4xf32>, vector<8x4xf32> -> vector<8x4xf32>
    %84 = arith.addf %64, %83 : vector<8x4xf32>
    %85 = arith.mulf %10, %58 : vector<8x128xf32>
    %cst_32 = arith.constant dense<0.000000e+00> : vector<8x4xf32>
    %86 = tpu.matmul %85, %25, %cst_32 {dimension_numbers = #tpu.dot_dimension_numbers<[1], [0], [0], [1], [0, 0, 1, 1], [], []>} : vector<8x128xf32>, vector<128x4xf32>, vector<8x4xf32> -> vector<8x4xf32>
    %87 = arith.addf %65, %86 : vector<8x4xf32>
    %88 = arith.mulf %11, %58 : vector<8x128xf32>
    %cst_33 = arith.constant dense<0.000000e+00> : vector<8x4xf32>
    %89 = tpu.matmul %88, %25, %cst_33 {dimension_numbers = #tpu.dot_dimension_numbers<[1], [0], [0], [1], [0, 0, 1, 1], [], []>} : vector<8x128xf32>, vector<128x4xf32>, vector<8x4xf32> -> vector<8x4xf32>
    %90 = arith.addf %66, %89 : vector<8x4xf32>
    %91 = arith.maximumf %69, %72 : vector<8x4xf32>
    %92 = arith.maximumf %91, %75 : vector<8x4xf32>
    %93 = arith.maximumf %92, %78 : vector<8x4xf32>
    %94 = arith.maximumf %93, %81 : vector<8x4xf32>
    %95 = arith.maximumf %94, %84 : vector<8x4xf32>
    %96 = arith.maximumf %95, %87 : vector<8x4xf32>
    %97 = arith.maximumf %96, %90 : vector<8x4xf32>
    %98 = arith.subf %69, %97 : vector<8x4xf32>
    %99 = math.exp %98 : vector<8x4xf32>
    %100 = arith.subf %72, %97 : vector<8x4xf32>
    %101 = math.exp %100 : vector<8x4xf32>
    %102 = arith.subf %75, %97 : vector<8x4xf32>
    %103 = math.exp %102 : vector<8x4xf32>
    %104 = arith.subf %78, %97 : vector<8x4xf32>
    %105 = math.exp %104 : vector<8x4xf32>
    %106 = arith.subf %81, %97 : vector<8x4xf32>
    %107 = math.exp %106 : vector<8x4xf32>
    %108 = arith.subf %84, %97 : vector<8x4xf32>
    %109 = math.exp %108 : vector<8x4xf32>
    %110 = arith.subf %87, %97 : vector<8x4xf32>
    %111 = math.exp %110 : vector<8x4xf32>
    %112 = arith.subf %90, %97 : vector<8x4xf32>
    %113 = math.exp %112 : vector<8x4xf32>
    %114 = arith.addf %99, %101 : vector<8x4xf32>
    %115 = arith.addf %114, %103 : vector<8x4xf32>
    %116 = arith.addf %115, %105 : vector<8x4xf32>
    %117 = arith.addf %116, %107 : vector<8x4xf32>
    %118 = arith.addf %117, %109 : vector<8x4xf32>
    %119 = arith.addf %118, %111 : vector<8x4xf32>
    %120 = arith.addf %119, %113 : vector<8x4xf32>
    %121 = tpu.reciprocal %120 {approx = true} : vector<8x4xf32> -> vector<8x4xf32>
    %cst_34 = arith.constant 0.000000e+00 : f32
    %122 = vector.broadcast %cst_34 : f32 to vector<8x128xf32>
    %123 = arith.mulf %99, %121 : vector<8x4xf32>
    %cst_35 = arith.constant dense<0.000000e+00> : vector<8x128xf32>
    %124 = tpu.matmul %123, %39, %cst_35 {dimension_numbers = #tpu.dot_dimension_numbers<[1], [0], [0], [1], [0, 0, 1, 1], [], []>} : vector<8x4xf32>, vector<4x128xf32>, vector<8x128xf32> -> vector<8x128xf32>
    %125 = arith.mulf %124, %4 : vector<8x128xf32>
    %126 = arith.addf %122, %125 : vector<8x128xf32>
    %127 = arith.mulf %101, %121 : vector<8x4xf32>
    %cst_36 = arith.constant dense<0.000000e+00> : vector<8x128xf32>
    %128 = tpu.matmul %127, %39, %cst_36 {dimension_numbers = #tpu.dot_dimension_numbers<[1], [0], [0], [1], [0, 0, 1, 1], [], []>} : vector<8x4xf32>, vector<4x128xf32>, vector<8x128xf32> -> vector<8x128xf32>
    %129 = arith.mulf %128, %5 : vector<8x128xf32>
    %130 = arith.addf %126, %129 : vector<8x128xf32>
    %131 = arith.mulf %103, %121 : vector<8x4xf32>
    %cst_37 = arith.constant dense<0.000000e+00> : vector<8x128xf32>
    %132 = tpu.matmul %131, %39, %cst_37 {dimension_numbers = #tpu.dot_dimension_numbers<[1], [0], [0], [1], [0, 0, 1, 1], [], []>} : vector<8x4xf32>, vector<4x128xf32>, vector<8x128xf32> -> vector<8x128xf32>
    %133 = arith.mulf %132, %6 : vector<8x128xf32>
    %134 = arith.addf %130, %133 : vector<8x128xf32>
    %135 = arith.mulf %105, %121 : vector<8x4xf32>
    %cst_38 = arith.constant dense<0.000000e+00> : vector<8x128xf32>
    %136 = tpu.matmul %135, %39, %cst_38 {dimension_numbers = #tpu.dot_dimension_numbers<[1], [0], [0], [1], [0, 0, 1, 1], [], []>} : vector<8x4xf32>, vector<4x128xf32>, vector<8x128xf32> -> vector<8x128xf32>
    %137 = arith.mulf %136, %7 : vector<8x128xf32>
    %138 = arith.addf %134, %137 : vector<8x128xf32>
    %139 = arith.mulf %107, %121 : vector<8x4xf32>
    %cst_39 = arith.constant dense<0.000000e+00> : vector<8x128xf32>
    %140 = tpu.matmul %139, %39, %cst_39 {dimension_numbers = #tpu.dot_dimension_numbers<[1], [0], [0], [1], [0, 0, 1, 1], [], []>} : vector<8x4xf32>, vector<4x128xf32>, vector<8x128xf32> -> vector<8x128xf32>
    %141 = arith.mulf %140, %8 : vector<8x128xf32>
    %142 = arith.addf %138, %141 : vector<8x128xf32>
    %143 = arith.mulf %109, %121 : vector<8x4xf32>
    %cst_40 = arith.constant dense<0.000000e+00> : vector<8x128xf32>
    %144 = tpu.matmul %143, %39, %cst_40 {dimension_numbers = #tpu.dot_dimension_numbers<[1], [0], [0], [1], [0, 0, 1, 1], [], []>} : vector<8x4xf32>, vector<4x128xf32>, vector<8x128xf32> -> vector<8x128xf32>
    %145 = arith.mulf %144, %9 : vector<8x128xf32>
    %146 = arith.addf %142, %145 : vector<8x128xf32>
    %147 = arith.mulf %111, %121 : vector<8x4xf32>
    %cst_41 = arith.constant dense<0.000000e+00> : vector<8x128xf32>
    %148 = tpu.matmul %147, %39, %cst_41 {dimension_numbers = #tpu.dot_dimension_numbers<[1], [0], [0], [1], [0, 0, 1, 1], [], []>} : vector<8x4xf32>, vector<4x128xf32>, vector<8x128xf32> -> vector<8x128xf32>
    %149 = arith.mulf %148, %10 : vector<8x128xf32>
    %150 = arith.addf %146, %149 : vector<8x128xf32>
    %151 = arith.mulf %113, %121 : vector<8x4xf32>
    %cst_42 = arith.constant dense<0.000000e+00> : vector<8x128xf32>
    %152 = tpu.matmul %151, %39, %cst_42 {dimension_numbers = #tpu.dot_dimension_numbers<[1], [0], [0], [1], [0, 0, 1, 1], [], []>} : vector<8x4xf32>, vector<4x128xf32>, vector<8x128xf32> -> vector<8x128xf32>
    %153 = arith.mulf %152, %11 : vector<8x128xf32>
    %154 = arith.addf %150, %153 : vector<8x128xf32>
    %155 = arith.mulf %154, %154 : vector<8x128xf32>
    %cst_43 = arith.constant dense<0.000000e+00> : vector<8x4xf32>
    %156 = tpu.matmul %155, %25, %cst_43 {dimension_numbers = #tpu.dot_dimension_numbers<[1], [0], [0], [1], [0, 0, 1, 1], [], []>} : vector<8x128xf32>, vector<128x4xf32>, vector<8x4xf32> -> vector<8x4xf32>
    %157 = math.rsqrt %156 : vector<8x4xf32>
    %158 = arith.mulf %156, %157 : vector<8x4xf32>
    %cst_44 = arith.constant 1.000000e+00 : f32
    %159 = vector.broadcast %cst_44 : f32 to vector<8x4xf32>
    %160 = arith.addf %156, %159 : vector<8x4xf32>
    %161 = tpu.reciprocal %160 {approx = true} : vector<8x4xf32> -> vector<8x4xf32>
    %162 = arith.mulf %158, %161 : vector<8x4xf32>
    %cst_45 = arith.constant dense<0.000000e+00> : vector<8x128xf32>
    %163 = tpu.matmul %162, %39, %cst_45 {dimension_numbers = #tpu.dot_dimension_numbers<[1], [0], [0], [1], [0, 0, 1, 1], [], []>} : vector<8x4xf32>, vector<4x128xf32>, vector<8x128xf32> -> vector<8x128xf32>
    %164 = arith.mulf %163, %154 : vector<8x128xf32>
    %165 = arith.mulf %4, %164 : vector<8x128xf32>
    %cst_46 = arith.constant dense<0.000000e+00> : vector<8x4xf32>
    %166 = tpu.matmul %165, %25, %cst_46 {dimension_numbers = #tpu.dot_dimension_numbers<[1], [0], [0], [1], [0, 0, 1, 1], [], []>} : vector<8x128xf32>, vector<128x4xf32>, vector<8x4xf32> -> vector<8x4xf32>
    %167 = arith.addf %69, %166 : vector<8x4xf32>
    %168 = arith.mulf %5, %164 : vector<8x128xf32>
    %cst_47 = arith.constant dense<0.000000e+00> : vector<8x4xf32>
    %169 = tpu.matmul %168, %25, %cst_47 {dimension_numbers = #tpu.dot_dimension_numbers<[1], [0], [0], [1], [0, 0, 1, 1], [], []>} : vector<8x128xf32>, vector<128x4xf32>, vector<8x4xf32> -> vector<8x4xf32>
    %170 = arith.addf %72, %169 : vector<8x4xf32>
    %171 = arith.mulf %6, %164 : vector<8x128xf32>
    %cst_48 = arith.constant dense<0.000000e+00> : vector<8x4xf32>
    %172 = tpu.matmul %171, %25, %cst_48 {dimension_numbers = #tpu.dot_dimension_numbers<[1], [0], [0], [1], [0, 0, 1, 1], [], []>} : vector<8x128xf32>, vector<128x4xf32>, vector<8x4xf32> -> vector<8x4xf32>
    %173 = arith.addf %75, %172 : vector<8x4xf32>
    %174 = arith.mulf %7, %164 : vector<8x128xf32>
    %cst_49 = arith.constant dense<0.000000e+00> : vector<8x4xf32>
    %175 = tpu.matmul %174, %25, %cst_49 {dimension_numbers = #tpu.dot_dimension_numbers<[1], [0], [0], [1], [0, 0, 1, 1], [], []>} : vector<8x128xf32>, vector<128x4xf32>, vector<8x4xf32> -> vector<8x4xf32>
    %176 = arith.addf %78, %175 : vector<8x4xf32>
    %177 = arith.mulf %8, %164 : vector<8x128xf32>
    %cst_50 = arith.constant dense<0.000000e+00> : vector<8x4xf32>
    %178 = tpu.matmul %177, %25, %cst_50 {dimension_numbers = #tpu.dot_dimension_numbers<[1], [0], [0], [1], [0, 0, 1, 1], [], []>} : vector<8x128xf32>, vector<128x4xf32>, vector<8x4xf32> -> vector<8x4xf32>
    %179 = arith.addf %81, %178 : vector<8x4xf32>
    %180 = arith.mulf %9, %164 : vector<8x128xf32>
    %cst_51 = arith.constant dense<0.000000e+00> : vector<8x4xf32>
    %181 = tpu.matmul %180, %25, %cst_51 {dimension_numbers = #tpu.dot_dimension_numbers<[1], [0], [0], [1], [0, 0, 1, 1], [], []>} : vector<8x128xf32>, vector<128x4xf32>, vector<8x4xf32> -> vector<8x4xf32>
    %182 = arith.addf %84, %181 : vector<8x4xf32>
    %183 = arith.mulf %10, %164 : vector<8x128xf32>
    %cst_52 = arith.constant dense<0.000000e+00> : vector<8x4xf32>
    %184 = tpu.matmul %183, %25, %cst_52 {dimension_numbers = #tpu.dot_dimension_numbers<[1], [0], [0], [1], [0, 0, 1, 1], [], []>} : vector<8x128xf32>, vector<128x4xf32>, vector<8x4xf32> -> vector<8x4xf32>
    %185 = arith.addf %87, %184 : vector<8x4xf32>
    %186 = arith.mulf %11, %164 : vector<8x128xf32>
    %cst_53 = arith.constant dense<0.000000e+00> : vector<8x4xf32>
    %187 = tpu.matmul %186, %25, %cst_53 {dimension_numbers = #tpu.dot_dimension_numbers<[1], [0], [0], [1], [0, 0, 1, 1], [], []>} : vector<8x128xf32>, vector<128x4xf32>, vector<8x4xf32> -> vector<8x4xf32>
    %188 = arith.addf %90, %187 : vector<8x4xf32>
    %189 = arith.maximumf %167, %170 : vector<8x4xf32>
    %190 = arith.maximumf %189, %173 : vector<8x4xf32>
    %191 = arith.maximumf %190, %176 : vector<8x4xf32>
    %192 = arith.maximumf %191, %179 : vector<8x4xf32>
    %193 = arith.maximumf %192, %182 : vector<8x4xf32>
    %194 = arith.maximumf %193, %185 : vector<8x4xf32>
    %195 = arith.maximumf %194, %188 : vector<8x4xf32>
    %196 = arith.subf %167, %195 : vector<8x4xf32>
    %197 = math.exp %196 : vector<8x4xf32>
    %198 = arith.subf %170, %195 : vector<8x4xf32>
    %199 = math.exp %198 : vector<8x4xf32>
    %200 = arith.subf %173, %195 : vector<8x4xf32>
    %201 = math.exp %200 : vector<8x4xf32>
    %202 = arith.subf %176, %195 : vector<8x4xf32>
    %203 = math.exp %202 : vector<8x4xf32>
    %204 = arith.subf %179, %195 : vector<8x4xf32>
    %205 = math.exp %204 : vector<8x4xf32>
    %206 = arith.subf %182, %195 : vector<8x4xf32>
    %207 = math.exp %206 : vector<8x4xf32>
    %208 = arith.subf %185, %195 : vector<8x4xf32>
    %209 = math.exp %208 : vector<8x4xf32>
    %210 = arith.subf %188, %195 : vector<8x4xf32>
    %211 = math.exp %210 : vector<8x4xf32>
    %212 = arith.addf %197, %199 : vector<8x4xf32>
    %213 = arith.addf %212, %201 : vector<8x4xf32>
    %214 = arith.addf %213, %203 : vector<8x4xf32>
    %215 = arith.addf %214, %205 : vector<8x4xf32>
    %216 = arith.addf %215, %207 : vector<8x4xf32>
    %217 = arith.addf %216, %209 : vector<8x4xf32>
    %218 = arith.addf %217, %211 : vector<8x4xf32>
    %219 = tpu.reciprocal %218 {approx = true} : vector<8x4xf32> -> vector<8x4xf32>
    %cst_54 = arith.constant 0.000000e+00 : f32
    %220 = vector.broadcast %cst_54 : f32 to vector<8x128xf32>
    %221 = arith.mulf %197, %219 : vector<8x4xf32>
    %cst_55 = arith.constant dense<0.000000e+00> : vector<8x128xf32>
    %222 = tpu.matmul %221, %39, %cst_55 {dimension_numbers = #tpu.dot_dimension_numbers<[1], [0], [0], [1], [0, 0, 1, 1], [], []>} : vector<8x4xf32>, vector<4x128xf32>, vector<8x128xf32> -> vector<8x128xf32>
    %223 = arith.mulf %222, %4 : vector<8x128xf32>
    %224 = arith.addf %220, %223 : vector<8x128xf32>
    %225 = arith.mulf %199, %219 : vector<8x4xf32>
    %cst_56 = arith.constant dense<0.000000e+00> : vector<8x128xf32>
    %226 = tpu.matmul %225, %39, %cst_56 {dimension_numbers = #tpu.dot_dimension_numbers<[1], [0], [0], [1], [0, 0, 1, 1], [], []>} : vector<8x4xf32>, vector<4x128xf32>, vector<8x128xf32> -> vector<8x128xf32>
    %227 = arith.mulf %226, %5 : vector<8x128xf32>
    %228 = arith.addf %224, %227 : vector<8x128xf32>
    %229 = arith.mulf %201, %219 : vector<8x4xf32>
    %cst_57 = arith.constant dense<0.000000e+00> : vector<8x128xf32>
    %230 = tpu.matmul %229, %39, %cst_57 {dimension_numbers = #tpu.dot_dimension_numbers<[1], [0], [0], [1], [0, 0, 1, 1], [], []>} : vector<8x4xf32>, vector<4x128xf32>, vector<8x128xf32> -> vector<8x128xf32>
    %231 = arith.mulf %230, %6 : vector<8x128xf32>
    %232 = arith.addf %228, %231 : vector<8x128xf32>
    %233 = arith.mulf %203, %219 : vector<8x4xf32>
    %cst_58 = arith.constant dense<0.000000e+00> : vector<8x128xf32>
    %234 = tpu.matmul %233, %39, %cst_58 {dimension_numbers = #tpu.dot_dimension_numbers<[1], [0], [0], [1], [0, 0, 1, 1], [], []>} : vector<8x4xf32>, vector<4x128xf32>, vector<8x128xf32> -> vector<8x128xf32>
    %235 = arith.mulf %234, %7 : vector<8x128xf32>
    %236 = arith.addf %232, %235 : vector<8x128xf32>
    %237 = arith.mulf %205, %219 : vector<8x4xf32>
    %cst_59 = arith.constant dense<0.000000e+00> : vector<8x128xf32>
    %238 = tpu.matmul %237, %39, %cst_59 {dimension_numbers = #tpu.dot_dimension_numbers<[1], [0], [0], [1], [0, 0, 1, 1], [], []>} : vector<8x4xf32>, vector<4x128xf32>, vector<8x128xf32> -> vector<8x128xf32>
    %239 = arith.mulf %238, %8 : vector<8x128xf32>
    %240 = arith.addf %236, %239 : vector<8x128xf32>
    %241 = arith.mulf %207, %219 : vector<8x4xf32>
    %cst_60 = arith.constant dense<0.000000e+00> : vector<8x128xf32>
    %242 = tpu.matmul %241, %39, %cst_60 {dimension_numbers = #tpu.dot_dimension_numbers<[1], [0], [0], [1], [0, 0, 1, 1], [], []>} : vector<8x4xf32>, vector<4x128xf32>, vector<8x128xf32> -> vector<8x128xf32>
    %243 = arith.mulf %242, %9 : vector<8x128xf32>
    %244 = arith.addf %240, %243 : vector<8x128xf32>
    %245 = arith.mulf %209, %219 : vector<8x4xf32>
    %cst_61 = arith.constant dense<0.000000e+00> : vector<8x128xf32>
    %246 = tpu.matmul %245, %39, %cst_61 {dimension_numbers = #tpu.dot_dimension_numbers<[1], [0], [0], [1], [0, 0, 1, 1], [], []>} : vector<8x4xf32>, vector<4x128xf32>, vector<8x128xf32> -> vector<8x128xf32>
    %247 = arith.mulf %246, %10 : vector<8x128xf32>
    %248 = arith.addf %244, %247 : vector<8x128xf32>
    %249 = arith.mulf %211, %219 : vector<8x4xf32>
    %cst_62 = arith.constant dense<0.000000e+00> : vector<8x128xf32>
    %250 = tpu.matmul %249, %39, %cst_62 {dimension_numbers = #tpu.dot_dimension_numbers<[1], [0], [0], [1], [0, 0, 1, 1], [], []>} : vector<8x4xf32>, vector<4x128xf32>, vector<8x128xf32> -> vector<8x128xf32>
    %251 = arith.mulf %250, %11 : vector<8x128xf32>
    %252 = arith.addf %248, %251 : vector<8x128xf32>
    %253 = arith.mulf %252, %252 : vector<8x128xf32>
    %cst_63 = arith.constant dense<0.000000e+00> : vector<8x4xf32>
    %254 = tpu.matmul %253, %25, %cst_63 {dimension_numbers = #tpu.dot_dimension_numbers<[1], [0], [0], [1], [0, 0, 1, 1], [], []>} : vector<8x128xf32>, vector<128x4xf32>, vector<8x4xf32> -> vector<8x4xf32>
    %255 = math.rsqrt %254 : vector<8x4xf32>
    %256 = arith.mulf %254, %255 : vector<8x4xf32>
    %cst_64 = arith.constant 1.000000e+00 : f32
    %257 = vector.broadcast %cst_64 : f32 to vector<8x4xf32>
    %258 = arith.addf %254, %257 : vector<8x4xf32>
    %259 = tpu.reciprocal %258 {approx = true} : vector<8x4xf32> -> vector<8x4xf32>
    %260 = arith.mulf %256, %259 : vector<8x4xf32>
    %cst_65 = arith.constant dense<0.000000e+00> : vector<8x128xf32>
    %261 = tpu.matmul %260, %39, %cst_65 {dimension_numbers = #tpu.dot_dimension_numbers<[1], [0], [0], [1], [0, 0, 1, 1], [], []>} : vector<8x4xf32>, vector<4x128xf32>, vector<8x128xf32> -> vector<8x128xf32>
    %262 = arith.mulf %261, %252 : vector<8x128xf32>
    %c0_66 = arith.constant 0 : index
    %c0_67 = arith.constant 0 : index
    %263 = vector.load %arg3[%c0_66, %c0_67] : memref<8x128xf32, #tpu.memory_space<vmem>>, vector<8x128xf32>
    tpu.vector_store %arg3[%c0_66, %c0_67], %262 {strides = array<i32>} : memref<8x128xf32, #tpu.memory_space<vmem>>, vector<8x128xf32>,
    return
  }
  func.func @transform_0(%arg0: i32) -> (i32, i32) {
    %c0_i32 = arith.constant 0 : i32
    %c0_i32_0 = arith.constant 0 : i32
    return %arg0, %c0_i32 : i32, i32
  }
  func.func @transform_1(%arg0: i32) -> (i32, i32) {
    %c0_i32 = arith.constant 0 : i32
    %c0_i32_0 = arith.constant 0 : i32
    %c0_i32_1 = arith.constant 0 : i32
    return %c0_i32, %c0_i32_0 : i32, i32
  }
  func.func @transform_2(%arg0: i32) -> (i32, i32) {
    %c0_i32 = arith.constant 0 : i32
    %c0_i32_0 = arith.constant 0 : i32
    return %arg0, %c0_i32 : i32, i32
  }
  func.func @transform_3(%arg0: i32) -> (i32, i32) {
    %c0_i32 = arith.constant 0 : i32
    %c0_i32_0 = arith.constant 0 : i32
    return %arg0, %c0_i32 : i32, i32
  }
}

</mosaic_0001>

<llo_original>
// kernel: tpu_custom_call.1
$region0: #{tpu_custom_call.1}
  #allocation0 [shape = 'u32[]', space=smem, size = 0x4, offset = 0x4, fixed_abs, tag = 'smem constant byte address 0x4 - core index']
  #allocation1 [shape = 'u32[144,128]{1,0:T(1,128)}', space=vmem, size = 0x12000, scoped, tag = 'internal scratch']
  %s0 = inlined_call_operand.hbm [shape: f32[8,128], index: 0, kind: input, shape index: {}]
  %s1 = inlined_call_operand.hbm [shape: f32[128,1024], index: 1, kind: input, shape index: {}]
  %s2 = inlined_call_operand.hbm [shape: f32[8,128], index: 2, kind: output, shape index: {0}]
  %s3 = inlined_call_operand.hbm [shape: f32[8,1024], index: 3, kind: output, shape index: {1}]
  %4 = xla_tuple %s2, %s3
  %s5 = sld [smem:[#allocation0]]
  $region34: #{tpu_custom_call.1} parent=0
    _
  %s7 = ssub.s32 1, %s5
  %s8 = scalar_select 0, %s7, %s5
  $region1: #{tpu_custom_call.1} parent=0
    #allocation2 [shape = 'u8[4096]{0}', space=vmem, size = 0x1000, scoped, tag = 'input window, operand 0, single buffered']
    #allocation3 [shape = 's32[1]{0}', space=sflag, size = 0x4, scoped, tag = 'scoped memory for tpu_custom_call.1']
    #allocation4 [shape = 's32[1]{0}', space=sflag, size = 0x4, scoped, tag = 'scoped memory for tpu_custom_call.1']
    #allocation5 [shape = 'u8[524288]{0}', space=vmem, size = 0x80000, scoped, tag = 'input window, operand 1, single buffered']
    #allocation6 [shape = 's32[1]{0}', space=sflag, size = 0x4, scoped, tag = 'scoped memory for tpu_custom_call.1']
    #allocation7 [shape = 'u8[4096]{0}', space=vmem, size = 0x1000, scoped, tag = 'output window, operand 0, single buffered']
    #allocation8 [shape = 'u8[32768]{0}', space=vmem, size = 0x8000, scoped, tag = 'output window, operand 1, single buffered']
    #allocation9 [shape = 's32[1]{0}', space=sflag, size = 0x4, scoped, tag = 'scoped memory for tpu_custom_call.1']
    %9 = vsyncpa [#allocation3], 0
    %10 = vsyncpa [#allocation6], 0
    %11 = vsyncpa [#allocation4], 0
    %12 = vsyncpa [#allocation9], 0
    // Predicated region
    $region2: #{tpu_custom_call.1} parent=1 // pred_check
      _
    $region3: #{tpu_custom_call.1} parent=1 // pred_check_branch
      %14 = sbr.rel (0) target = $region5
    $region4: #{tpu_custom_call.1} parent=1 // pred_region
      %s16 = ssub.s32 128, 128
      %17 = vsyncadd [#allocation3], %s16
      %s19 = sshll.u32 [#allocation2], 4
      %s20 = int_to_ptr.vmem [resolvable:$true] %s19
      %22 = dma.hbm_to_vmem [thread:$0]  %s0, 128, %s20, [#allocation3]
    $region5: #{tpu_custom_call.1} parent=1 // pred_fallthru
      _
    // Predicated region
    $region6: #{tpu_custom_call.1} parent=1 // pred_check
      _
    $region7: #{tpu_custom_call.1} parent=1 // pred_check_branch
      %24 = sbr.rel (0) target = $region9
    $region8: #{tpu_custom_call.1} parent=1 // pred_region
      %s26 = ssub.s32 16384, 16384
      %27 = vsyncadd [#allocation6], %s26
      %s28 = sshll.u32 [#allocation5], 4
      %s29 = int_to_ptr.vmem [resolvable:$true] %s28
      %34 = dma.hbm_to_vmem [thread:$0]  %s1, 16384, %s29, [#allocation6], 1024, 1024, 64
    $region9: #{tpu_custom_call.1} parent=1 // pred_fallthru
      _
    // Predicated region
    $region10: #{tpu_custom_call.1} parent=1 // pred_check
      _
    $region11: #{tpu_custom_call.1} parent=1 // pred_check_branch
      %36 = sbr.rel (0) target = $region13
    $region12: #{tpu_custom_call.1} parent=1 // pred_region
      %37 = dma.done [#allocation3], 128
    $region13: #{tpu_custom_call.1} parent=1 // pred_fallthru
      _
    // Predicated region
    $region14: #{tpu_custom_call.1} parent=1 // pred_check
      _
    $region15: #{tpu_custom_call.1} parent=1 // pred_check_branch
      %39 = sbr.rel (0) target = $region17
    $region16: #{tpu_custom_call.1} parent=1 // pred_region
      %40 = dma.done [#allocation6], 16384
    $region17: #{tpu_custom_call.1} parent=1 // pred_fallthru
      _
    %v41 = vld [vmem:[#allocation2] sm:$0xff]
    %v42 = vld [vmem:[#allocation5] sm:$0xff]
    %v43 = vld [vmem:[#allocation5 + $0x8] sm:$0xff]
    %v44 = vld [vmem:[#allocation5 + $0x10] sm:$0xff]
    %v45 = vld [vmem:[#allocation5 + $0x18] sm:$0xff]
    %v46 = vld [vmem:[#allocation5 + $0x20] sm:$0xff]
    %v47 = vld [vmem:[#allocation5 + $0x28] sm:$0xff]
    %v48 = vld [vmem:[#allocation5 + $0x30] sm:$0xff]
    %v49 = vld [vmem:[#allocation5 + $0x38] sm:$0xff]
    %v50 = vld [vmem:[#allocation5 + $0x40] sm:$0xff]
    %v51 = vld [vmem:[#allocation5 + $0x48] sm:$0xff]
    %v52 = vld [vmem:[#allocation5 + $0x50] sm:$0xff]
    %v53 = vld [vmem:[#allocation5 + $0x58] sm:$0xff]
    %v54 = vld [vmem:[#allocation5 + $0x60] sm:$0xff]
    %v55 = vld [vmem:[#allocation5 + $0x68] sm:$0xff]
    %v56 = vld [vmem:[#allocation5 + $0x70] sm:$0xff]
    %v57 = vld [vmem:[#allocation5 + $0x78] sm:$0xff]
    %v58 = vld [vmem:[#allocation5 + $0x80] sm:$0xff]
    %v59 = vld [vmem:[#allocation5 + $0x88] sm:$0xff]
    %v60 = vld [vmem:[#allocation5 + $0x90] sm:$0xff]
    %v61 = vld [vmem:[#allocation5 + $0x98] sm:$0xff]
    %v62 = vld [vmem:[#allocation5 + $0xa0] sm:$0xff]
    %v63 = vld [vmem:[#allocation5 + $0xa8] sm:$0xff]
    %v64 = vld [vmem:[#allocation5 + $0xb0] sm:$0xff]
    %v65 = vld [vmem:[#allocation5 + $0xb8] sm:$0xff]
    %v66 = vld [vmem:[#allocation5 + $0xc0] sm:$0xff]
    %v67 = vld [vmem:[#allocation5 + $0xc8] sm:$0xff]
    %v68 = vld [vmem:[#allocation5 + $0xd0] sm:$0xff]
    %v69 = vld [vmem:[#allocation5 + $0xd8] sm:$0xff]
    %v70 = vld [vmem:[#allocation5 + $0xe0] sm:$0xff]
    %v71 = vld [vmem:[#allocation5 + $0xe8] sm:$0xff]
    %v72 = vld [vmem:[#allocation5 + $0xf0] sm:$0xff]
    %v73 = vld [vmem:[#allocation5 + $0xf8] sm:$0xff]
    %v74 = vld [vmem:[#allocation5 + $0x100] sm:$0xff]
    %v75 = vld [vmem:[#allocation5 + $0x108] sm:$0xff]
    %v76 = vld [vmem:[#allocation5 + $0x110] sm:$0xff]
    %v77 = vld [vmem:[#allocation5 + $0x118] sm:$0xff]
    %v78 = vld [vmem:[#allocation5 + $0x120] sm:$0xff]
    %v79 = vld [vmem:[#allocation5 + $0x128] sm:$0xff]
    %v80 = vld [vmem:[#allocation5 + $0x130] sm:$0xff]
    %v81 = vld [vmem:[#allocation5 + $0x138] sm:$0xff]
    %v82 = vld [vmem:[#allocation5 + $0x140] sm:$0xff]
    %v83 = vld [vmem:[#allocation5 + $0x148] sm:$0xff]
    %v84 = vld [vmem:[#allocation5 + $0x150] sm:$0xff]
    %v85 = vld [vmem:[#allocation5 + $0x158] sm:$0xff]
    %v86 = vld [vmem:[#allocation5 + $0x160] sm:$0xff]
    %v87 = vld [vmem:[#allocation5 + $0x168] sm:$0xff]
    %v88 = vld [vmem:[#allocation5 + $0x170] sm:$0xff]
    %v89 = vld [vmem:[#allocation5 + $0x178] sm:$0xff]
    %v90 = vld [vmem:[#allocation5 + $0x180] sm:$0xff]
    %v91 = vld [vmem:[#allocation5 + $0x188] sm:$0xff]
    %v92 = vld [vmem:[#allocation5 + $0x190] sm:$0xff]
    %v93 = vld [vmem:[#allocation5 + $0x198] sm:$0xff]
    %v94 = vld [vmem:[#allocation5 + $0x1a0] sm:$0xff]
    %v95 = vld [vmem:[#allocation5 + $0x1a8] sm:$0xff]
    %v96 = vld [vmem:[#allocation5 + $0x1b0] sm:$0xff]
    %v97 = vld [vmem:[#allocation5 + $0x1b8] sm:$0xff]
    %v98 = vld [vmem:[#allocation5 + $0x1c0] sm:$0xff]
    %v99 = vld [vmem:[#allocation5 + $0x1c8] sm:$0xff]
    %v100 = vld [vmem:[#allocation5 + $0x1d0] sm:$0xff]
    %v101 = vld [vmem:[#allocation5 + $0x1d8] sm:$0xff]
    %v102 = vld [vmem:[#allocation5 + $0x1e0] sm:$0xff]
    %v103 = vld [vmem:[#allocation5 + $0x1e8] sm:$0xff]
    %v104 = vld [vmem:[#allocation5 + $0x1f0] sm:$0xff]
    %v105 = vld [vmem:[#allocation5 + $0x1f8] sm:$0xff]
    %v106 = vld [vmem:[#allocation5 + $0x200] sm:$0xff]
    %v107 = vld [vmem:[#allocation5 + $0x208] sm:$0xff]
    %v108 = vld [vmem:[#allocation5 + $0x210] sm:$0xff]
    %v109 = vld [vmem:[#allocation5 + $0x218] sm:$0xff]
    %v110 = vld [vmem:[#allocation5 + $0x220] sm:$0xff]
    %v111 = vld [vmem:[#allocation5 + $0x228] sm:$0xff]
    %v112 = vld [vmem:[#allocation5 + $0x230] sm:$0xff]
    %v113 = vld [vmem:[#allocation5 + $0x238] sm:$0xff]
    %v114 = vld [vmem:[#allocation5 + $0x240] sm:$0xff]
    %v115 = vld [vmem:[#allocation5 + $0x248] sm:$0xff]
    %v116 = vld [vmem:[#allocation5 + $0x250] sm:$0xff]
    %v117 = vld [vmem:[#allocation5 + $0x258] sm:$0xff]
    %v118 = vld [vmem:[#allocation5 + $0x260] sm:$0xff]
    %v119 = vld [vmem:[#allocation5 + $0x268] sm:$0xff]
    %v120 = vld [vmem:[#allocation5 + $0x270] sm:$0xff]
    %v121 = vld [vmem:[#allocation5 + $0x278] sm:$0xff]
    %v122 = vld [vmem:[#allocation5 + $0x280] sm:$0xff]
    %v123 = vld [vmem:[#allocation5 + $0x288] sm:$0xff]
    %v124 = vld [vmem:[#allocation5 + $0x290] sm:$0xff]
    %v125 = vld [vmem:[#allocation5 + $0x298] sm:$0xff]
    %v126 = vld [vmem:[#allocation5 + $0x2a0] sm:$0xff]
    %v127 = vld [vmem:[#allocation5 + $0x2a8] sm:$0xff]
    %v128 = vld [vmem:[#allocation5 + $0x2b0] sm:$0xff]
    %v129 = vld [vmem:[#allocation5 + $0x2b8] sm:$0xff]
    %v130 = vld [vmem:[#allocation5 + $0x2c0] sm:$0xff]
    %v131 = vld [vmem:[#allocation5 + $0x2c8] sm:$0xff]
    %v132 = vld [vmem:[#allocation5 + $0x2d0] sm:$0xff]
    %v133 = vld [vmem:[#allocation5 + $0x2d8] sm:$0xff]
    %v134 = vld [vmem:[#allocation5 + $0x2e0] sm:$0xff]
    %v135 = vld [vmem:[#allocation5 + $0x2e8] sm:$0xff]
    %v136 = vld [vmem:[#allocation5 + $0x2f0] sm:$0xff]
    %v137 = vld [vmem:[#allocation5 + $0x2f8] sm:$0xff]
    %v138 = vld [vmem:[#allocation5 + $0x300] sm:$0xff]
    %v139 = vld [vmem:[#allocation5 + $0x308] sm:$0xff]
    %v140 = vld [vmem:[#allocation5 + $0x310] sm:$0xff]
    %v141 = vld [vmem:[#allocation5 + $0x318] sm:$0xff]
    %v142 = vld [vmem:[#allocation5 + $0x320] sm:$0xff]
    %v143 = vld [vmem:[#allocation5 + $0x328] sm:$0xff]
    %v144 = vld [vmem:[#allocation5 + $0x330] sm:$0xff]
    %v145 = vld [vmem:[#allocation5 + $0x338] sm:$0xff]
    %v146 = vld [vmem:[#allocation5 + $0x340] sm:$0xff]
    %v147 = vld [vmem:[#allocation5 + $0x348] sm:$0xff]
    %v148 = vld [vmem:[#allocation5 + $0x350] sm:$0xff]
    %v149 = vld [vmem:[#allocation5 + $0x358] sm:$0xff]
    %v150 = vld [vmem:[#allocation5 + $0x360] sm:$0xff]
    %v151 = vld [vmem:[#allocation5 + $0x368] sm:$0xff]
    %v152 = vld [vmem:[#allocation5 + $0x370] sm:$0xff]
    %v153 = vld [vmem:[#allocation5 + $0x378] sm:$0xff]
    %v154 = vld [vmem:[#allocation5 + $0x380] sm:$0xff]
    %v155 = vld [vmem:[#allocation5 + $0x388] sm:$0xff]
    %v156 = vld [vmem:[#allocation5 + $0x390] sm:$0xff]
    %v157 = vld [vmem:[#allocation5 + $0x398] sm:$0xff]
    %v158 = vld [vmem:[#allocation5 + $0x3a0] sm:$0xff]
    %v159 = vld [vmem:[#allocation5 + $0x3a8] sm:$0xff]
    %v160 = vld [vmem:[#allocation5 + $0x3b0] sm:$0xff]
    %v161 = vld [vmem:[#allocation5 + $0x3b8] sm:$0xff]
    %v162 = vld [vmem:[#allocation5 + $0x3c0] sm:$0xff]
    %v163 = vld [vmem:[#allocation5 + $0x3c8] sm:$0xff]
    %v164 = vld [vmem:[#allocation5 + $0x3d0] sm:$0xff]
    %v165 = vld [vmem:[#allocation5 + $0x3d8] sm:$0xff]
    %v166 = vld [vmem:[#allocation5 + $0x3e0] sm:$0xff]
    %v167 = vld [vmem:[#allocation5 + $0x3e8] sm:$0xff]
    %v168 = vld [vmem:[#allocation5 + $0x3f0] sm:$0xff]
    %v169 = vld [vmem:[#allocation5 + $0x3f8] sm:$0xff]
    %170 = vmatprep.subr.mxu0 %v43
    %171 = vmatpush1.msra.mxu0 %v42
    %172 = vmatprep.subr.mxu0 %v51
    %173 = vmatpush1.msra.mxu0 %v50
    %174 = vmatprep.subr.mxu0 %v59
    %175 = vmatpush1.msra.mxu0 %v58
    %176 = vmatprep.subr.mxu0 %v67
    %177 = vmatpush1.msra.mxu0 %v66
    %178 = vmatprep.subr.mxu0 %v75
    %179 = vmatpush1.msra.mxu0 %v74
    %180 = vmatprep.subr.mxu0 %v83
    %181 = vmatpush1.msra.mxu0 %v82
    %182 = vmatprep.subr.mxu0 %v91
    %183 = vmatpush1.msra.mxu0 %v90
    %184 = vmatprep.subr.mxu0 %v99
    %185 = vmatpush1.msra.mxu0 %v98
    %186 = vmatprep.subr.mxu0 %v107
    %187 = vmatpush1.msra.mxu0 %v106
    %188 = vmatprep.subr.mxu0 %v115
    %189 = vmatpush1.msra.mxu0 %v114
    %190 = vmatprep.subr.mxu0 %v123
    %191 = vmatpush1.msra.mxu0 %v122
    %192 = vmatprep.subr.mxu0 %v131
    %193 = vmatpush1.msra.mxu0 %v130
    %194 = vmatprep.subr.mxu0 %v139
    %195 = vmatpush1.msra.mxu0 %v138
    %196 = vmatprep.subr.mxu0 %v147
    %197 = vmatpush1.msra.mxu0 %v146
    %198 = vmatprep.subr.mxu0 %v155
    %199 = vmatpush1.msra.mxu0 %v154
    %200 = vmatprep.subr.mxu0 %v163
    %201 = vmatpush1.msra.mxu0 %v162
    %202 = vmatprep.subr.mxu0 0.0
    %203 = vmatpush1.msra.mxu0 0.0
    %204 = vmatprep.subr.mxu0 0.0
    %205 = vmatpush1.msra.mxu0 0.0
    %206 = vmatprep.subr.mxu0 0.0
    %207 = vmatpush1.msra.mxu0 0.0
    %208 = vmatprep.subr.mxu0 0.0
    %209 = vmatpush1.msra.mxu0 0.0
    %210 = vmatprep.subr.mxu0 0.0
    %211 = vmatpush1.msra.mxu0 0.0
    %212 = vmatprep.subr.mxu0 0.0
    %213 = vmatpush1.msra.mxu0 0.0
    %214 = vmatprep.subr.mxu0 0.0
    %215 = vmatpush1.msra.mxu0 0.0
    %216 = vmatprep.subr.mxu0 0.0
    %217 = vmatpush1.msra.mxu0 0.0
    %218 = vmatprep.subr.mxu0 0.0
    %219 = vmatpush1.msra.mxu0 0.0
    %220 = vmatprep.subr.mxu0 0.0
    %221 = vmatpush1.msra.mxu0 0.0
    %222 = vmatprep.subr.mxu0 0.0
    %223 = vmatpush1.msra.mxu0 0.0
    %224 = vmatprep.subr.mxu0 0.0
    %225 = vmatpush1.msra.mxu0 0.0
    %226 = vmatprep.subr.mxu0 0.0
    %227 = vmatpush1.msra.mxu0 0.0
    %228 = vmatprep.subr.mxu0 0.0
    %229 = vmatpush1.msra.mxu0 0.0
    %230 = vmatprep.subr.mxu0 0.0
    %231 = vmatpush1.msra.mxu0 0.0
    %232 = vmatprep.subr.mxu0 0.0
    %233 = vmatpush1.msra.mxu0 0.0
    %234 = vmatprep.mubr.f32.mxu0 0.0
    %235 = vmatmul.mubr.f32.gmra.mrb[0].mxu0 %v41
    %v236 = vpop.f32.mrb[0].mxu0
    %v237 = vadd.f32 0.0, %v236
    %v238 = vpop.f32.mrb[0].mxu0
    %v239 = vadd.f32 0.0, %v238
    %240 = vdwg.mxu0
    %241 = vmatprep.subr.mxu0 %v45
    %242 = vmatpush1.msra.mxu0 %v44
    %243 = vmatprep.subr.mxu0 %v53
    %244 = vmatpush1.msra.mxu0 %v52
    %245 = vmatprep.subr.mxu0 %v61
    %246 = vmatpush1.msra.mxu0 %v60
    %247 = vmatprep.subr.mxu0 %v69
    %248 = vmatpush1.msra.mxu0 %v68
    %249 = vmatprep.subr.mxu0 %v77
    %250 = vmatpush1.msra.mxu0 %v76
    %251 = vmatprep.subr.mxu0 %v85
    %252 = vmatpush1.msra.mxu0 %v84
    %253 = vmatprep.subr.mxu0 %v93
    %254 = vmatpush1.msra.mxu0 %v92
    %255 = vmatprep.subr.mxu0 %v101
    %256 = vmatpush1.msra.mxu0 %v100
    %257 = vmatprep.subr.mxu0 %v109
    %258 = vmatpush1.msra.mxu0 %v108
    %259 = vmatprep.subr.mxu0 %v117
    %260 = vmatpush1.msra.mxu0 %v116
    %261 = vmatprep.subr.mxu0 %v125
    %262 = vmatpush1.msra.mxu0 %v124
    %263 = vmatprep.subr.mxu0 %v133
    %264 = vmatpush1.msra.mxu0 %v132
    %265 = vmatprep.subr.mxu0 %v141
    %266 = vmatpush1.msra.mxu0 %v140
    %267 = vmatprep.subr.mxu0 %v149
    %268 = vmatpush1.msra.mxu0 %v148
    %269 = vmatprep.subr.mxu0 %v157
    %270 = vmatpush1.msra.mxu0 %v156
    %271 = vmatprep.subr.mxu0 %v165
    %272 = vmatpush1.msra.mxu0 %v164
    %273 = vmatprep.subr.mxu0 0.0
    %274 = vmatpush1.msra.mxu0 0.0
    %275 = vmatprep.subr.mxu0 0.0
    %276 = vmatpush1.msra.mxu0 0.0
    %277 = vmatprep.subr.mxu0 0.0
    %278 = vmatpush1.msra.mxu0 0.0
    %279 = vmatprep.subr.mxu0 0.0
    %280 = vmatpush1.msra.mxu0 0.0
    %281 = vmatprep.subr.mxu0 0.0
    %282 = vmatpush1.msra.mxu0 0.0
    %283 = vmatprep.subr.mxu0 0.0
    %284 = vmatpush1.msra.mxu0 0.0
    %285 = vmatprep.subr.mxu0 0.0
    %286 = vmatpush1.msra.mxu0 0.0
    %287 = vmatprep.subr.mxu0 0.0
    %288 = vmatpush1.msra.mxu0 0.0
    %289 = vmatprep.subr.mxu0 0.0
    %290 = vmatpush1.msra.mxu0 0.0
    %291 = vmatprep.subr.mxu0 0.0
    %292 = vmatpush1.msra.mxu0 0.0
    %293 = vmatprep.subr.mxu0 0.0
    %294 = vmatpush1.msra.mxu0 0.0
    %295 = vmatprep.subr.mxu0 0.0
    %296 = vmatpush1.msra.mxu0 0.0
    %297 = vmatprep.subr.mxu0 0.0
    %298 = vmatpush1.msra.mxu0 0.0
    %299 = vmatprep.subr.mxu0 0.0
    %300 = vmatpush1.msra.mxu0 0.0
    %301 = vmatprep.subr.mxu0 0.0
    %302 = vmatpush1.msra.mxu0 0.0
    %303 = vmatprep.subr.mxu0 0.0
    %304 = vmatpush1.msra.mxu0 0.0
    %305 = vmatprep.mubr.f32.mxu0 0.0
    %306 = vmatmul.mubr.f32.gmra.mrb[0].mxu0 %v41
    %v307 = vpop.f32.mrb[0].mxu0
    %v308 = vadd.f32 0.0, %v307
    %v309 = vpop.f32.mrb[0].mxu0
    %v310 = vadd.f32 0.0, %v309
    %311 = vdwg.mxu0
    %312 = vmatprep.subr.mxu0 %v47
    %313 = vmatpush1.msra.mxu0 %v46
    %314 = vmatprep.subr.mxu0 %v55
    %315 = vmatpush1.msra.mxu0 %v54
    %316 = vmatprep.subr.mxu0 %v63
    %317 = vmatpush1.msra.mxu0 %v62
    %318 = vmatprep.subr.mxu0 %v71
    %319 = vmatpush1.msra.mxu0 %v70
    %320 = vmatprep.subr.mxu0 %v79
    %321 = vmatpush1.msra.mxu0 %v78
    %322 = vmatprep.subr.mxu0 %v87
    %323 = vmatpush1.msra.mxu0 %v86
    %324 = vmatprep.subr.mxu0 %v95
    %325 = vmatpush1.msra.mxu0 %v94
    %326 = vmatprep.subr.mxu0 %v103
    %327 = vmatpush1.msra.mxu0 %v102
    %328 = vmatprep.subr.mxu0 %v111
    %329 = vmatpush1.msra.mxu0 %v110
    %330 = vmatprep.subr.mxu0 %v119
    %331 = vmatpush1.msra.mxu0 %v118
    %332 = vmatprep.subr.mxu0 %v127
    %333 = vmatpush1.msra.mxu0 %v126
    %334 = vmatprep.subr.mxu0 %v135
    %335 = vmatpush1.msra.mxu0 %v134
    %336 = vmatprep.subr.mxu0 %v143
    %337 = vmatpush1.msra.mxu0 %v142
    %338 = vmatprep.subr.mxu0 %v151
    %339 = vmatpush1.msra.mxu0 %v150
    %340 = vmatprep.subr.mxu0 %v159
    %341 = vmatpush1.msra.mxu0 %v158
    %342 = vmatprep.subr.mxu0 %v167
    %343 = vmatpush1.msra.mxu0 %v166
    %344 = vmatprep.subr.mxu0 0.0
    %345 = vmatpush1.msra.mxu0 0.0
    %346 = vmatprep.subr.mxu0 0.0
    %347 = vmatpush1.msra.mxu0 0.0
    %348 = vmatprep.subr.mxu0 0.0
    %349 = vmatpush1.msra.mxu0 0.0
    %350 = vmatprep.subr.mxu0 0.0
    %351 = vmatpush1.msra.mxu0 0.0
    %352 = vmatprep.subr.mxu0 0.0
    %353 = vmatpush1.msra.mxu0 0.0
    %354 = vmatprep.subr.mxu0 0.0
    %355 = vmatpush1.msra.mxu0 0.0
    %356 = vmatprep.subr.mxu0 0.0
    %357 = vmatpush1.msra.mxu0 0.0
    %358 = vmatprep.subr.mxu0 0.0
    %359 = vmatpush1.msra.mxu0 0.0
    %360 = vmatprep.subr.mxu0 0.0
    %361 = vmatpush1.msra.mxu0 0.0
    %362 = vmatprep.subr.mxu0 0.0
    %363 = vmatpush1.msra.mxu0 0.0
    %364 = vmatprep.subr.mxu0 0.0
    %365 = vmatpush1.msra.mxu0 0.0
    %366 = vmatprep.subr.mxu0 0.0
    %367 = vmatpush1.msra.mxu0 0.0
    %368 = vmatprep.subr.mxu0 0.0
    %369 = vmatpush1.msra.mxu0 0.0
    %370 = vmatprep.subr.mxu0 0.0
    %371 = vmatpush1.msra.mxu0 0.0
    %372 = vmatprep.subr.mxu0 0.0
    %373 = vmatpush1.msra.mxu0 0.0
    %374 = vmatprep.subr.mxu0 0.0
    %375 = vmatpush1.msra.mxu0 0.0
    %376 = vmatprep.mubr.f32.mxu0 0.0
    %377 = vmatmul.mubr.f32.gmra.mrb[0].mxu0 %v41
    %v378 = vpop.f32.mrb[0].mxu0
    %v379 = vadd.f32 0.0, %v378
    %v380 = vpop.f32.mrb[0].mxu0
    %v381 = vadd.f32 0.0, %v380
    %382 = vdwg.mxu0
    %383 = vmatprep.subr.mxu0 %v49
    %384 = vmatpush1.msra.mxu0 %v48
    %385 = vmatprep.subr.mxu0 %v57
    %386 = vmatpush1.msra.mxu0 %v56
    %387 = vmatprep.subr.mxu0 %v65
    %388 = vmatpush1.msra.mxu0 %v64
    %389 = vmatprep.subr.mxu0 %v73
    %390 = vmatpush1.msra.mxu0 %v72
    %391 = vmatprep.subr.mxu0 %v81
    %392 = vmatpush1.msra.mxu0 %v80
    %393 = vmatprep.subr.mxu0 %v89
    %394 = vmatpush1.msra.mxu0 %v88
    %395 = vmatprep.subr.mxu0 %v97
    %396 = vmatpush1.msra.mxu0 %v96
    %397 = vmatprep.subr.mxu0 %v105
    %398 = vmatpush1.msra.mxu0 %v104
    %399 = vmatprep.subr.mxu0 %v113
    %400 = vmatpush1.msra.mxu0 %v112
    %401 = vmatprep.subr.mxu0 %v121
    %402 = vmatpush1.msra.mxu0 %v120
    %403 = vmatprep.subr.mxu0 %v129
    %404 = vmatpush1.msra.mxu0 %v128
    %405 = vmatprep.subr.mxu0 %v137
    %406 = vmatpush1.msra.mxu0 %v136
    %407 = vmatprep.subr.mxu0 %v145
    %408 = vmatpush1.msra.mxu0 %v144
    %409 = vmatprep.subr.mxu0 %v153
    %410 = vmatpush1.msra.mxu0 %v152
    %411 = vmatprep.subr.mxu0 %v161
    %412 = vmatpush1.msra.mxu0 %v160
    %413 = vmatprep.subr.mxu0 %v169
    %414 = vmatpush1.msra.mxu0 %v168
    %415 = vmatprep.subr.mxu0 0.0
    %416 = vmatpush1.msra.mxu0 0.0
    %417 = vmatprep.subr.mxu0 0.0
    %418 = vmatpush1.msra.mxu0 0.0
    %419 = vmatprep.subr.mxu0 0.0
    %420 = vmatpush1.msra.mxu0 0.0
    %421 = vmatprep.subr.mxu0 0.0
    %422 = vmatpush1.msra.mxu0 0.0
    %423 = vmatprep.subr.mxu0 0.0
    %424 = vmatpush1.msra.mxu0 0.0
    %425 = vmatprep.subr.mxu0 0.0
    %426 = vmatpush1.msra.mxu0 0.0
    %427 = vmatprep.subr.mxu0 0.0
    %428 = vmatpush1.msra.mxu0 0.0
    %429 = vmatprep.subr.mxu0 0.0
    %430 = vmatpush1.msra.mxu0 0.0
    %431 = vmatprep.subr.mxu0 0.0
    %432 = vmatpush1.msra.mxu0 0.0
    %433 = vmatprep.subr.mxu0 0.0
    %434 = vmatpush1.msra.mxu0 0.0
    %435 = vmatprep.subr.mxu0 0.0
    %436 = vmatpush1.msra.mxu0 0.0
    %437 = vmatprep.subr.mxu0 0.0
    %438 = vmatpush1.msra.mxu0 0.0
    %439 = vmatprep.subr.mxu0 0.0
    %440 = vmatpush1.msra.mxu0 0.0
    %441 = vmatprep.subr.mxu0 0.0
    %442 = vmatpush1.msra.mxu0 0.0
    %443 = vmatprep.subr.mxu0 0.0
    %444 = vmatpush1.msra.mxu0 0.0
    %445 = vmatprep.subr.mxu0 0.0
    %446 = vmatpush1.msra.mxu0 0.0
    %447 = vmatprep.mubr.f32.mxu0 0.0
    %448 = vmatmul.mubr.f32.gmra.mrb[0].mxu0 %v41
    %v449 = vpop.f32.mrb[0].mxu0
    %v450 = vadd.f32 0.0, %v449
    %v451 = vpop.f32.mrb[0].mxu0
    %v452 = vadd.f32 0.0, %v451
    %453 = vdwg.mxu0
    %454 = vst [vmem:[#allocation8] sm:$0xff] %v237
    %455 = vst [vmem:[#allocation8 + $0x8] sm:$0xff] %v239
    %456 = vst [vmem:[#allocation8 + $0x10] sm:$0xff] %v308
    %457 = vst [vmem:[#allocation8 + $0x18] sm:$0xff] %v310
    %458 = vst [vmem:[#allocation8 + $0x20] sm:$0xff] %v379
    %459 = vst [vmem:[#allocation8 + $0x28] sm:$0xff] %v381
    %460 = vst [vmem:[#allocation8 + $0x30] sm:$0xff] %v450
    %461 = vst [vmem:[#allocation8 + $0x38] sm:$0xff] %v452
    %v462 = vlaneseq
    %v463 = vshrl.u32 %v462, 7
    %v464 = vadd.s32 %v463, 8
    %v465 = vadd.s32 %v463, 16
    %v466 = vadd.s32 %v463, 24
    %v467 = vadd.s32 %v463, 32
    %v468 = vadd.s32 %v463, 40
    %v469 = vadd.s32 %v463, 48
    %v470 = vadd.s32 %v463, 56
    %v471 = vadd.s32 %v463, 64
    %v472 = vadd.s32 %v463, 72
    %v473 = vadd.s32 %v463, 80
    %v474 = vadd.s32 %v463, 88
    %v475 = vadd.s32 %v463, 96
    %v476 = vadd.s32 %v463, 104
    %v477 = vadd.s32 %v463, 112
    %v478 = vadd.s32 %v463, 120
    %v479 = vlaneseq
    %v480 = vand.u32 %v479, 127
    %v481 = vmul.u32 %v480, 32
    %vm482 = vcmp.ge.s32.totalorder %v463, %v481
    %vm483 = vcmp.ge.s32.totalorder %v464, %v481
    %vm484 = vcmp.ge.s32.totalorder %v465, %v481
    %vm485 = vcmp.ge.s32.totalorder %v466, %v481
    %vm486 = vcmp.ge.s32.totalorder %v467, %v481
    %vm487 = vcmp.ge.s32.totalorder %v468, %v481
    %vm488 = vcmp.ge.s32.totalorder %v469, %v481
    %vm489 = vcmp.ge.s32.totalorder %v470, %v481
    %vm490 = vcmp.ge.s32.totalorder %v471, %v481
    %vm491 = vcmp.ge.s32.totalorder %v472, %v481
    %vm492 = vcmp.ge.s32.totalorder %v473, %v481
    %vm493 = vcmp.ge.s32.totalorder %v474, %v481
    %vm494 = vcmp.ge.s32.totalorder %v475, %v481
    %vm495 = vcmp.ge.s32.totalorder %v476, %v481
    %vm496 = vcmp.ge.s32.totalorder %v477, %v481
    %vm497 = vcmp.ge.s32.totalorder %v478, %v481
    %v498 = vadd.s32 %v481, 32
    %vm499 = vcmp.lt.s32.totalorder %v463, %v498
    %vm500 = vcmp.lt.s32.totalorder %v464, %v498
    %vm501 = vcmp.lt.s32.totalorder %v465, %v498
    %vm502 = vcmp.lt.s32.totalorder %v466, %v498
    %vm503 = vcmp.lt.s32.totalorder %v467, %v498
    %vm504 = vcmp.lt.s32.totalorder %v468, %v498
    %vm505 = vcmp.lt.s32.totalorder %v469, %v498
    %vm506 = vcmp.lt.s32.totalorder %v470, %v498
    %vm507 = vcmp.lt.s32.totalorder %v471, %v498
    %vm508 = vcmp.lt.s32.totalorder %v472, %v498
    %vm509 = vcmp.lt.s32.totalorder %v473, %v498
    %vm510 = vcmp.lt.s32.totalorder %v474, %v498
    %vm511 = vcmp.lt.s32.totalorder %v475, %v498
    %vm512 = vcmp.lt.s32.totalorder %v476, %v498
    %vm513 = vcmp.lt.s32.totalorder %v477, %v498
    %vm514 = vcmp.lt.s32.totalorder %v478, %v498
    %vm515 = vmand %vm482, %vm499
    %vm516 = vmand %vm483, %vm500
    %vm517 = vmand %vm484, %vm501
    %vm518 = vmand %vm485, %vm502
    %vm519 = vmand %vm486, %vm503
    %vm520 = vmand %vm487, %vm504
    %vm521 = vmand %vm488, %vm505
    %vm522 = vmand %vm489, %vm506
    %vm523 = vmand %vm490, %vm507
    %vm524 = vmand %vm491, %vm508
    %vm525 = vmand %vm492, %vm509
    %vm526 = vmand %vm493, %vm510
    %vm527 = vmand %vm494, %vm511
    %vm528 = vmand %vm495, %vm512
    %vm529 = vmand %vm496, %vm513
    %vm530 = vmand %vm497, %vm514
    %v531 = vsel %vm515, 1.0, 0.0
    %v532 = vsel %vm516, 1.0, 0.0
    %v533 = vsel %vm517, 1.0, 0.0
    %v534 = vsel %vm518, 1.0, 0.0
    %v535 = vsel %vm519, 1.0, 0.0
    %v536 = vsel %vm520, 1.0, 0.0
    %v537 = vsel %vm521, 1.0, 0.0
    %v538 = vsel %vm522, 1.0, 0.0
    %v539 = vsel %vm523, 1.0, 0.0
    %v540 = vsel %vm524, 1.0, 0.0
    %v541 = vsel %vm525, 1.0, 0.0
    %v542 = vsel %vm526, 1.0, 0.0
    %v543 = vsel %vm527, 1.0, 0.0
    %v544 = vsel %vm528, 1.0, 0.0
    %v545 = vsel %vm529, 1.0, 0.0
    %v546 = vsel %vm530, 1.0, 0.0
    %v547 = vmul.u32 %v463, 32
    %vm548 = vcmp.ge.s32.totalorder %v480, %v547
    %v549 = vadd.s32 %v547, 32
    %vm550 = vcmp.lt.s32.totalorder %v480, %v549
    %vm551 = vmand %vm548, %vm550
    %v552 = vsel %vm551, 1.0, 0.0
    %v553 = vadd.f32 %v237, %v239
    %v554 = vadd.f32 %v553, %v308
    %v555 = vadd.f32 %v554, %v310
    %v556 = vadd.f32 %v555, %v379
    %v557 = vadd.f32 %v556, %v381
    %v558 = vadd.f32 %v557, %v450
    %v559 = vadd.f32 %v558, %v452
    %v560 = vmul.f32 %v559, 0.125
    %v561 = vmul.f32 %v560, %v560
    %562 = vmatprep.subr.mxu0 0.0
    %563 = vmatpush1.msra.mxu0 %v531
    %564 = vmatprep.subr.mxu0 0.0
    %565 = vmatpush1.msra.mxu0 %v532
    %566 = vmatprep.subr.mxu0 0.0
    %567 = vmatpush1.msra.mxu0 %v533
    %568 = vmatprep.subr.mxu0 0.0
    %569 = vmatpush1.msra.mxu0 %v534
    %570 = vmatprep.subr.mxu0 0.0
    %571 = vmatpush1.msra.mxu0 %v535
    %572 = vmatprep.subr.mxu0 0.0
    %573 = vmatpush1.msra.mxu0 %v536
    %574 = vmatprep.subr.mxu0 0.0
    %575 = vmatpush1.msra.mxu0 %v537
    %576 = vmatprep.subr.mxu0 0.0
    %577 = vmatpush1.msra.mxu0 %v538
    %578 = vmatprep.subr.mxu0 0.0
    %579 = vmatpush1.msra.mxu0 %v539
    %580 = vmatprep.subr.mxu0 0.0
    %581 = vmatpush1.msra.mxu0 %v540
    %582 = vmatprep.subr.mxu0 0.0
    %583 = vmatpush1.msra.mxu0 %v541
    %584 = vmatprep.subr.mxu0 0.0
    %585 = vmatpush1.msra.mxu0 %v542
    %586 = vmatprep.subr.mxu0 0.0
    %587 = vmatpush1.msra.mxu0 %v543
    %588 = vmatprep.subr.mxu0 0.0
    %589 = vmatpush1.msra.mxu0 %v544
    %590 = vmatprep.subr.mxu0 0.0
    %591 = vmatpush1.msra.mxu0 %v545
    %592 = vmatprep.subr.mxu0 0.0
    %593 = vmatpush1.msra.mxu0 %v546
    %594 = vmatprep.subr.mxu0 0.0
    %595 = vmatpush1.msra.mxu0 0.0
    %596 = vmatprep.subr.mxu0 0.0
    %597 = vmatpush1.msra.mxu0 0.0
    %598 = vmatprep.subr.mxu0 0.0
    %599 = vmatpush1.msra.mxu0 0.0
    %600 = vmatprep.subr.mxu0 0.0
    %601 = vmatpush1.msra.mxu0 0.0
    %602 = vmatprep.subr.mxu0 0.0
    %603 = vmatpush1.msra.mxu0 0.0
    %604 = vmatprep.subr.mxu0 0.0
    %605 = vmatpush1.msra.mxu0 0.0
    %606 = vmatprep.subr.mxu0 0.0
    %607 = vmatpush1.msra.mxu0 0.0
    %608 = vmatprep.subr.mxu0 0.0
    %609 = vmatpush1.msra.mxu0 0.0
    %610 = vmatprep.subr.mxu0 0.0
    %611 = vmatpush1.msra.mxu0 0.0
    %612 = vmatprep.subr.mxu0 0.0
    %613 = vmatpush1.msra.mxu0 0.0
    %614 = vmatprep.subr.mxu0 0.0
    %615 = vmatpush1.msra.mxu0 0.0
    %616 = vmatprep.subr.mxu0 0.0
    %617 = vmatpush1.msra.mxu0 0.0
    %618 = vmatprep.subr.mxu0 0.0
    %619 = vmatpush1.msra.mxu0 0.0
    %620 = vmatprep.subr.mxu0 0.0
    %621 = vmatpush1.msra.mxu0 0.0
    %622 = vmatprep.subr.mxu0 0.0
    %623 = vmatpush1.msra.mxu0 0.0
    %624 = vmatprep.subr.mxu0 0.0
    %625 = vmatpush1.msra.mxu0 0.0
    %626 = vmatprep.mubr.f32.mxu0 0.0
    %627 = vmatmul.mubr.f32.gmra.mrb[0].mxu0 %v561
    %v628 = vpop.f32.mrb[0].mxu0
    %v629 = vadd.f32 0.0, %v628
    %v630 = vpop.f32.mrb[0].mxu0
    %631 = vdwg.mxu0
    %v632 = vrsqrt.pop %v629
    %v633 = vmul.f32 %v629, %v632
    %v634 = vadd.f32 %v629, 1.0
    %v635 = vrcp.pop %v634
    %v636 = vmul.f32 %v633, %v635
    %vm637 = vcmask 31744
    %v639 = vsel %vm637, %v636, 0
    %vm641 = vcmask 1043456
    %v643 = vsel %vm641, %v552, 0
    %645 = vmatprep.subr.mxu0 0.0
    %646 = vmatpush1.msra.mxu0 %v643
    %647 = vmatprep.subr.mxu0 0.0
    %648 = vmatpush1.msra.mxu0 0.0
    %649 = vmatprep.subr.mxu0 0.0
    %650 = vmatpush1.msra.mxu0 0.0
    %651 = vmatprep.subr.mxu0 0.0
    %652 = vmatpush1.msra.mxu0 0.0
    %653 = vmatprep.subr.mxu0 0.0
    %654 = vmatpush1.msra.mxu0 0.0
    %655 = vmatprep.subr.mxu0 0.0
    %656 = vmatpush1.msra.mxu0 0.0
    %657 = vmatprep.subr.mxu0 0.0
    %658 = vmatpush1.msra.mxu0 0.0
    %659 = vmatprep.subr.mxu0 0.0
    %660 = vmatpush1.msra.mxu0 0.0
    %661 = vmatprep.subr.mxu0 0.0
    %662 = vmatpush1.msra.mxu0 0.0
    %663 = vmatprep.subr.mxu0 0.0
    %664 = vmatpush1.msra.mxu0 0.0
    %665 = vmatprep.subr.mxu0 0.0
    %666 = vmatpush1.msra.mxu0 0.0
    %667 = vmatprep.subr.mxu0 0.0
    %668 = vmatpush1.msra.mxu0 0.0
    %669 = vmatprep.subr.mxu0 0.0
    %670 = vmatpush1.msra.mxu0 0.0
    %671 = vmatprep.subr.mxu0 0.0
    %672 = vmatpush1.msra.mxu0 0.0
    %673 = vmatprep.subr.mxu0 0.0
    %674 = vmatpush1.msra.mxu0 0.0
    %675 = vmatprep.subr.mxu0 0.0
    %676 = vmatpush1.msra.mxu0 0.0
    %677 = vmatprep.subr.mxu0 0.0
    %678 = vmatpush1.msra.mxu0 0.0
    %679 = vmatprep.subr.mxu0 0.0
    %680 = vmatpush1.msra.mxu0 0.0
    %681 = vmatprep.subr.mxu0 0.0
    %682 = vmatpush1.msra.mxu0 0.0
    %683 = vmatprep.subr.mxu0 0.0
    %684 = vmatpush1.msra.mxu0 0.0
    %685 = vmatprep.subr.mxu0 0.0
    %686 = vmatpush1.msra.mxu0 0.0
    %687 = vmatprep.subr.mxu0 0.0
    %688 = vmatpush1.msra.mxu0 0.0
    %689 = vmatprep.subr.mxu0 0.0
    %690 = vmatpush1.msra.mxu0 0.0
    %691 = vmatprep.subr.mxu0 0.0
    %692 = vmatpush1.msra.mxu0 0.0
    %693 = vmatprep.subr.mxu0 0.0
    %694 = vmatpush1.msra.mxu0 0.0
    %695 = vmatprep.subr.mxu0 0.0
    %696 = vmatpush1.msra.mxu0 0.0
    %697 = vmatprep.subr.mxu0 0.0
    %698 = vmatpush1.msra.mxu0 0.0
    %699 = vmatprep.subr.mxu0 0.0
    %700 = vmatpush1.msra.mxu0 0.0
    %701 = vmatprep.subr.mxu0 0.0
    %702 = vmatpush1.msra.mxu0 0.0
    %703 = vmatprep.subr.mxu0 0.0
    %704 = vmatpush1.msra.mxu0 0.0
    %705 = vmatprep.subr.mxu0 0.0
    %706 = vmatpush1.msra.mxu0 0.0
    %707 = vmatprep.subr.mxu0 0.0
    %708 = vmatpush1.msra.mxu0 0.0
    %709 = vmatprep.mubr.f32.mxu0 0.0
    %710 = vmatmul.mubr.f32.gmra.mrb[0].mxu0 %v639
    %v711 = vpop.f32.mrb[0].mxu0
    %v712 = vadd.f32 0.0, %v711
    %v713 = vpop.f32.mrb[0].mxu0
    %714 = vdwg.mxu0
    %v715 = vmul.f32 %v712, %v560
    %v716 = vmul.f32 %v237, %v715
    %717 = vmatprep.subr.mxu0 0.0
    %718 = vmatpush1.msra.mxu0 %v531
    %719 = vmatprep.subr.mxu0 0.0
    %720 = vmatpush1.msra.mxu0 %v532
    %721 = vmatprep.subr.mxu0 0.0
    %722 = vmatpush1.msra.mxu0 %v533
    %723 = vmatprep.subr.mxu0 0.0
    %724 = vmatpush1.msra.mxu0 %v534
    %725 = vmatprep.subr.mxu0 0.0
    %726 = vmatpush1.msra.mxu0 %v535
    %727 = vmatprep.subr.mxu0 0.0
    %728 = vmatpush1.msra.mxu0 %v536
    %729 = vmatprep.subr.mxu0 0.0
    %730 = vmatpush1.msra.mxu0 %v537
    %731 = vmatprep.subr.mxu0 0.0
    %732 = vmatpush1.msra.mxu0 %v538
    %733 = vmatprep.subr.mxu0 0.0
    %734 = vmatpush1.msra.mxu0 %v539
    %735 = vmatprep.subr.mxu0 0.0
    %736 = vmatpush1.msra.mxu0 %v540
    %737 = vmatprep.subr.mxu0 0.0
    %738 = vmatpush1.msra.mxu0 %v541
    %739 = vmatprep.subr.mxu0 0.0
    %740 = vmatpush1.msra.mxu0 %v542
    %741 = vmatprep.subr.mxu0 0.0
    %742 = vmatpush1.msra.mxu0 %v543
    %743 = vmatprep.subr.mxu0 0.0
    %744 = vmatpush1.msra.mxu0 %v544
    %745 = vmatprep.subr.mxu0 0.0
    %746 = vmatpush1.msra.mxu0 %v545
    %747 = vmatprep.subr.mxu0 0.0
    %748 = vmatpush1.msra.mxu0 %v546
    %749 = vmatprep.subr.mxu0 0.0
    %750 = vmatpush1.msra.mxu0 0.0
    %751 = vmatprep.subr.mxu0 0.0
    %752 = vmatpush1.msra.mxu0 0.0
    %753 = vmatprep.subr.mxu0 0.0
    %754 = vmatpush1.msra.mxu0 0.0
    %755 = vmatprep.subr.mxu0 0.0
    %756 = vmatpush1.msra.mxu0 0.0
    %757 = vmatprep.subr.mxu0 0.0
    %758 = vmatpush1.msra.mxu0 0.0
    %759 = vmatprep.subr.mxu0 0.0
    %760 = vmatpush1.msra.mxu0 0.0
    %761 = vmatprep.subr.mxu0 0.0
    %762 = vmatpush1.msra.mxu0 0.0
    %763 = vmatprep.subr.mxu0 0.0
    %764 = vmatpush1.msra.mxu0 0.0
    %765 = vmatprep.subr.mxu0 0.0
    %766 = vmatpush1.msra.mxu0 0.0
    %767 = vmatprep.subr.mxu0 0.0
    %768 = vmatpush1.msra.mxu0 0.0
    %769 = vmatprep.subr.mxu0 0.0
    %770 = vmatpush1.msra.mxu0 0.0
    %771 = vmatprep.subr.mxu0 0.0
    %772 = vmatpush1.msra.mxu0 0.0
    %773 = vmatprep.subr.mxu0 0.0
    %774 = vmatpush1.msra.mxu0 0.0
    %775 = vmatprep.subr.mxu0 0.0
    %776 = vmatpush1.msra.mxu0 0.0
    %777 = vmatprep.subr.mxu0 0.0
    %778 = vmatpush1.msra.mxu0 0.0
    %779 = vmatprep.subr.mxu0 0.0
    %780 = vmatpush1.msra.mxu0 0.0
    %781 = vmatprep.mubr.f32.mxu0 0.0
    %782 = vmatmul.mubr.f32.gmra.mrb[0].mxu0 %v716
    %v783 = vpop.f32.mrb[0].mxu0
    %v784 = vadd.f32 0.0, %v783
    %v785 = vpop.f32.mrb[0].mxu0
    %786 = vdwg.mxu0
    %v787 = vmul.f32 %v239, %v715
    %788 = vmatprep.subr.mxu0 0.0
    %789 = vmatpush1.msra.mxu0 %v531
    %790 = vmatprep.subr.mxu0 0.0
    %791 = vmatpush1.msra.mxu0 %v532
    %792 = vmatprep.subr.mxu0 0.0
    %793 = vmatpush1.msra.mxu0 %v533
    %794 = vmatprep.subr.mxu0 0.0
    %795 = vmatpush1.msra.mxu0 %v534
    %796 = vmatprep.subr.mxu0 0.0
    %797 = vmatpush1.msra.mxu0 %v535
    %798 = vmatprep.subr.mxu0 0.0
    %799 = vmatpush1.msra.mxu0 %v536
    %800 = vmatprep.subr.mxu0 0.0
    %801 = vmatpush1.msra.mxu0 %v537
    %802 = vmatprep.subr.mxu0 0.0
    %803 = vmatpush1.msra.mxu0 %v538
    %804 = vmatprep.subr.mxu0 0.0
    %805 = vmatpush1.msra.mxu0 %v539
    %806 = vmatprep.subr.mxu0 0.0
    %807 = vmatpush1.msra.mxu0 %v540
    %808 = vmatprep.subr.mxu0 0.0
    %809 = vmatpush1.msra.mxu0 %v541
    %810 = vmatprep.subr.mxu0 0.0
    %811 = vmatpush1.msra.mxu0 %v542
    %812 = vmatprep.subr.mxu0 0.0
    %813 = vmatpush1.msra.mxu0 %v543
    %814 = vmatprep.subr.mxu0 0.0
    %815 = vmatpush1.msra.mxu0 %v544
    %816 = vmatprep.subr.mxu0 0.0
    %817 = vmatpush1.msra.mxu0 %v545
    %818 = vmatprep.subr.mxu0 0.0
    %819 = vmatpush1.msra.mxu0 %v546
    %820 = vmatprep.subr.mxu0 0.0
    %821 = vmatpush1.msra.mxu0 0.0
    %822 = vmatprep.subr.mxu0 0.0
    %823 = vmatpush1.msra.mxu0 0.0
    %824 = vmatprep.subr.mxu0 0.0
    %825 = vmatpush1.msra.mxu0 0.0
    %826 = vmatprep.subr.mxu0 0.0
    %827 = vmatpush1.msra.mxu0 0.0
    %828 = vmatprep.subr.mxu0 0.0
    %829 = vmatpush1.msra.mxu0 0.0
    %830 = vmatprep.subr.mxu0 0.0
    %831 = vmatpush1.msra.mxu0 0.0
    %832 = vmatprep.subr.mxu0 0.0
    %833 = vmatpush1.msra.mxu0 0.0
    %834 = vmatprep.subr.mxu0 0.0
    %835 = vmatpush1.msra.mxu0 0.0
    %836 = vmatprep.subr.mxu0 0.0
    %837 = vmatpush1.msra.mxu0 0.0
    %838 = vmatprep.subr.mxu0 0.0
    %839 = vmatpush1.msra.mxu0 0.0
    %840 = vmatprep.subr.mxu0 0.0
    %841 = vmatpush1.msra.mxu0 0.0
    %842 = vmatprep.subr.mxu0 0.0
    %843 = vmatpush1.msra.mxu0 0.0
    %844 = vmatprep.subr.mxu0 0.0
    %845 = vmatpush1.msra.mxu0 0.0
    %846 = vmatprep.subr.mxu0 0.0
    %847 = vmatpush1.msra.mxu0 0.0
    %848 = vmatprep.subr.mxu0 0.0
    %849 = vmatpush1.msra.mxu0 0.0
    %850 = vmatprep.subr.mxu0 0.0
    %851 = vmatpush1.msra.mxu0 0.0
    %852 = vmatprep.mubr.f32.mxu0 0.0
    %853 = vmatmul.mubr.f32.gmra.mrb[0].mxu0 %v787
    %v854 = vpop.f32.mrb[0].mxu0
    %v855 = vadd.f32 0.0, %v854
    %v856 = vpop.f32.mrb[0].mxu0
    %857 = vdwg.mxu0
    %v858 = vmul.f32 %v308, %v715
    %859 = vmatprep.subr.mxu0 0.0
    %860 = vmatpush1.msra.mxu0 %v531
    %861 = vmatprep.subr.mxu0 0.0
    %862 = vmatpush1.msra.mxu0 %v532
    %863 = vmatprep.subr.mxu0 0.0
    %864 = vmatpush1.msra.mxu0 %v533
    %865 = vmatprep.subr.mxu0 0.0
    %866 = vmatpush1.msra.mxu0 %v534
    %867 = vmatprep.subr.mxu0 0.0
    %868 = vmatpush1.msra.mxu0 %v535
    %869 = vmatprep.subr.mxu0 0.0
    %870 = vmatpush1.msra.mxu0 %v536
    %871 = vmatprep.subr.mxu0 0.0
    %872 = vmatpush1.msra.mxu0 %v537
    %873 = vmatprep.subr.mxu0 0.0
    %874 = vmatpush1.msra.mxu0 %v538
    %875 = vmatprep.subr.mxu0 0.0
    %876 = vmatpush1.msra.mxu0 %v539
    %877 = vmatprep.subr.mxu0 0.0
    %878 = vmatpush1.msra.mxu0 %v540
    %879 = vmatprep.subr.mxu0 0.0
    %880 = vmatpush1.msra.mxu0 %v541
    %881 = vmatprep.subr.mxu0 0.0
    %882 = vmatpush1.msra.mxu0 %v542
    %883 = vmatprep.subr.mxu0 0.0
    %884 = vmatpush1.msra.mxu0 %v543
    %885 = vmatprep.subr.mxu0 0.0
    %886 = vmatpush1.msra.mxu0 %v544
    %887 = vmatprep.subr.mxu0 0.0
    %888 = vmatpush1.msra.mxu0 %v545
    %889 = vmatprep.subr.mxu0 0.0
    %890 = vmatpush1.msra.mxu0 %v546
    %891 = vmatprep.subr.mxu0 0.0
    %892 = vmatpush1.msra.mxu0 0.0
    %893 = vmatprep.subr.mxu0 0.0
    %894 = vmatpush1.msra.mxu0 0.0
    %895 = vmatprep.subr.mxu0 0.0
    %896 = vmatpush1.msra.mxu0 0.0
    %897 = vmatprep.subr.mxu0 0.0
    %898 = vmatpush1.msra.mxu0 0.0
    %899 = vmatprep.subr.mxu0 0.0
    %900 = vmatpush1.msra.mxu0 0.0
    %901 = vmatprep.subr.mxu0 0.0
    %902 = vmatpush1.msra.mxu0 0.0
    %903 = vmatprep.subr.mxu0 0.0
    %904 = vmatpush1.msra.mxu0 0.0
    %905 = vmatprep.subr.mxu0 0.0
    %906 = vmatpush1.msra.mxu0 0.0
    %907 = vmatprep.subr.mxu0 0.0
    %908 = vmatpush1.msra.mxu0 0.0
    %909 = vmatprep.subr.mxu0 0.0
    %910 = vmatpush1.msra.mxu0 0.0
    %911 = vmatprep.subr.mxu0 0.0
    %912 = vmatpush1.msra.mxu0 0.0
    %913 = vmatprep.subr.mxu0 0.0
    %914 = vmatpush1.msra.mxu0 0.0
    %915 = vmatprep.subr.mxu0 0.0
    %916 = vmatpush1.msra.mxu0 0.0
    %917 = vmatprep.subr.mxu0 0.0
    %918 = vmatpush1.msra.mxu0 0.0
    %919 = vmatprep.subr.mxu0 0.0
    %920 = vmatpush1.msra.mxu0 0.0
    %921 = vmatprep.subr.mxu0 0.0
    %922 = vmatpush1.msra.mxu0 0.0
    %923 = vmatprep.mubr.f32.mxu0 0.0
    %924 = vmatmul.mubr.f32.gmra.mrb[0].mxu0 %v858
    %v925 = vpop.f32.mrb[0].mxu0
    %v926 = vadd.f32 0.0, %v925
    %v927 = vpop.f32.mrb[0].mxu0
    %928 = vdwg.mxu0
    %v929 = vmul.f32 %v310, %v715
    %930 = vmatprep.subr.mxu0 0.0
    %931 = vmatpush1.msra.mxu0 %v531
    %932 = vmatprep.subr.mxu0 0.0
    %933 = vmatpush1.msra.mxu0 %v532
    %934 = vmatprep.subr.mxu0 0.0
    %935 = vmatpush1.msra.mxu0 %v533
    %936 = vmatprep.subr.mxu0 0.0
    %937 = vmatpush1.msra.mxu0 %v534
    %938 = vmatprep.subr.mxu0 0.0
    %939 = vmatpush1.msra.mxu0 %v535
    %940 = vmatprep.subr.mxu0 0.0
    %941 = vmatpush1.msra.mxu0 %v536
    %942 = vmatprep.subr.mxu0 0.0
    %943 = vmatpush1.msra.mxu0 %v537
    %944 = vmatprep.subr.mxu0 0.0
    %945 = vmatpush1.msra.mxu0 %v538
    %946 = vmatprep.subr.mxu0 0.0
    %947 = vmatpush1.msra.mxu0 %v539
    %948 = vmatprep.subr.mxu0 0.0
    %949 = vmatpush1.msra.mxu0 %v540
    %950 = vmatprep.subr.mxu0 0.0
    %951 = vmatpush1.msra.mxu0 %v541
    %952 = vmatprep.subr.mxu0 0.0
    %953 = vmatpush1.msra.mxu0 %v542
    %954 = vmatprep.subr.mxu0 0.0
    %955 = vmatpush1.msra.mxu0 %v543
    %956 = vmatprep.subr.mxu0 0.0
    %957 = vmatpush1.msra.mxu0 %v544
    %958 = vmatprep.subr.mxu0 0.0
    %959 = vmatpush1.msra.mxu0 %v545
    %960 = vmatprep.subr.mxu0 0.0
    %961 = vmatpush1.msra.mxu0 %v546
    %962 = vmatprep.subr.mxu0 0.0
    %963 = vmatpush1.msra.mxu0 0.0
    %964 = vmatprep.subr.mxu0 0.0
    %965 = vmatpush1.msra.mxu0 0.0
    %966 = vmatprep.subr.mxu0 0.0
    %967 = vmatpush1.msra.mxu0 0.0
    %968 = vmatprep.subr.mxu0 0.0
    %969 = vmatpush1.msra.mxu0 0.0
    %970 = vmatprep.subr.mxu0 0.0
    %971 = vmatpush1.msra.mxu0 0.0
    %972 = vmatprep.subr.mxu0 0.0
    %973 = vmatpush1.msra.mxu0 0.0
    %974 = vmatprep.subr.mxu0 0.0
    %975 = vmatpush1.msra.mxu0 0.0
    %976 = vmatprep.subr.mxu0 0.0
    %977 = vmatpush1.msra.mxu0 0.0
    %978 = vmatprep.subr.mxu0 0.0
    %979 = vmatpush1.msra.mxu0 0.0
    %980 = vmatprep.subr.mxu0 0.0
    %981 = vmatpush1.msra.mxu0 0.0
    %982 = vmatprep.subr.mxu0 0.0
    %983 = vmatpush1.msra.mxu0 0.0
    %984 = vmatprep.subr.mxu0 0.0
    %985 = vmatpush1.msra.mxu0 0.0
    %986 = vmatprep.subr.mxu0 0.0
    %987 = vmatpush1.msra.mxu0 0.0
    %988 = vmatprep.subr.mxu0 0.0
    %989 = vmatpush1.msra.mxu0 0.0
    %990 = vmatprep.subr.mxu0 0.0
    %991 = vmatpush1.msra.mxu0 0.0
    %992 = vmatprep.subr.mxu0 0.0
    %993 = vmatpush1.msra.mxu0 0.0
    %994 = vmatprep.mubr.f32.mxu0 0.0
    %995 = vmatmul.mubr.f32.gmra.mrb[0].mxu0 %v929
    %v996 = vpop.f32.mrb[0].mxu0
    %v997 = vadd.f32 0.0, %v996
    %v998 = vpop.f32.mrb[0].mxu0
    %999 = vdwg.mxu0
    %v1000 = vmul.f32 %v379, %v715
    %1001 = vmatprep.subr.mxu0 0.0
    %1002 = vmatpush1.msra.mxu0 %v531
    %1003 = vmatprep.subr.mxu0 0.0
    %1004 = vmatpush1.msra.mxu0 %v532
    %1005 = vmatprep.subr.mxu0 0.0
    %1006 = vmatpush1.msra.mxu0 %v533
    %1007 = vmatprep.subr.mxu0 0.0
    %1008 = vmatpush1.msra.mxu0 %v534
    %1009 = vmatprep.subr.mxu0 0.0
    %1010 = vmatpush1.msra.mxu0 %v535
    %1011 = vmatprep.subr.mxu0 0.0
    %1012 = vmatpush1.msra.mxu0 %v536
    %1013 = vmatprep.subr.mxu0 0.0
    %1014 = vmatpush1.msra.mxu0 %v537
    %1015 = vmatprep.subr.mxu0 0.0
    %1016 = vmatpush1.msra.mxu0 %v538
    %1017 = vmatprep.subr.mxu0 0.0
    %1018 = vmatpush1.msra.mxu0 %v539
    %1019 = vmatprep.subr.mxu0 0.0
    %1020 = vmatpush1.msra.mxu0 %v540
    %1021 = vmatprep.subr.mxu0 0.0
    %1022 = vmatpush1.msra.mxu0 %v541
    %1023 = vmatprep.subr.mxu0 0.0
    %1024 = vmatpush1.msra.mxu0 %v542
    %1025 = vmatprep.subr.mxu0 0.0
    %1026 = vmatpush1.msra.mxu0 %v543
    %1027 = vmatprep.subr.mxu0 0.0
    %1028 = vmatpush1.msra.mxu0 %v544
    %1029 = vmatprep.subr.mxu0 0.0
    %1030 = vmatpush1.msra.mxu0 %v545
    %1031 = vmatprep.subr.mxu0 0.0
    %1032 = vmatpush1.msra.mxu0 %v546
    %1033 = vmatprep.subr.mxu0 0.0
    %1034 = vmatpush1.msra.mxu0 0.0
    %1035 = vmatprep.subr.mxu0 0.0
    %1036 = vmatpush1.msra.mxu0 0.0
    %1037 = vmatprep.subr.mxu0 0.0
    %1038 = vmatpush1.msra.mxu0 0.0
    %1039 = vmatprep.subr.mxu0 0.0
    %1040 = vmatpush1.msra.mxu0 0.0
    %1041 = vmatprep.subr.mxu0 0.0
    %1042 = vmatpush1.msra.mxu0 0.0
    %1043 = vmatprep.subr.mxu0 0.0
    %1044 = vmatpush1.msra.mxu0 0.0
    %1045 = vmatprep.subr.mxu0 0.0
    %1046 = vmatpush1.msra.mxu0 0.0
    %1047 = vmatprep.subr.mxu0 0.0
    %1048 = vmatpush1.msra.mxu0 0.0
    %1049 = vmatprep.subr.mxu0 0.0
    %1050 = vmatpush1.msra.mxu0 0.0
    %1051 = vmatprep.subr.mxu0 0.0
    %1052 = vmatpush1.msra.mxu0 0.0
    %1053 = vmatprep.subr.mxu0 0.0
    %1054 = vmatpush1.msra.mxu0 0.0
    %1055 = vmatprep.subr.mxu0 0.0
    %1056 = vmatpush1.msra.mxu0 0.0
    %1057 = vmatprep.subr.mxu0 0.0
    %1058 = vmatpush1.msra.mxu0 0.0
    %1059 = vmatprep.subr.mxu0 0.0
    %1060 = vmatpush1.msra.mxu0 0.0
    %1061 = vmatprep.subr.mxu0 0.0
    %1062 = vmatpush1.msra.mxu0 0.0
    %1063 = vmatprep.subr.mxu0 0.0
    %1064 = vmatpush1.msra.mxu0 0.0
    %1065 = vmatprep.mubr.f32.mxu0 0.0
    %1066 = vmatmul.mubr.f32.gmra.mrb[0].mxu0 %v1000
    %v1067 = vpop.f32.mrb[0].mxu0
    %v1068 = vadd.f32 0.0, %v1067
    %v1069 = vpop.f32.mrb[0].mxu0
    %1070 = vdwg.mxu0
    %v1071 = vmul.f32 %v381, %v715
    %1072 = vmatprep.subr.mxu0 0.0
    %1073 = vmatpush1.msra.mxu0 %v531
    %1074 = vmatprep.subr.mxu0 0.0
    %1075 = vmatpush1.msra.mxu0 %v532
    %1076 = vmatprep.subr.mxu0 0.0
    %1077 = vmatpush1.msra.mxu0 %v533
    %1078 = vmatprep.subr.mxu0 0.0
    %1079 = vmatpush1.msra.mxu0 %v534
    %1080 = vmatprep.subr.mxu0 0.0
    %1081 = vmatpush1.msra.mxu0 %v535
    %1082 = vmatprep.subr.mxu0 0.0
    %1083 = vmatpush1.msra.mxu0 %v536
    %1084 = vmatprep.subr.mxu0 0.0
    %1085 = vmatpush1.msra.mxu0 %v537
    %1086 = vmatprep.subr.mxu0 0.0
    %1087 = vmatpush1.msra.mxu0 %v538
    %1088 = vmatprep.subr.mxu0 0.0
    %1089 = vmatpush1.msra.mxu0 %v539
    %1090 = vmatprep.subr.mxu0 0.0
    %1091 = vmatpush1.msra.mxu0 %v540
    %1092 = vmatprep.subr.mxu0 0.0
    %1093 = vmatpush1.msra.mxu0 %v541
    %1094 = vmatprep.subr.mxu0 0.0
    %1095 = vmatpush1.msra.mxu0 %v542
    %1096 = vmatprep.subr.mxu0 0.0
    %1097 = vmatpush1.msra.mxu0 %v543
    %1098 = vmatprep.subr.mxu0 0.0
    %1099 = vmatpush1.msra.mxu0 %v544
    %1100 = vmatprep.subr.mxu0 0.0
    %1101 = vmatpush1.msra.mxu0 %v545
    %1102 = vmatprep.subr.mxu0 0.0
    %1103 = vmatpush1.msra.mxu0 %v546
    %1104 = vmatprep.subr.mxu0 0.0
    %1105 = vmatpush1.msra.mxu0 0.0
    %1106 = vmatprep.subr.mxu0 0.0
    %1107 = vmatpush1.msra.mxu0 0.0
    %1108 = vmatprep.subr.mxu0 0.0
    %1109 = vmatpush1.msra.mxu0 0.0
    %1110 = vmatprep.subr.mxu0 0.0
    %1111 = vmatpush1.msra.mxu0 0.0
    %1112 = vmatprep.subr.mxu0 0.0
    %1113 = vmatpush1.msra.mxu0 0.0
    %1114 = vmatprep.subr.mxu0 0.0
    %1115 = vmatpush1.msra.mxu0 0.0
    %1116 = vmatprep.subr.mxu0 0.0
    %1117 = vmatpush1.msra.mxu0 0.0
    %1118 = vmatprep.subr.mxu0 0.0
    %1119 = vmatpush1.msra.mxu0 0.0
    %1120 = vmatprep.subr.mxu0 0.0
    %1121 = vmatpush1.msra.mxu0 0.0
    %1122 = vmatprep.subr.mxu0 0.0
    %1123 = vmatpush1.msra.mxu0 0.0
    %1124 = vmatprep.subr.mxu0 0.0
    %1125 = vmatpush1.msra.mxu0 0.0
    %1126 = vmatprep.subr.mxu0 0.0
    %1127 = vmatpush1.msra.mxu0 0.0
    %1128 = vmatprep.subr.mxu0 0.0
    %1129 = vmatpush1.msra.mxu0 0.0
    %1130 = vmatprep.subr.mxu0 0.0
    %1131 = vmatpush1.msra.mxu0 0.0
    %1132 = vmatprep.subr.mxu0 0.0
    %1133 = vmatpush1.msra.mxu0 0.0
    %1134 = vmatprep.subr.mxu0 0.0
    %1135 = vmatpush1.msra.mxu0 0.0
    %1136 = vmatprep.mubr.f32.mxu0 0.0
    %1137 = vmatmul.mubr.f32.gmra.mrb[0].mxu0 %v1071
    %v1138 = vpop.f32.mrb[0].mxu0
    %v1139 = vadd.f32 0.0, %v1138
    %v1140 = vpop.f32.mrb[0].mxu0
    %1141 = vdwg.mxu0
    %v1142 = vmul.f32 %v450, %v715
    %1143 = vmatprep.subr.mxu0 0.0
    %1144 = vmatpush1.msra.mxu0 %v531
    %1145 = vmatprep.subr.mxu0 0.0
    %1146 = vmatpush1.msra.mxu0 %v532
    %1147 = vmatprep.subr.mxu0 0.0
    %1148 = vmatpush1.msra.mxu0 %v533
    %1149 = vmatprep.subr.mxu0 0.0
    %1150 = vmatpush1.msra.mxu0 %v534
    %1151 = vmatprep.subr.mxu0 0.0
    %1152 = vmatpush1.msra.mxu0 %v535
    %1153 = vmatprep.subr.mxu0 0.0
    %1154 = vmatpush1.msra.mxu0 %v536
    %1155 = vmatprep.subr.mxu0 0.0
    %1156 = vmatpush1.msra.mxu0 %v537
    %1157 = vmatprep.subr.mxu0 0.0
    %1158 = vmatpush1.msra.mxu0 %v538
    %1159 = vmatprep.subr.mxu0 0.0
    %1160 = vmatpush1.msra.mxu0 %v539
    %1161 = vmatprep.subr.mxu0 0.0
    %1162 = vmatpush1.msra.mxu0 %v540
    %1163 = vmatprep.subr.mxu0 0.0
    %1164 = vmatpush1.msra.mxu0 %v541
    %1165 = vmatprep.subr.mxu0 0.0
    %1166 = vmatpush1.msra.mxu0 %v542
    %1167 = vmatprep.subr.mxu0 0.0
    %1168 = vmatpush1.msra.mxu0 %v543
    %1169 = vmatprep.subr.mxu0 0.0
    %1170 = vmatpush1.msra.mxu0 %v544
    %1171 = vmatprep.subr.mxu0 0.0
    %1172 = vmatpush1.msra.mxu0 %v545
    %1173 = vmatprep.subr.mxu0 0.0
    %1174 = vmatpush1.msra.mxu0 %v546
    %1175 = vmatprep.subr.mxu0 0.0
    %1176 = vmatpush1.msra.mxu0 0.0
    %1177 = vmatprep.subr.mxu0 0.0
    %1178 = vmatpush1.msra.mxu0 0.0
    %1179 = vmatprep.subr.mxu0 0.0
    %1180 = vmatpush1.msra.mxu0 0.0
    %1181 = vmatprep.subr.mxu0 0.0
    %1182 = vmatpush1.msra.mxu0 0.0
    %1183 = vmatprep.subr.mxu0 0.0
    %1184 = vmatpush1.msra.mxu0 0.0
    %1185 = vmatprep.subr.mxu0 0.0
    %1186 = vmatpush1.msra.mxu0 0.0
    %1187 = vmatprep.subr.mxu0 0.0
    %1188 = vmatpush1.msra.mxu0 0.0
    %1189 = vmatprep.subr.mxu0 0.0
    %1190 = vmatpush1.msra.mxu0 0.0
    %1191 = vmatprep.subr.mxu0 0.0
    %1192 = vmatpush1.msra.mxu0 0.0
    %1193 = vmatprep.subr.mxu0 0.0
    %1194 = vmatpush1.msra.mxu0 0.0
    %1195 = vmatprep.subr.mxu0 0.0
    %1196 = vmatpush1.msra.mxu0 0.0
    %1197 = vmatprep.subr.mxu0 0.0
    %1198 = vmatpush1.msra.mxu0 0.0
    %1199 = vmatprep.subr.mxu0 0.0
    %1200 = vmatpush1.msra.mxu0 0.0
    %1201 = vmatprep.subr.mxu0 0.0
    %1202 = vmatpush1.msra.mxu0 0.0
    %1203 = vmatprep.subr.mxu0 0.0
    %1204 = vmatpush1.msra.mxu0 0.0
    %1205 = vmatprep.subr.mxu0 0.0
    %1206 = vmatpush1.msra.mxu0 0.0
    %1207 = vmatprep.mubr.f32.mxu0 0.0
    %1208 = vmatmul.mubr.f32.gmra.mrb[0].mxu0 %v1142
    %v1209 = vpop.f32.mrb[0].mxu0
    %v1210 = vadd.f32 0.0, %v1209
    %v1211 = vpop.f32.mrb[0].mxu0
    %1212 = vdwg.mxu0
    %v1213 = vmul.f32 %v452, %v715
    %1214 = vmatprep.subr.mxu0 0.0
    %1215 = vmatpush1.msra.mxu0 %v531
    %1216 = vmatprep.subr.mxu0 0.0
    %1217 = vmatpush1.msra.mxu0 %v532
    %1218 = vmatprep.subr.mxu0 0.0
    %1219 = vmatpush1.msra.mxu0 %v533
    %1220 = vmatprep.subr.mxu0 0.0
    %1221 = vmatpush1.msra.mxu0 %v534
    %1222 = vmatprep.subr.mxu0 0.0
    %1223 = vmatpush1.msra.mxu0 %v535
    %1224 = vmatprep.subr.mxu0 0.0
    %1225 = vmatpush1.msra.mxu0 %v536
    %1226 = vmatprep.subr.mxu0 0.0
    %1227 = vmatpush1.msra.mxu0 %v537
    %1228 = vmatprep.subr.mxu0 0.0
    %1229 = vmatpush1.msra.mxu0 %v538
    %1230 = vmatprep.subr.mxu0 0.0
    %1231 = vmatpush1.msra.mxu0 %v539
    %1232 = vmatprep.subr.mxu0 0.0
    %1233 = vmatpush1.msra.mxu0 %v540
    %1234 = vmatprep.subr.mxu0 0.0
    %1235 = vmatpush1.msra.mxu0 %v541
    %1236 = vmatprep.subr.mxu0 0.0
    %1237 = vmatpush1.msra.mxu0 %v542
    %1238 = vmatprep.subr.mxu0 0.0
    %1239 = vmatpush1.msra.mxu0 %v543
    %1240 = vmatprep.subr.mxu0 0.0
    %1241 = vmatpush1.msra.mxu0 %v544
    %1242 = vmatprep.subr.mxu0 0.0
    %1243 = vmatpush1.msra.mxu0 %v545
    %1244 = vmatprep.subr.mxu0 0.0
    %1245 = vmatpush1.msra.mxu0 %v546
    %1246 = vmatprep.subr.mxu0 0.0
    %1247 = vmatpush1.msra.mxu0 0.0
    %1248 = vmatprep.subr.mxu0 0.0
    %1249 = vmatpush1.msra.mxu0 0.0
    %1250 = vmatprep.subr.mxu0 0.0
    %1251 = vmatpush1.msra.mxu0 0.0
    %1252 = vmatprep.subr.mxu0 0.0
    %1253 = vmatpush1.msra.mxu0 0.0
    %1254 = vmatprep.subr.mxu0 0.0
    %1255 = vmatpush1.msra.mxu0 0.0
    %1256 = vmatprep.subr.mxu0 0.0
    %1257 = vmatpush1.msra.mxu0 0.0
    %1258 = vmatprep.subr.mxu0 0.0
    %1259 = vmatpush1.msra.mxu0 0.0
    %1260 = vmatprep.subr.mxu0 0.0
    %1261 = vmatpush1.msra.mxu0 0.0
    %1262 = vmatprep.subr.mxu0 0.0
    %1263 = vmatpush1.msra.mxu0 0.0
    %1264 = vmatprep.subr.mxu0 0.0
    %1265 = vmatpush1.msra.mxu0 0.0
    %1266 = vmatprep.subr.mxu0 0.0
    %1267 = vmatpush1.msra.mxu0 0.0
    %1268 = vmatprep.subr.mxu0 0.0
    %1269 = vmatpush1.msra.mxu0 0.0
    %1270 = vmatprep.subr.mxu0 0.0
    %1271 = vmatpush1.msra.mxu0 0.0
    %1272 = vmatprep.subr.mxu0 0.0
    %1273 = vmatpush1.msra.mxu0 0.0
    %1274 = vmatprep.subr.mxu0 0.0
    %1275 = vmatpush1.msra.mxu0 0.0
    %1276 = vmatprep.subr.mxu0 0.0
    %1277 = vmatpush1.msra.mxu0 0.0
    %1278 = vmatprep.mubr.f32.mxu0 0.0
    %1279 = vmatmul.mubr.f32.gmra.mrb[0].mxu0 %v1213
    %v1280 = vpop.f32.mrb[0].mxu0
    %v1281 = vadd.f32 0.0, %v1280
    %v1282 = vpop.f32.mrb[0].mxu0
    %1283 = vdwg.mxu0
    %v1284 = vmax.f32 %v784, %v855
    %v1285 = vmax.f32 %v1284, %v926
    %v1286 = vmax.f32 %v1285, %v997
    %v1287 = vmax.f32 %v1286, %v1068
    %v1288 = vmax.f32 %v1287, %v1139
    %v1289 = vmax.f32 %v1288, %v1210
    %v1290 = vmax.f32 %v1289, %v1281
    %v1291 = vsub.f32 %v784, %v1290
    %v1292 = vmul.f32 %v1291, 1.442695
    %v1293 = vpow.pop %v1292
    %v1294 = vsub.f32 %v855, %v1290
    %v1295 = vmul.f32 %v1294, 1.442695
    %v1296 = vpow.pop %v1295
    %v1297 = vsub.f32 %v926, %v1290
    %v1298 = vmul.f32 %v1297, 1.442695
    %v1299 = vpow.pop %v1298
    %v1300 = vsub.f32 %v997, %v1290
    %v1301 = vmul.f32 %v1300, 1.442695
    %v1302 = vpow.pop %v1301
    %v1303 = vsub.f32 %v1068, %v1290
    %v1304 = vmul.f32 %v1303, 1.442695
    %v1305 = vpow.pop %v1304
    %v1306 = vsub.f32 %v1139, %v1290
    %v1307 = vmul.f32 %v1306, 1.442695
    %v1308 = vpow.pop %v1307
    %v1309 = vsub.f32 %v1210, %v1290
    %v1310 = vmul.f32 %v1309, 1.442695
    %v1311 = vpow.pop %v1310
    %v1312 = vsub.f32 %v1281, %v1290
    %v1313 = vmul.f32 %v1312, 1.442695
    %v1314 = vpow.pop %v1313
    %v1315 = vadd.f32 %v1293, %v1296
    %v1316 = vadd.f32 %v1315, %v1299
    %v1317 = vadd.f32 %v1316, %v1302
    %v1318 = vadd.f32 %v1317, %v1305
    %v1319 = vadd.f32 %v1318, %v1308
    %v1320 = vadd.f32 %v1319, %v1311
    %v1321 = vadd.f32 %v1320, %v1314
    %v1322 = vrcp.pop %v1321
    %v1323 = vmul.f32 %v1293, %v1322
    %v1325 = vsel %vm637, %v1323, 0
    %1327 = vmatprep.subr.mxu0 0.0
    %1328 = vmatpush1.msra.mxu0 %v643
    %1329 = vmatprep.subr.mxu0 0.0
    %1330 = vmatpush1.msra.mxu0 0.0
    %1331 = vmatprep.subr.mxu0 0.0
    %1332 = vmatpush1.msra.mxu0 0.0
    %1333 = vmatprep.subr.mxu0 0.0
    %1334 = vmatpush1.msra.mxu0 0.0
    %1335 = vmatprep.subr.mxu0 0.0
    %1336 = vmatpush1.msra.mxu0 0.0
    %1337 = vmatprep.subr.mxu0 0.0
    %1338 = vmatpush1.msra.mxu0 0.0
    %1339 = vmatprep.subr.mxu0 0.0
    %1340 = vmatpush1.msra.mxu0 0.0
    %1341 = vmatprep.subr.mxu0 0.0
    %1342 = vmatpush1.msra.mxu0 0.0
    %1343 = vmatprep.subr.mxu0 0.0
    %1344 = vmatpush1.msra.mxu0 0.0
    %1345 = vmatprep.subr.mxu0 0.0
    %1346 = vmatpush1.msra.mxu0 0.0
    %1347 = vmatprep.subr.mxu0 0.0
    %1348 = vmatpush1.msra.mxu0 0.0
    %1349 = vmatprep.subr.mxu0 0.0
    %1350 = vmatpush1.msra.mxu0 0.0
    %1351 = vmatprep.subr.mxu0 0.0
    %1352 = vmatpush1.msra.mxu0 0.0
    %1353 = vmatprep.subr.mxu0 0.0
    %1354 = vmatpush1.msra.mxu0 0.0
    %1355 = vmatprep.subr.mxu0 0.0
    %1356 = vmatpush1.msra.mxu0 0.0
    %1357 = vmatprep.subr.mxu0 0.0
    %1358 = vmatpush1.msra.mxu0 0.0
    %1359 = vmatprep.subr.mxu0 0.0
    %1360 = vmatpush1.msra.mxu0 0.0
    %1361 = vmatprep.subr.mxu0 0.0
    %1362 = vmatpush1.msra.mxu0 0.0
    %1363 = vmatprep.subr.mxu0 0.0
    %1364 = vmatpush1.msra.mxu0 0.0
    %1365 = vmatprep.subr.mxu0 0.0
    %1366 = vmatpush1.msra.mxu0 0.0
    %1367 = vmatprep.subr.mxu0 0.0
    %1368 = vmatpush1.msra.mxu0 0.0
    %1369 = vmatprep.subr.mxu0 0.0
    %1370 = vmatpush1.msra.mxu0 0.0
    %1371 = vmatprep.subr.mxu0 0.0
    %1372 = vmatpush1.msra.mxu0 0.0
    %1373 = vmatprep.subr.mxu0 0.0
    %1374 = vmatpush1.msra.mxu0 0.0
    %1375 = vmatprep.subr.mxu0 0.0
    %1376 = vmatpush1.msra.mxu0 0.0
    %1377 = vmatprep.subr.mxu0 0.0
    %1378 = vmatpush1.msra.mxu0 0.0
    %1379 = vmatprep.subr.mxu0 0.0
    %1380 = vmatpush1.msra.mxu0 0.0
    %1381 = vmatprep.subr.mxu0 0.0
    %1382 = vmatpush1.msra.mxu0 0.0
    %1383 = vmatprep.subr.mxu0 0.0
    %1384 = vmatpush1.msra.mxu0 0.0
    %1385 = vmatprep.subr.mxu0 0.0
    %1386 = vmatpush1.msra.mxu0 0.0
    %1387 = vmatprep.subr.mxu0 0.0
    %1388 = vmatpush1.msra.mxu0 0.0
    %1389 = vmatprep.subr.mxu0 0.0
    %1390 = vmatpush1.msra.mxu0 0.0
    %1391 = vmatprep.mubr.f32.mxu0 0.0
    %1392 = vmatmul.mubr.f32.gmra.mrb[0].mxu0 %v1325
    %v1393 = vpop.f32.mrb[0].mxu0
    %v1394 = vadd.f32 0.0, %v1393
    %v1395 = vpop.f32.mrb[0].mxu0
    %1396 = vdwg.mxu0
    %v1397 = vmul.f32 %v1394, %v237
    %v1398 = vadd.f32 %v1397, 0.0
    %v1399 = vmul.f32 %v1296, %v1322
    %v1401 = vsel %vm637, %v1399, 0
    %1403 = vmatprep.subr.mxu0 0.0
    %1404 = vmatpush1.msra.mxu0 %v643
    %1405 = vmatprep.subr.mxu0 0.0
    %1406 = vmatpush1.msra.mxu0 0.0
    %1407 = vmatprep.subr.mxu0 0.0
    %1408 = vmatpush1.msra.mxu0 0.0
    %1409 = vmatprep.subr.mxu0 0.0
    %1410 = vmatpush1.msra.mxu0 0.0
    %1411 = vmatprep.subr.mxu0 0.0
    %1412 = vmatpush1.msra.mxu0 0.0
    %1413 = vmatprep.subr.mxu0 0.0
    %1414 = vmatpush1.msra.mxu0 0.0
    %1415 = vmatprep.subr.mxu0 0.0
    %1416 = vmatpush1.msra.mxu0 0.0
    %1417 = vmatprep.subr.mxu0 0.0
    %1418 = vmatpush1.msra.mxu0 0.0
    %1419 = vmatprep.subr.mxu0 0.0
    %1420 = vmatpush1.msra.mxu0 0.0
    %1421 = vmatprep.subr.mxu0 0.0
    %1422 = vmatpush1.msra.mxu0 0.0
    %1423 = vmatprep.subr.mxu0 0.0
    %1424 = vmatpush1.msra.mxu0 0.0
    %1425 = vmatprep.subr.mxu0 0.0
    %1426 = vmatpush1.msra.mxu0 0.0
    %1427 = vmatprep.subr.mxu0 0.0
    %1428 = vmatpush1.msra.mxu0 0.0
    %1429 = vmatprep.subr.mxu0 0.0
    %1430 = vmatpush1.msra.mxu0 0.0
    %1431 = vmatprep.subr.mxu0 0.0
    %1432 = vmatpush1.msra.mxu0 0.0
    %1433 = vmatprep.subr.mxu0 0.0
    %1434 = vmatpush1.msra.mxu0 0.0
    %1435 = vmatprep.subr.mxu0 0.0
    %1436 = vmatpush1.msra.mxu0 0.0
    %1437 = vmatprep.subr.mxu0 0.0
    %1438 = vmatpush1.msra.mxu0 0.0
    %1439 = vmatprep.subr.mxu0 0.0
    %1440 = vmatpush1.msra.mxu0 0.0
    %1441 = vmatprep.subr.mxu0 0.0
    %1442 = vmatpush1.msra.mxu0 0.0
    %1443 = vmatprep.subr.mxu0 0.0
    %1444 = vmatpush1.msra.mxu0 0.0
    %1445 = vmatprep.subr.mxu0 0.0
    %1446 = vmatpush1.msra.mxu0 0.0
    %1447 = vmatprep.subr.mxu0 0.0
    %1448 = vmatpush1.msra.mxu0 0.0
    %1449 = vmatprep.subr.mxu0 0.0
    %1450 = vmatpush1.msra.mxu0 0.0
    %1451 = vmatprep.subr.mxu0 0.0
    %1452 = vmatpush1.msra.mxu0 0.0
    %1453 = vmatprep.subr.mxu0 0.0
    %1454 = vmatpush1.msra.mxu0 0.0
    %1455 = vmatprep.subr.mxu0 0.0
    %1456 = vmatpush1.msra.mxu0 0.0
    %1457 = vmatprep.subr.mxu0 0.0
    %1458 = vmatpush1.msra.mxu0 0.0
    %1459 = vmatprep.subr.mxu0 0.0
    %1460 = vmatpush1.msra.mxu0 0.0
    %1461 = vmatprep.subr.mxu0 0.0
    %1462 = vmatpush1.msra.mxu0 0.0
    %1463 = vmatprep.subr.mxu0 0.0
    %1464 = vmatpush1.msra.mxu0 0.0
    %1465 = vmatprep.subr.mxu0 0.0
    %1466 = vmatpush1.msra.mxu0 0.0
    %1467 = vmatprep.mubr.f32.mxu0 0.0
    %1468 = vmatmul.mubr.f32.gmra.mrb[0].mxu0 %v1401
    %v1469 = vpop.f32.mrb[0].mxu0
    %v1470 = vadd.f32 0.0, %v1469
    %v1471 = vpop.f32.mrb[0].mxu0
    %1472 = vdwg.mxu0
    %v1473 = vmul.f32 %v1470, %v239
    %v1474 = vadd.f32 %v1398, %v1473
    %v1475 = vmul.f32 %v1299, %v1322
    %v1477 = vsel %vm637, %v1475, 0
    %1479 = vmatprep.subr.mxu0 0.0
    %1480 = vmatpush1.msra.mxu0 %v643
    %1481 = vmatprep.subr.mxu0 0.0
    %1482 = vmatpush1.msra.mxu0 0.0
    %1483 = vmatprep.subr.mxu0 0.0
    %1484 = vmatpush1.msra.mxu0 0.0
    %1485 = vmatprep.subr.mxu0 0.0
    %1486 = vmatpush1.msra.mxu0 0.0
    %1487 = vmatprep.subr.mxu0 0.0
    %1488 = vmatpush1.msra.mxu0 0.0
    %1489 = vmatprep.subr.mxu0 0.0
    %1490 = vmatpush1.msra.mxu0 0.0
    %1491 = vmatprep.subr.mxu0 0.0
    %1492 = vmatpush1.msra.mxu0 0.0
    %1493 = vmatprep.subr.mxu0 0.0
    %1494 = vmatpush1.msra.mxu0 0.0
    %1495 = vmatprep.subr.mxu0 0.0
    %1496 = vmatpush1.msra.mxu0 0.0
    %1497 = vmatprep.subr.mxu0 0.0
    %1498 = vmatpush1.msra.mxu0 0.0
    %1499 = vmatprep.subr.mxu0 0.0
    %1500 = vmatpush1.msra.mxu0 0.0
    %1501 = vmatprep.subr.mxu0 0.0
    %1502 = vmatpush1.msra.mxu0 0.0
    %1503 = vmatprep.subr.mxu0 0.0
    %1504 = vmatpush1.msra.mxu0 0.0
    %1505 = vmatprep.subr.mxu0 0.0
    %1506 = vmatpush1.msra.mxu0 0.0
    %1507 = vmatprep.subr.mxu0 0.0
    %1508 = vmatpush1.msra.mxu0 0.0
    %1509 = vmatprep.subr.mxu0 0.0
    %1510 = vmatpush1.msra.mxu0 0.0
    %1511 = vmatprep.subr.mxu0 0.0
    %1512 = vmatpush1.msra.mxu0 0.0
    %1513 = vmatprep.subr.mxu0 0.0
    %1514 = vmatpush1.msra.mxu0 0.0
    %1515 = vmatprep.subr.mxu0 0.0
    %1516 = vmatpush1.msra.mxu0 0.0
    %1517 = vmatprep.subr.mxu0 0.0
    %1518 = vmatpush1.msra.mxu0 0.0
    %1519 = vmatprep.subr.mxu0 0.0
    %1520 = vmatpush1.msra.mxu0 0.0
    %1521 = vmatprep.subr.mxu0 0.0
    %1522 = vmatpush1.msra.mxu0 0.0
    %1523 = vmatprep.subr.mxu0 0.0
    %1524 = vmatpush1.msra.mxu0 0.0
    %1525 = vmatprep.subr.mxu0 0.0
    %1526 = vmatpush1.msra.mxu0 0.0
    %1527 = vmatprep.subr.mxu0 0.0
    %1528 = vmatpush1.msra.mxu0 0.0
    %1529 = vmatprep.subr.mxu0 0.0
    %1530 = vmatpush1.msra.mxu0 0.0
    %1531 = vmatprep.subr.mxu0 0.0
    %1532 = vmatpush1.msra.mxu0 0.0
    %1533 = vmatprep.subr.mxu0 0.0
    %1534 = vmatpush1.msra.mxu0 0.0
    %1535 = vmatprep.subr.mxu0 0.0
    %1536 = vmatpush1.msra.mxu0 0.0
    %1537 = vmatprep.subr.mxu0 0.0
    %1538 = vmatpush1.msra.mxu0 0.0
    %1539 = vmatprep.subr.mxu0 0.0
    %1540 = vmatpush1.msra.mxu0 0.0
    %1541 = vmatprep.subr.mxu0 0.0
    %1542 = vmatpush1.msra.mxu0 0.0
    %1543 = vmatprep.mubr.f32.mxu0 0.0
    %1544 = vmatmul.mubr.f32.gmra.mrb[0].mxu0 %v1477
    %v1545 = vpop.f32.mrb[0].mxu0
    %v1546 = vadd.f32 0.0, %v1545
    %v1547 = vpop.f32.mrb[0].mxu0
    %1548 = vdwg.mxu0
    %v1549 = vmul.f32 %v1546, %v308
    %v1550 = vadd.f32 %v1474, %v1549
    %v1551 = vmul.f32 %v1302, %v1322
    %v1553 = vsel %vm637, %v1551, 0
    %1555 = vmatprep.subr.mxu0 0.0
    %1556 = vmatpush1.msra.mxu0 %v643
    %1557 = vmatprep.subr.mxu0 0.0
    %1558 = vmatpush1.msra.mxu0 0.0
    %1559 = vmatprep.subr.mxu0 0.0
    %1560 = vmatpush1.msra.mxu0 0.0
    %1561 = vmatprep.subr.mxu0 0.0
    %1562 = vmatpush1.msra.mxu0 0.0
    %1563 = vmatprep.subr.mxu0 0.0
    %1564 = vmatpush1.msra.mxu0 0.0
    %1565 = vmatprep.subr.mxu0 0.0
    %1566 = vmatpush1.msra.mxu0 0.0
    %1567 = vmatprep.subr.mxu0 0.0
    %1568 = vmatpush1.msra.mxu0 0.0
    %1569 = vmatprep.subr.mxu0 0.0
    %1570 = vmatpush1.msra.mxu0 0.0
    %1571 = vmatprep.subr.mxu0 0.0
    %1572 = vmatpush1.msra.mxu0 0.0
    %1573 = vmatprep.subr.mxu0 0.0
    %1574 = vmatpush1.msra.mxu0 0.0
    %1575 = vmatprep.subr.mxu0 0.0
    %1576 = vmatpush1.msra.mxu0 0.0
    %1577 = vmatprep.subr.mxu0 0.0
    %1578 = vmatpush1.msra.mxu0 0.0
    %1579 = vmatprep.subr.mxu0 0.0
    %1580 = vmatpush1.msra.mxu0 0.0
    %1581 = vmatprep.subr.mxu0 0.0
    %1582 = vmatpush1.msra.mxu0 0.0
    %1583 = vmatprep.subr.mxu0 0.0
    %1584 = vmatpush1.msra.mxu0 0.0
    %1585 = vmatprep.subr.mxu0 0.0
    %1586 = vmatpush1.msra.mxu0 0.0
    %1587 = vmatprep.subr.mxu0 0.0
    %1588 = vmatpush1.msra.mxu0 0.0
    %1589 = vmatprep.subr.mxu0 0.0
    %1590 = vmatpush1.msra.mxu0 0.0
    %1591 = vmatprep.subr.mxu0 0.0
    %1592 = vmatpush1.msra.mxu0 0.0
    %1593 = vmatprep.subr.mxu0 0.0
    %1594 = vmatpush1.msra.mxu0 0.0
    %1595 = vmatprep.subr.mxu0 0.0
    %1596 = vmatpush1.msra.mxu0 0.0
    %1597 = vmatprep.subr.mxu0 0.0
    %1598 = vmatpush1.msra.mxu0 0.0
    %1599 = vmatprep.subr.mxu0 0.0
    %1600 = vmatpush1.msra.mxu0 0.0
    %1601 = vmatprep.subr.mxu0 0.0
    %1602 = vmatpush1.msra.mxu0 0.0
    %1603 = vmatprep.subr.mxu0 0.0
    %1604 = vmatpush1.msra.mxu0 0.0
    %1605 = vmatprep.subr.mxu0 0.0
    %1606 = vmatpush1.msra.mxu0 0.0
    %1607 = vmatprep.subr.mxu0 0.0
    %1608 = vmatpush1.msra.mxu0 0.0
    %1609 = vmatprep.subr.mxu0 0.0
    %1610 = vmatpush1.msra.mxu0 0.0
    %1611 = vmatprep.subr.mxu0 0.0
    %1612 = vmatpush1.msra.mxu0 0.0
    %1613 = vmatprep.subr.mxu0 0.0
    %1614 = vmatpush1.msra.mxu0 0.0
    %1615 = vmatprep.subr.mxu0 0.0
    %1616 = vmatpush1.msra.mxu0 0.0
    %1617 = vmatprep.subr.mxu0 0.0
    %1618 = vmatpush1.msra.mxu0 0.0
    %1619 = vmatprep.mubr.f32.mxu0 0.0
    %1620 = vmatmul.mubr.f32.gmra.mrb[0].mxu0 %v1553
    %v1621 = vpop.f32.mrb[0].mxu0
    %v1622 = vadd.f32 0.0, %v1621
    %v1623 = vpop.f32.mrb[0].mxu0
    %1624 = vdwg.mxu0
    %v1625 = vmul.f32 %v1622, %v310
    %v1626 = vadd.f32 %v1550, %v1625
    %v1627 = vmul.f32 %v1305, %v1322
    %v1629 = vsel %vm637, %v1627, 0
    %1631 = vmatprep.subr.mxu0 0.0
    %1632 = vmatpush1.msra.mxu0 %v643
    %1633 = vmatprep.subr.mxu0 0.0
    %1634 = vmatpush1.msra.mxu0 0.0
    %1635 = vmatprep.subr.mxu0 0.0
    %1636 = vmatpush1.msra.mxu0 0.0
    %1637 = vmatprep.subr.mxu0 0.0
    %1638 = vmatpush1.msra.mxu0 0.0
    %1639 = vmatprep.subr.mxu0 0.0
    %1640 = vmatpush1.msra.mxu0 0.0
    %1641 = vmatprep.subr.mxu0 0.0
    %1642 = vmatpush1.msra.mxu0 0.0
    %1643 = vmatprep.subr.mxu0 0.0
    %1644 = vmatpush1.msra.mxu0 0.0
    %1645 = vmatprep.subr.mxu0 0.0
    %1646 = vmatpush1.msra.mxu0 0.0
    %1647 = vmatprep.subr.mxu0 0.0
    %1648 = vmatpush1.msra.mxu0 0.0
    %1649 = vmatprep.subr.mxu0 0.0
    %1650 = vmatpush1.msra.mxu0 0.0
    %1651 = vmatprep.subr.mxu0 0.0
    %1652 = vmatpush1.msra.mxu0 0.0
    %1653 = vmatprep.subr.mxu0 0.0
    %1654 = vmatpush1.msra.mxu0 0.0
    %1655 = vmatprep.subr.mxu0 0.0
    %1656 = vmatpush1.msra.mxu0 0.0
    %1657 = vmatprep.subr.mxu0 0.0
    %1658 = vmatpush1.msra.mxu0 0.0
    %1659 = vmatprep.subr.mxu0 0.0
    %1660 = vmatpush1.msra.mxu0 0.0
    %1661 = vmatprep.subr.mxu0 0.0
    %1662 = vmatpush1.msra.mxu0 0.0
    %1663 = vmatprep.subr.mxu0 0.0
    %1664 = vmatpush1.msra.mxu0 0.0
    %1665 = vmatprep.subr.mxu0 0.0
    %1666 = vmatpush1.msra.mxu0 0.0
    %1667 = vmatprep.subr.mxu0 0.0
    %1668 = vmatpush1.msra.mxu0 0.0
    %1669 = vmatprep.subr.mxu0 0.0
    %1670 = vmatpush1.msra.mxu0 0.0
    %1671 = vmatprep.subr.mxu0 0.0
    %1672 = vmatpush1.msra.mxu0 0.0
    %1673 = vmatprep.subr.mxu0 0.0
    %1674 = vmatpush1.msra.mxu0 0.0
    %1675 = vmatprep.subr.mxu0 0.0
    %1676 = vmatpush1.msra.mxu0 0.0
    %1677 = vmatprep.subr.mxu0 0.0
    %1678 = vmatpush1.msra.mxu0 0.0
    %1679 = vmatprep.subr.mxu0 0.0
    %1680 = vmatpush1.msra.mxu0 0.0
    %1681 = vmatprep.subr.mxu0 0.0
    %1682 = vmatpush1.msra.mxu0 0.0
    %1683 = vmatprep.subr.mxu0 0.0
    %1684 = vmatpush1.msra.mxu0 0.0
    %1685 = vmatprep.subr.mxu0 0.0
    %1686 = vmatpush1.msra.mxu0 0.0
    %1687 = vmatprep.subr.mxu0 0.0
    %1688 = vmatpush1.msra.mxu0 0.0
    %1689 = vmatprep.subr.mxu0 0.0
    %1690 = vmatpush1.msra.mxu0 0.0
    %1691 = vmatprep.subr.mxu0 0.0
    %1692 = vmatpush1.msra.mxu0 0.0
    %1693 = vmatprep.subr.mxu0 0.0
    %1694 = vmatpush1.msra.mxu0 0.0
    %1695 = vmatprep.mubr.f32.mxu0 0.0
    %1696 = vmatmul.mubr.f32.gmra.mrb[0].mxu0 %v1629
    %v1697 = vpop.f32.mrb[0].mxu0
    %v1698 = vadd.f32 0.0, %v1697
    %v1699 = vpop.f32.mrb[0].mxu0
    %1700 = vdwg.mxu0
    %v1701 = vmul.f32 %v1698, %v379
    %v1702 = vadd.f32 %v1626, %v1701
    %v1703 = vmul.f32 %v1308, %v1322
    %v1705 = vsel %vm637, %v1703, 0
    %1707 = vmatprep.subr.mxu0 0.0
    %1708 = vmatpush1.msra.mxu0 %v643
    %1709 = vmatprep.subr.mxu0 0.0
    %1710 = vmatpush1.msra.mxu0 0.0
    %1711 = vmatprep.subr.mxu0 0.0
    %1712 = vmatpush1.msra.mxu0 0.0
    %1713 = vmatprep.subr.mxu0 0.0
    %1714 = vmatpush1.msra.mxu0 0.0
    %1715 = vmatprep.subr.mxu0 0.0
    %1716 = vmatpush1.msra.mxu0 0.0
    %1717 = vmatprep.subr.mxu0 0.0
    %1718 = vmatpush1.msra.mxu0 0.0
    %1719 = vmatprep.subr.mxu0 0.0
    %1720 = vmatpush1.msra.mxu0 0.0
    %1721 = vmatprep.subr.mxu0 0.0
    %1722 = vmatpush1.msra.mxu0 0.0
    %1723 = vmatprep.subr.mxu0 0.0
    %1724 = vmatpush1.msra.mxu0 0.0
    %1725 = vmatprep.subr.mxu0 0.0
    %1726 = vmatpush1.msra.mxu0 0.0
    %1727 = vmatprep.subr.mxu0 0.0
    %1728 = vmatpush1.msra.mxu0 0.0
    %1729 = vmatprep.subr.mxu0 0.0
    %1730 = vmatpush1.msra.mxu0 0.0
    %1731 = vmatprep.subr.mxu0 0.0
    %1732 = vmatpush1.msra.mxu0 0.0
    %1733 = vmatprep.subr.mxu0 0.0
    %1734 = vmatpush1.msra.mxu0 0.0
    %1735 = vmatprep.subr.mxu0 0.0
    %1736 = vmatpush1.msra.mxu0 0.0
    %1737 = vmatprep.subr.mxu0 0.0
    %1738 = vmatpush1.msra.mxu0 0.0
    %1739 = vmatprep.subr.mxu0 0.0
    %1740 = vmatpush1.msra.mxu0 0.0
    %1741 = vmatprep.subr.mxu0 0.0
    %1742 = vmatpush1.msra.mxu0 0.0
    %1743 = vmatprep.subr.mxu0 0.0
    %1744 = vmatpush1.msra.mxu0 0.0
    %1745 = vmatprep.subr.mxu0 0.0
    %1746 = vmatpush1.msra.mxu0 0.0
    %1747 = vmatprep.subr.mxu0 0.0
    %1748 = vmatpush1.msra.mxu0 0.0
    %1749 = vmatprep.subr.mxu0 0.0
    %1750 = vmatpush1.msra.mxu0 0.0
    %1751 = vmatprep.subr.mxu0 0.0
    %1752 = vmatpush1.msra.mxu0 0.0
    %1753 = vmatprep.subr.mxu0 0.0
    %1754 = vmatpush1.msra.mxu0 0.0
    %1755 = vmatprep.subr.mxu0 0.0
    %1756 = vmatpush1.msra.mxu0 0.0
    %1757 = vmatprep.subr.mxu0 0.0
    %1758 = vmatpush1.msra.mxu0 0.0
    %1759 = vmatprep.subr.mxu0 0.0
    %1760 = vmatpush1.msra.mxu0 0.0
    %1761 = vmatprep.subr.mxu0 0.0
    %1762 = vmatpush1.msra.mxu0 0.0
    %1763 = vmatprep.subr.mxu0 0.0
    %1764 = vmatpush1.msra.mxu0 0.0
    %1765 = vmatprep.subr.mxu0 0.0
    %1766 = vmatpush1.msra.mxu0 0.0
    %1767 = vmatprep.subr.mxu0 0.0
    %1768 = vmatpush1.msra.mxu0 0.0
    %1769 = vmatprep.subr.mxu0 0.0
    %1770 = vmatpush1.msra.mxu0 0.0
    %1771 = vmatprep.mubr.f32.mxu0 0.0
    %1772 = vmatmul.mubr.f32.gmra.mrb[0].mxu0 %v1705
    %v1773 = vpop.f32.mrb[0].mxu0
    %v1774 = vadd.f32 0.0, %v1773
    %v1775 = vpop.f32.mrb[0].mxu0
    %1776 = vdwg.mxu0
    %v1777 = vmul.f32 %v1774, %v381
    %v1778 = vadd.f32 %v1702, %v1777
    %v1779 = vmul.f32 %v1311, %v1322
    %v1781 = vsel %vm637, %v1779, 0
    %1783 = vmatprep.subr.mxu0 0.0
    %1784 = vmatpush1.msra.mxu0 %v643
    %1785 = vmatprep.subr.mxu0 0.0
    %1786 = vmatpush1.msra.mxu0 0.0
    %1787 = vmatprep.subr.mxu0 0.0
    %1788 = vmatpush1.msra.mxu0 0.0
    %1789 = vmatprep.subr.mxu0 0.0
    %1790 = vmatpush1.msra.mxu0 0.0
    %1791 = vmatprep.subr.mxu0 0.0
    %1792 = vmatpush1.msra.mxu0 0.0
    %1793 = vmatprep.subr.mxu0 0.0
    %1794 = vmatpush1.msra.mxu0 0.0
    %1795 = vmatprep.subr.mxu0 0.0
    %1796 = vmatpush1.msra.mxu0 0.0
    %1797 = vmatprep.subr.mxu0 0.0
    %1798 = vmatpush1.msra.mxu0 0.0
    %1799 = vmatprep.subr.mxu0 0.0
    %1800 = vmatpush1.msra.mxu0 0.0
    %1801 = vmatprep.subr.mxu0 0.0
    %1802 = vmatpush1.msra.mxu0 0.0
    %1803 = vmatprep.subr.mxu0 0.0
    %1804 = vmatpush1.msra.mxu0 0.0
    %1805 = vmatprep.subr.mxu0 0.0
    %1806 = vmatpush1.msra.mxu0 0.0
    %1807 = vmatprep.subr.mxu0 0.0
    %1808 = vmatpush1.msra.mxu0 0.0
    %1809 = vmatprep.subr.mxu0 0.0
    %1810 = vmatpush1.msra.mxu0 0.0
    %1811 = vmatprep.subr.mxu0 0.0
    %1812 = vmatpush1.msra.mxu0 0.0
    %1813 = vmatprep.subr.mxu0 0.0
    %1814 = vmatpush1.msra.mxu0 0.0
    %1815 = vmatprep.subr.mxu0 0.0
    %1816 = vmatpush1.msra.mxu0 0.0
    %1817 = vmatprep.subr.mxu0 0.0
    %1818 = vmatpush1.msra.mxu0 0.0
    %1819 = vmatprep.subr.mxu0 0.0
    %1820 = vmatpush1.msra.mxu0 0.0
    %1821 = vmatprep.subr.mxu0 0.0
    %1822 = vmatpush1.msra.mxu0 0.0
    %1823 = vmatprep.subr.mxu0 0.0
    %1824 = vmatpush1.msra.mxu0 0.0
    %1825 = vmatprep.subr.mxu0 0.0
    %1826 = vmatpush1.msra.mxu0 0.0
    %1827 = vmatprep.subr.mxu0 0.0
    %1828 = vmatpush1.msra.mxu0 0.0
    %1829 = vmatprep.subr.mxu0 0.0
    %1830 = vmatpush1.msra.mxu0 0.0
    %1831 = vmatprep.subr.mxu0 0.0
    %1832 = vmatpush1.msra.mxu0 0.0
    %1833 = vmatprep.subr.mxu0 0.0
    %1834 = vmatpush1.msra.mxu0 0.0
    %1835 = vmatprep.subr.mxu0 0.0
    %1836 = vmatpush1.msra.mxu0 0.0
    %1837 = vmatprep.subr.mxu0 0.0
    %1838 = vmatpush1.msra.mxu0 0.0
    %1839 = vmatprep.subr.mxu0 0.0
    %1840 = vmatpush1.msra.mxu0 0.0
    %1841 = vmatprep.subr.mxu0 0.0
    %1842 = vmatpush1.msra.mxu0 0.0
    %1843 = vmatprep.subr.mxu0 0.0
    %1844 = vmatpush1.msra.mxu0 0.0
    %1845 = vmatprep.subr.mxu0 0.0
    %1846 = vmatpush1.msra.mxu0 0.0
    %1847 = vmatprep.mubr.f32.mxu0 0.0
    %1848 = vmatmul.mubr.f32.gmra.mrb[0].mxu0 %v1781
    %v1849 = vpop.f32.mrb[0].mxu0
    %v1850 = vadd.f32 0.0, %v1849
    %v1851 = vpop.f32.mrb[0].mxu0
    %1852 = vdwg.mxu0
    %v1853 = vmul.f32 %v1850, %v450
    %v1854 = vadd.f32 %v1778, %v1853
    %v1855 = vmul.f32 %v1314, %v1322
    %v1857 = vsel %vm637, %v1855, 0
    %1859 = vmatprep.subr.mxu0 0.0
    %1860 = vmatpush1.msra.mxu0 %v643
    %1861 = vmatprep.subr.mxu0 0.0
    %1862 = vmatpush1.msra.mxu0 0.0
    %1863 = vmatprep.subr.mxu0 0.0
    %1864 = vmatpush1.msra.mxu0 0.0
    %1865 = vmatprep.subr.mxu0 0.0
    %1866 = vmatpush1.msra.mxu0 0.0
    %1867 = vmatprep.subr.mxu0 0.0
    %1868 = vmatpush1.msra.mxu0 0.0
    %1869 = vmatprep.subr.mxu0 0.0
    %1870 = vmatpush1.msra.mxu0 0.0
    %1871 = vmatprep.subr.mxu0 0.0
    %1872 = vmatpush1.msra.mxu0 0.0
    %1873 = vmatprep.subr.mxu0 0.0
    %1874 = vmatpush1.msra.mxu0 0.0
    %1875 = vmatprep.subr.mxu0 0.0
    %1876 = vmatpush1.msra.mxu0 0.0
    %1877 = vmatprep.subr.mxu0 0.0
    %1878 = vmatpush1.msra.mxu0 0.0
    %1879 = vmatprep.subr.mxu0 0.0
    %1880 = vmatpush1.msra.mxu0 0.0
    %1881 = vmatprep.subr.mxu0 0.0
    %1882 = vmatpush1.msra.mxu0 0.0
    %1883 = vmatprep.subr.mxu0 0.0
    %1884 = vmatpush1.msra.mxu0 0.0
    %1885 = vmatprep.subr.mxu0 0.0
    %1886 = vmatpush1.msra.mxu0 0.0
    %1887 = vmatprep.subr.mxu0 0.0
    %1888 = vmatpush1.msra.mxu0 0.0
    %1889 = vmatprep.subr.mxu0 0.0
    %1890 = vmatpush1.msra.mxu0 0.0
    %1891 = vmatprep.subr.mxu0 0.0
    %1892 = vmatpush1.msra.mxu0 0.0
    %1893 = vmatprep.subr.mxu0 0.0
    %1894 = vmatpush1.msra.mxu0 0.0
    %1895 = vmatprep.subr.mxu0 0.0
    %1896 = vmatpush1.msra.mxu0 0.0
    %1897 = vmatprep.subr.mxu0 0.0
    %1898 = vmatpush1.msra.mxu0 0.0
    %1899 = vmatprep.subr.mxu0 0.0
    %1900 = vmatpush1.msra.mxu0 0.0
    %1901 = vmatprep.subr.mxu0 0.0
    %1902 = vmatpush1.msra.mxu0 0.0
    %1903 = vmatprep.subr.mxu0 0.0
    %1904 = vmatpush1.msra.mxu0 0.0
    %1905 = vmatprep.subr.mxu0 0.0
    %1906 = vmatpush1.msra.mxu0 0.0
    %1907 = vmatprep.subr.mxu0 0.0
    %1908 = vmatpush1.msra.mxu0 0.0
    %1909 = vmatprep.subr.mxu0 0.0
    %1910 = vmatpush1.msra.mxu0 0.0
    %1911 = vmatprep.subr.mxu0 0.0
    %1912 = vmatpush1.msra.mxu0 0.0
    %1913 = vmatprep.subr.mxu0 0.0
    %1914 = vmatpush1.msra.mxu0 0.0
    %1915 = vmatprep.subr.mxu0 0.0
    %1916 = vmatpush1.msra.mxu0 0.0
    %1917 = vmatprep.subr.mxu0 0.0
    %1918 = vmatpush1.msra.mxu0 0.0
    %1919 = vmatprep.subr.mxu0 0.0
    %1920 = vmatpush1.msra.mxu0 0.0
    %1921 = vmatprep.subr.mxu0 0.0
    %1922 = vmatpush1.msra.mxu0 0.0
    %1923 = vmatprep.mubr.f32.mxu0 0.0
    %1924 = vmatmul.mubr.f32.gmra.mrb[0].mxu0 %v1857
    %v1925 = vpop.f32.mrb[0].mxu0
    %v1926 = vadd.f32 0.0, %v1925
    %v1927 = vpop.f32.mrb[0].mxu0
    %1928 = vdwg.mxu0
    %v1929 = vmul.f32 %v1926, %v452
    %v1930 = vadd.f32 %v1854, %v1929
    %v1931 = vmul.f32 %v1930, %v1930
    %1932 = vmatprep.subr.mxu0 0.0
    %1933 = vmatpush1.msra.mxu0 %v531
    %1934 = vmatprep.subr.mxu0 0.0
    %1935 = vmatpush1.msra.mxu0 %v532
    %1936 = vmatprep.subr.mxu0 0.0
    %1937 = vmatpush1.msra.mxu0 %v533
    %1938 = vmatprep.subr.mxu0 0.0
    %1939 = vmatpush1.msra.mxu0 %v534
    %1940 = vmatprep.subr.mxu0 0.0
    %1941 = vmatpush1.msra.mxu0 %v535
    %1942 = vmatprep.subr.mxu0 0.0
    %1943 = vmatpush1.msra.mxu0 %v536
    %1944 = vmatprep.subr.mxu0 0.0
    %1945 = vmatpush1.msra.mxu0 %v537
    %1946 = vmatprep.subr.mxu0 0.0
    %1947 = vmatpush1.msra.mxu0 %v538
    %1948 = vmatprep.subr.mxu0 0.0
    %1949 = vmatpush1.msra.mxu0 %v539
    %1950 = vmatprep.subr.mxu0 0.0
    %1951 = vmatpush1.msra.mxu0 %v540
    %1952 = vmatprep.subr.mxu0 0.0
    %1953 = vmatpush1.msra.mxu0 %v541
    %1954 = vmatprep.subr.mxu0 0.0
    %1955 = vmatpush1.msra.mxu0 %v542
    %1956 = vmatprep.subr.mxu0 0.0
    %1957 = vmatpush1.msra.mxu0 %v543
    %1958 = vmatprep.subr.mxu0 0.0
    %1959 = vmatpush1.msra.mxu0 %v544
    %1960 = vmatprep.subr.mxu0 0.0
    %1961 = vmatpush1.msra.mxu0 %v545
    %1962 = vmatprep.subr.mxu0 0.0
    %1963 = vmatpush1.msra.mxu0 %v546
    %1964 = vmatprep.subr.mxu0 0.0
    %1965 = vmatpush1.msra.mxu0 0.0
    %1966 = vmatprep.subr.mxu0 0.0
    %1967 = vmatpush1.msra.mxu0 0.0
    %1968 = vmatprep.subr.mxu0 0.0
    %1969 = vmatpush1.msra.mxu0 0.0
    %1970 = vmatprep.subr.mxu0 0.0
    %1971 = vmatpush1.msra.mxu0 0.0
    %1972 = vmatprep.subr.mxu0 0.0
    %1973 = vmatpush1.msra.mxu0 0.0
    %1974 = vmatprep.subr.mxu0 0.0
    %1975 = vmatpush1.msra.mxu0 0.0
    %1976 = vmatprep.subr.mxu0 0.0
    %1977 = vmatpush1.msra.mxu0 0.0
    %1978 = vmatprep.subr.mxu0 0.0
    %1979 = vmatpush1.msra.mxu0 0.0
    %1980 = vmatprep.subr.mxu0 0.0
    %1981 = vmatpush1.msra.mxu0 0.0
    %1982 = vmatprep.subr.mxu0 0.0
    %1983 = vmatpush1.msra.mxu0 0.0
    %1984 = vmatprep.subr.mxu0 0.0
    %1985 = vmatpush1.msra.mxu0 0.0
    %1986 = vmatprep.subr.mxu0 0.0
    %1987 = vmatpush1.msra.mxu0 0.0
    %1988 = vmatprep.subr.mxu0 0.0
    %1989 = vmatpush1.msra.mxu0 0.0
    %1990 = vmatprep.subr.mxu0 0.0
    %1991 = vmatpush1.msra.mxu0 0.0
    %1992 = vmatprep.subr.mxu0 0.0
    %1993 = vmatpush1.msra.mxu0 0.0
    %1994 = vmatprep.subr.mxu0 0.0
    %1995 = vmatpush1.msra.mxu0 0.0
    %1996 = vmatprep.mubr.f32.mxu0 0.0
    %1997 = vmatmul.mubr.f32.gmra.mrb[0].mxu0 %v1931
    %v1998 = vpop.f32.mrb[0].mxu0
    %v1999 = vadd.f32 0.0, %v1998
    %v2000 = vpop.f32.mrb[0].mxu0
    %2001 = vdwg.mxu0
    %v2002 = vrsqrt.pop %v1999
    %v2003 = vmul.f32 %v1999, %v2002
    %v2004 = vadd.f32 %v1999, 1.0
    %v2005 = vrcp.pop %v2004
    %v2006 = vmul.f32 %v2003, %v2005
    %v2008 = vsel %vm637, %v2006, 0
    %2010 = vmatprep.subr.mxu0 0.0
    %2011 = vmatpush1.msra.mxu0 %v643
    %2012 = vmatprep.subr.mxu0 0.0
    %2013 = vmatpush1.msra.mxu0 0.0
    %2014 = vmatprep.subr.mxu0 0.0
    %2015 = vmatpush1.msra.mxu0 0.0
    %2016 = vmatprep.subr.mxu0 0.0
    %2017 = vmatpush1.msra.mxu0 0.0
    %2018 = vmatprep.subr.mxu0 0.0
    %2019 = vmatpush1.msra.mxu0 0.0
    %2020 = vmatprep.subr.mxu0 0.0
    %2021 = vmatpush1.msra.mxu0 0.0
    %2022 = vmatprep.subr.mxu0 0.0
    %2023 = vmatpush1.msra.mxu0 0.0
    %2024 = vmatprep.subr.mxu0 0.0
    %2025 = vmatpush1.msra.mxu0 0.0
    %2026 = vmatprep.subr.mxu0 0.0
    %2027 = vmatpush1.msra.mxu0 0.0
    %2028 = vmatprep.subr.mxu0 0.0
    %2029 = vmatpush1.msra.mxu0 0.0
    %2030 = vmatprep.subr.mxu0 0.0
    %2031 = vmatpush1.msra.mxu0 0.0
    %2032 = vmatprep.subr.mxu0 0.0
    %2033 = vmatpush1.msra.mxu0 0.0
    %2034 = vmatprep.subr.mxu0 0.0
    %2035 = vmatpush1.msra.mxu0 0.0
    %2036 = vmatprep.subr.mxu0 0.0
    %2037 = vmatpush1.msra.mxu0 0.0
    %2038 = vmatprep.subr.mxu0 0.0
    %2039 = vmatpush1.msra.mxu0 0.0
    %2040 = vmatprep.subr.mxu0 0.0
    %2041 = vmatpush1.msra.mxu0 0.0
    %2042 = vmatprep.subr.mxu0 0.0
    %2043 = vmatpush1.msra.mxu0 0.0
    %2044 = vmatprep.subr.mxu0 0.0
    %2045 = vmatpush1.msra.mxu0 0.0
    %2046 = vmatprep.subr.mxu0 0.0
    %2047 = vmatpush1.msra.mxu0 0.0
    %2048 = vmatprep.subr.mxu0 0.0
    %2049 = vmatpush1.msra.mxu0 0.0
    %2050 = vmatprep.subr.mxu0 0.0
    %2051 = vmatpush1.msra.mxu0 0.0
    %2052 = vmatprep.subr.mxu0 0.0
    %2053 = vmatpush1.msra.mxu0 0.0
    %2054 = vmatprep.subr.mxu0 0.0
    %2055 = vmatpush1.msra.mxu0 0.0
    %2056 = vmatprep.subr.mxu0 0.0
    %2057 = vmatpush1.msra.mxu0 0.0
    %2058 = vmatprep.subr.mxu0 0.0
    %2059 = vmatpush1.msra.mxu0 0.0
    %2060 = vmatprep.subr.mxu0 0.0
    %2061 = vmatpush1.msra.mxu0 0.0
    %2062 = vmatprep.subr.mxu0 0.0
    %2063 = vmatpush1.msra.mxu0 0.0
    %2064 = vmatprep.subr.mxu0 0.0
    %2065 = vmatpush1.msra.mxu0 0.0
    %2066 = vmatprep.subr.mxu0 0.0
    %2067 = vmatpush1.msra.mxu0 0.0
    %2068 = vmatprep.subr.mxu0 0.0
    %2069 = vmatpush1.msra.mxu0 0.0
    %2070 = vmatprep.subr.mxu0 0.0
    %2071 = vmatpush1.msra.mxu0 0.0
    %2072 = vmatprep.subr.mxu0 0.0
    %2073 = vmatpush1.msra.mxu0 0.0
    %2074 = vmatprep.mubr.f32.mxu0 0.0
    %2075 = vmatmul.mubr.f32.gmra.mrb[0].mxu0 %v2008
    %v2076 = vpop.f32.mrb[0].mxu0
    %v2077 = vadd.f32 0.0, %v2076
    %v2078 = vpop.f32.mrb[0].mxu0
    %2079 = vdwg.mxu0
    %v2080 = vmul.f32 %v2077, %v1930
    %v2081 = vmul.f32 %v237, %v2080
    %2082 = vmatprep.subr.mxu0 0.0
    %2083 = vmatpush1.msra.mxu0 %v531
    %2084 = vmatprep.subr.mxu0 0.0
    %2085 = vmatpush1.msra.mxu0 %v532
    %2086 = vmatprep.subr.mxu0 0.0
    %2087 = vmatpush1.msra.mxu0 %v533
    %2088 = vmatprep.subr.mxu0 0.0
    %2089 = vmatpush1.msra.mxu0 %v534
    %2090 = vmatprep.subr.mxu0 0.0
    %2091 = vmatpush1.msra.mxu0 %v535
    %2092 = vmatprep.subr.mxu0 0.0
    %2093 = vmatpush1.msra.mxu0 %v536
    %2094 = vmatprep.subr.mxu0 0.0
    %2095 = vmatpush1.msra.mxu0 %v537
    %2096 = vmatprep.subr.mxu0 0.0
    %2097 = vmatpush1.msra.mxu0 %v538
    %2098 = vmatprep.subr.mxu0 0.0
    %2099 = vmatpush1.msra.mxu0 %v539
    %2100 = vmatprep.subr.mxu0 0.0
    %2101 = vmatpush1.msra.mxu0 %v540
    %2102 = vmatprep.subr.mxu0 0.0
    %2103 = vmatpush1.msra.mxu0 %v541
    %2104 = vmatprep.subr.mxu0 0.0
    %2105 = vmatpush1.msra.mxu0 %v542
    %2106 = vmatprep.subr.mxu0 0.0
    %2107 = vmatpush1.msra.mxu0 %v543
    %2108 = vmatprep.subr.mxu0 0.0
    %2109 = vmatpush1.msra.mxu0 %v544
    %2110 = vmatprep.subr.mxu0 0.0
    %2111 = vmatpush1.msra.mxu0 %v545
    %2112 = vmatprep.subr.mxu0 0.0
    %2113 = vmatpush1.msra.mxu0 %v546
    %2114 = vmatprep.subr.mxu0 0.0
    %2115 = vmatpush1.msra.mxu0 0.0
    %2116 = vmatprep.subr.mxu0 0.0
    %2117 = vmatpush1.msra.mxu0 0.0
    %2118 = vmatprep.subr.mxu0 0.0
    %2119 = vmatpush1.msra.mxu0 0.0
    %2120 = vmatprep.subr.mxu0 0.0
    %2121 = vmatpush1.msra.mxu0 0.0
    %2122 = vmatprep.subr.mxu0 0.0
    %2123 = vmatpush1.msra.mxu0 0.0
    %2124 = vmatprep.subr.mxu0 0.0
    %2125 = vmatpush1.msra.mxu0 0.0
    %2126 = vmatprep.subr.mxu0 0.0
    %2127 = vmatpush1.msra.mxu0 0.0
    %2128 = vmatprep.subr.mxu0 0.0
    %2129 = vmatpush1.msra.mxu0 0.0
    %2130 = vmatprep.subr.mxu0 0.0
    %2131 = vmatpush1.msra.mxu0 0.0
    %2132 = vmatprep.subr.mxu0 0.0
    %2133 = vmatpush1.msra.mxu0 0.0
    %2134 = vmatprep.subr.mxu0 0.0
    %2135 = vmatpush1.msra.mxu0 0.0
    %2136 = vmatprep.subr.mxu0 0.0
    %2137 = vmatpush1.msra.mxu0 0.0
    %2138 = vmatprep.subr.mxu0 0.0
    %2139 = vmatpush1.msra.mxu0 0.0
    %2140 = vmatprep.subr.mxu0 0.0
    %2141 = vmatpush1.msra.mxu0 0.0
    %2142 = vmatprep.subr.mxu0 0.0
    %2143 = vmatpush1.msra.mxu0 0.0
    %2144 = vmatprep.subr.mxu0 0.0
    %2145 = vmatpush1.msra.mxu0 0.0
    %2146 = vmatprep.mubr.f32.mxu0 0.0
    %2147 = vmatmul.mubr.f32.gmra.mrb[0].mxu0 %v2081
    %v2148 = vpop.f32.mrb[0].mxu0
    %v2149 = vadd.f32 0.0, %v2148
    %v2150 = vpop.f32.mrb[0].mxu0
    %2151 = vdwg.mxu0
    %v2152 = vadd.f32 %v784, %v2149
    %v2153 = vmul.f32 %v239, %v2080
    %2154 = vmatprep.subr.mxu0 0.0
    %2155 = vmatpush1.msra.mxu0 %v531
    %2156 = vmatprep.subr.mxu0 0.0
    %2157 = vmatpush1.msra.mxu0 %v532
    %2158 = vmatprep.subr.mxu0 0.0
    %2159 = vmatpush1.msra.mxu0 %v533
    %2160 = vmatprep.subr.mxu0 0.0
    %2161 = vmatpush1.msra.mxu0 %v534
    %2162 = vmatprep.subr.mxu0 0.0
    %2163 = vmatpush1.msra.mxu0 %v535
    %2164 = vmatprep.subr.mxu0 0.0
    %2165 = vmatpush1.msra.mxu0 %v536
    %2166 = vmatprep.subr.mxu0 0.0
    %2167 = vmatpush1.msra.mxu0 %v537
    %2168 = vmatprep.subr.mxu0 0.0
    %2169 = vmatpush1.msra.mxu0 %v538
    %2170 = vmatprep.subr.mxu0 0.0
    %2171 = vmatpush1.msra.mxu0 %v539
    %2172 = vmatprep.subr.mxu0 0.0
    %2173 = vmatpush1.msra.mxu0 %v540
    %2174 = vmatprep.subr.mxu0 0.0
    %2175 = vmatpush1.msra.mxu0 %v541
    %2176 = vmatprep.subr.mxu0 0.0
    %2177 = vmatpush1.msra.mxu0 %v542
    %2178 = vmatprep.subr.mxu0 0.0
    %2179 = vmatpush1.msra.mxu0 %v543
    %2180 = vmatprep.subr.mxu0 0.0
    %2181 = vmatpush1.msra.mxu0 %v544
    %2182 = vmatprep.subr.mxu0 0.0
    %2183 = vmatpush1.msra.mxu0 %v545
    %2184 = vmatprep.subr.mxu0 0.0
    %2185 = vmatpush1.msra.mxu0 %v546
    %2186 = vmatprep.subr.mxu0 0.0
    %2187 = vmatpush1.msra.mxu0 0.0
    %2188 = vmatprep.subr.mxu0 0.0
    %2189 = vmatpush1.msra.mxu0 0.0
    %2190 = vmatprep.subr.mxu0 0.0
    %2191 = vmatpush1.msra.mxu0 0.0
    %2192 = vmatprep.subr.mxu0 0.0
    %2193 = vmatpush1.msra.mxu0 0.0
    %2194 = vmatprep.subr.mxu0 0.0
    %2195 = vmatpush1.msra.mxu0 0.0
    %2196 = vmatprep.subr.mxu0 0.0
    %2197 = vmatpush1.msra.mxu0 0.0
    %2198 = vmatprep.subr.mxu0 0.0
    %2199 = vmatpush1.msra.mxu0 0.0
    %2200 = vmatprep.subr.mxu0 0.0
    %2201 = vmatpush1.msra.mxu0 0.0
    %2202 = vmatprep.subr.mxu0 0.0
    %2203 = vmatpush1.msra.mxu0 0.0
    %2204 = vmatprep.subr.mxu0 0.0
    %2205 = vmatpush1.msra.mxu0 0.0
    %2206 = vmatprep.subr.mxu0 0.0
    %2207 = vmatpush1.msra.mxu0 0.0
    %2208 = vmatprep.subr.mxu0 0.0
    %2209 = vmatpush1.msra.mxu0 0.0
    %2210 = vmatprep.subr.mxu0 0.0
    %2211 = vmatpush1.msra.mxu0 0.0
    %2212 = vmatprep.subr.mxu0 0.0
    %2213 = vmatpush1.msra.mxu0 0.0
    %2214 = vmatprep.subr.mxu0 0.0
    %2215 = vmatpush1.msra.mxu0 0.0
    %2216 = vmatprep.subr.mxu0 0.0
    %2217 = vmatpush1.msra.mxu0 0.0
    %2218 = vmatprep.mubr.f32.mxu0 0.0
    %2219 = vmatmul.mubr.f32.gmra.mrb[0].mxu0 %v2153
    %v2220 = vpop.f32.mrb[0].mxu0
    %v2221 = vadd.f32 0.0, %v2220
    %v2222 = vpop.f32.mrb[0].mxu0
    %2223 = vdwg.mxu0
    %v2224 = vadd.f32 %v855, %v2221
    %v2225 = vmul.f32 %v308, %v2080
    %2226 = vmatprep.subr.mxu0 0.0
    %2227 = vmatpush1.msra.mxu0 %v531
    %2228 = vmatprep.subr.mxu0 0.0
    %2229 = vmatpush1.msra.mxu0 %v532
    %2230 = vmatprep.subr.mxu0 0.0
    %2231 = vmatpush1.msra.mxu0 %v533
    %2232 = vmatprep.subr.mxu0 0.0
    %2233 = vmatpush1.msra.mxu0 %v534
    %2234 = vmatprep.subr.mxu0 0.0
    %2235 = vmatpush1.msra.mxu0 %v535
    %2236 = vmatprep.subr.mxu0 0.0
    %2237 = vmatpush1.msra.mxu0 %v536
    %2238 = vmatprep.subr.mxu0 0.0
    %2239 = vmatpush1.msra.mxu0 %v537
    %2240 = vmatprep.subr.mxu0 0.0
    %2241 = vmatpush1.msra.mxu0 %v538
    %2242 = vmatprep.subr.mxu0 0.0
    %2243 = vmatpush1.msra.mxu0 %v539
    %2244 = vmatprep.subr.mxu0 0.0
    %2245 = vmatpush1.msra.mxu0 %v540
    %2246 = vmatprep.subr.mxu0 0.0
    %2247 = vmatpush1.msra.mxu0 %v541
    %2248 = vmatprep.subr.mxu0 0.0
    %2249 = vmatpush1.msra.mxu0 %v542
    %2250 = vmatprep.subr.mxu0 0.0
    %2251 = vmatpush1.msra.mxu0 %v543
    %2252 = vmatprep.subr.mxu0 0.0
    %2253 = vmatpush1.msra.mxu0 %v544
    %2254 = vmatprep.subr.mxu0 0.0
    %2255 = vmatpush1.msra.mxu0 %v545
    %2256 = vmatprep.subr.mxu0 0.0
    %2257 = vmatpush1.msra.mxu0 %v546
    %2258 = vmatprep.subr.mxu0 0.0
    %2259 = vmatpush1.msra.mxu0 0.0
    %2260 = vmatprep.subr.mxu0 0.0
    %2261 = vmatpush1.msra.mxu0 0.0
    %2262 = vmatprep.subr.mxu0 0.0
    %2263 = vmatpush1.msra.mxu0 0.0
    %2264 = vmatprep.subr.mxu0 0.0
    %2265 = vmatpush1.msra.mxu0 0.0
    %2266 = vmatprep.subr.mxu0 0.0
    %2267 = vmatpush1.msra.mxu0 0.0
    %2268 = vmatprep.subr.mxu0 0.0
    %2269 = vmatpush1.msra.mxu0 0.0
    %2270 = vmatprep.subr.mxu0 0.0
    %2271 = vmatpush1.msra.mxu0 0.0
    %2272 = vmatprep.subr.mxu0 0.0
    %2273 = vmatpush1.msra.mxu0 0.0
    %2274 = vmatprep.subr.mxu0 0.0
    %2275 = vmatpush1.msra.mxu0 0.0
    %2276 = vmatprep.subr.mxu0 0.0
    %2277 = vmatpush1.msra.mxu0 0.0
    %2278 = vmatprep.subr.mxu0 0.0
    %2279 = vmatpush1.msra.mxu0 0.0
    %2280 = vmatprep.subr.mxu0 0.0
    %2281 = vmatpush1.msra.mxu0 0.0
    %2282 = vmatprep.subr.mxu0 0.0
    %2283 = vmatpush1.msra.mxu0 0.0
    %2284 = vmatprep.subr.mxu0 0.0
    %2285 = vmatpush1.msra.mxu0 0.0
    %2286 = vmatprep.subr.mxu0 0.0
    %2287 = vmatpush1.msra.mxu0 0.0
    %2288 = vmatprep.subr.mxu0 0.0
    %2289 = vmatpush1.msra.mxu0 0.0
    %2290 = vmatprep.mubr.f32.mxu0 0.0
    %2291 = vmatmul.mubr.f32.gmra.mrb[0].mxu0 %v2225
    %v2292 = vpop.f32.mrb[0].mxu0
    %v2293 = vadd.f32 0.0, %v2292
    %v2294 = vpop.f32.mrb[0].mxu0
    %2295 = vdwg.mxu0
    %v2296 = vadd.f32 %v926, %v2293
    %v2297 = vmul.f32 %v310, %v2080
    %2298 = vmatprep.subr.mxu0 0.0
    %2299 = vmatpush1.msra.mxu0 %v531
    %2300 = vmatprep.subr.mxu0 0.0
    %2301 = vmatpush1.msra.mxu0 %v532
    %2302 = vmatprep.subr.mxu0 0.0
    %2303 = vmatpush1.msra.mxu0 %v533
    %2304 = vmatprep.subr.mxu0 0.0
    %2305 = vmatpush1.msra.mxu0 %v534
    %2306 = vmatprep.subr.mxu0 0.0
    %2307 = vmatpush1.msra.mxu0 %v535
    %2308 = vmatprep.subr.mxu0 0.0
    %2309 = vmatpush1.msra.mxu0 %v536
    %2310 = vmatprep.subr.mxu0 0.0
    %2311 = vmatpush1.msra.mxu0 %v537
    %2312 = vmatprep.subr.mxu0 0.0
    %2313 = vmatpush1.msra.mxu0 %v538
    %2314 = vmatprep.subr.mxu0 0.0
    %2315 = vmatpush1.msra.mxu0 %v539
    %2316 = vmatprep.subr.mxu0 0.0
    %2317 = vmatpush1.msra.mxu0 %v540
    %2318 = vmatprep.subr.mxu0 0.0
    %2319 = vmatpush1.msra.mxu0 %v541
    %2320 = vmatprep.subr.mxu0 0.0
    %2321 = vmatpush1.msra.mxu0 %v542
    %2322 = vmatprep.subr.mxu0 0.0
    %2323 = vmatpush1.msra.mxu0 %v543
    %2324 = vmatprep.subr.mxu0 0.0
    %2325 = vmatpush1.msra.mxu0 %v544
    %2326 = vmatprep.subr.mxu0 0.0
    %2327 = vmatpush1.msra.mxu0 %v545
    %2328 = vmatprep.subr.mxu0 0.0
    %2329 = vmatpush1.msra.mxu0 %v546
    %2330 = vmatprep.subr.mxu0 0.0
    %2331 = vmatpush1.msra.mxu0 0.0
    %2332 = vmatprep.subr.mxu0 0.0
    %2333 = vmatpush1.msra.mxu0 0.0
    %2334 = vmatprep.subr.mxu0 0.0
    %2335 = vmatpush1.msra.mxu0 0.0
    %2336 = vmatprep.subr.mxu0 0.0
    %2337 = vmatpush1.msra.mxu0 0.0
    %2338 = vmatprep.subr.mxu0 0.0
    %2339 = vmatpush1.msra.mxu0 0.0
    %2340 = vmatprep.subr.mxu0 0.0
    %2341 = vmatpush1.msra.mxu0 0.0
    %2342 = vmatprep.subr.mxu0 0.0
    %2343 = vmatpush1.msra.mxu0 0.0
    %2344 = vmatprep.subr.mxu0 0.0
    %2345 = vmatpush1.msra.mxu0 0.0
    %2346 = vmatprep.subr.mxu0 0.0
    %2347 = vmatpush1.msra.mxu0 0.0
    %2348 = vmatprep.subr.mxu0 0.0
    %2349 = vmatpush1.msra.mxu0 0.0
    %2350 = vmatprep.subr.mxu0 0.0
    %2351 = vmatpush1.msra.mxu0 0.0
    %2352 = vmatprep.subr.mxu0 0.0
    %2353 = vmatpush1.msra.mxu0 0.0
    %2354 = vmatprep.subr.mxu0 0.0
    %2355 = vmatpush1.msra.mxu0 0.0
    %2356 = vmatprep.subr.mxu0 0.0
    %2357 = vmatpush1.msra.mxu0 0.0
    %2358 = vmatprep.subr.mxu0 0.0
    %2359 = vmatpush1.msra.mxu0 0.0
    %2360 = vmatprep.subr.mxu0 0.0
    %2361 = vmatpush1.msra.mxu0 0.0
    %2362 = vmatprep.mubr.f32.mxu0 0.0
    %2363 = vmatmul.mubr.f32.gmra.mrb[0].mxu0 %v2297
    %v2364 = vpop.f32.mrb[0].mxu0
    %v2365 = vadd.f32 0.0, %v2364
    %v2366 = vpop.f32.mrb[0].mxu0
    %2367 = vdwg.mxu0
    %v2368 = vadd.f32 %v997, %v2365
    %v2369 = vmul.f32 %v379, %v2080
    %2370 = vmatprep.subr.mxu0 0.0
    %2371 = vmatpush1.msra.mxu0 %v531
    %2372 = vmatprep.subr.mxu0 0.0
    %2373 = vmatpush1.msra.mxu0 %v532
    %2374 = vmatprep.subr.mxu0 0.0
    %2375 = vmatpush1.msra.mxu0 %v533
    %2376 = vmatprep.subr.mxu0 0.0
    %2377 = vmatpush1.msra.mxu0 %v534
    %2378 = vmatprep.subr.mxu0 0.0
    %2379 = vmatpush1.msra.mxu0 %v535
    %2380 = vmatprep.subr.mxu0 0.0
    %2381 = vmatpush1.msra.mxu0 %v536
    %2382 = vmatprep.subr.mxu0 0.0
    %2383 = vmatpush1.msra.mxu0 %v537
    %2384 = vmatprep.subr.mxu0 0.0
    %2385 = vmatpush1.msra.mxu0 %v538
    %2386 = vmatprep.subr.mxu0 0.0
    %2387 = vmatpush1.msra.mxu0 %v539
    %2388 = vmatprep.subr.mxu0 0.0
    %2389 = vmatpush1.msra.mxu0 %v540
    %2390 = vmatprep.subr.mxu0 0.0
    %2391 = vmatpush1.msra.mxu0 %v541
    %2392 = vmatprep.subr.mxu0 0.0
    %2393 = vmatpush1.msra.mxu0 %v542
    %2394 = vmatprep.subr.mxu0 0.0
    %2395 = vmatpush1.msra.mxu0 %v543
    %2396 = vmatprep.subr.mxu0 0.0
    %2397 = vmatpush1.msra.mxu0 %v544
    %2398 = vmatprep.subr.mxu0 0.0
    %2399 = vmatpush1.msra.mxu0 %v545
    %2400 = vmatprep.subr.mxu0 0.0
    %2401 = vmatpush1.msra.mxu0 %v546
    %2402 = vmatprep.subr.mxu0 0.0
    %2403 = vmatpush1.msra.mxu0 0.0
    %2404 = vmatprep.subr.mxu0 0.0
    %2405 = vmatpush1.msra.mxu0 0.0
    %2406 = vmatprep.subr.mxu0 0.0
    %2407 = vmatpush1.msra.mxu0 0.0
    %2408 = vmatprep.subr.mxu0 0.0
    %2409 = vmatpush1.msra.mxu0 0.0
    %2410 = vmatprep.subr.mxu0 0.0
    %2411 = vmatpush1.msra.mxu0 0.0
    %2412 = vmatprep.subr.mxu0 0.0
    %2413 = vmatpush1.msra.mxu0 0.0
    %2414 = vmatprep.subr.mxu0 0.0
    %2415 = vmatpush1.msra.mxu0 0.0
    %2416 = vmatprep.subr.mxu0 0.0
    %2417 = vmatpush1.msra.mxu0 0.0
    %2418 = vmatprep.subr.mxu0 0.0
    %2419 = vmatpush1.msra.mxu0 0.0
    %2420 = vmatprep.subr.mxu0 0.0
    %2421 = vmatpush1.msra.mxu0 0.0
    %2422 = vmatprep.subr.mxu0 0.0
    %2423 = vmatpush1.msra.mxu0 0.0
    %2424 = vmatprep.subr.mxu0 0.0
    %2425 = vmatpush1.msra.mxu0 0.0
    %2426 = vmatprep.subr.mxu0 0.0
    %2427 = vmatpush1.msra.mxu0 0.0
    %2428 = vmatprep.subr.mxu0 0.0
    %2429 = vmatpush1.msra.mxu0 0.0
    %2430 = vmatprep.subr.mxu0 0.0
    %2431 = vmatpush1.msra.mxu0 0.0
    %2432 = vmatprep.subr.mxu0 0.0
    %2433 = vmatpush1.msra.mxu0 0.0
    %2434 = vmatprep.mubr.f32.mxu0 0.0
    %2435 = vmatmul.mubr.f32.gmra.mrb[0].mxu0 %v2369
    %v2436 = vpop.f32.mrb[0].mxu0
    %v2437 = vadd.f32 0.0, %v2436
    %v2438 = vpop.f32.mrb[0].mxu0
    %2439 = vdwg.mxu0
    %v2440 = vadd.f32 %v1068, %v2437
    %v2441 = vmul.f32 %v381, %v2080
    %2442 = vmatprep.subr.mxu0 0.0
    %2443 = vmatpush1.msra.mxu0 %v531
    %2444 = vmatprep.subr.mxu0 0.0
    %2445 = vmatpush1.msra.mxu0 %v532
    %2446 = vmatprep.subr.mxu0 0.0
    %2447 = vmatpush1.msra.mxu0 %v533
    %2448 = vmatprep.subr.mxu0 0.0
    %2449 = vmatpush1.msra.mxu0 %v534
    %2450 = vmatprep.subr.mxu0 0.0
    %2451 = vmatpush1.msra.mxu0 %v535
    %2452 = vmatprep.subr.mxu0 0.0
    %2453 = vmatpush1.msra.mxu0 %v536
    %2454 = vmatprep.subr.mxu0 0.0
    %2455 = vmatpush1.msra.mxu0 %v537
    %2456 = vmatprep.subr.mxu0 0.0
    %2457 = vmatpush1.msra.mxu0 %v538
    %2458 = vmatprep.subr.mxu0 0.0
    %2459 = vmatpush1.msra.mxu0 %v539
    %2460 = vmatprep.subr.mxu0 0.0
    %2461 = vmatpush1.msra.mxu0 %v540
    %2462 = vmatprep.subr.mxu0 0.0
    %2463 = vmatpush1.msra.mxu0 %v541
    %2464 = vmatprep.subr.mxu0 0.0
    %2465 = vmatpush1.msra.mxu0 %v542
    %2466 = vmatprep.subr.mxu0 0.0
    %2467 = vmatpush1.msra.mxu0 %v543
    %2468 = vmatprep.subr.mxu0 0.0
    %2469 = vmatpush1.msra.mxu0 %v544
    %2470 = vmatprep.subr.mxu0 0.0
    %2471 = vmatpush1.msra.mxu0 %v545
    %2472 = vmatprep.subr.mxu0 0.0
    %2473 = vmatpush1.msra.mxu0 %v546
    %2474 = vmatprep.subr.mxu0 0.0
    %2475 = vmatpush1.msra.mxu0 0.0
    %2476 = vmatprep.subr.mxu0 0.0
    %2477 = vmatpush1.msra.mxu0 0.0
    %2478 = vmatprep.subr.mxu0 0.0
    %2479 = vmatpush1.msra.mxu0 0.0
    %2480 = vmatprep.subr.mxu0 0.0
    %2481 = vmatpush1.msra.mxu0 0.0
    %2482 = vmatprep.subr.mxu0 0.0
    %2483 = vmatpush1.msra.mxu0 0.0
    %2484 = vmatprep.subr.mxu0 0.0
    %2485 = vmatpush1.msra.mxu0 0.0
    %2486 = vmatprep.subr.mxu0 0.0
    %2487 = vmatpush1.msra.mxu0 0.0
    %2488 = vmatprep.subr.mxu0 0.0
    %2489 = vmatpush1.msra.mxu0 0.0
    %2490 = vmatprep.subr.mxu0 0.0
    %2491 = vmatpush1.msra.mxu0 0.0
    %2492 = vmatprep.subr.mxu0 0.0
    %2493 = vmatpush1.msra.mxu0 0.0
    %2494 = vmatprep.subr.mxu0 0.0
    %2495 = vmatpush1.msra.mxu0 0.0
    %2496 = vmatprep.subr.mxu0 0.0
    %2497 = vmatpush1.msra.mxu0 0.0
    %2498 = vmatprep.subr.mxu0 0.0
    %2499 = vmatpush1.msra.mxu0 0.0
    %2500 = vmatprep.subr.mxu0 0.0
    %2501 = vmatpush1.msra.mxu0 0.0
    %2502 = vmatprep.subr.mxu0 0.0
    %2503 = vmatpush1.msra.mxu0 0.0
    %2504 = vmatprep.subr.mxu0 0.0
    %2505 = vmatpush1.msra.mxu0 0.0
    %2506 = vmatprep.mubr.f32.mxu0 0.0
    %2507 = vmatmul.mubr.f32.gmra.mrb[0].mxu0 %v2441
    %v2508 = vpop.f32.mrb[0].mxu0
    %v2509 = vadd.f32 0.0, %v2508
    %v2510 = vpop.f32.mrb[0].mxu0
    %2511 = vdwg.mxu0
    %v2512 = vadd.f32 %v1139, %v2509
    %v2513 = vmul.f32 %v450, %v2080
    %2514 = vmatprep.subr.mxu0 0.0
    %2515 = vmatpush1.msra.mxu0 %v531
    %2516 = vmatprep.subr.mxu0 0.0
    %2517 = vmatpush1.msra.mxu0 %v532
    %2518 = vmatprep.subr.mxu0 0.0
    %2519 = vmatpush1.msra.mxu0 %v533
    %2520 = vmatprep.subr.mxu0 0.0
    %2521 = vmatpush1.msra.mxu0 %v534
    %2522 = vmatprep.subr.mxu0 0.0
    %2523 = vmatpush1.msra.mxu0 %v535
    %2524 = vmatprep.subr.mxu0 0.0
    %2525 = vmatpush1.msra.mxu0 %v536
    %2526 = vmatprep.subr.mxu0 0.0
    %2527 = vmatpush1.msra.mxu0 %v537
    %2528 = vmatprep.subr.mxu0 0.0
    %2529 = vmatpush1.msra.mxu0 %v538
    %2530 = vmatprep.subr.mxu0 0.0
    %2531 = vmatpush1.msra.mxu0 %v539
    %2532 = vmatprep.subr.mxu0 0.0
    %2533 = vmatpush1.msra.mxu0 %v540
    %2534 = vmatprep.subr.mxu0 0.0
    %2535 = vmatpush1.msra.mxu0 %v541
    %2536 = vmatprep.subr.mxu0 0.0
    %2537 = vmatpush1.msra.mxu0 %v542
    %2538 = vmatprep.subr.mxu0 0.0
    %2539 = vmatpush1.msra.mxu0 %v543
    %2540 = vmatprep.subr.mxu0 0.0
    %2541 = vmatpush1.msra.mxu0 %v544
    %2542 = vmatprep.subr.mxu0 0.0
    %2543 = vmatpush1.msra.mxu0 %v545
    %2544 = vmatprep.subr.mxu0 0.0
    %2545 = vmatpush1.msra.mxu0 %v546
    %2546 = vmatprep.subr.mxu0 0.0
    %2547 = vmatpush1.msra.mxu0 0.0
    %2548 = vmatprep.subr.mxu0 0.0
    %2549 = vmatpush1.msra.mxu0 0.0
    %2550 = vmatprep.subr.mxu0 0.0
    %2551 = vmatpush1.msra.mxu0 0.0
    %2552 = vmatprep.subr.mxu0 0.0
    %2553 = vmatpush1.msra.mxu0 0.0
    %2554 = vmatprep.subr.mxu0 0.0
    %2555 = vmatpush1.msra.mxu0 0.0
    %2556 = vmatprep.subr.mxu0 0.0
    %2557 = vmatpush1.msra.mxu0 0.0
    %2558 = vmatprep.subr.mxu0 0.0
    %2559 = vmatpush1.msra.mxu0 0.0
    %2560 = vmatprep.subr.mxu0 0.0
    %2561 = vmatpush1.msra.mxu0 0.0
    %2562 = vmatprep.subr.mxu0 0.0
    %2563 = vmatpush1.msra.mxu0 0.0
    %2564 = vmatprep.subr.mxu0 0.0
    %2565 = vmatpush1.msra.mxu0 0.0
    %2566 = vmatprep.subr.mxu0 0.0
    %2567 = vmatpush1.msra.mxu0 0.0
    %2568 = vmatprep.subr.mxu0 0.0
    %2569 = vmatpush1.msra.mxu0 0.0
    %2570 = vmatprep.subr.mxu0 0.0
    %2571 = vmatpush1.msra.mxu0 0.0
    %2572 = vmatprep.subr.mxu0 0.0
    %2573 = vmatpush1.msra.mxu0 0.0
    %2574 = vmatprep.subr.mxu0 0.0
    %2575 = vmatpush1.msra.mxu0 0.0
    %2576 = vmatprep.subr.mxu0 0.0
    %2577 = vmatpush1.msra.mxu0 0.0
    %2578 = vmatprep.mubr.f32.mxu0 0.0
    %2579 = vmatmul.mubr.f32.gmra.mrb[0].mxu0 %v2513
    %v2580 = vpop.f32.mrb[0].mxu0
    %v2581 = vadd.f32 0.0, %v2580
    %v2582 = vpop.f32.mrb[0].mxu0
    %2583 = vdwg.mxu0
    %v2584 = vadd.f32 %v1210, %v2581
    %v2585 = vmul.f32 %v452, %v2080
    %2586 = vmatprep.subr.mxu0 0.0
    %2587 = vmatpush1.msra.mxu0 %v531
    %2588 = vmatprep.subr.mxu0 0.0
    %2589 = vmatpush1.msra.mxu0 %v532
    %2590 = vmatprep.subr.mxu0 0.0
    %2591 = vmatpush1.msra.mxu0 %v533
    %2592 = vmatprep.subr.mxu0 0.0
    %2593 = vmatpush1.msra.mxu0 %v534
    %2594 = vmatprep.subr.mxu0 0.0
    %2595 = vmatpush1.msra.mxu0 %v535
    %2596 = vmatprep.subr.mxu0 0.0
    %2597 = vmatpush1.msra.mxu0 %v536
    %2598 = vmatprep.subr.mxu0 0.0
    %2599 = vmatpush1.msra.mxu0 %v537
    %2600 = vmatprep.subr.mxu0 0.0
    %2601 = vmatpush1.msra.mxu0 %v538
    %2602 = vmatprep.subr.mxu0 0.0
    %2603 = vmatpush1.msra.mxu0 %v539
    %2604 = vmatprep.subr.mxu0 0.0
    %2605 = vmatpush1.msra.mxu0 %v540
    %2606 = vmatprep.subr.mxu0 0.0
    %2607 = vmatpush1.msra.mxu0 %v541
    %2608 = vmatprep.subr.mxu0 0.0
    %2609 = vmatpush1.msra.mxu0 %v542
    %2610 = vmatprep.subr.mxu0 0.0
    %2611 = vmatpush1.msra.mxu0 %v543
    %2612 = vmatprep.subr.mxu0 0.0
    %2613 = vmatpush1.msra.mxu0 %v544
    %2614 = vmatprep.subr.mxu0 0.0
    %2615 = vmatpush1.msra.mxu0 %v545
    %2616 = vmatprep.subr.mxu0 0.0
    %2617 = vmatpush1.msra.mxu0 %v546
    %2618 = vmatprep.subr.mxu0 0.0
    %2619 = vmatpush1.msra.mxu0 0.0
    %2620 = vmatprep.subr.mxu0 0.0
    %2621 = vmatpush1.msra.mxu0 0.0
    %2622 = vmatprep.subr.mxu0 0.0
    %2623 = vmatpush1.msra.mxu0 0.0
    %2624 = vmatprep.subr.mxu0 0.0
    %2625 = vmatpush1.msra.mxu0 0.0
    %2626 = vmatprep.subr.mxu0 0.0
    %2627 = vmatpush1.msra.mxu0 0.0
    %2628 = vmatprep.subr.mxu0 0.0
    %2629 = vmatpush1.msra.mxu0 0.0
    %2630 = vmatprep.subr.mxu0 0.0
    %2631 = vmatpush1.msra.mxu0 0.0
    %2632 = vmatprep.subr.mxu0 0.0
    %2633 = vmatpush1.msra.mxu0 0.0
    %2634 = vmatprep.subr.mxu0 0.0
    %2635 = vmatpush1.msra.mxu0 0.0
    %2636 = vmatprep.subr.mxu0 0.0
    %2637 = vmatpush1.msra.mxu0 0.0
    %2638 = vmatprep.subr.mxu0 0.0
    %2639 = vmatpush1.msra.mxu0 0.0
    %2640 = vmatprep.subr.mxu0 0.0
    %2641 = vmatpush1.msra.mxu0 0.0
    %2642 = vmatprep.subr.mxu0 0.0
    %2643 = vmatpush1.msra.mxu0 0.0
    %2644 = vmatprep.subr.mxu0 0.0
    %2645 = vmatpush1.msra.mxu0 0.0
    %2646 = vmatprep.subr.mxu0 0.0
    %2647 = vmatpush1.msra.mxu0 0.0
    %2648 = vmatprep.subr.mxu0 0.0
    %2649 = vmatpush1.msra.mxu0 0.0
    %2650 = vmatprep.mubr.f32.mxu0 0.0
    %2651 = vmatmul.mubr.f32.gmra.mrb[0].mxu0 %v2585
    %v2652 = vpop.f32.mrb[0].mxu0
    %v2653 = vadd.f32 0.0, %v2652
    %v2654 = vpop.f32.mrb[0].mxu0
    %2655 = vdwg.mxu0
    %v2656 = vadd.f32 %v1281, %v2653
    %v2657 = vmax.f32 %v2152, %v2224
    %v2658 = vmax.f32 %v2657, %v2296
    %v2659 = vmax.f32 %v2658, %v2368
    %v2660 = vmax.f32 %v2659, %v2440
    %v2661 = vmax.f32 %v2660, %v2512
    %v2662 = vmax.f32 %v2661, %v2584
    %v2663 = vmax.f32 %v2662, %v2656
    %v2664 = vsub.f32 %v2152, %v2663
    %v2665 = vmul.f32 %v2664, 1.442695
    %v2666 = vpow.pop %v2665
    %v2667 = vsub.f32 %v2224, %v2663
    %v2668 = vmul.f32 %v2667, 1.442695
    %v2669 = vpow.pop %v2668
    %v2670 = vsub.f32 %v2296, %v2663
    %v2671 = vmul.f32 %v2670, 1.442695
    %v2672 = vpow.pop %v2671
    %v2673 = vsub.f32 %v2368, %v2663
    %v2674 = vmul.f32 %v2673, 1.442695
    %v2675 = vpow.pop %v2674
    %v2676 = vsub.f32 %v2440, %v2663
    %v2677 = vmul.f32 %v2676, 1.442695
    %v2678 = vpow.pop %v2677
    %v2679 = vsub.f32 %v2512, %v2663
    %v2680 = vmul.f32 %v2679, 1.442695
    %v2681 = vpow.pop %v2680
    %v2682 = vsub.f32 %v2584, %v2663
    %v2683 = vmul.f32 %v2682, 1.442695
    %v2684 = vpow.pop %v2683
    %v2685 = vsub.f32 %v2656, %v2663
    %v2686 = vmul.f32 %v2685, 1.442695
    %v2687 = vpow.pop %v2686
    %v2688 = vadd.f32 %v2666, %v2669
    %v2689 = vadd.f32 %v2688, %v2672
    %v2690 = vadd.f32 %v2689, %v2675
    %v2691 = vadd.f32 %v2690, %v2678
    %v2692 = vadd.f32 %v2691, %v2681
    %v2693 = vadd.f32 %v2692, %v2684
    %v2694 = vadd.f32 %v2693, %v2687
    %v2695 = vrcp.pop %v2694
    %v2696 = vmul.f32 %v2666, %v2695
    %v2698 = vsel %vm637, %v2696, 0
    %2700 = vmatprep.subr.mxu0 0.0
    %2701 = vmatpush1.msra.mxu0 %v643
    %2702 = vmatprep.subr.mxu0 0.0
    %2703 = vmatpush1.msra.mxu0 0.0
    %2704 = vmatprep.subr.mxu0 0.0
    %2705 = vmatpush1.msra.mxu0 0.0
    %2706 = vmatprep.subr.mxu0 0.0
    %2707 = vmatpush1.msra.mxu0 0.0
    %2708 = vmatprep.subr.mxu0 0.0
    %2709 = vmatpush1.msra.mxu0 0.0
    %2710 = vmatprep.subr.mxu0 0.0
    %2711 = vmatpush1.msra.mxu0 0.0
    %2712 = vmatprep.subr.mxu0 0.0
    %2713 = vmatpush1.msra.mxu0 0.0
    %2714 = vmatprep.subr.mxu0 0.0
    %2715 = vmatpush1.msra.mxu0 0.0
    %2716 = vmatprep.subr.mxu0 0.0
    %2717 = vmatpush1.msra.mxu0 0.0
    %2718 = vmatprep.subr.mxu0 0.0
    %2719 = vmatpush1.msra.mxu0 0.0
    %2720 = vmatprep.subr.mxu0 0.0
    %2721 = vmatpush1.msra.mxu0 0.0
    %2722 = vmatprep.subr.mxu0 0.0
    %2723 = vmatpush1.msra.mxu0 0.0
    %2724 = vmatprep.subr.mxu0 0.0
    %2725 = vmatpush1.msra.mxu0 0.0
    %2726 = vmatprep.subr.mxu0 0.0
    %2727 = vmatpush1.msra.mxu0 0.0
    %2728 = vmatprep.subr.mxu0 0.0
    %2729 = vmatpush1.msra.mxu0 0.0
    %2730 = vmatprep.subr.mxu0 0.0
    %2731 = vmatpush1.msra.mxu0 0.0
    %2732 = vmatprep.subr.mxu0 0.0
    %2733 = vmatpush1.msra.mxu0 0.0
    %2734 = vmatprep.subr.mxu0 0.0
    %2735 = vmatpush1.msra.mxu0 0.0
    %2736 = vmatprep.subr.mxu0 0.0
    %2737 = vmatpush1.msra.mxu0 0.0
    %2738 = vmatprep.subr.mxu0 0.0
    %2739 = vmatpush1.msra.mxu0 0.0
    %2740 = vmatprep.subr.mxu0 0.0
    %2741 = vmatpush1.msra.mxu0 0.0
    %2742 = vmatprep.subr.mxu0 0.0
    %2743 = vmatpush1.msra.mxu0 0.0
    %2744 = vmatprep.subr.mxu0 0.0
    %2745 = vmatpush1.msra.mxu0 0.0
    %2746 = vmatprep.subr.mxu0 0.0
    %2747 = vmatpush1.msra.mxu0 0.0
    %2748 = vmatprep.subr.mxu0 0.0
    %2749 = vmatpush1.msra.mxu0 0.0
    %2750 = vmatprep.subr.mxu0 0.0
    %2751 = vmatpush1.msra.mxu0 0.0
    %2752 = vmatprep.subr.mxu0 0.0
    %2753 = vmatpush1.msra.mxu0 0.0
    %2754 = vmatprep.subr.mxu0 0.0
    %2755 = vmatpush1.msra.mxu0 0.0
    %2756 = vmatprep.subr.mxu0 0.0
    %2757 = vmatpush1.msra.mxu0 0.0
    %2758 = vmatprep.subr.mxu0 0.0
    %2759 = vmatpush1.msra.mxu0 0.0
    %2760 = vmatprep.subr.mxu0 0.0
    %2761 = vmatpush1.msra.mxu0 0.0
    %2762 = vmatprep.subr.mxu0 0.0
    %2763 = vmatpush1.msra.mxu0 0.0
    %2764 = vmatprep.mubr.f32.mxu0 0.0
    %2765 = vmatmul.mubr.f32.gmra.mrb[0].mxu0 %v2698
    %v2766 = vpop.f32.mrb[0].mxu0
    %v2767 = vadd.f32 0.0, %v2766
    %v2768 = vpop.f32.mrb[0].mxu0
    %2769 = vdwg.mxu0
    %v2770 = vmul.f32 %v2767, %v237
    %v2771 = vadd.f32 %v2770, 0.0
    %v2772 = vmul.f32 %v2669, %v2695
    %v2774 = vsel %vm637, %v2772, 0
    %2776 = vmatprep.subr.mxu0 0.0
    %2777 = vmatpush1.msra.mxu0 %v643
    %2778 = vmatprep.subr.mxu0 0.0
    %2779 = vmatpush1.msra.mxu0 0.0
    %2780 = vmatprep.subr.mxu0 0.0
    %2781 = vmatpush1.msra.mxu0 0.0
    %2782 = vmatprep.subr.mxu0 0.0
    %2783 = vmatpush1.msra.mxu0 0.0
    %2784 = vmatprep.subr.mxu0 0.0
    %2785 = vmatpush1.msra.mxu0 0.0
    %2786 = vmatprep.subr.mxu0 0.0
    %2787 = vmatpush1.msra.mxu0 0.0
    %2788 = vmatprep.subr.mxu0 0.0
    %2789 = vmatpush1.msra.mxu0 0.0
    %2790 = vmatprep.subr.mxu0 0.0
    %2791 = vmatpush1.msra.mxu0 0.0
    %2792 = vmatprep.subr.mxu0 0.0
    %2793 = vmatpush1.msra.mxu0 0.0
    %2794 = vmatprep.subr.mxu0 0.0
    %2795 = vmatpush1.msra.mxu0 0.0
    %2796 = vmatprep.subr.mxu0 0.0
    %2797 = vmatpush1.msra.mxu0 0.0
    %2798 = vmatprep.subr.mxu0 0.0
    %2799 = vmatpush1.msra.mxu0 0.0
    %2800 = vmatprep.subr.mxu0 0.0
    %2801 = vmatpush1.msra.mxu0 0.0
    %2802 = vmatprep.subr.mxu0 0.0
    %2803 = vmatpush1.msra.mxu0 0.0
    %2804 = vmatprep.subr.mxu0 0.0
    %2805 = vmatpush1.msra.mxu0 0.0
    %2806 = vmatprep.subr.mxu0 0.0
    %2807 = vmatpush1.msra.mxu0 0.0
    %2808 = vmatprep.subr.mxu0 0.0
    %2809 = vmatpush1.msra.mxu0 0.0
    %2810 = vmatprep.subr.mxu0 0.0
    %2811 = vmatpush1.msra.mxu0 0.0
    %2812 = vmatprep.subr.mxu0 0.0
    %2813 = vmatpush1.msra.mxu0 0.0
    %2814 = vmatprep.subr.mxu0 0.0
    %2815 = vmatpush1.msra.mxu0 0.0
    %2816 = vmatprep.subr.mxu0 0.0
    %2817 = vmatpush1.msra.mxu0 0.0
    %2818 = vmatprep.subr.mxu0 0.0
    %2819 = vmatpush1.msra.mxu0 0.0
    %2820 = vmatprep.subr.mxu0 0.0
    %2821 = vmatpush1.msra.mxu0 0.0
    %2822 = vmatprep.subr.mxu0 0.0
    %2823 = vmatpush1.msra.mxu0 0.0
    %2824 = vmatprep.subr.mxu0 0.0
    %2825 = vmatpush1.msra.mxu0 0.0
    %2826 = vmatprep.subr.mxu0 0.0
    %2827 = vmatpush1.msra.mxu0 0.0
    %2828 = vmatprep.subr.mxu0 0.0
    %2829 = vmatpush1.msra.mxu0 0.0
    %2830 = vmatprep.subr.mxu0 0.0
    %2831 = vmatpush1.msra.mxu0 0.0
    %2832 = vmatprep.subr.mxu0 0.0
    %2833 = vmatpush1.msra.mxu0 0.0
    %2834 = vmatprep.subr.mxu0 0.0
    %2835 = vmatpush1.msra.mxu0 0.0
    %2836 = vmatprep.subr.mxu0 0.0
    %2837 = vmatpush1.msra.mxu0 0.0
    %2838 = vmatprep.subr.mxu0 0.0
    %2839 = vmatpush1.msra.mxu0 0.0
    %2840 = vmatprep.mubr.f32.mxu0 0.0
    %2841 = vmatmul.mubr.f32.gmra.mrb[0].mxu0 %v2774
    %v2842 = vpop.f32.mrb[0].mxu0
    %v2843 = vadd.f32 0.0, %v2842
    %v2844 = vpop.f32.mrb[0].mxu0
    %2845 = vdwg.mxu0
    %v2846 = vmul.f32 %v2843, %v239
    %v2847 = vadd.f32 %v2771, %v2846
    %v2848 = vmul.f32 %v2672, %v2695
    %v2850 = vsel %vm637, %v2848, 0
    %2852 = vmatprep.subr.mxu0 0.0
    %2853 = vmatpush1.msra.mxu0 %v643
    %2854 = vmatprep.subr.mxu0 0.0
    %2855 = vmatpush1.msra.mxu0 0.0
    %2856 = vmatprep.subr.mxu0 0.0
    %2857 = vmatpush1.msra.mxu0 0.0
    %2858 = vmatprep.subr.mxu0 0.0
    %2859 = vmatpush1.msra.mxu0 0.0
    %2860 = vmatprep.subr.mxu0 0.0
    %2861 = vmatpush1.msra.mxu0 0.0
    %2862 = vmatprep.subr.mxu0 0.0
    %2863 = vmatpush1.msra.mxu0 0.0
    %2864 = vmatprep.subr.mxu0 0.0
    %2865 = vmatpush1.msra.mxu0 0.0
    %2866 = vmatprep.subr.mxu0 0.0
    %2867 = vmatpush1.msra.mxu0 0.0
    %2868 = vmatprep.subr.mxu0 0.0
    %2869 = vmatpush1.msra.mxu0 0.0
    %2870 = vmatprep.subr.mxu0 0.0
    %2871 = vmatpush1.msra.mxu0 0.0
    %2872 = vmatprep.subr.mxu0 0.0
    %2873 = vmatpush1.msra.mxu0 0.0
    %2874 = vmatprep.subr.mxu0 0.0
    %2875 = vmatpush1.msra.mxu0 0.0
    %2876 = vmatprep.subr.mxu0 0.0
    %2877 = vmatpush1.msra.mxu0 0.0
    %2878 = vmatprep.subr.mxu0 0.0
    %2879 = vmatpush1.msra.mxu0 0.0
    %2880 = vmatprep.subr.mxu0 0.0
    %2881 = vmatpush1.msra.mxu0 0.0
    %2882 = vmatprep.subr.mxu0 0.0
    %2883 = vmatpush1.msra.mxu0 0.0
    %2884 = vmatprep.subr.mxu0 0.0
    %2885 = vmatpush1.msra.mxu0 0.0
    %2886 = vmatprep.subr.mxu0 0.0
    %2887 = vmatpush1.msra.mxu0 0.0
    %2888 = vmatprep.subr.mxu0 0.0
    %2889 = vmatpush1.msra.mxu0 0.0
    %2890 = vmatprep.subr.mxu0 0.0
    %2891 = vmatpush1.msra.mxu0 0.0
    %2892 = vmatprep.subr.mxu0 0.0
    %2893 = vmatpush1.msra.mxu0 0.0
    %2894 = vmatprep.subr.mxu0 0.0
    %2895 = vmatpush1.msra.mxu0 0.0
    %2896 = vmatprep.subr.mxu0 0.0
    %2897 = vmatpush1.msra.mxu0 0.0
    %2898 = vmatprep.subr.mxu0 0.0
    %2899 = vmatpush1.msra.mxu0 0.0
    %2900 = vmatprep.subr.mxu0 0.0
    %2901 = vmatpush1.msra.mxu0 0.0
    %2902 = vmatprep.subr.mxu0 0.0
    %2903 = vmatpush1.msra.mxu0 0.0
    %2904 = vmatprep.subr.mxu0 0.0
    %2905 = vmatpush1.msra.mxu0 0.0
    %2906 = vmatprep.subr.mxu0 0.0
    %2907 = vmatpush1.msra.mxu0 0.0
    %2908 = vmatprep.subr.mxu0 0.0
    %2909 = vmatpush1.msra.mxu0 0.0
    %2910 = vmatprep.subr.mxu0 0.0
    %2911 = vmatpush1.msra.mxu0 0.0
    %2912 = vmatprep.subr.mxu0 0.0
    %2913 = vmatpush1.msra.mxu0 0.0
    %2914 = vmatprep.subr.mxu0 0.0
    %2915 = vmatpush1.msra.mxu0 0.0
    %2916 = vmatprep.mubr.f32.mxu0 0.0
    %2917 = vmatmul.mubr.f32.gmra.mrb[0].mxu0 %v2850
    %v2918 = vpop.f32.mrb[0].mxu0
    %v2919 = vadd.f32 0.0, %v2918
    %v2920 = vpop.f32.mrb[0].mxu0
    %2921 = vdwg.mxu0
    %v2922 = vmul.f32 %v2919, %v308
    %v2923 = vadd.f32 %v2847, %v2922
    %v2924 = vmul.f32 %v2675, %v2695
    %v2926 = vsel %vm637, %v2924, 0
    %2928 = vmatprep.subr.mxu0 0.0
    %2929 = vmatpush1.msra.mxu0 %v643
    %2930 = vmatprep.subr.mxu0 0.0
    %2931 = vmatpush1.msra.mxu0 0.0
    %2932 = vmatprep.subr.mxu0 0.0
    %2933 = vmatpush1.msra.mxu0 0.0
    %2934 = vmatprep.subr.mxu0 0.0
    %2935 = vmatpush1.msra.mxu0 0.0
    %2936 = vmatprep.subr.mxu0 0.0
    %2937 = vmatpush1.msra.mxu0 0.0
    %2938 = vmatprep.subr.mxu0 0.0
    %2939 = vmatpush1.msra.mxu0 0.0
    %2940 = vmatprep.subr.mxu0 0.0
    %2941 = vmatpush1.msra.mxu0 0.0
    %2942 = vmatprep.subr.mxu0 0.0
    %2943 = vmatpush1.msra.mxu0 0.0
    %2944 = vmatprep.subr.mxu0 0.0
    %2945 = vmatpush1.msra.mxu0 0.0
    %2946 = vmatprep.subr.mxu0 0.0
    %2947 = vmatpush1.msra.mxu0 0.0
    %2948 = vmatprep.subr.mxu0 0.0
    %2949 = vmatpush1.msra.mxu0 0.0
    %2950 = vmatprep.subr.mxu0 0.0
    %2951 = vmatpush1.msra.mxu0 0.0
    %2952 = vmatprep.subr.mxu0 0.0
    %2953 = vmatpush1.msra.mxu0 0.0
    %2954 = vmatprep.subr.mxu0 0.0
    %2955 = vmatpush1.msra.mxu0 0.0
    %2956 = vmatprep.subr.mxu0 0.0
    %2957 = vmatpush1.msra.mxu0 0.0
    %2958 = vmatprep.subr.mxu0 0.0
    %2959 = vmatpush1.msra.mxu0 0.0
    %2960 = vmatprep.subr.mxu0 0.0
    %2961 = vmatpush1.msra.mxu0 0.0
    %2962 = vmatprep.subr.mxu0 0.0
    %2963 = vmatpush1.msra.mxu0 0.0
    %2964 = vmatprep.subr.mxu0 0.0
    %2965 = vmatpush1.msra.mxu0 0.0
    %2966 = vmatprep.subr.mxu0 0.0
    %2967 = vmatpush1.msra.mxu0 0.0
    %2968 = vmatprep.subr.mxu0 0.0
    %2969 = vmatpush1.msra.mxu0 0.0
    %2970 = vmatprep.subr.mxu0 0.0
    %2971 = vmatpush1.msra.mxu0 0.0
    %2972 = vmatprep.subr.mxu0 0.0
    %2973 = vmatpush1.msra.mxu0 0.0
    %2974 = vmatprep.subr.mxu0 0.0
    %2975 = vmatpush1.msra.mxu0 0.0
    %2976 = vmatprep.subr.mxu0 0.0
    %2977 = vmatpush1.msra.mxu0 0.0
    %2978 = vmatprep.subr.mxu0 0.0
    %2979 = vmatpush1.msra.mxu0 0.0
    %2980 = vmatprep.subr.mxu0 0.0
    %2981 = vmatpush1.msra.mxu0 0.0
    %2982 = vmatprep.subr.mxu0 0.0
    %2983 = vmatpush1.msra.mxu0 0.0
    %2984 = vmatprep.subr.mxu0 0.0
    %2985 = vmatpush1.msra.mxu0 0.0
    %2986 = vmatprep.subr.mxu0 0.0
    %2987 = vmatpush1.msra.mxu0 0.0
    %2988 = vmatprep.subr.mxu0 0.0
    %2989 = vmatpush1.msra.mxu0 0.0
    %2990 = vmatprep.subr.mxu0 0.0
    %2991 = vmatpush1.msra.mxu0 0.0
    %2992 = vmatprep.mubr.f32.mxu0 0.0
    %2993 = vmatmul.mubr.f32.gmra.mrb[0].mxu0 %v2926
    %v2994 = vpop.f32.mrb[0].mxu0
    %v2995 = vadd.f32 0.0, %v2994
    %v2996 = vpop.f32.mrb[0].mxu0
    %2997 = vdwg.mxu0
    %v2998 = vmul.f32 %v2995, %v310
    %v2999 = vadd.f32 %v2923, %v2998
    %v3000 = vmul.f32 %v2678, %v2695
    %v3002 = vsel %vm637, %v3000, 0
    %3004 = vmatprep.subr.mxu0 0.0
    %3005 = vmatpush1.msra.mxu0 %v643
    %3006 = vmatprep.subr.mxu0 0.0
    %3007 = vmatpush1.msra.mxu0 0.0
    %3008 = vmatprep.subr.mxu0 0.0
    %3009 = vmatpush1.msra.mxu0 0.0
    %3010 = vmatprep.subr.mxu0 0.0
    %3011 = vmatpush1.msra.mxu0 0.0
    %3012 = vmatprep.subr.mxu0 0.0
    %3013 = vmatpush1.msra.mxu0 0.0
    %3014 = vmatprep.subr.mxu0 0.0
    %3015 = vmatpush1.msra.mxu0 0.0
    %3016 = vmatprep.subr.mxu0 0.0
    %3017 = vmatpush1.msra.mxu0 0.0
    %3018 = vmatprep.subr.mxu0 0.0
    %3019 = vmatpush1.msra.mxu0 0.0
    %3020 = vmatprep.subr.mxu0 0.0
    %3021 = vmatpush1.msra.mxu0 0.0
    %3022 = vmatprep.subr.mxu0 0.0
    %3023 = vmatpush1.msra.mxu0 0.0
    %3024 = vmatprep.subr.mxu0 0.0
    %3025 = vmatpush1.msra.mxu0 0.0
    %3026 = vmatprep.subr.mxu0 0.0
    %3027 = vmatpush1.msra.mxu0 0.0
    %3028 = vmatprep.subr.mxu0 0.0
    %3029 = vmatpush1.msra.mxu0 0.0
    %3030 = vmatprep.subr.mxu0 0.0
    %3031 = vmatpush1.msra.mxu0 0.0
    %3032 = vmatprep.subr.mxu0 0.0
    %3033 = vmatpush1.msra.mxu0 0.0
    %3034 = vmatprep.subr.mxu0 0.0
    %3035 = vmatpush1.msra.mxu0 0.0
    %3036 = vmatprep.subr.mxu0 0.0
    %3037 = vmatpush1.msra.mxu0 0.0
    %3038 = vmatprep.subr.mxu0 0.0
    %3039 = vmatpush1.msra.mxu0 0.0
    %3040 = vmatprep.subr.mxu0 0.0
    %3041 = vmatpush1.msra.mxu0 0.0
    %3042 = vmatprep.subr.mxu0 0.0
    %3043 = vmatpush1.msra.mxu0 0.0
    %3044 = vmatprep.subr.mxu0 0.0
    %3045 = vmatpush1.msra.mxu0 0.0
    %3046 = vmatprep.subr.mxu0 0.0
    %3047 = vmatpush1.msra.mxu0 0.0
    %3048 = vmatprep.subr.mxu0 0.0
    %3049 = vmatpush1.msra.mxu0 0.0
    %3050 = vmatprep.subr.mxu0 0.0
    %3051 = vmatpush1.msra.mxu0 0.0
    %3052 = vmatprep.subr.mxu0 0.0
    %3053 = vmatpush1.msra.mxu0 0.0
    %3054 = vmatprep.subr.mxu0 0.0
    %3055 = vmatpush1.msra.mxu0 0.0
    %3056 = vmatprep.subr.mxu0 0.0
    %3057 = vmatpush1.msra.mxu0 0.0
    %3058 = vmatprep.subr.mxu0 0.0
    %3059 = vmatpush1.msra.mxu0 0.0
    %3060 = vmatprep.subr.mxu0 0.0
    %3061 = vmatpush1.msra.mxu0 0.0
    %3062 = vmatprep.subr.mxu0 0.0
    %3063 = vmatpush1.msra.mxu0 0.0
    %3064 = vmatprep.subr.mxu0 0.0
    %3065 = vmatpush1.msra.mxu0 0.0
    %3066 = vmatprep.subr.mxu0 0.0
    %3067 = vmatpush1.msra.mxu0 0.0
    %3068 = vmatprep.mubr.f32.mxu0 0.0
    %3069 = vmatmul.mubr.f32.gmra.mrb[0].mxu0 %v3002
    %v3070 = vpop.f32.mrb[0].mxu0
    %v3071 = vadd.f32 0.0, %v3070
    %v3072 = vpop.f32.mrb[0].mxu0
    %3073 = vdwg.mxu0
    %v3074 = vmul.f32 %v3071, %v379
    %v3075 = vadd.f32 %v2999, %v3074
    %v3076 = vmul.f32 %v2681, %v2695
    %v3078 = vsel %vm637, %v3076, 0
    %3080 = vmatprep.subr.mxu0 0.0
    %3081 = vmatpush1.msra.mxu0 %v643
    %3082 = vmatprep.subr.mxu0 0.0
    %3083 = vmatpush1.msra.mxu0 0.0
    %3084 = vmatprep.subr.mxu0 0.0
    %3085 = vmatpush1.msra.mxu0 0.0
    %3086 = vmatprep.subr.mxu0 0.0
    %3087 = vmatpush1.msra.mxu0 0.0
    %3088 = vmatprep.subr.mxu0 0.0
    %3089 = vmatpush1.msra.mxu0 0.0
    %3090 = vmatprep.subr.mxu0 0.0
    %3091 = vmatpush1.msra.mxu0 0.0
    %3092 = vmatprep.subr.mxu0 0.0
    %3093 = vmatpush1.msra.mxu0 0.0
    %3094 = vmatprep.subr.mxu0 0.0
    %3095 = vmatpush1.msra.mxu0 0.0
    %3096 = vmatprep.subr.mxu0 0.0
    %3097 = vmatpush1.msra.mxu0 0.0
    %3098 = vmatprep.subr.mxu0 0.0
    %3099 = vmatpush1.msra.mxu0 0.0
    %3100 = vmatprep.subr.mxu0 0.0
    %3101 = vmatpush1.msra.mxu0 0.0
    %3102 = vmatprep.subr.mxu0 0.0
    %3103 = vmatpush1.msra.mxu0 0.0
    %3104 = vmatprep.subr.mxu0 0.0
    %3105 = vmatpush1.msra.mxu0 0.0
    %3106 = vmatprep.subr.mxu0 0.0
    %3107 = vmatpush1.msra.mxu0 0.0
    %3108 = vmatprep.subr.mxu0 0.0
    %3109 = vmatpush1.msra.mxu0 0.0
    %3110 = vmatprep.subr.mxu0 0.0
    %3111 = vmatpush1.msra.mxu0 0.0
    %3112 = vmatprep.subr.mxu0 0.0
    %3113 = vmatpush1.msra.mxu0 0.0
    %3114 = vmatprep.subr.mxu0 0.0
    %3115 = vmatpush1.msra.mxu0 0.0
    %3116 = vmatprep.subr.mxu0 0.0
    %3117 = vmatpush1.msra.mxu0 0.0
    %3118 = vmatprep.subr.mxu0 0.0
    %3119 = vmatpush1.msra.mxu0 0.0
    %3120 = vmatprep.subr.mxu0 0.0
    %3121 = vmatpush1.msra.mxu0 0.0
    %3122 = vmatprep.subr.mxu0 0.0
    %3123 = vmatpush1.msra.mxu0 0.0
    %3124 = vmatprep.subr.mxu0 0.0
    %3125 = vmatpush1.msra.mxu0 0.0
    %3126 = vmatprep.subr.mxu0 0.0
    %3127 = vmatpush1.msra.mxu0 0.0
    %3128 = vmatprep.subr.mxu0 0.0
    %3129 = vmatpush1.msra.mxu0 0.0
    %3130 = vmatprep.subr.mxu0 0.0
    %3131 = vmatpush1.msra.mxu0 0.0
    %3132 = vmatprep.subr.mxu0 0.0
    %3133 = vmatpush1.msra.mxu0 0.0
    %3134 = vmatprep.subr.mxu0 0.0
    %3135 = vmatpush1.msra.mxu0 0.0
    %3136 = vmatprep.subr.mxu0 0.0
    %3137 = vmatpush1.msra.mxu0 0.0
    %3138 = vmatprep.subr.mxu0 0.0
    %3139 = vmatpush1.msra.mxu0 0.0
    %3140 = vmatprep.subr.mxu0 0.0
    %3141 = vmatpush1.msra.mxu0 0.0
    %3142 = vmatprep.subr.mxu0 0.0
    %3143 = vmatpush1.msra.mxu0 0.0
    %3144 = vmatprep.mubr.f32.mxu0 0.0
    %3145 = vmatmul.mubr.f32.gmra.mrb[0].mxu0 %v3078
    %v3146 = vpop.f32.mrb[0].mxu0
    %v3147 = vadd.f32 0.0, %v3146
    %v3148 = vpop.f32.mrb[0].mxu0
    %3149 = vdwg.mxu0
    %v3150 = vmul.f32 %v3147, %v381
    %v3151 = vadd.f32 %v3075, %v3150
    %v3152 = vmul.f32 %v2684, %v2695
    %v3154 = vsel %vm637, %v3152, 0
    %3156 = vmatprep.subr.mxu0 0.0
    %3157 = vmatpush1.msra.mxu0 %v643
    %3158 = vmatprep.subr.mxu0 0.0
    %3159 = vmatpush1.msra.mxu0 0.0
    %3160 = vmatprep.subr.mxu0 0.0
    %3161 = vmatpush1.msra.mxu0 0.0
    %3162 = vmatprep.subr.mxu0 0.0
    %3163 = vmatpush1.msra.mxu0 0.0
    %3164 = vmatprep.subr.mxu0 0.0
    %3165 = vmatpush1.msra.mxu0 0.0
    %3166 = vmatprep.subr.mxu0 0.0
    %3167 = vmatpush1.msra.mxu0 0.0
    %3168 = vmatprep.subr.mxu0 0.0
    %3169 = vmatpush1.msra.mxu0 0.0
    %3170 = vmatprep.subr.mxu0 0.0
    %3171 = vmatpush1.msra.mxu0 0.0
    %3172 = vmatprep.subr.mxu0 0.0
    %3173 = vmatpush1.msra.mxu0 0.0
    %3174 = vmatprep.subr.mxu0 0.0
    %3175 = vmatpush1.msra.mxu0 0.0
    %3176 = vmatprep.subr.mxu0 0.0
    %3177 = vmatpush1.msra.mxu0 0.0
    %3178 = vmatprep.subr.mxu0 0.0
    %3179 = vmatpush1.msra.mxu0 0.0
    %3180 = vmatprep.subr.mxu0 0.0
    %3181 = vmatpush1.msra.mxu0 0.0
    %3182 = vmatprep.subr.mxu0 0.0
    %3183 = vmatpush1.msra.mxu0 0.0
    %3184 = vmatprep.subr.mxu0 0.0
    %3185 = vmatpush1.msra.mxu0 0.0
    %3186 = vmatprep.subr.mxu0 0.0
    %3187 = vmatpush1.msra.mxu0 0.0
    %3188 = vmatprep.subr.mxu0 0.0
    %3189 = vmatpush1.msra.mxu0 0.0
    %3190 = vmatprep.subr.mxu0 0.0
    %3191 = vmatpush1.msra.mxu0 0.0
    %3192 = vmatprep.subr.mxu0 0.0
    %3193 = vmatpush1.msra.mxu0 0.0
    %3194 = vmatprep.subr.mxu0 0.0
    %3195 = vmatpush1.msra.mxu0 0.0
    %3196 = vmatprep.subr.mxu0 0.0
    %3197 = vmatpush1.msra.mxu0 0.0
    %3198 = vmatprep.subr.mxu0 0.0
    %3199 = vmatpush1.msra.mxu0 0.0
    %3200 = vmatprep.subr.mxu0 0.0
    %3201 = vmatpush1.msra.mxu0 0.0
    %3202 = vmatprep.subr.mxu0 0.0
    %3203 = vmatpush1.msra.mxu0 0.0
    %3204 = vmatprep.subr.mxu0 0.0
    %3205 = vmatpush1.msra.mxu0 0.0
    %3206 = vmatprep.subr.mxu0 0.0
    %3207 = vmatpush1.msra.mxu0 0.0
    %3208 = vmatprep.subr.mxu0 0.0
    %3209 = vmatpush1.msra.mxu0 0.0
    %3210 = vmatprep.subr.mxu0 0.0
    %3211 = vmatpush1.msra.mxu0 0.0
    %3212 = vmatprep.subr.mxu0 0.0
    %3213 = vmatpush1.msra.mxu0 0.0
    %3214 = vmatprep.subr.mxu0 0.0
    %3215 = vmatpush1.msra.mxu0 0.0
    %3216 = vmatprep.subr.mxu0 0.0
    %3217 = vmatpush1.msra.mxu0 0.0
    %3218 = vmatprep.subr.mxu0 0.0
    %3219 = vmatpush1.msra.mxu0 0.0
    %3220 = vmatprep.mubr.f32.mxu0 0.0
    %3221 = vmatmul.mubr.f32.gmra.mrb[0].mxu0 %v3154
    %v3222 = vpop.f32.mrb[0].mxu0
    %v3223 = vadd.f32 0.0, %v3222
    %v3224 = vpop.f32.mrb[0].mxu0
    %3225 = vdwg.mxu0
    %v3226 = vmul.f32 %v3223, %v450
    %v3227 = vadd.f32 %v3151, %v3226
    %v3228 = vmul.f32 %v2687, %v2695
    %v3230 = vsel %vm637, %v3228, 0
    %3232 = vmatprep.subr.mxu0 0.0
    %3233 = vmatpush1.msra.mxu0 %v643
    %3234 = vmatprep.subr.mxu0 0.0
    %3235 = vmatpush1.msra.mxu0 0.0
    %3236 = vmatprep.subr.mxu0 0.0
    %3237 = vmatpush1.msra.mxu0 0.0
    %3238 = vmatprep.subr.mxu0 0.0
    %3239 = vmatpush1.msra.mxu0 0.0
    %3240 = vmatprep.subr.mxu0 0.0
    %3241 = vmatpush1.msra.mxu0 0.0
    %3242 = vmatprep.subr.mxu0 0.0
    %3243 = vmatpush1.msra.mxu0 0.0
    %3244 = vmatprep.subr.mxu0 0.0
    %3245 = vmatpush1.msra.mxu0 0.0
    %3246 = vmatprep.subr.mxu0 0.0
    %3247 = vmatpush1.msra.mxu0 0.0
    %3248 = vmatprep.subr.mxu0 0.0
    %3249 = vmatpush1.msra.mxu0 0.0
    %3250 = vmatprep.subr.mxu0 0.0
    %3251 = vmatpush1.msra.mxu0 0.0
    %3252 = vmatprep.subr.mxu0 0.0
    %3253 = vmatpush1.msra.mxu0 0.0
    %3254 = vmatprep.subr.mxu0 0.0
    %3255 = vmatpush1.msra.mxu0 0.0
    %3256 = vmatprep.subr.mxu0 0.0
    %3257 = vmatpush1.msra.mxu0 0.0
    %3258 = vmatprep.subr.mxu0 0.0
    %3259 = vmatpush1.msra.mxu0 0.0
    %3260 = vmatprep.subr.mxu0 0.0
    %3261 = vmatpush1.msra.mxu0 0.0
    %3262 = vmatprep.subr.mxu0 0.0
    %3263 = vmatpush1.msra.mxu0 0.0
    %3264 = vmatprep.subr.mxu0 0.0
    %3265 = vmatpush1.msra.mxu0 0.0
    %3266 = vmatprep.subr.mxu0 0.0
    %3267 = vmatpush1.msra.mxu0 0.0
    %3268 = vmatprep.subr.mxu0 0.0
    %3269 = vmatpush1.msra.mxu0 0.0
    %3270 = vmatprep.subr.mxu0 0.0
    %3271 = vmatpush1.msra.mxu0 0.0
    %3272 = vmatprep.subr.mxu0 0.0
    %3273 = vmatpush1.msra.mxu0 0.0
    %3274 = vmatprep.subr.mxu0 0.0
    %3275 = vmatpush1.msra.mxu0 0.0
    %3276 = vmatprep.subr.mxu0 0.0
    %3277 = vmatpush1.msra.mxu0 0.0
    %3278 = vmatprep.subr.mxu0 0.0
    %3279 = vmatpush1.msra.mxu0 0.0
    %3280 = vmatprep.subr.mxu0 0.0
    %3281 = vmatpush1.msra.mxu0 0.0
    %3282 = vmatprep.subr.mxu0 0.0
    %3283 = vmatpush1.msra.mxu0 0.0
    %3284 = vmatprep.subr.mxu0 0.0
    %3285 = vmatpush1.msra.mxu0 0.0
    %3286 = vmatprep.subr.mxu0 0.0
    %3287 = vmatpush1.msra.mxu0 0.0
    %3288 = vmatprep.subr.mxu0 0.0
    %3289 = vmatpush1.msra.mxu0 0.0
    %3290 = vmatprep.subr.mxu0 0.0
    %3291 = vmatpush1.msra.mxu0 0.0
    %3292 = vmatprep.subr.mxu0 0.0
    %3293 = vmatpush1.msra.mxu0 0.0
    %3294 = vmatprep.subr.mxu0 0.0
    %3295 = vmatpush1.msra.mxu0 0.0
    %3296 = vmatprep.mubr.f32.mxu0 0.0
    %3297 = vmatmul.mubr.f32.gmra.mrb[0].mxu0 %v3230
    %v3298 = vpop.f32.mrb[0].mxu0
    %v3299 = vadd.f32 0.0, %v3298
    %v3300 = vpop.f32.mrb[0].mxu0
    %3301 = vdwg.mxu0
    %v3302 = vmul.f32 %v3299, %v452
    %v3303 = vadd.f32 %v3227, %v3302
    %v3304 = vmul.f32 %v3303, %v3303
    %3305 = vmatprep.subr.mxu0 0.0
    %3306 = vmatpush1.msra.mxu0 %v531
    %3307 = vmatprep.subr.mxu0 0.0
    %3308 = vmatpush1.msra.mxu0 %v532
    %3309 = vmatprep.subr.mxu0 0.0
    %3310 = vmatpush1.msra.mxu0 %v533
    %3311 = vmatprep.subr.mxu0 0.0
    %3312 = vmatpush1.msra.mxu0 %v534
    %3313 = vmatprep.subr.mxu0 0.0
    %3314 = vmatpush1.msra.mxu0 %v535
    %3315 = vmatprep.subr.mxu0 0.0
    %3316 = vmatpush1.msra.mxu0 %v536
    %3317 = vmatprep.subr.mxu0 0.0
    %3318 = vmatpush1.msra.mxu0 %v537
    %3319 = vmatprep.subr.mxu0 0.0
    %3320 = vmatpush1.msra.mxu0 %v538
    %3321 = vmatprep.subr.mxu0 0.0
    %3322 = vmatpush1.msra.mxu0 %v539
    %3323 = vmatprep.subr.mxu0 0.0
    %3324 = vmatpush1.msra.mxu0 %v540
    %3325 = vmatprep.subr.mxu0 0.0
    %3326 = vmatpush1.msra.mxu0 %v541
    %3327 = vmatprep.subr.mxu0 0.0
    %3328 = vmatpush1.msra.mxu0 %v542
    %3329 = vmatprep.subr.mxu0 0.0
    %3330 = vmatpush1.msra.mxu0 %v543
    %3331 = vmatprep.subr.mxu0 0.0
    %3332 = vmatpush1.msra.mxu0 %v544
    %3333 = vmatprep.subr.mxu0 0.0
    %3334 = vmatpush1.msra.mxu0 %v545
    %3335 = vmatprep.subr.mxu0 0.0
    %3336 = vmatpush1.msra.mxu0 %v546
    %3337 = vmatprep.subr.mxu0 0.0
    %3338 = vmatpush1.msra.mxu0 0.0
    %3339 = vmatprep.subr.mxu0 0.0
    %3340 = vmatpush1.msra.mxu0 0.0
    %3341 = vmatprep.subr.mxu0 0.0
    %3342 = vmatpush1.msra.mxu0 0.0
    %3343 = vmatprep.subr.mxu0 0.0
    %3344 = vmatpush1.msra.mxu0 0.0
    %3345 = vmatprep.subr.mxu0 0.0
    %3346 = vmatpush1.msra.mxu0 0.0
    %3347 = vmatprep.subr.mxu0 0.0
    %3348 = vmatpush1.msra.mxu0 0.0
    %3349 = vmatprep.subr.mxu0 0.0
    %3350 = vmatpush1.msra.mxu0 0.0
    %3351 = vmatprep.subr.mxu0 0.0
    %3352 = vmatpush1.msra.mxu0 0.0
    %3353 = vmatprep.subr.mxu0 0.0
    %3354 = vmatpush1.msra.mxu0 0.0
    %3355 = vmatprep.subr.mxu0 0.0
    %3356 = vmatpush1.msra.mxu0 0.0
    %3357 = vmatprep.subr.mxu0 0.0
    %3358 = vmatpush1.msra.mxu0 0.0
    %3359 = vmatprep.subr.mxu0 0.0
    %3360 = vmatpush1.msra.mxu0 0.0
    %3361 = vmatprep.subr.mxu0 0.0
    %3362 = vmatpush1.msra.mxu0 0.0
    %3363 = vmatprep.subr.mxu0 0.0
    %3364 = vmatpush1.msra.mxu0 0.0
    %3365 = vmatprep.subr.mxu0 0.0
    %3366 = vmatpush1.msra.mxu0 0.0
    %3367 = vmatprep.subr.mxu0 0.0
    %3368 = vmatpush1.msra.mxu0 0.0
    %3369 = vmatprep.mubr.f32.mxu0 0.0
    %3370 = vmatmul.mubr.f32.gmra.mrb[0].mxu0 %v3304
    %v3371 = vpop.f32.mrb[0].mxu0
    %v3372 = vadd.f32 0.0, %v3371
    %v3373 = vpop.f32.mrb[0].mxu0
    %3374 = vdwg.mxu0
    %v3375 = vrsqrt.pop %v3372
    %v3376 = vmul.f32 %v3372, %v3375
    %v3377 = vadd.f32 %v3372, 1.0
    %v3378 = vrcp.pop %v3377
    %v3379 = vmul.f32 %v3376, %v3378
    %v3381 = vsel %vm637, %v3379, 0
    %3383 = vmatprep.subr.mxu0 0.0
    %3384 = vmatpush1.msra.mxu0 %v643
    %3385 = vmatprep.subr.mxu0 0.0
    %3386 = vmatpush1.msra.mxu0 0.0
    %3387 = vmatprep.subr.mxu0 0.0
    %3388 = vmatpush1.msra.mxu0 0.0
    %3389 = vmatprep.subr.mxu0 0.0
    %3390 = vmatpush1.msra.mxu0 0.0
    %3391 = vmatprep.subr.mxu0 0.0
    %3392 = vmatpush1.msra.mxu0 0.0
    %3393 = vmatprep.subr.mxu0 0.0
    %3394 = vmatpush1.msra.mxu0 0.0
    %3395 = vmatprep.subr.mxu0 0.0
    %3396 = vmatpush1.msra.mxu0 0.0
    %3397 = vmatprep.subr.mxu0 0.0
    %3398 = vmatpush1.msra.mxu0 0.0
    %3399 = vmatprep.subr.mxu0 0.0
    %3400 = vmatpush1.msra.mxu0 0.0
    %3401 = vmatprep.subr.mxu0 0.0
    %3402 = vmatpush1.msra.mxu0 0.0
    %3403 = vmatprep.subr.mxu0 0.0
    %3404 = vmatpush1.msra.mxu0 0.0
    %3405 = vmatprep.subr.mxu0 0.0
    %3406 = vmatpush1.msra.mxu0 0.0
    %3407 = vmatprep.subr.mxu0 0.0
    %3408 = vmatpush1.msra.mxu0 0.0
    %3409 = vmatprep.subr.mxu0 0.0
    %3410 = vmatpush1.msra.mxu0 0.0
    %3411 = vmatprep.subr.mxu0 0.0
    %3412 = vmatpush1.msra.mxu0 0.0
    %3413 = vmatprep.subr.mxu0 0.0
    %3414 = vmatpush1.msra.mxu0 0.0
    %3415 = vmatprep.subr.mxu0 0.0
    %3416 = vmatpush1.msra.mxu0 0.0
    %3417 = vmatprep.subr.mxu0 0.0
    %3418 = vmatpush1.msra.mxu0 0.0
    %3419 = vmatprep.subr.mxu0 0.0
    %3420 = vmatpush1.msra.mxu0 0.0
    %3421 = vmatprep.subr.mxu0 0.0
    %3422 = vmatpush1.msra.mxu0 0.0
    %3423 = vmatprep.subr.mxu0 0.0
    %3424 = vmatpush1.msra.mxu0 0.0
    %3425 = vmatprep.subr.mxu0 0.0
    %3426 = vmatpush1.msra.mxu0 0.0
    %3427 = vmatprep.subr.mxu0 0.0
    %3428 = vmatpush1.msra.mxu0 0.0
    %3429 = vmatprep.subr.mxu0 0.0
    %3430 = vmatpush1.msra.mxu0 0.0
    %3431 = vmatprep.subr.mxu0 0.0
    %3432 = vmatpush1.msra.mxu0 0.0
    %3433 = vmatprep.subr.mxu0 0.0
    %3434 = vmatpush1.msra.mxu0 0.0
    %3435 = vmatprep.subr.mxu0 0.0
    %3436 = vmatpush1.msra.mxu0 0.0
    %3437 = vmatprep.subr.mxu0 0.0
    %3438 = vmatpush1.msra.mxu0 0.0
    %3439 = vmatprep.subr.mxu0 0.0
    %3440 = vmatpush1.msra.mxu0 0.0
    %3441 = vmatprep.subr.mxu0 0.0
    %3442 = vmatpush1.msra.mxu0 0.0
    %3443 = vmatprep.subr.mxu0 0.0
    %3444 = vmatpush1.msra.mxu0 0.0
    %3445 = vmatprep.subr.mxu0 0.0
    %3446 = vmatpush1.msra.mxu0 0.0
    %3447 = vmatprep.mubr.f32.mxu0 0.0
    %3448 = vmatmul.mubr.f32.gmra.mrb[0].mxu0 %v3381
    %v3449 = vpop.f32.mrb[0].mxu0
    %v3450 = vadd.f32 0.0, %v3449
    %v3451 = vpop.f32.mrb[0].mxu0
    %3452 = vdwg.mxu0
    %v3453 = vmul.f32 %v3450, %v3303
    %3454 = vst [vmem:[#allocation7] sm:$0xff] %v3453
    // Predicated region
    $region18: #{tpu_custom_call.1} parent=1 // pred_check
      _
    $region19: #{tpu_custom_call.1} parent=1 // pred_check_branch
      %3456 = sbr.rel (0) target = $region21
    $region20: #{tpu_custom_call.1} parent=1 // pred_region
      %s3458 = ssub.s32 128, 128
      %3459 = vsyncadd [#allocation4], %s3458
      %s3461 = sshll.u32 [#allocation7], 4
      %s3462 = int_to_ptr.vmem [resolvable:$true] %s3461
      %3464 = dma.vmem_to_hbm [thread:$0]  %s3462, 128, %s2, [#allocation4]
    $region21: #{tpu_custom_call.1} parent=1 // pred_fallthru
      _
    // Predicated region
    $region22: #{tpu_custom_call.1} parent=1 // pred_check
      _
    $region23: #{tpu_custom_call.1} parent=1 // pred_check_branch
      %3466 = sbr.rel (0) target = $region25
    $region24: #{tpu_custom_call.1} parent=1 // pred_region
      %s3468 = ssub.s32 1024, 1024
      %3469 = vsyncadd [#allocation9], %s3468
      %s3471 = sshll.u32 [#allocation8], 4
      %s3472 = int_to_ptr.vmem [resolvable:$true] %s3471
      %3474 = dma.vmem_to_hbm [thread:$0]  %s3472, 1024, %s3, [#allocation9]
    $region25: #{tpu_custom_call.1} parent=1 // pred_fallthru
      _
    // Predicated region
    $region26: #{tpu_custom_call.1} parent=1 // pred_check
      _
    $region27: #{tpu_custom_call.1} parent=1 // pred_check_branch
      %3476 = sbr.rel (0) target = $region29
    $region28: #{tpu_custom_call.1} parent=1 // pred_region
      %3477 = dma.done [#allocation4], 128
    $region29: #{tpu_custom_call.1} parent=1 // pred_fallthru
      _
    // Predicated region
    $region30: #{tpu_custom_call.1} parent=1 // pred_check
      _
    $region31: #{tpu_custom_call.1} parent=1 // pred_check_branch
      %3479 = sbr.rel (0) target = $region33
    $region32: #{tpu_custom_call.1} parent=1 // pred_region
      %3480 = dma.done [#allocation9], 1024
    $region33: #{tpu_custom_call.1} parent=1 // pred_fallthru
      _
    %3481 = vsyncpa [#allocation3], 1
    %3482 = vsyncpa [#allocation6], 1
    %3483 = vsyncpa [#allocation4], 1
    %3484 = vsyncpa [#allocation9], 1

// kernel: tpu_custom_call.1
$region0: #{tpu_custom_call.1}
  #allocation0 [shape = 'u32[]', space=smem, size = 0x4, offset = 0x4, fixed_abs, tag = 'smem constant byte address 0x4 - core index']
  #allocation1 [shape = 'u32[144,128]{1,0:T(1,128)}', space=vmem, size = 0x12000, scoped, tag = 'internal scratch']
  %s0 = inlined_call_operand.hbm [shape: f32[8,128], index: 0, kind: input, shape index: {}]
  %s1 = inlined_call_operand.hbm [shape: f32[128,1024], index: 1, kind: input, shape index: {}]
  %s2 = inlined_call_operand.hbm [shape: f32[8,128], index: 2, kind: output, shape index: {0}]
  %s3 = inlined_call_operand.hbm [shape: f32[8,1024], index: 3, kind: output, shape index: {1}]
  %4 = xla_tuple %s2, %s3
  %s5 = sld [smem:[#allocation0]]
  $region34: #{tpu_custom_call.1} parent=0
    _
  %s7 = ssub.s32 1, %s5
  %s8 = scalar_select 0, %s7, %s5
  $region1: #{tpu_custom_call.1} parent=0
    #allocation2 [shape = 'u8[4096]{0}', space=vmem, size = 0x1000, scoped, tag = 'input window, operand 0, single buffered']
    #allocation3 [shape = 's32[1]{0}', space=sflag, size = 0x4, scoped, tag = 'scoped memory for tpu_custom_call.1']
    #allocation4 [shape = 's32[1]{0}', space=sflag, size = 0x4, scoped, tag = 'scoped memory for tpu_custom_call.1']
    #allocation5 [shape = 'u8[524288]{0}', space=vmem, size = 0x80000, scoped, tag = 'input window, operand 1, single buffered']
    #allocation6 [shape = 's32[1]{0}', space=sflag, size = 0x4, scoped, tag = 'scoped memory for tpu_custom_call.1']
    #allocation7 [shape = 'u8[4096]{0}', space=vmem, size = 0x1000, scoped, tag = 'output window, operand 0, single buffered']
    #allocation8 [shape = 'u8[32768]{0}', space=vmem, size = 0x8000, scoped, tag = 'output window, operand 1, single buffered']
    #allocation9 [shape = 's32[1]{0}', space=sflag, size = 0x4, scoped, tag = 'scoped memory for tpu_custom_call.1']
    %9 = vsyncpa [#allocation3], 0
    %10 = vsyncpa [#allocation6], 0
    %11 = vsyncpa [#allocation4], 0
    %12 = vsyncpa [#allocation9], 0
    // Predicated region
    $region2: #{tpu_custom_call.1} parent=1 // pred_check
      _
    $region3: #{tpu_custom_call.1} parent=1 // pred_check_branch
      %14 = sbr.rel (0) target = $region5
    $region4: #{tpu_custom_call.1} parent=1 // pred_region
      %s16 = ssub.s32 128, 128
      %17 = vsyncadd [#allocation3], %s16
      %s19 = sshll.u32 [#allocation2], 4
      %s20 = int_to_ptr.vmem [resolvable:$true] %s19
      %22 = dma.hbm_to_vmem [thread:$0]  %s0, 128, %s20, [#allocation3]
    $region5: #{tpu_custom_call.1} parent=1 // pred_fallthru
      _
    // Predicated region
    $region6: #{tpu_custom_call.1} parent=1 // pred_check
      _
    $region7: #{tpu_custom_call.1} parent=1 // pred_check_branch
      %24 = sbr.rel (0) target = $region9
    $region8: #{tpu_custom_call.1} parent=1 // pred_region
      %s26 = ssub.s32 16384, 16384
      %27 = vsyncadd [#allocation6], %s26
      %s28 = sshll.u32 [#allocation5], 4
      %s29 = int_to_ptr.vmem [resolvable:$true] %s28
      %34 = dma.hbm_to_vmem [thread:$0]  %s1, 16384, %s29, [#allocation6], 1024, 1024, 64
    $region9: #{tpu_custom_call.1} parent=1 // pred_fallthru
      _
    // Predicated region
    $region10: #{tpu_custom_call.1} parent=1 // pred_check
      _
    $region11: #{tpu_custom_call.1} parent=1 // pred_check_branch
      %36 = sbr.rel (0) target = $region13
    $region12: #{tpu_custom_call.1} parent=1 // pred_region
      %37 = dma.done [#allocation3], 128
    $region13: #{tpu_custom_call.1} parent=1 // pred_fallthru
      _
    // Predicated region
    $region14: #{tpu_custom_call.1} parent=1 // pred_check
      _
    $region15: #{tpu_custom_call.1} parent=1 // pred_check_branch
      %39 = sbr.rel (0) target = $region17
    $region16: #{tpu_custom_call.1} parent=1 // pred_region
      %40 = dma.done [#allocation6], 16384
    $region17: #{tpu_custom_call.1} parent=1 // pred_fallthru
      _
    %v41 = vld [vmem:[#allocation2] sm:$0xff]
    %v42 = vld [vmem:[#allocation5] sm:$0xff]
    %v43 = vld [vmem:[#allocation5 + $0x8] sm:$0xff]
    %v44 = vld [vmem:[#allocation5 + $0x10] sm:$0xff]
    %v45 = vld [vmem:[#allocation5 + $0x18] sm:$0xff]
    %v46 = vld [vmem:[#allocation5 + $0x20] sm:$0xff]
    %v47 = vld [vmem:[#allocation5 + $0x28] sm:$0xff]
    %v48 = vld [vmem:[#allocation5 + $0x30] sm:$0xff]
    %v49 = vld [vmem:[#allocation5 + $0x38] sm:$0xff]
    %v50 = vld [vmem:[#allocation5 + $0x40] sm:$0xff]
    %v51 = vld [vmem:[#allocation5 + $0x48] sm:$0xff]
    %v52 = vld [vmem:[#allocation5 + $0x50] sm:$0xff]
    %v53 = vld [vmem:[#allocation5 + $0x58] sm:$0xff]
    %v54 = vld [vmem:[#allocation5 + $0x60] sm:$0xff]
    %v55 = vld [vmem:[#allocation5 + $0x68] sm:$0xff]
    %v56 = vld [vmem:[#allocation5 + $0x70] sm:$0xff]
    %v57 = vld [vmem:[#allocation5 + $0x78] sm:$0xff]
    %v58 = vld [vmem:[#allocation5 + $0x80] sm:$0xff]
    %v59 = vld [vmem:[#allocation5 + $0x88] sm:$0xff]
    %v60 = vld [vmem:[#allocation5 + $0x90] sm:$0xff]
    %v61 = vld [vmem:[#allocation5 + $0x98] sm:$0xff]
    %v62 = vld [vmem:[#allocation5 + $0xa0] sm:$0xff]
    %v63 = vld [vmem:[#allocation5 + $0xa8] sm:$0xff]
    %v64 = vld [vmem:[#allocation5 + $0xb0] sm:$0xff]
    %v65 = vld [vmem:[#allocation5 + $0xb8] sm:$0xff]
    %v66 = vld [vmem:[#allocation5 + $0xc0] sm:$0xff]
    %v67 = vld [vmem:[#allocation5 + $0xc8] sm:$0xff]
    %v68 = vld [vmem:[#allocation5 + $0xd0] sm:$0xff]
    %v69 = vld [vmem:[#allocation5 + $0xd8] sm:$0xff]
    %v70 = vld [vmem:[#allocation5 + $0xe0] sm:$0xff]
    %v71 = vld [vmem:[#allocation5 + $0xe8] sm:$0xff]
    %v72 = vld [vmem:[#allocation5 + $0xf0] sm:$0xff]
    %v73 = vld [vmem:[#allocation5 + $0xf8] sm:$0xff]
    %v74 = vld [vmem:[#allocation5 + $0x100] sm:$0xff]
    %v75 = vld [vmem:[#allocation5 + $0x108] sm:$0xff]
    %v76 = vld [vmem:[#allocation5 + $0x110] sm:$0xff]
    %v77 = vld [vmem:[#allocation5 + $0x118] sm:$0xff]
    %v78 = vld [vmem:[#allocation5 + $0x120] sm:$0xff]
    %v79 = vld [vmem:[#allocation5 + $0x128] sm:$0xff]
    %v80 = vld [vmem:[#allocation5 + $0x130] sm:$0xff]
    %v81 = vld [vmem:[#allocation5 + $0x138] sm:$0xff]
    %v82 = vld [vmem:[#allocation5 + $0x140] sm:$0xff]
    %v83 = vld [vmem:[#allocation5 + $0x148] sm:$0xff]
    %v84 = vld [vmem:[#allocation5 + $0x150] sm:$0xff]
    %v85 = vld [vmem:[#allocation5 + $0x158] sm:$0xff]
    %v86 = vld [vmem:[#allocation5 + $0x160] sm:$0xff]
    %v87 = vld [vmem:[#allocation5 + $0x168] sm:$0xff]
    %v88 = vld [vmem:[#allocation5 + $0x170] sm:$0xff]
    %v89 = vld [vmem:[#allocation5 + $0x178] sm:$0xff]
    %v90 = vld [vmem:[#allocation5 + $0x180] sm:$0xff]
    %v91 = vld [vmem:[#allocation5 + $0x188] sm:$0xff]
    %v92 = vld [vmem:[#allocation5 + $0x190] sm:$0xff]
    %v93 = vld [vmem:[#allocation5 + $0x198] sm:$0xff]
    %v94 = vld [vmem:[#allocation5 + $0x1a0] sm:$0xff]
    %v95 = vld [vmem:[#allocation5 + $0x1a8] sm:$0xff]
    %v96 = vld [vmem:[#allocation5 + $0x1b0] sm:$0xff]
    %v97 = vld [vmem:[#allocation5 + $0x1b8] sm:$0xff]
    %v98 = vld [vmem:[#allocation5 + $0x1c0] sm:$0xff]
    %v99 = vld [vmem:[#allocation5 + $0x1c8] sm:$0xff]
    %v100 = vld [vmem:[#allocation5 + $0x1d0] sm:$0xff]
    %v101 = vld [vmem:[#allocation5 + $0x1d8] sm:$0xff]
    %v102 = vld [vmem:[#allocation5 + $0x1e0] sm:$0xff]
    %v103 = vld [vmem:[#allocation5 + $0x1e8] sm:$0xff]
    %v104 = vld [vmem:[#allocation5 + $0x1f0] sm:$0xff]
    %v105 = vld [vmem:[#allocation5 + $0x1f8] sm:$0xff]
    %v106 = vld [vmem:[#allocation5 + $0x200] sm:$0xff]
    %v107 = vld [vmem:[#allocation5 + $0x208] sm:$0xff]
    %v108 = vld [vmem:[#allocation5 + $0x210] sm:$0xff]
    %v109 = vld [vmem:[#allocation5 + $0x218] sm:$0xff]
    %v110 = vld [vmem:[#allocation5 + $0x220] sm:$0xff]
    %v111 = vld [vmem:[#allocation5 + $0x228] sm:$0xff]
    %v112 = vld [vmem:[#allocation5 + $0x230] sm:$0xff]
    %v113 = vld [vmem:[#allocation5 + $0x238] sm:$0xff]
    %v114 = vld [vmem:[#allocation5 + $0x240] sm:$0xff]
    %v115 = vld [vmem:[#allocation5 + $0x248] sm:$0xff]
    %v116 = vld [vmem:[#allocation5 + $0x250] sm:$0xff]
    %v117 = vld [vmem:[#allocation5 + $0x258] sm:$0xff]
    %v118 = vld [vmem:[#allocation5 + $0x260] sm:$0xff]
    %v119 = vld [vmem:[#allocation5 + $0x268] sm:$0xff]
    %v120 = vld [vmem:[#allocation5 + $0x270] sm:$0xff]
    %v121 = vld [vmem:[#allocation5 + $0x278] sm:$0xff]
    %v122 = vld [vmem:[#allocation5 + $0x280] sm:$0xff]
    %v123 = vld [vmem:[#allocation5 + $0x288] sm:$0xff]
    %v124 = vld [vmem:[#allocation5 + $0x290] sm:$0xff]
    %v125 = vld [vmem:[#allocation5 + $0x298] sm:$0xff]
    %v126 = vld [vmem:[#allocation5 + $0x2a0] sm:$0xff]
    %v127 = vld [vmem:[#allocation5 + $0x2a8] sm:$0xff]
    %v128 = vld [vmem:[#allocation5 + $0x2b0] sm:$0xff]
    %v129 = vld [vmem:[#allocation5 + $0x2b8] sm:$0xff]
    %v130 = vld [vmem:[#allocation5 + $0x2c0] sm:$0xff]
    %v131 = vld [vmem:[#allocation5 + $0x2c8] sm:$0xff]
    %v132 = vld [vmem:[#allocation5 + $0x2d0] sm:$0xff]
    %v133 = vld [vmem:[#allocation5 + $0x2d8] sm:$0xff]
    %v134 = vld [vmem:[#allocation5 + $0x2e0] sm:$0xff]
    %v135 = vld [vmem:[#allocation5 + $0x2e8] sm:$0xff]
    %v136 = vld [vmem:[#allocation5 + $0x2f0] sm:$0xff]
    %v137 = vld [vmem:[#allocation5 + $0x2f8] sm:$0xff]
    %v138 = vld [vmem:[#allocation5 + $0x300] sm:$0xff]
    %v139 = vld [vmem:[#allocation5 + $0x308] sm:$0xff]
    %v140 = vld [vmem:[#allocation5 + $0x310] sm:$0xff]
    %v141 = vld [vmem:[#allocation5 + $0x318] sm:$0xff]
    %v142 = vld [vmem:[#allocation5 + $0x320] sm:$0xff]
    %v143 = vld [vmem:[#allocation5 + $0x328] sm:$0xff]
    %v144 = vld [vmem:[#allocation5 + $0x330] sm:$0xff]
    %v145 = vld [vmem:[#allocation5 + $0x338] sm:$0xff]
    %v146 = vld [vmem:[#allocation5 + $0x340] sm:$0xff]
    %v147 = vld [vmem:[#allocation5 + $0x348] sm:$0xff]
    %v148 = vld [vmem:[#allocation5 + $0x350] sm:$0xff]
    %v149 = vld [vmem:[#allocation5 + $0x358] sm:$0xff]
    %v150 = vld [vmem:[#allocation5 + $0x360] sm:$0xff]
    %v151 = vld [vmem:[#allocation5 + $0x368] sm:$0xff]
    %v152 = vld [vmem:[#allocation5 + $0x370] sm:$0xff]
    %v153 = vld [vmem:[#allocation5 + $0x378] sm:$0xff]
    %v154 = vld [vmem:[#allocation5 + $0x380] sm:$0xff]
    %v155 = vld [vmem:[#allocation5 + $0x388] sm:$0xff]
    %v156 = vld [vmem:[#allocation5 + $0x390] sm:$0xff]
    %v157 = vld [vmem:[#allocation5 + $0x398] sm:$0xff]
    %v158 = vld [vmem:[#allocation5 + $0x3a0] sm:$0xff]
    %v159 = vld [vmem:[#allocation5 + $0x3a8] sm:$0xff]
    %v160 = vld [vmem:[#allocation5 + $0x3b0] sm:$0xff]
    %v161 = vld [vmem:[#allocation5 + $0x3b8] sm:$0xff]
    %v162 = vld [vmem:[#allocation5 + $0x3c0] sm:$0xff]
    %v163 = vld [vmem:[#allocation5 + $0x3c8] sm:$0xff]
    %v164 = vld [vmem:[#allocation5 + $0x3d0] sm:$0xff]
    %v165 = vld [vmem:[#allocation5 + $0x3d8] sm:$0xff]
    %v166 = vld [vmem:[#allocation5 + $0x3e0] sm:$0xff]
    %v167 = vld [vmem:[#allocation5 + $0x3e8] sm:$0xff]
    %v168 = vld [vmem:[#allocation5 + $0x3f0] sm:$0xff]
    %v169 = vld [vmem:[#allocation5 + $0x3f8] sm:$0xff]
    %170 = vmatprep.subr.mxu0 %v43
    %171 = vmatpush1.msra.mxu0 %v42
    %172 = vmatprep.subr.mxu0 %v51
    %173 = vmatpush1.msra.mxu0 %v50
    %174 = vmatprep.subr.mxu0 %v59
    %175 = vmatpush1.msra.mxu0 %v58
    %176 = vmatprep.subr.mxu0 %v67
    %177 = vmatpush1.msra.mxu0 %v66
    %178 = vmatprep.subr.mxu0 %v75
    %179 = vmatpush1.msra.mxu0 %v74
    %180 = vmatprep.subr.mxu0 %v83
    %181 = vmatpush1.msra.mxu0 %v82
    %182 = vmatprep.subr.mxu0 %v91
    %183 = vmatpush1.msra.mxu0 %v90
    %184 = vmatprep.subr.mxu0 %v99
    %185 = vmatpush1.msra.mxu0 %v98
    %186 = vmatprep.subr.mxu0 %v107
    %187 = vmatpush1.msra.mxu0 %v106
    %188 = vmatprep.subr.mxu0 %v115
    %189 = vmatpush1.msra.mxu0 %v114
    %190 = vmatprep.subr.mxu0 %v123
    %191 = vmatpush1.msra.mxu0 %v122
    %192 = vmatprep.subr.mxu0 %v131
    %193 = vmatpush1.msra.mxu0 %v130
    %194 = vmatprep.subr.mxu0 %v139
    %195 = vmatpush1.msra.mxu0 %v138
    %196 = vmatprep.subr.mxu0 %v147
    %197 = vmatpush1.msra.mxu0 %v146
    %198 = vmatprep.subr.mxu0 %v155
    %199 = vmatpush1.msra.mxu0 %v154
    %200 = vmatprep.subr.mxu0 %v163
    %201 = vmatpush1.msra.mxu0 %v162
    %202 = vmatprep.subr.mxu0 0.0
    %203 = vmatpush1.msra.mxu0 0.0
    %204 = vmatprep.subr.mxu0 0.0
    %205 = vmatpush1.msra.mxu0 0.0
    %206 = vmatprep.subr.mxu0 0.0
    %207 = vmatpush1.msra.mxu0 0.0
    %208 = vmatprep.subr.mxu0 0.0
    %209 = vmatpush1.msra.mxu0 0.0
    %210 = vmatprep.subr.mxu0 0.0
    %211 = vmatpush1.msra.mxu0 0.0
    %212 = vmatprep.subr.mxu0 0.0
    %213 = vmatpush1.msra.mxu0 0.0
    %214 = vmatprep.subr.mxu0 0.0
    %215 = vmatpush1.msra.mxu0 0.0
    %216 = vmatprep.subr.mxu0 0.0
    %217 = vmatpush1.msra.mxu0 0.0
    %218 = vmatprep.subr.mxu0 0.0
    %219 = vmatpush1.msra.mxu0 0.0
    %220 = vmatprep.subr.mxu0 0.0
    %221 = vmatpush1.msra.mxu0 0.0
    %222 = vmatprep.subr.mxu0 0.0
    %223 = vmatpush1.msra.mxu0 0.0
    %224 = vmatprep.subr.mxu0 0.0
    %225 = vmatpush1.msra.mxu0 0.0
    %226 = vmatprep.subr.mxu0 0.0
    %227 = vmatpush1.msra.mxu0 0.0
    %228 = vmatprep.subr.mxu0 0.0
    %229 = vmatpush1.msra.mxu0 0.0
    %230 = vmatprep.subr.mxu0 0.0
    %231 = vmatpush1.msra.mxu0 0.0
    %232 = vmatprep.subr.mxu0 0.0
    %233 = vmatpush1.msra.mxu0 0.0
    %234 = vmatprep.mubr.f32.mxu0 0.0
    %235 = vmatmul.mubr.f32.gmra.mrb[0].mxu0 %v41
    %v236 = vpop.f32.mrb[0].mxu0
    %v237 = vadd.f32 0.0, %v236
    %v238 = vpop.f32.mrb[0].mxu0
    %v239 = vadd.f32 0.0, %v238
    %240 = vdwg.mxu0
    %241 = vmatprep.subr.mxu0 %v45
    %242 = vmatpush1.msra.mxu0 %v44
    %243 = vmatprep.subr.mxu0 %v53
    %244 = vmatpush1.msra.mxu0 %v52
    %245 = vmatprep.subr.mxu0 %v61
    %246 = vmatpush1.msra.mxu0 %v60
    %247 = vmatprep.subr.mxu0 %v69
    %248 = vmatpush1.msra.mxu0 %v68
    %249 = vmatprep.subr.mxu0 %v77
    %250 = vmatpush1.msra.mxu0 %v76
    %251 = vmatprep.subr.mxu0 %v85
    %252 = vmatpush1.msra.mxu0 %v84
    %253 = vmatprep.subr.mxu0 %v93
    %254 = vmatpush1.msra.mxu0 %v92
    %255 = vmatprep.subr.mxu0 %v101
    %256 = vmatpush1.msra.mxu0 %v100
    %257 = vmatprep.subr.mxu0 %v109
    %258 = vmatpush1.msra.mxu0 %v108
    %259 = vmatprep.subr.mxu0 %v117
    %260 = vmatpush1.msra.mxu0 %v116
    %261 = vmatprep.subr.mxu0 %v125
    %262 = vmatpush1.msra.mxu0 %v124
    %263 = vmatprep.subr.mxu0 %v133
    %264 = vmatpush1.msra.mxu0 %v132
    %265 = vmatprep.subr.mxu0 %v141
    %266 = vmatpush1.msra.mxu0 %v140
    %267 = vmatprep.subr.mxu0 %v149
    %268 = vmatpush1.msra.mxu0 %v148
    %269 = vmatprep.subr.mxu0 %v157
    %270 = vmatpush1.msra.mxu0 %v156
    %271 = vmatprep.subr.mxu0 %v165
    %272 = vmatpush1.msra.mxu0 %v164
    %273 = vmatprep.subr.mxu0 0.0
    %274 = vmatpush1.msra.mxu0 0.0
    %275 = vmatprep.subr.mxu0 0.0
    %276 = vmatpush1.msra.mxu0 0.0
    %277 = vmatprep.subr.mxu0 0.0
    %278 = vmatpush1.msra.mxu0 0.0
    %279 = vmatprep.subr.mxu0 0.0
    %280 = vmatpush1.msra.mxu0 0.0
    %281 = vmatprep.subr.mxu0 0.0
    %282 = vmatpush1.msra.mxu0 0.0
    %283 = vmatprep.subr.mxu0 0.0
    %284 = vmatpush1.msra.mxu0 0.0
    %285 = vmatprep.subr.mxu0 0.0
    %286 = vmatpush1.msra.mxu0 0.0
    %287 = vmatprep.subr.mxu0 0.0
    %288 = vmatpush1.msra.mxu0 0.0
    %289 = vmatprep.subr.mxu0 0.0
    %290 = vmatpush1.msra.mxu0 0.0
    %291 = vmatprep.subr.mxu0 0.0
    %292 = vmatpush1.msra.mxu0 0.0
    %293 = vmatprep.subr.mxu0 0.0
    %294 = vmatpush1.msra.mxu0 0.0
    %295 = vmatprep.subr.mxu0 0.0
    %296 = vmatpush1.msra.mxu0 0.0
    %297 = vmatprep.subr.mxu0 0.0
    %298 = vmatpush1.msra.mxu0 0.0
    %299 = vmatprep.subr.mxu0 0.0
    %300 = vmatpush1.msra.mxu0 0.0
    %301 = vmatprep.subr.mxu0 0.0
    %302 = vmatpush1.msra.mxu0 0.0
    %303 = vmatprep.subr.mxu0 0.0
    %304 = vmatpush1.msra.mxu0 0.0
    %305 = vmatprep.mubr.f32.mxu0 0.0
    %306 = vmatmul.mubr.f32.gmra.mrb[0].mxu0 %v41
    %v307 = vpop.f32.mrb[0].mxu0
    %v308 = vadd.f32 0.0, %v307
    %v309 = vpop.f32.mrb[0].mxu0
    %v310 = vadd.f32 0.0, %v309
    %311 = vdwg.mxu0
    %312 = vmatprep.subr.mxu0 %v47
    %313 = vmatpush1.msra.mxu0 %v46
    %314 = vmatprep.subr.mxu0 %v55
    %315 = vmatpush1.msra.mxu0 %v54
    %316 = vmatprep.subr.mxu0 %v63
    %317 = vmatpush1.msra.mxu0 %v62
    %318 = vmatprep.subr.mxu0 %v71
    %319 = vmatpush1.msra.mxu0 %v70
    %320 = vmatprep.subr.mxu0 %v79
    %321 = vmatpush1.msra.mxu0 %v78
    %322 = vmatprep.subr.mxu0 %v87
    %323 = vmatpush1.msra.mxu0 %v86
    %324 = vmatprep.subr.mxu0 %v95
    %325 = vmatpush1.msra.mxu0 %v94
    %326 = vmatprep.subr.mxu0 %v103
    %327 = vmatpush1.msra.mxu0 %v102
    %328 = vmatprep.subr.mxu0 %v111
    %329 = vmatpush1.msra.mxu0 %v110
    %330 = vmatprep.subr.mxu0 %v119
    %331 = vmatpush1.msra.mxu0 %v118
    %332 = vmatprep.subr.mxu0 %v127
    %333 = vmatpush1.msra.mxu0 %v126
    %334 = vmatprep.subr.mxu0 %v135
    %335 = vmatpush1.msra.mxu0 %v134
    %336 = vmatprep.subr.mxu0 %v143
    %337 = vmatpush1.msra.mxu0 %v142
    %338 = vmatprep.subr.mxu0 %v151
    %339 = vmatpush1.msra.mxu0 %v150
    %340 = vmatprep.subr.mxu0 %v159
    %341 = vmatpush1.msra.mxu0 %v158
    %342 = vmatprep.subr.mxu0 %v167
    %343 = vmatpush1.msra.mxu0 %v166
    %344 = vmatprep.subr.mxu0 0.0
    %345 = vmatpush1.msra.mxu0 0.0
    %346 = vmatprep.subr.mxu0 0.0
    %347 = vmatpush1.msra.mxu0 0.0
    %348 = vmatprep.subr.mxu0 0.0
    %349 = vmatpush1.msra.mxu0 0.0
    %350 = vmatprep.subr.mxu0 0.0
    %351 = vmatpush1.msra.mxu0 0.0
    %352 = vmatprep.subr.mxu0 0.0
    %353 = vmatpush1.msra.mxu0 0.0
    %354 = vmatprep.subr.mxu0 0.0
    %355 = vmatpush1.msra.mxu0 0.0
    %356 = vmatprep.subr.mxu0 0.0
    %357 = vmatpush1.msra.mxu0 0.0
    %358 = vmatprep.subr.mxu0 0.0
    %359 = vmatpush1.msra.mxu0 0.0
    %360 = vmatprep.subr.mxu0 0.0
    %361 = vmatpush1.msra.mxu0 0.0
    %362 = vmatprep.subr.mxu0 0.0
    %363 = vmatpush1.msra.mxu0 0.0
    %364 = vmatprep.subr.mxu0 0.0
    %365 = vmatpush1.msra.mxu0 0.0
    %366 = vmatprep.subr.mxu0 0.0
    %367 = vmatpush1.msra.mxu0 0.0
    %368 = vmatprep.subr.mxu0 0.0
    %369 = vmatpush1.msra.mxu0 0.0
    %370 = vmatprep.subr.mxu0 0.0
    %371 = vmatpush1.msra.mxu0 0.0
    %372 = vmatprep.subr.mxu0 0.0
    %373 = vmatpush1.msra.mxu0 0.0
    %374 = vmatprep.subr.mxu0 0.0
    %375 = vmatpush1.msra.mxu0 0.0
    %376 = vmatprep.mubr.f32.mxu0 0.0
    %377 = vmatmul.mubr.f32.gmra.mrb[0].mxu0 %v41
    %v378 = vpop.f32.mrb[0].mxu0
    %v379 = vadd.f32 0.0, %v378
    %v380 = vpop.f32.mrb[0].mxu0
    %v381 = vadd.f32 0.0, %v380
    %382 = vdwg.mxu0
    %383 = vmatprep.subr.mxu0 %v49
    %384 = vmatpush1.msra.mxu0 %v48
    %385 = vmatprep.subr.mxu0 %v57
    %386 = vmatpush1.msra.mxu0 %v56
    %387 = vmatprep.subr.mxu0 %v65
    %388 = vmatpush1.msra.mxu0 %v64
    %389 = vmatprep.subr.mxu0 %v73
    %390 = vmatpush1.msra.mxu0 %v72
    %391 = vmatprep.subr.mxu0 %v81
    %392 = vmatpush1.msra.mxu0 %v80
    %393 = vmatprep.subr.mxu0 %v89
    %394 = vmatpush1.msra.mxu0 %v88
    %395 = vmatprep.subr.mxu0 %v97
    %396 = vmatpush1.msra.mxu0 %v96
    %397 = vmatprep.subr.mxu0 %v105
    %398 = vmatpush1.msra.mxu0 %v104
    %399 = vmatprep.subr.mxu0 %v113
    %400 = vmatpush1.msra.mxu0 %v112
    %401 = vmatprep.subr.mxu0 %v121
    %402 = vmatpush1.msra.mxu0 %v120
    %403 = vmatprep.subr.mxu0 %v129
    %404 = vmatpush1.msra.mxu0 %v128
    %405 = vmatprep.subr.mxu0 %v137
    %406 = vmatpush1.msra.mxu0 %v136
    %407 = vmatprep.subr.mxu0 %v145
    %408 = vmatpush1.msra.mxu0 %v144
    %409 = vmatprep.subr.mxu0 %v153
    %410 = vmatpush1.msra.mxu0 %v152
    %411 = vmatprep.subr.mxu0 %v161
    %412 = vmatpush1.msra.mxu0 %v160
    %413 = vmatprep.subr.mxu0 %v169
    %414 = vmatpush1.msra.mxu0 %v168
    %415 = vmatprep.subr.mxu0 0.0
    %416 = vmatpush1.msra.mxu0 0.0
    %417 = vmatprep.subr.mxu0 0.0
    %418 = vmatpush1.msra.mxu0 0.0
    %419 = vmatprep.subr.mxu0 0.0
    %420 = vmatpush1.msra.mxu0 0.0
    %421 = vmatprep.subr.mxu0 0.0
    %422 = vmatpush1.msra.mxu0 0.0
    %423 = vmatprep.subr.mxu0 0.0
    %424 = vmatpush1.msra.mxu0 0.0
    %425 = vmatprep.subr.mxu0 0.0
    %426 = vmatpush1.msra.mxu0 0.0
    %427 = vmatprep.subr.mxu0 0.0
    %428 = vmatpush1.msra.mxu0 0.0
    %429 = vmatprep.subr.mxu0 0.0
    %430 = vmatpush1.msra.mxu0 0.0
    %431 = vmatprep.subr.mxu0 0.0
    %432 = vmatpush1.msra.mxu0 0.0
    %433 = vmatprep.subr.mxu0 0.0
    %434 = vmatpush1.msra.mxu0 0.0
    %435 = vmatprep.subr.mxu0 0.0
    %436 = vmatpush1.msra.mxu0 0.0
    %437 = vmatprep.subr.mxu0 0.0
    %438 = vmatpush1.msra.mxu0 0.0
    %439 = vmatprep.subr.mxu0 0.0
    %440 = vmatpush1.msra.mxu0 0.0
    %441 = vmatprep.subr.mxu0 0.0
    %442 = vmatpush1.msra.mxu0 0.0
    %443 = vmatprep.subr.mxu0 0.0
    %444 = vmatpush1.msra.mxu0 0.0
    %445 = vmatprep.subr.mxu0 0.0
    %446 = vmatpush1.msra.mxu0 0.0
    %447 = vmatprep.mubr.f32.mxu0 0.0
    %448 = vmatmul.mubr.f32.gmra.mrb[0].mxu0 %v41
    %v449 = vpop.f32.mrb[0].mxu0
    %v450 = vadd.f32 0.0, %v449
    %v451 = vpop.f32.mrb[0].mxu0
    %v452 = vadd.f32 0.0, %v451
    %453 = vdwg.mxu0
    %454 = vst [vmem:[#allocation8] sm:$0xff] %v237
    %455 = vst [vmem:[#allocation8 + $0x8] sm:$0xff] %v239
    %456 = vst [vmem:[#allocation8 + $0x10] sm:$0xff] %v308
    %457 = vst [vmem:[#allocation8 + $0x18] sm:$0xff] %v310
    %458 = vst [vmem:[#allocation8 + $0x20] sm:$0xff] %v379
    %459 = vst [vmem:[#allocation8 + $0x28] sm:$0xff] %v381
    %460 = vst [vmem:[#allocation8 + $0x30] sm:$0xff] %v450
    %461 = vst [vmem:[#allocation8 + $0x38] sm:$0xff] %v452
    %v462 = vlaneseq
    %v463 = vshrl.u32 %v462, 7
    %v464 = vadd.s32 %v463, 8
    %v465 = vadd.s32 %v463, 16
    %v466 = vadd.s32 %v463, 24
    %v467 = vadd.s32 %v463, 32
    %v468 = vadd.s32 %v463, 40
    %v469 = vadd.s32 %v463, 48
    %v470 = vadd.s32 %v463, 56
    %v471 = vadd.s32 %v463, 64
    %v472 = vadd.s32 %v463, 72
    %v473 = vadd.s32 %v463, 80
    %v474 = vadd.s32 %v463, 88
    %v475 = vadd.s32 %v463, 96
    %v476 = vadd.s32 %v463, 104
    %v477 = vadd.s32 %v463, 112
    %v478 = vadd.s32 %v463, 120
    %v479 = vlaneseq
    %v480 = vand.u32 %v479, 127
    %v481 = vmul.u32 %v480, 32
    %vm482 = vcmp.ge.s32.totalorder %v463, %v481
    %vm483 = vcmp.ge.s32.totalorder %v464, %v481
    %vm484 = vcmp.ge.s32.totalorder %v465, %v481
    %vm485 = vcmp.ge.s32.totalorder %v466, %v481
    %vm486 = vcmp.ge.s32.totalorder %v467, %v481
    %vm487 = vcmp.ge.s32.totalorder %v468, %v481
    %vm488 = vcmp.ge.s32.totalorder %v469, %v481
    %vm489 = vcmp.ge.s32.totalorder %v470, %v481
    %vm490 = vcmp.ge.s32.totalorder %v471, %v481
    %vm491 = vcmp.ge.s32.totalorder %v472, %v481
    %vm492 = vcmp.ge.s32.totalorder %v473, %v481
    %vm493 = vcmp.ge.s32.totalorder %v474, %v481
    %vm494 = vcmp.ge.s32.totalorder %v475, %v481
    %vm495 = vcmp.ge.s32.totalorder %v476, %v481
    %vm496 = vcmp.ge.s32.totalorder %v477, %v481
    %vm497 = vcmp.ge.s32.totalorder %v478, %v481
    %v498 = vadd.s32 %v481, 32
    %vm499 = vcmp.lt.s32.totalorder %v463, %v498
    %vm500 = vcmp.lt.s32.totalorder %v464, %v498
    %vm501 = vcmp.lt.s32.totalorder %v465, %v498
    %vm502 = vcmp.lt.s32.totalorder %v466, %v498
    %vm503 = vcmp.lt.s32.totalorder %v467, %v498
    %vm504 = vcmp.lt.s32.totalorder %v468, %v498
    %vm505 = vcmp.lt.s32.totalorder %v469, %v498
    %vm506 = vcmp.lt.s32.totalorder %v470, %v498
    %vm507 = vcmp.lt.s32.totalorder %v471, %v498
    %vm508 = vcmp.lt.s32.totalorder %v472, %v498
    %vm509 = vcmp.lt.s32.totalorder %v473, %v498
    %vm510 = vcmp.lt.s32.totalorder %v474, %v498
    %vm511 = vcmp.lt.s32.totalorder %v475, %v498
    %vm512 = vcmp.lt.s32.totalorder %v476, %v498
    %vm513 = vcmp.lt.s32.totalorder %v477, %v498
    %vm514 = vcmp.lt.s32.totalorder %v478, %v498
    %vm515 = vmand %vm482, %vm499
    %vm516 = vmand %vm483, %vm500
    %vm517 = vmand %vm484, %vm501
    %vm518 = vmand %vm485, %vm502
    %vm519 = vmand %vm486, %vm503
    %vm520 = vmand %vm487, %vm504
    %vm521 = vmand %vm488, %vm505
    %vm522 = vmand %vm489, %vm506
    %vm523 = vmand %vm490, %vm507
    %vm524 = vmand %vm491, %vm508
    %vm525 = vmand %vm492, %vm509
    %vm526 = vmand %vm493, %vm510
    %vm527 = vmand %vm494, %vm511
    %vm528 = vmand %vm495, %vm512
    %vm529 = vmand %vm496, %vm513
    %vm530 = vmand %vm497, %vm514
    %v531 = vsel %vm515, 1.0, 0.0
    %v532 = vsel %vm516, 1.0, 0.0
    %v533 = vsel %vm517, 1.0, 0.0
    %v534 = vsel %vm518, 1.0, 0.0
    %v535 = vsel %vm519, 1.0, 0.0
    %v536 = vsel %vm520, 1.0, 0.0
    %v537 = vsel %vm521, 1.0, 0.0
    %v538 = vsel %vm522, 1.0, 0.0
    %v539 = vsel %vm523, 1.0, 0.0
    %v540 = vsel %vm524, 1.0, 0.0
    %v541 = vsel %vm525, 1.0, 0.0
    %v542 = vsel %vm526, 1.0, 0.0
    %v543 = vsel %vm527, 1.0, 0.0
    %v544 = vsel %vm528, 1.0, 0.0
    %v545 = vsel %vm529, 1.0, 0.0
    %v546 = vsel %vm530, 1.0, 0.0
    %v547 = vmul.u32 %v463, 32
    %vm548 = vcmp.ge.s32.totalorder %v480, %v547
    %v549 = vadd.s32 %v547, 32
    %vm550 = vcmp.lt.s32.totalorder %v480, %v549
    %vm551 = vmand %vm548, %vm550
    %v552 = vsel %vm551, 1.0, 0.0
    %v553 = vadd.f32 %v237, %v239
    %v554 = vadd.f32 %v553, %v308
    %v555 = vadd.f32 %v554, %v310
    %v556 = vadd.f32 %v555, %v379
    %v557 = vadd.f32 %v556, %v381
    %v558 = vadd.f32 %v557, %v450
    %v559 = vadd.f32 %v558, %v452
    %v560 = vmul.f32 %v559, 0.125
    %v561 = vmul.f32 %v560, %v560
    %562 = vmatprep.subr.mxu0 0.0
    %563 = vmatpush1.msra.mxu0 %v531
    %564 = vmatprep.subr.mxu0 0.0
    %565 = vmatpush1.msra.mxu0 %v532
    %566 = vmatprep.subr.mxu0 0.0
    %567 = vmatpush1.msra.mxu0 %v533
    %568 = vmatprep.subr.mxu0 0.0
    %569 = vmatpush1.msra.mxu0 %v534
    %570 = vmatprep.subr.mxu0 0.0
    %571 = vmatpush1.msra.mxu0 %v535
    %572 = vmatprep.subr.mxu0 0.0
    %573 = vmatpush1.msra.mxu0 %v536
    %574 = vmatprep.subr.mxu0 0.0
    %575 = vmatpush1.msra.mxu0 %v537
    %576 = vmatprep.subr.mxu0 0.0
    %577 = vmatpush1.msra.mxu0 %v538
    %578 = vmatprep.subr.mxu0 0.0
    %579 = vmatpush1.msra.mxu0 %v539
    %580 = vmatprep.subr.mxu0 0.0
    %581 = vmatpush1.msra.mxu0 %v540
    %582 = vmatprep.subr.mxu0 0.0
    %583 = vmatpush1.msra.mxu0 %v541
    %584 = vmatprep.subr.mxu0 0.0
    %585 = vmatpush1.msra.mxu0 %v542
    %586 = vmatprep.subr.mxu0 0.0
    %587 = vmatpush1.msra.mxu0 %v543
    %588 = vmatprep.subr.mxu0 0.0
    %589 = vmatpush1.msra.mxu0 %v544
    %590 = vmatprep.subr.mxu0 0.0
    %591 = vmatpush1.msra.mxu0 %v545
    %592 = vmatprep.subr.mxu0 0.0
    %593 = vmatpush1.msra.mxu0 %v546
    %594 = vmatprep.subr.mxu0 0.0
    %595 = vmatpush1.msra.mxu0 0.0
    %596 = vmatprep.subr.mxu0 0.0
    %597 = vmatpush1.msra.mxu0 0.0
    %598 = vmatprep.subr.mxu0 0.0
    %599 = vmatpush1.msra.mxu0 0.0
    %600 = vmatprep.subr.mxu0 0.0
    %601 = vmatpush1.msra.mxu0 0.0
    %602 = vmatprep.subr.mxu0 0.0
    %603 = vmatpush1.msra.mxu0 0.0
    %604 = vmatprep.subr.mxu0 0.0
    %605 = vmatpush1.msra.mxu0 0.0
    %606 = vmatprep.subr.mxu0 0.0
    %607 = vmatpush1.msra.mxu0 0.0
    %608 = vmatprep.subr.mxu0 0.0
    %609 = vmatpush1.msra.mxu0 0.0
    %610 = vmatprep.subr.mxu0 0.0
    %611 = vmatpush1.msra.mxu0 0.0
    %612 = vmatprep.subr.mxu0 0.0
    %613 = vmatpush1.msra.mxu0 0.0
    %614 = vmatprep.subr.mxu0 0.0
    %615 = vmatpush1.msra.mxu0 0.0
    %616 = vmatprep.subr.mxu0 0.0
    %617 = vmatpush1.msra.mxu0 0.0
    %618 = vmatprep.subr.mxu0 0.0
    %619 = vmatpush1.msra.mxu0 0.0
    %620 = vmatprep.subr.mxu0 0.0
    %621 = vmatpush1.msra.mxu0 0.0
    %622 = vmatprep.subr.mxu0 0.0
    %623 = vmatpush1.msra.mxu0 0.0
    %624 = vmatprep.subr.mxu0 0.0
    %625 = vmatpush1.msra.mxu0 0.0
    %626 = vmatprep.mubr.f32.mxu0 0.0
    %627 = vmatmul.mubr.f32.gmra.mrb[0].mxu0 %v561
    %v628 = vpop.f32.mrb[0].mxu0
    %v629 = vadd.f32 0.0, %v628
    %v630 = vpop.f32.mrb[0].mxu0
    %631 = vdwg.mxu0
    %v632 = vrsqrt.pop %v629
    %v633 = vmul.f32 %v629, %v632
    %v634 = vadd.f32 %v629, 1.0
    %v635 = vrcp.pop %v634
    %v636 = vmul.f32 %v633, %v635
    %vm637 = vcmask 31744
    %v639 = vsel %vm637, %v636, 0
    %vm641 = vcmask 1043456
    %v643 = vsel %vm641, %v552, 0
    %645 = vmatprep.subr.mxu0 0.0
    %646 = vmatpush1.msra.mxu0 %v643
    %647 = vmatprep.subr.mxu0 0.0
    %648 = vmatpush1.msra.mxu0 0.0
    %649 = vmatprep.subr.mxu0 0.0
    %650 = vmatpush1.msra.mxu0 0.0
    %651 = vmatprep.subr.mxu0 0.0
    %652 = vmatpush1.msra.mxu0 0.0
    %653 = vmatprep.subr.mxu0 0.0
    %654 = vmatpush1.msra.mxu0 0.0
    %655 = vmatprep.subr.mxu0 0.0
    %656 = vmatpush1.msra.mxu0 0.0
    %657 = vmatprep.subr.mxu0 0.0
    %658 = vmatpush1.msra.mxu0 0.0
    %659 = vmatprep.subr.mxu0 0.0
    %660 = vmatpush1.msra.mxu0 0.0
    %661 = vmatprep.subr.mxu0 0.0
    %662 = vmatpush1.msra.mxu0 0.0
    %663 = vmatprep.subr.mxu0 0.0
    %664 = vmatpush1.msra.mxu0 0.0
    %665 = vmatprep.subr.mxu0 0.0
    %666 = vmatpush1.msra.mxu0 0.0
    %667 = vmatprep.subr.mxu0 0.0
    %668 = vmatpush1.msra.mxu0 0.0
    %669 = vmatprep.subr.mxu0 0.0
    %670 = vmatpush1.msra.mxu0 0.0
    %671 = vmatprep.subr.mxu0 0.0
    %672 = vmatpush1.msra.mxu0 0.0
    %673 = vmatprep.subr.mxu0 0.0
    %674 = vmatpush1.msra.mxu0 0.0
    %675 = vmatprep.subr.mxu0 0.0
    %676 = vmatpush1.msra.mxu0 0.0
    %677 = vmatprep.subr.mxu0 0.0
    %678 = vmatpush1.msra.mxu0 0.0
    %679 = vmatprep.subr.mxu0 0.0
    %680 = vmatpush1.msra.mxu0 0.0
    %681 = vmatprep.subr.mxu0 0.0
    %682 = vmatpush1.msra.mxu0 0.0
    %683 = vmatprep.subr.mxu0 0.0
    %684 = vmatpush1.msra.mxu0 0.0
    %685 = vmatprep.subr.mxu0 0.0
    %686 = vmatpush1.msra.mxu0 0.0
    %687 = vmatprep.subr.mxu0 0.0
    %688 = vmatpush1.msra.mxu0 0.0
    %689 = vmatprep.subr.mxu0 0.0
    %690 = vmatpush1.msra.mxu0 0.0
    %691 = vmatprep.subr.mxu0 0.0
    %692 = vmatpush1.msra.mxu0 0.0
    %693 = vmatprep.subr.mxu0 0.0
    %694 = vmatpush1.msra.mxu0 0.0
    %695 = vmatprep.subr.mxu0 0.0
    %696 = vmatpush1.msra.mxu0 0.0
    %697 = vmatprep.subr.mxu0 0.0
    %698 = vmatpush1.msra.mxu0 0.0
    %699 = vmatprep.subr.mxu0 0.0
    %700 = vmatpush1.msra.mxu0 0.0
    %701 = vmatprep.subr.mxu0 0.0
    %702 = vmatpush1.msra.mxu0 0.0
    %703 = vmatprep.subr.mxu0 0.0
    %704 = vmatpush1.msra.mxu0 0.0
    %705 = vmatprep.subr.mxu0 0.0
    %706 = vmatpush1.msra.mxu0 0.0
    %707 = vmatprep.subr.mxu0 0.0
    %708 = vmatpush1.msra.mxu0 0.0
    %709 = vmatprep.mubr.f32.mxu0 0.0
    %710 = vmatmul.mubr.f32.gmra.mrb[0].mxu0 %v639
    %v711 = vpop.f32.mrb[0].mxu0
    %v712 = vadd.f32 0.0, %v711
    %v713 = vpop.f32.mrb[0].mxu0
    %714 = vdwg.mxu0
    %v715 = vmul.f32 %v712, %v560
    %v716 = vmul.f32 %v237, %v715
    %717 = vmatprep.subr.mxu0 0.0
    %718 = vmatpush1.msra.mxu0 %v531
    %719 = vmatprep.subr.mxu0 0.0
    %720 = vmatpush1.msra.mxu0 %v532
    %721 = vmatprep.subr.mxu0 0.0
    %722 = vmatpush1.msra.mxu0 %v533
    %723 = vmatprep.subr.mxu0 0.0
    %724 = vmatpush1.msra.mxu0 %v534
    %725 = vmatprep.subr.mxu0 0.0
    %726 = vmatpush1.msra.mxu0 %v535
    %727 = vmatprep.subr.mxu0 0.0
    %728 = vmatpush1.msra.mxu0 %v536
    %729 = vmatprep.subr.mxu0 0.0
    %730 = vmatpush1.msra.mxu0 %v537
    %731 = vmatprep.subr.mxu0 0.0
    %732 = vmatpush1.msra.mxu0 %v538
    %733 = vmatprep.subr.mxu0 0.0
    %734 = vmatpush1.msra.mxu0 %v539
    %735 = vmatprep.subr.mxu0 0.0
    %736 = vmatpush1.msra.mxu0 %v540
    %737 = vmatprep.subr.mxu0 0.0
    %738 = vmatpush1.msra.mxu0 %v541
    %739 = vmatprep.subr.mxu0 0.0
    %740 = vmatpush1.msra.mxu0 %v542
    %741 = vmatprep.subr.mxu0 0.0
    %742 = vmatpush1.msra.mxu0 %v543
    %743 = vmatprep.subr.mxu0 0.0
    %744 = vmatpush1.msra.mxu0 %v544
    %745 = vmatprep.subr.mxu0 0.0
    %746 = vmatpush1.msra.mxu0 %v545
    %747 = vmatprep.subr.mxu0 0.0
    %748 = vmatpush1.msra.mxu0 %v546
    %749 = vmatprep.subr.mxu0 0.0
    %750 = vmatpush1.msra.mxu0 0.0
    %751 = vmatprep.subr.mxu0 0.0
    %752 = vmatpush1.msra.mxu0 0.0
    %753 = vmatprep.subr.mxu0 0.0
    %754 = vmatpush1.msra.mxu0 0.0
    %755 = vmatprep.subr.mxu0 0.0
    %756 = vmatpush1.msra.mxu0 0.0
    %757 = vmatprep.subr.mxu0 0.0
    %758 = vmatpush1.msra.mxu0 0.0
    %759 = vmatprep.subr.mxu0 0.0
    %760 = vmatpush1.msra.mxu0 0.0
    %761 = vmatprep.subr.mxu0 0.0
    %762 = vmatpush1.msra.mxu0 0.0
    %763 = vmatprep.subr.mxu0 0.0
    %764 = vmatpush1.msra.mxu0 0.0
    %765 = vmatprep.subr.mxu0 0.0
    %766 = vmatpush1.msra.mxu0 0.0
    %767 = vmatprep.subr.mxu0 0.0
    %768 = vmatpush1.msra.mxu0 0.0
    %769 = vmatprep.subr.mxu0 0.0
    %770 = vmatpush1.msra.mxu0 0.0
    %771 = vmatprep.subr.mxu0 0.0
    %772 = vmatpush1.msra.mxu0 0.0
    %773 = vmatprep.subr.mxu0 0.0
    %774 = vmatpush1.msra.mxu0 0.0
    %775 = vmatprep.subr.mxu0 0.0
    %776 = vmatpush1.msra.mxu0 0.0
    %777 = vmatprep.subr.mxu0 0.0
    %778 = vmatpush1.msra.mxu0 0.0
    %779 = vmatprep.subr.mxu0 0.0
    %780 = vmatpush1.msra.mxu0 0.0
    %781 = vmatprep.mubr.f32.mxu0 0.0
    %782 = vmatmul.mubr.f32.gmra.mrb[0].mxu0 %v716
    %v783 = vpop.f32.mrb[0].mxu0
    %v784 = vadd.f32 0.0, %v783
    %v785 = vpop.f32.mrb[0].mxu0
    %786 = vdwg.mxu0
    %v787 = vmul.f32 %v239, %v715
    %788 = vmatprep.subr.mxu0 0.0
    %789 = vmatpush1.msra.mxu0 %v531
    %790 = vmatprep.subr.mxu0 0.0
    %791 = vmatpush1.msra.mxu0 %v532
    %792 = vmatprep.subr.mxu0 0.0
    %793 = vmatpush1.msra.mxu0 %v533
    %794 = vmatprep.subr.mxu0 0.0
    %795 = vmatpush1.msra.mxu0 %v534
    %796 = vmatprep.subr.mxu0 0.0
    %797 = vmatpush1.msra.mxu0 %v535
    %798 = vmatprep.subr.mxu0 0.0
    %799 = vmatpush1.msra.mxu0 %v536
    %800 = vmatprep.subr.mxu0 0.0
    %801 = vmatpush1.msra.mxu0 %v537
    %802 = vmatprep.subr.mxu0 0.0
    %803 = vmatpush1.msra.mxu0 %v538
    %804 = vmatprep.subr.mxu0 0.0
    %805 = vmatpush1.msra.mxu0 %v539
    %806 = vmatprep.subr.mxu0 0.0
    %807 = vmatpush1.msra.mxu0 %v540
    %808 = vmatprep.subr.mxu0 0.0
    %809 = vmatpush1.msra.mxu0 %v541
    %810 = vmatprep.subr.mxu0 0.0
    %811 = vmatpush1.msra.mxu0 %v542
    %812 = vmatprep.subr.mxu0 0.0
    %813 = vmatpush1.msra.mxu0 %v543
    %814 = vmatprep.subr.mxu0 0.0
    %815 = vmatpush1.msra.mxu0 %v544
    %816 = vmatprep.subr.mxu0 0.0
    %817 = vmatpush1.msra.mxu0 %v545
    %818 = vmatprep.subr.mxu0 0.0
    %819 = vmatpush1.msra.mxu0 %v546
    %820 = vmatprep.subr.mxu0 0.0
    %821 = vmatpush1.msra.mxu0 0.0
    %822 = vmatprep.subr.mxu0 0.0
    %823 = vmatpush1.msra.mxu0 0.0
    %824 = vmatprep.subr.mxu0 0.0
    %825 = vmatpush1.msra.mxu0 0.0
    %826 = vmatprep.subr.mxu0 0.0
    %827 = vmatpush1.msra.mxu0 0.0
    %828 = vmatprep.subr.mxu0 0.0
    %829 = vmatpush1.msra.mxu0 0.0
    %830 = vmatprep.subr.mxu0 0.0
    %831 = vmatpush1.msra.mxu0 0.0
    %832 = vmatprep.subr.mxu0 0.0
    %833 = vmatpush1.msra.mxu0 0.0
    %834 = vmatprep.subr.mxu0 0.0
    %835 = vmatpush1.msra.mxu0 0.0
    %836 = vmatprep.subr.mxu0 0.0
    %837 = vmatpush1.msra.mxu0 0.0
    %838 = vmatprep.subr.mxu0 0.0
    %839 = vmatpush1.msra.mxu0 0.0
    %840 = vmatprep.subr.mxu0 0.0
    %841 = vmatpush1.msra.mxu0 0.0
    %842 = vmatprep.subr.mxu0 0.0
    %843 = vmatpush1.msra.mxu0 0.0
    %844 = vmatprep.subr.mxu0 0.0
    %845 = vmatpush1.msra.mxu0 0.0
    %846 = vmatprep.subr.mxu0 0.0
    %847 = vmatpush1.msra.mxu0 0.0
    %848 = vmatprep.subr.mxu0 0.0
    %849 = vmatpush1.msra.mxu0 0.0
    %850 = vmatprep.subr.mxu0 0.0
    %851 = vmatpush1.msra.mxu0 0.0
    %852 = vmatprep.mubr.f32.mxu0 0.0
    %853 = vmatmul.mubr.f32.gmra.mrb[0].mxu0 %v787
    %v854 = vpop.f32.mrb[0].mxu0
    %v855 = vadd.f32 0.0, %v854
    %v856 = vpop.f32.mrb[0].mxu0
    %857 = vdwg.mxu0
    %v858 = vmul.f32 %v308, %v715
    %859 = vmatprep.subr.mxu0 0.0
    %860 = vmatpush1.msra.mxu0 %v531
    %861 = vmatprep.subr.mxu0 0.0
    %862 = vmatpush1.msra.mxu0 %v532
    %863 = vmatprep.subr.mxu0 0.0
    %864 = vmatpush1.msra.mxu0 %v533
    %865 = vmatprep.subr.mxu0 0.0
    %866 = vmatpush1.msra.mxu0 %v534
    %867 = vmatprep.subr.mxu0 0.0
    %868 = vmatpush1.msra.mxu0 %v535
    %869 = vmatprep.subr.mxu0 0.0
    %870 = vmatpush1.msra.mxu0 %v536
    %871 = vmatprep.subr.mxu0 0.0
    %872 = vmatpush1.msra.mxu0 %v537
    %873 = vmatprep.subr.mxu0 0.0
    %874 = vmatpush1.msra.mxu0 %v538
    %875 = vmatprep.subr.mxu0 0.0
    %876 = vmatpush1.msra.mxu0 %v539
    %877 = vmatprep.subr.mxu0 0.0
    %878 = vmatpush1.msra.mxu0 %v540
    %879 = vmatprep.subr.mxu0 0.0
    %880 = vmatpush1.msra.mxu0 %v541
    %881 = vmatprep.subr.mxu0 0.0
    %882 = vmatpush1.msra.mxu0 %v542
    %883 = vmatprep.subr.mxu0 0.0
    %884 = vmatpush1.msra.mxu0 %v543
    %885 = vmatprep.subr.mxu0 0.0
    %886 = vmatpush1.msra.mxu0 %v544
    %887 = vmatprep.subr.mxu0 0.0
    %888 = vmatpush1.msra.mxu0 %v545
    %889 = vmatprep.subr.mxu0 0.0
    %890 = vmatpush1.msra.mxu0 %v546
    %891 = vmatprep.subr.mxu0 0.0
    %892 = vmatpush1.msra.mxu0 0.0
    %893 = vmatprep.subr.mxu0 0.0
    %894 = vmatpush1.msra.mxu0 0.0
    %895 = vmatprep.subr.mxu0 0.0
    %896 = vmatpush1.msra.mxu0 0.0
    %897 = vmatprep.subr.mxu0 0.0
    %898 = vmatpush1.msra.mxu0 0.0
    %899 = vmatprep.subr.mxu0 0.0
    %900 = vmatpush1.msra.mxu0 0.0
    %901 = vmatprep.subr.mxu0 0.0
    %902 = vmatpush1.msra.mxu0 0.0
    %903 = vmatprep.subr.mxu0 0.0
    %904 = vmatpush1.msra.mxu0 0.0
    %905 = vmatprep.subr.mxu0 0.0
    %906 = vmatpush1.msra.mxu0 0.0
    %907 = vmatprep.subr.mxu0 0.0
    %908 = vmatpush1.msra.mxu0 0.0
    %909 = vmatprep.subr.mxu0 0.0
    %910 = vmatpush1.msra.mxu0 0.0
    %911 = vmatprep.subr.mxu0 0.0
    %912 = vmatpush1.msra.mxu0 0.0
    %913 = vmatprep.subr.mxu0 0.0
    %914 = vmatpush1.msra.mxu0 0.0
    %915 = vmatprep.subr.mxu0 0.0
    %916 = vmatpush1.msra.mxu0 0.0
    %917 = vmatprep.subr.mxu0 0.0
    %918 = vmatpush1.msra.mxu0 0.0
    %919 = vmatprep.subr.mxu0 0.0
    %920 = vmatpush1.msra.mxu0 0.0
    %921 = vmatprep.subr.mxu0 0.0
    %922 = vmatpush1.msra.mxu0 0.0
    %923 = vmatprep.mubr.f32.mxu0 0.0
    %924 = vmatmul.mubr.f32.gmra.mrb[0].mxu0 %v858
    %v925 = vpop.f32.mrb[0].mxu0
    %v926 = vadd.f32 0.0, %v925
    %v927 = vpop.f32.mrb[0].mxu0
    %928 = vdwg.mxu0
    %v929 = vmul.f32 %v310, %v715
    %930 = vmatprep.subr.mxu0 0.0
    %931 = vmatpush1.msra.mxu0 %v531
    %932 = vmatprep.subr.mxu0 0.0
    %933 = vmatpush1.msra.mxu0 %v532
    %934 = vmatprep.subr.mxu0 0.0
    %935 = vmatpush1.msra.mxu0 %v533
    %936 = vmatprep.subr.mxu0 0.0
    %937 = vmatpush1.msra.mxu0 %v534
    %938 = vmatprep.subr.mxu0 0.0
    %939 = vmatpush1.msra.mxu0 %v535
    %940 = vmatprep.subr.mxu0 0.0
    %941 = vmatpush1.msra.mxu0 %v536
    %942 = vmatprep.subr.mxu0 0.0
    %943 = vmatpush1.msra.mxu0 %v537
    %944 = vmatprep.subr.mxu0 0.0
    %945 = vmatpush1.msra.mxu0 %v538
    %946 = vmatprep.subr.mxu0 0.0
    %947 = vmatpush1.msra.mxu0 %v539
    %948 = vmatprep.subr.mxu0 0.0
    %949 = vmatpush1.msra.mxu0 %v540
    %950 = vmatprep.subr.mxu0 0.0
    %951 = vmatpush1.msra.mxu0 %v541
    %952 = vmatprep.subr.mxu0 0.0
    %953 = vmatpush1.msra.mxu0 %v542
    %954 = vmatprep.subr.mxu0 0.0
    %955 = vmatpush1.msra.mxu0 %v543
    %956 = vmatprep.subr.mxu0 0.0
    %957 = vmatpush1.msra.mxu0 %v544
    %958 = vmatprep.subr.mxu0 0.0
    %959 = vmatpush1.msra.mxu0 %v545
    %960 = vmatprep.subr.mxu0 0.0
    %961 = vmatpush1.msra.mxu0 %v546
    %962 = vmatprep.subr.mxu0 0.0
    %963 = vmatpush1.msra.mxu0 0.0
    %964 = vmatprep.subr.mxu0 0.0
    %965 = vmatpush1.msra.mxu0 0.0
    %966 = vmatprep.subr.mxu0 0.0
    %967 = vmatpush1.msra.mxu0 0.0
    %968 = vmatprep.subr.mxu0 0.0
    %969 = vmatpush1.msra.mxu0 0.0
    %970 = vmatprep.subr.mxu0 0.0
    %971 = vmatpush1.msra.mxu0 0.0
    %972 = vmatprep.subr.mxu0 0.0
    %973 = vmatpush1.msra.mxu0 0.0
    %974 = vmatprep.subr.mxu0 0.0
    %975 = vmatpush1.msra.mxu0 0.0
    %976 = vmatprep.subr.mxu0 0.0
    %977 = vmatpush1.msra.mxu0 0.0
    %978 = vmatprep.subr.mxu0 0.0
    %979 = vmatpush1.msra.mxu0 0.0
    %980 = vmatprep.subr.mxu0 0.0
    %981 = vmatpush1.msra.mxu0 0.0
    %982 = vmatprep.subr.mxu0 0.0
    %983 = vmatpush1.msra.mxu0 0.0
    %984 = vmatprep.subr.mxu0 0.0
    %985 = vmatpush1.msra.mxu0 0.0
    %986 = vmatprep.subr.mxu0 0.0
    %987 = vmatpush1.msra.mxu0 0.0
    %988 = vmatprep.subr.mxu0 0.0
    %989 = vmatpush1.msra.mxu0 0.0
    %990 = vmatprep.subr.mxu0 0.0
    %991 = vmatpush1.msra.mxu0 0.0
    %992 = vmatprep.subr.mxu0 0.0
    %993 = vmatpush1.msra.mxu0 0.0
    %994 = vmatprep.mubr.f32.mxu0 0.0
    %995 = vmatmul.mubr.f32.gmra.mrb[0].mxu0 %v929
    %v996 = vpop.f32.mrb[0].mxu0
    %v997 = vadd.f32 0.0, %v996
    %v998 = vpop.f32.mrb[0].mxu0
    %999 = vdwg.mxu0
    %v1000 = vmul.f32 %v379, %v715
    %1001 = vmatprep.subr.mxu0 0.0
    %1002 = vmatpush1.msra.mxu0 %v531
    %1003 = vmatprep.subr.mxu0 0.0
    %1004 = vmatpush1.msra.mxu0 %v532
    %1005 = vmatprep.subr.mxu0 0.0
    %1006 = vmatpush1.msra.mxu0 %v533
    %1007 = vmatprep.subr.mxu0 0.0
    %1008 = vmatpush1.msra.mxu0 %v534
    %1009 = vmatprep.subr.mxu0 0.0
    %1010 = vmatpush1.msra.mxu0 %v535
    %1011 = vmatprep.subr.mxu0 0.0
    %1012 = vmatpush1.msra.mxu0 %v536
    %1013 = vmatprep.subr.mxu0 0.0
    %1014 = vmatpush1.msra.mxu0 %v537
    %1015 = vmatprep.subr.mxu0 0.0
    %1016 = vmatpush1.msra.mxu0 %v538
    %1017 = vmatprep.subr.mxu0 0.0
    %1018 = vmatpush1.msra.mxu0 %v539
    %1019 = vmatprep.subr.mxu0 0.0
    %1020 = vmatpush1.msra.mxu0 %v540
    %1021 = vmatprep.subr.mxu0 0.0
    %1022 = vmatpush1.msra.mxu0 %v541
    %1023 = vmatprep.subr.mxu0 0.0
    %1024 = vmatpush1.msra.mxu0 %v542
    %1025 = vmatprep.subr.mxu0 0.0
    %1026 = vmatpush1.msra.mxu0 %v543
    %1027 = vmatprep.subr.mxu0 0.0
    %1028 = vmatpush1.msra.mxu0 %v544
    %1029 = vmatprep.subr.mxu0 0.0
    %1030 = vmatpush1.msra.mxu0 %v545
    %1031 = vmatprep.subr.mxu0 0.0
    %1032 = vmatpush1.msra.mxu0 %v546
    %1033 = vmatprep.subr.mxu0 0.0
    %1034 = vmatpush1.msra.mxu0 0.0
    %1035 = vmatprep.subr.mxu0 0.0
    %1036 = vmatpush1.msra.mxu0 0.0
    %1037 = vmatprep.subr.mxu0 0.0
    %1038 = vmatpush1.msra.mxu0 0.0
    %1039 = vmatprep.subr.mxu0 0.0
    %1040 = vmatpush1.msra.mxu0 0.0
    %1041 = vmatprep.subr.mxu0 0.0
    %1042 = vmatpush1.msra.mxu0 0.0
    %1043 = vmatprep.subr.mxu0 0.0
    %1044 = vmatpush1.msra.mxu0 0.0
    %1045 = vmatprep.subr.mxu0 0.0
    %1046 = vmatpush1.msra.mxu0 0.0
    %1047 = vmatprep.subr.mxu0 0.0
    %1048 = vmatpush1.msra.mxu0 0.0
    %1049 = vmatprep.subr.mxu0 0.0
    %1050 = vmatpush1.msra.mxu0 0.0
    %1051 = vmatprep.subr.mxu0 0.0
    %1052 = vmatpush1.msra.mxu0 0.0
    %1053 = vmatprep.subr.mxu0 0.0
    %1054 = vmatpush1.msra.mxu0 0.0
    %1055 = vmatprep.subr.mxu0 0.0
    %1056 = vmatpush1.msra.mxu0 0.0
    %1057 = vmatprep.subr.mxu0 0.0
    %1058 = vmatpush1.msra.mxu0 0.0
    %1059 = vmatprep.subr.mxu0 0.0
    %1060 = vmatpush1.msra.mxu0 0.0
    %1061 = vmatprep.subr.mxu0 0.0
    %1062 = vmatpush1.msra.mxu0 0.0
    %1063 = vmatprep.subr.mxu0 0.0
    %1064 = vmatpush1.msra.mxu0 0.0
    %1065 = vmatprep.mubr.f32.mxu0 0.0
    %1066 = vmatmul.mubr.f32.gmra.mrb[0].mxu0 %v1000
    %v1067 = vpop.f32.mrb[0].mxu0
    %v1068 = vadd.f32 0.0, %v1067
    %v1069 = vpop.f32.mrb[0].mxu0
    %1070 = vdwg.mxu0
    %v1071 = vmul.f32 %v381, %v715
    %1072 = vmatprep.subr.mxu0 0.0
    %1073 = vmatpush1.msra.mxu0 %v531
    %1074 = vmatprep.subr.mxu0 0.0
    %1075 = vmatpush1.msra.mxu0 %v532
    %1076 = vmatprep.subr.mxu0 0.0
    %1077 = vmatpush1.msra.mxu0 %v533
    %1078 = vmatprep.subr.mxu0 0.0
    %1079 = vmatpush1.msra.mxu0 %v534
    %1080 = vmatprep.subr.mxu0 0.0
    %1081 = vmatpush1.msra.mxu0 %v535
    %1082 = vmatprep.subr.mxu0 0.0
    %1083 = vmatpush1.msra.mxu0 %v536
    %1084 = vmatprep.subr.mxu0 0.0
    %1085 = vmatpush1.msra.mxu0 %v537
    %1086 = vmatprep.subr.mxu0 0.0
    %1087 = vmatpush1.msra.mxu0 %v538
    %1088 = vmatprep.subr.mxu0 0.0
    %1089 = vmatpush1.msra.mxu0 %v539
    %1090 = vmatprep.subr.mxu0 0.0
    %1091 = vmatpush1.msra.mxu0 %v540
    %1092 = vmatprep.subr.mxu0 0.0
    %1093 = vmatpush1.msra.mxu0 %v541
    %1094 = vmatprep.subr.mxu0 0.0
    %1095 = vmatpush1.msra.mxu0 %v542
    %1096 = vmatprep.subr.mxu0 0.0
    %1097 = vmatpush1.msra.mxu0 %v543
    %1098 = vmatprep.subr.mxu0 0.0
    %1099 = vmatpush1.msra.mxu0 %v544
    %1100 = vmatprep.subr.mxu0 0.0
    %1101 = vmatpush1.msra.mxu0 %v545
    %1102 = vmatprep.subr.mxu0 0.0
    %1103 = vmatpush1.msra.mxu0 %v546
    %1104 = vmatprep.subr.mxu0 0.0
    %1105 = vmatpush1.msra.mxu0 0.0
    %1106 = vmatprep.subr.mxu0 0.0
    %1107 = vmatpush1.msra.mxu0 0.0
    %1108 = vmatprep.subr.mxu0 0.0
    %1109 = vmatpush1.msra.mxu0 0.0
    %1110 = vmatprep.subr.mxu0 0.0
    %1111 = vmatpush1.msra.mxu0 0.0
    %1112 = vmatprep.subr.mxu0 0.0
    %1113 = vmatpush1.msra.mxu0 0.0
    %1114 = vmatprep.subr.mxu0 0.0
    %1115 = vmatpush1.msra.mxu0 0.0
    %1116 = vmatprep.subr.mxu0 0.0
    %1117 = vmatpush1.msra.mxu0 0.0
    %1118 = vmatprep.subr.mxu0 0.0
    %1119 = vmatpush1.msra.mxu0 0.0
    %1120 = vmatprep.subr.mxu0 0.0
    %1121 = vmatpush1.msra.mxu0 0.0
    %1122 = vmatprep.subr.mxu0 0.0
    %1123 = vmatpush1.msra.mxu0 0.0
    %1124 = vmatprep.subr.mxu0 0.0
    %1125 = vmatpush1.msra.mxu0 0.0
    %1126 = vmatprep.subr.mxu0 0.0
    %1127 = vmatpush1.msra.mxu0 0.0
    %1128 = vmatprep.subr.mxu0 0.0
    %1129 = vmatpush1.msra.mxu0 0.0
    %1130 = vmatprep.subr.mxu0 0.0
    %1131 = vmatpush1.msra.mxu0 0.0
    %1132 = vmatprep.subr.mxu0 0.0
    %1133 = vmatpush1.msra.mxu0 0.0
    %1134 = vmatprep.subr.mxu0 0.0
    %1135 = vmatpush1.msra.mxu0 0.0
    %1136 = vmatprep.mubr.f32.mxu0 0.0
    %1137 = vmatmul.mubr.f32.gmra.mrb[0].mxu0 %v1071
    %v1138 = vpop.f32.mrb[0].mxu0
    %v1139 = vadd.f32 0.0, %v1138
    %v1140 = vpop.f32.mrb[0].mxu0
    %1141 = vdwg.mxu0
    %v1142 = vmul.f32 %v450, %v715
    %1143 = vmatprep.subr.mxu0 0.0
    %1144 = vmatpush1.msra.mxu0 %v531
    %1145 = vmatprep.subr.mxu0 0.0
    %1146 = vmatpush1.msra.mxu0 %v532
    %1147 = vmatprep.subr.mxu0 0.0
    %1148 = vmatpush1.msra.mxu0 %v533
    %1149 = vmatprep.subr.mxu0 0.0
    %1150 = vmatpush1.msra.mxu0 %v534
    %1151 = vmatprep.subr.mxu0 0.0
    %1152 = vmatpush1.msra.mxu0 %v535
    %1153 = vmatprep.subr.mxu0 0.0
    %1154 = vmatpush1.msra.mxu0 %v536
    %1155 = vmatprep.subr.mxu0 0.0
    %1156 = vmatpush1.msra.mxu0 %v537
    %1157 = vmatprep.subr.mxu0 0.0
    %1158 = vmatpush1.msra.mxu0 %v538
    %1159 = vmatprep.subr.mxu0 0.0
    %1160 = vmatpush1.msra.mxu0 %v539
    %1161 = vmatprep.subr.mxu0 0.0
    %1162 = vmatpush1.msra.mxu0 %v540
    %1163 = vmatprep.subr.mxu0 0.0
    %1164 = vmatpush1.msra.mxu0 %v541
    %1165 = vmatprep.subr.mxu0 0.0
    %1166 = vmatpush1.msra.mxu0 %v542
    %1167 = vmatprep.subr.mxu0 0.0
    %1168 = vmatpush1.msra.mxu0 %v543
    %1169 = vmatprep.subr.mxu0 0.0
    %1170 = vmatpush1.msra.mxu0 %v544
    %1171 = vmatprep.subr.mxu0 0.0
    %1172 = vmatpush1.msra.mxu0 %v545
    %1173 = vmatprep.subr.mxu0 0.0
    %1174 = vmatpush1.msra.mxu0 %v546
    %1175 = vmatprep.subr.mxu0 0.0
    %1176 = vmatpush1.msra.mxu0 0.0
    %1177 = vmatprep.subr.mxu0 0.0
    %1178 = vmatpush1.msra.mxu0 0.0
    %1179 = vmatprep.subr.mxu0 0.0
    %1180 = vmatpush1.msra.mxu0 0.0
    %1181 = vmatprep.subr.mxu0 0.0
    %1182 = vmatpush1.msra.mxu0 0.0
    %1183 = vmatprep.subr.mxu0 0.0
    %1184 = vmatpush1.msra.mxu0 0.0
    %1185 = vmatprep.subr.mxu0 0.0
    %1186 = vmatpush1.msra.mxu0 0.0
    %1187 = vmatprep.subr.mxu0 0.0
    %1188 = vmatpush1.msra.mxu0 0.0
    %1189 = vmatprep.subr.mxu0 0.0
    %1190 = vmatpush1.msra.mxu0 0.0
    %1191 = vmatprep.subr.mxu0 0.0
    %1192 = vmatpush1.msra.mxu0 0.0
    %1193 = vmatprep.subr.mxu0 0.0
    %1194 = vmatpush1.msra.mxu0 0.0
    %1195 = vmatprep.subr.mxu0 0.0
    %1196 = vmatpush1.msra.mxu0 0.0
    %1197 = vmatprep.subr.mxu0 0.0
    %1198 = vmatpush1.msra.mxu0 0.0
    %1199 = vmatprep.subr.mxu0 0.0
    %1200 = vmatpush1.msra.mxu0 0.0
    %1201 = vmatprep.subr.mxu0 0.0
    %1202 = vmatpush1.msra.mxu0 0.0
    %1203 = vmatprep.subr.mxu0 0.0
    %1204 = vmatpush1.msra.mxu0 0.0
    %1205 = vmatprep.subr.mxu0 0.0
    %1206 = vmatpush1.msra.mxu0 0.0
    %1207 = vmatprep.mubr.f32.mxu0 0.0
    %1208 = vmatmul.mubr.f32.gmra.mrb[0].mxu0 %v1142
    %v1209 = vpop.f32.mrb[0].mxu0
    %v1210 = vadd.f32 0.0, %v1209
    %v1211 = vpop.f32.mrb[0].mxu0
    %1212 = vdwg.mxu0
    %v1213 = vmul.f32 %v452, %v715
    %1214 = vmatprep.subr.mxu0 0.0
    %1215 = vmatpush1.msra.mxu0 %v531
    %1216 = vmatprep.subr.mxu0 0.0
    %1217 = vmatpush1.msra.mxu0 %v532
    %1218 = vmatprep.subr.mxu0 0.0
    %1219 = vmatpush1.msra.mxu0 %v533
    %1220 = vmatprep.subr.mxu0 0.0
    %1221 = vmatpush1.msra.mxu0 %v534
    %1222 = vmatprep.subr.mxu0 0.0
    %1223 = vmatpush1.msra.mxu0 %v535
    %1224 = vmatprep.subr.mxu0 0.0
    %1225 = vmatpush1.msra.mxu0 %v536
    %1226 = vmatprep.subr.mxu0 0.0
    %1227 = vmatpush1.msra.mxu0 %v537
    %1228 = vmatprep.subr.mxu0 0.0
    %1229 = vmatpush1.msra.mxu0 %v538
    %1230 = vmatprep.subr.mxu0 0.0
    %1231 = vmatpush1.msra.mxu0 %v539
    %1232 = vmatprep.subr.mxu0 0.0
    %1233 = vmatpush1.msra.mxu0 %v540
    %1234 = vmatprep.subr.mxu0 0.0
    %1235 = vmatpush1.msra.mxu0 %v541
    %1236 = vmatprep.subr.mxu0 0.0
    %1237 = vmatpush1.msra.mxu0 %v542
    %1238 = vmatprep.subr.mxu0 0.0
    %1239 = vmatpush1.msra.mxu0 %v543
    %1240 = vmatprep.subr.mxu0 0.0
    %1241 = vmatpush1.msra.mxu0 %v544
    %1242 = vmatprep.subr.mxu0 0.0
    %1243 = vmatpush1.msra.mxu0 %v545
    %1244 = vmatprep.subr.mxu0 0.0
    %1245 = vmatpush1.msra.mxu0 %v546
    %1246 = vmatprep.subr.mxu0 0.0
    %1247 = vmatpush1.msra.mxu0 0.0
    %1248 = vmatprep.subr.mxu0 0.0
    %1249 = vmatpush1.msra.mxu0 0.0
    %1250 = vmatprep.subr.mxu0 0.0
    %1251 = vmatpush1.msra.mxu0 0.0
    %1252 = vmatprep.subr.mxu0 0.0
    %1253 = vmatpush1.msra.mxu0 0.0
    %1254 = vmatprep.subr.mxu0 0.0
    %1255 = vmatpush1.msra.mxu0 0.0
    %1256 = vmatprep.subr.mxu0 0.0
    %1257 = vmatpush1.msra.mxu0 0.0
    %1258 = vmatprep.subr.mxu0 0.0
    %1259 = vmatpush1.msra.mxu0 0.0
    %1260 = vmatprep.subr.mxu0 0.0
    %1261 = vmatpush1.msra.mxu0 0.0
    %1262 = vmatprep.subr.mxu0 0.0
    %1263 = vmatpush1.msra.mxu0 0.0
    %1264 = vmatprep.subr.mxu0 0.0
    %1265 = vmatpush1.msra.mxu0 0.0
    %1266 = vmatprep.subr.mxu0 0.0
    %1267 = vmatpush1.msra.mxu0 0.0
    %1268 = vmatprep.subr.mxu0 0.0
    %1269 = vmatpush1.msra.mxu0 0.0
    %1270 = vmatprep.subr.mxu0 0.0
    %1271 = vmatpush1.msra.mxu0 0.0
    %1272 = vmatprep.subr.mxu0 0.0
    %1273 = vmatpush1.msra.mxu0 0.0
    %1274 = vmatprep.subr.mxu0 0.0
    %1275 = vmatpush1.msra.mxu0 0.0
    %1276 = vmatprep.subr.mxu0 0.0
    %1277 = vmatpush1.msra.mxu0 0.0
    %1278 = vmatprep.mubr.f32.mxu0 0.0
    %1279 = vmatmul.mubr.f32.gmra.mrb[0].mxu0 %v1213
    %v1280 = vpop.f32.mrb[0].mxu0
    %v1281 = vadd.f32 0.0, %v1280
    %v1282 = vpop.f32.mrb[0].mxu0
    %1283 = vdwg.mxu0
    %v1284 = vmax.f32 %v784, %v855
    %v1285 = vmax.f32 %v1284, %v926
    %v1286 = vmax.f32 %v1285, %v997
    %v1287 = vmax.f32 %v1286, %v1068
    %v1288 = vmax.f32 %v1287, %v1139
    %v1289 = vmax.f32 %v1288, %v1210
    %v1290 = vmax.f32 %v1289, %v1281
    %v1291 = vsub.f32 %v784, %v1290
    %v1292 = vmul.f32 %v1291, 1.442695
    %v1293 = vpow.pop %v1292
    %v1294 = vsub.f32 %v855, %v1290
    %v1295 = vmul.f32 %v1294, 1.442695
    %v1296 = vpow.pop %v1295
    %v1297 = vsub.f32 %v926, %v1290
    %v1298 = vmul.f32 %v1297, 1.442695
    %v1299 = vpow.pop %v1298
    %v1300 = vsub.f32 %v997, %v1290
    %v1301 = vmul.f32 %v1300, 1.442695
    %v1302 = vpow.pop %v1301
    %v1303 = vsub.f32 %v1068, %v1290
    %v1304 = vmul.f32 %v1303, 1.442695
    %v1305 = vpow.pop %v1304
    %v1306 = vsub.f32 %v1139, %v1290
    %v1307 = vmul.f32 %v1306, 1.442695
    %v1308 = vpow.pop %v1307
    %v1309 = vsub.f32 %v1210, %v1290
    %v1310 = vmul.f32 %v1309, 1.442695
    %v1311 = vpow.pop %v1310
    %v1312 = vsub.f32 %v1281, %v1290
    %v1313 = vmul.f32 %v1312, 1.442695
    %v1314 = vpow.pop %v1313
    %v1315 = vadd.f32 %v1293, %v1296
    %v1316 = vadd.f32 %v1315, %v1299
    %v1317 = vadd.f32 %v1316, %v1302
    %v1318 = vadd.f32 %v1317, %v1305
    %v1319 = vadd.f32 %v1318, %v1308
    %v1320 = vadd.f32 %v1319, %v1311
    %v1321 = vadd.f32 %v1320, %v1314
    %v1322 = vrcp.pop %v1321
    %v1323 = vmul.f32 %v1293, %v1322
    %v1325 = vsel %vm637, %v1323, 0
    %1327 = vmatprep.subr.mxu0 0.0
    %1328 = vmatpush1.msra.mxu0 %v643
    %1329 = vmatprep.subr.mxu0 0.0
    %1330 = vmatpush1.msra.mxu0 0.0
    %1331 = vmatprep.subr.mxu0 0.0
    %1332 = vmatpush1.msra.mxu0 0.0
    %1333 = vmatprep.subr.mxu0 0.0
    %1334 = vmatpush1.msra.mxu0 0.0
    %1335 = vmatprep.subr.mxu0 0.0
    %1336 = vmatpush1.msra.mxu0 0.0
    %1337 = vmatprep.subr.mxu0 0.0
    %1338 = vmatpush1.msra.mxu0 0.0
    %1339 = vmatprep.subr.mxu0 0.0
    %1340 = vmatpush1.msra.mxu0 0.0
    %1341 = vmatprep.subr.mxu0 0.0
    %1342 = vmatpush1.msra.mxu0 0.0
    %1343 = vmatprep.subr.mxu0 0.0
    %1344 = vmatpush1.msra.mxu0 0.0
    %1345 = vmatprep.subr.mxu0 0.0
    %1346 = vmatpush1.msra.mxu0 0.0
    %1347 = vmatprep.subr.mxu0 0.0
    %1348 = vmatpush1.msra.mxu0 0.0
    %1349 = vmatprep.subr.mxu0 0.0
    %1350 = vmatpush1.msra.mxu0 0.0
    %1351 = vmatprep.subr.mxu0 0.0
    %1352 = vmatpush1.msra.mxu0 0.0
    %1353 = vmatprep.subr.mxu0 0.0
    %1354 = vmatpush1.msra.mxu0 0.0
    %1355 = vmatprep.subr.mxu0 0.0
    %1356 = vmatpush1.msra.mxu0 0.0
    %1357 = vmatprep.subr.mxu0 0.0
    %1358 = vmatpush1.msra.mxu0 0.0
    %1359 = vmatprep.subr.mxu0 0.0
    %1360 = vmatpush1.msra.mxu0 0.0
    %1361 = vmatprep.subr.mxu0 0.0
    %1362 = vmatpush1.msra.mxu0 0.0
    %1363 = vmatprep.subr.mxu0 0.0
    %1364 = vmatpush1.msra.mxu0 0.0
    %1365 = vmatprep.subr.mxu0 0.0
    %1366 = vmatpush1.msra.mxu0 0.0
    %1367 = vmatprep.subr.mxu0 0.0
    %1368 = vmatpush1.msra.mxu0 0.0
    %1369 = vmatprep.subr.mxu0 0.0
    %1370 = vmatpush1.msra.mxu0 0.0
    %1371 = vmatprep.subr.mxu0 0.0
    %1372 = vmatpush1.msra.mxu0 0.0
    %1373 = vmatprep.subr.mxu0 0.0
    %1374 = vmatpush1.msra.mxu0 0.0
    %1375 = vmatprep.subr.mxu0 0.0
    %1376 = vmatpush1.msra.mxu0 0.0
    %1377 = vmatprep.subr.mxu0 0.0
    %1378 = vmatpush1.msra.mxu0 0.0
    %1379 = vmatprep.subr.mxu0 0.0
    %1380 = vmatpush1.msra.mxu0 0.0
    %1381 = vmatprep.subr.mxu0 0.0
    %1382 = vmatpush1.msra.mxu0 0.0
    %1383 = vmatprep.subr.mxu0 0.0
    %1384 = vmatpush1.msra.mxu0 0.0
    %1385 = vmatprep.subr.mxu0 0.0
    %1386 = vmatpush1.msra.mxu0 0.0
    %1387 = vmatprep.subr.mxu0 0.0
    %1388 = vmatpush1.msra.mxu0 0.0
    %1389 = vmatprep.subr.mxu0 0.0
    %1390 = vmatpush1.msra.mxu0 0.0
    %1391 = vmatprep.mubr.f32.mxu0 0.0
    %1392 = vmatmul.mubr.f32.gmra.mrb[0].mxu0 %v1325
    %v1393 = vpop.f32.mrb[0].mxu0
    %v1394 = vadd.f32 0.0, %v1393
    %v1395 = vpop.f32.mrb[0].mxu0
    %1396 = vdwg.mxu0
    %v1397 = vmul.f32 %v1394, %v237
    %v1398 = vadd.f32 %v1397, 0.0
    %v1399 = vmul.f32 %v1296, %v1322
    %v1401 = vsel %vm637, %v1399, 0
    %1403 = vmatprep.subr.mxu0 0.0
    %1404 = vmatpush1.msra.mxu0 %v643
    %1405 = vmatprep.subr.mxu0 0.0
    %1406 = vmatpush1.msra.mxu0 0.0
    %1407 = vmatprep.subr.mxu0 0.0
    %1408 = vmatpush1.msra.mxu0 0.0
    %1409 = vmatprep.subr.mxu0 0.0
    %1410 = vmatpush1.msra.mxu0 0.0
    %1411 = vmatprep.subr.mxu0 0.0
    %1412 = vmatpush1.msra.mxu0 0.0
    %1413 = vmatprep.subr.mxu0 0.0
    %1414 = vmatpush1.msra.mxu0 0.0
    %1415 = vmatprep.subr.mxu0 0.0
    %1416 = vmatpush1.msra.mxu0 0.0
    %1417 = vmatprep.subr.mxu0 0.0
    %1418 = vmatpush1.msra.mxu0 0.0
    %1419 = vmatprep.subr.mxu0 0.0
    %1420 = vmatpush1.msra.mxu0 0.0
    %1421 = vmatprep.subr.mxu0 0.0
    %1422 = vmatpush1.msra.mxu0 0.0
    %1423 = vmatprep.subr.mxu0 0.0
    %1424 = vmatpush1.msra.mxu0 0.0
    %1425 = vmatprep.subr.mxu0 0.0
    %1426 = vmatpush1.msra.mxu0 0.0
    %1427 = vmatprep.subr.mxu0 0.0
    %1428 = vmatpush1.msra.mxu0 0.0
    %1429 = vmatprep.subr.mxu0 0.0
    %1430 = vmatpush1.msra.mxu0 0.0
    %1431 = vmatprep.subr.mxu0 0.0
    %1432 = vmatpush1.msra.mxu0 0.0
    %1433 = vmatprep.subr.mxu0 0.0
    %1434 = vmatpush1.msra.mxu0 0.0
    %1435 = vmatprep.subr.mxu0 0.0
    %1436 = vmatpush1.msra.mxu0 0.0
    %1437 = vmatprep.subr.mxu0 0.0
    %1438 = vmatpush1.msra.mxu0 0.0
    %1439 = vmatprep.subr.mxu0 0.0
    %1440 = vmatpush1.msra.mxu0 0.0
    %1441 = vmatprep.subr.mxu0 0.0
    %1442 = vmatpush1.msra.mxu0 0.0
    %1443 = vmatprep.subr.mxu0 0.0
    %1444 = vmatpush1.msra.mxu0 0.0
    %1445 = vmatprep.subr.mxu0 0.0
    %1446 = vmatpush1.msra.mxu0 0.0
    %1447 = vmatprep.subr.mxu0 0.0
    %1448 = vmatpush1.msra.mxu0 0.0
    %1449 = vmatprep.subr.mxu0 0.0
    %1450 = vmatpush1.msra.mxu0 0.0
    %1451 = vmatprep.subr.mxu0 0.0
    %1452 = vmatpush1.msra.mxu0 0.0
    %1453 = vmatprep.subr.mxu0 0.0
    %1454 = vmatpush1.msra.mxu0 0.0
    %1455 = vmatprep.subr.mxu0 0.0
    %1456 = vmatpush1.msra.mxu0 0.0
    %1457 = vmatprep.subr.mxu0 0.0
    %1458 = vmatpush1.msra.mxu0 0.0
    %1459 = vmatprep.subr.mxu0 0.0
    %1460 = vmatpush1.msra.mxu0 0.0
    %1461 = vmatprep.subr.mxu0 0.0
    %1462 = vmatpush1.msra.mxu0 0.0
    %1463 = vmatprep.subr.mxu0 0.0
    %1464 = vmatpush1.msra.mxu0 0.0
    %1465 = vmatprep.subr.mxu0 0.0
    %1466 = vmatpush1.msra.mxu0 0.0
    %1467 = vmatprep.mubr.f32.mxu0 0.0
    %1468 = vmatmul.mubr.f32.gmra.mrb[0].mxu0 %v1401
    %v1469 = vpop.f32.mrb[0].mxu0
    %v1470 = vadd.f32 0.0, %v1469
    %v1471 = vpop.f32.mrb[0].mxu0
    %1472 = vdwg.mxu0
    %v1473 = vmul.f32 %v1470, %v239
    %v1474 = vadd.f32 %v1398, %v1473
    %v1475 = vmul.f32 %v1299, %v1322
    %v1477 = vsel %vm637, %v1475, 0
    %1479 = vmatprep.subr.mxu0 0.0
    %1480 = vmatpush1.msra.mxu0 %v643
    %1481 = vmatprep.subr.mxu0 0.0
    %1482 = vmatpush1.msra.mxu0 0.0
    %1483 = vmatprep.subr.mxu0 0.0
    %1484 = vmatpush1.msra.mxu0 0.0
    %1485 = vmatprep.subr.mxu0 0.0
    %1486 = vmatpush1.msra.mxu0 0.0
    %1487 = vmatprep.subr.mxu0 0.0
    %1488 = vmatpush1.msra.mxu0 0.0
    %1489 = vmatprep.subr.mxu0 0.0
    %1490 = vmatpush1.msra.mxu0 0.0
    %1491 = vmatprep.subr.mxu0 0.0
    %1492 = vmatpush1.msra.mxu0 0.0
    %1493 = vmatprep.subr.mxu0 0.0
    %1494 = vmatpush1.msra.mxu0 0.0
    %1495 = vmatprep.subr.mxu0 0.0
    %1496 = vmatpush1.msra.mxu0 0.0
    %1497 = vmatprep.subr.mxu0 0.0
    %1498 = vmatpush1.msra.mxu0 0.0
    %1499 = vmatprep.subr.mxu0 0.0
    %1500 = vmatpush1.msra.mxu0 0.0
    %1501 = vmatprep.subr.mxu0 0.0
    %1502 = vmatpush1.msra.mxu0 0.0
    %1503 = vmatprep.subr.mxu0 0.0
    %1504 = vmatpush1.msra.mxu0 0.0
    %1505 = vmatprep.subr.mxu0 0.0
    %1506 = vmatpush1.msra.mxu0 0.0
    %1507 = vmatprep.subr.mxu0 0.0
    %1508 = vmatpush1.msra.mxu0 0.0
    %1509 = vmatprep.subr.mxu0 0.0
    %1510 = vmatpush1.msra.mxu0 0.0
    %1511 = vmatprep.subr.mxu0 0.0
    %1512 = vmatpush1.msra.mxu0 0.0
    %1513 = vmatprep.subr.mxu0 0.0
    %1514 = vmatpush1.msra.mxu0 0.0
    %1515 = vmatprep.subr.mxu0 0.0
    %1516 = vmatpush1.msra.mxu0 0.0
    %1517 = vmatprep.subr.mxu0 0.0
    %1518 = vmatpush1.msra.mxu0 0.0
    %1519 = vmatprep.subr.mxu0 0.0
    %1520 = vmatpush1.msra.mxu0 0.0
    %1521 = vmatprep.subr.mxu0 0.0
    %1522 = vmatpush1.msra.mxu0 0.0
    %1523 = vmatprep.subr.mxu0 0.0
    %1524 = vmatpush1.msra.mxu0 0.0
    %1525 = vmatprep.subr.mxu0 0.0
    %1526 = vmatpush1.msra.mxu0 0.0
    %1527 = vmatprep.subr.mxu0 0.0
    %1528 = vmatpush1.msra.mxu0 0.0
    %1529 = vmatprep.subr.mxu0 0.0
    %1530 = vmatpush1.msra.mxu0 0.0
    %1531 = vmatprep.subr.mxu0 0.0
    %1532 = vmatpush1.msra.mxu0 0.0
    %1533 = vmatprep.subr.mxu0 0.0
    %1534 = vmatpush1.msra.mxu0 0.0
    %1535 = vmatprep.subr.mxu0 0.0
    %1536 = vmatpush1.msra.mxu0 0.0
    %1537 = vmatprep.subr.mxu0 0.0
    %1538 = vmatpush1.msra.mxu0 0.0
    %1539 = vmatprep.subr.mxu0 0.0
    %1540 = vmatpush1.msra.mxu0 0.0
    %1541 = vmatprep.subr.mxu0 0.0
    %1542 = vmatpush1.msra.mxu0 0.0
    %1543 = vmatprep.mubr.f32.mxu0 0.0
    %1544 = vmatmul.mubr.f32.gmra.mrb[0].mxu0 %v1477
    %v1545 = vpop.f32.mrb[0].mxu0
    %v1546 = vadd.f32 0.0, %v1545
    %v1547 = vpop.f32.mrb[0].mxu0
    %1548 = vdwg.mxu0
    %v1549 = vmul.f32 %v1546, %v308
    %v1550 = vadd.f32 %v1474, %v1549
    %v1551 = vmul.f32 %v1302, %v1322
    %v1553 = vsel %vm637, %v1551, 0
    %1555 = vmatprep.subr.mxu0 0.0
    %1556 = vmatpush1.msra.mxu0 %v643
    %1557 = vmatprep.subr.mxu0 0.0
    %1558 = vmatpush1.msra.mxu0 0.0
    %1559 = vmatprep.subr.mxu0 0.0
    %1560 = vmatpush1.msra.mxu0 0.0
    %1561 = vmatprep.subr.mxu0 0.0
    %1562 = vmatpush1.msra.mxu0 0.0
    %1563 = vmatprep.subr.mxu0 0.0
    %1564 = vmatpush1.msra.mxu0 0.0
    %1565 = vmatprep.subr.mxu0 0.0
    %1566 = vmatpush1.msra.mxu0 0.0
    %1567 = vmatprep.subr.mxu0 0.0
    %1568 = vmatpush1.msra.mxu0 0.0
    %1569 = vmatprep.subr.mxu0 0.0
    %1570 = vmatpush1.msra.mxu0 0.0
    %1571 = vmatprep.subr.mxu0 0.0
    %1572 = vmatpush1.msra.mxu0 0.0
    %1573 = vmatprep.subr.mxu0 0.0
    %1574 = vmatpush1.msra.mxu0 0.0
    %1575 = vmatprep.subr.mxu0 0.0
    %1576 = vmatpush1.msra.mxu0 0.0
    %1577 = vmatprep.subr.mxu0 0.0
    %1578 = vmatpush1.msra.mxu0 0.0
    %1579 = vmatprep.subr.mxu0 0.0
    %1580 = vmatpush1.msra.mxu0 0.0
    %1581 = vmatprep.subr.mxu0 0.0
    %1582 = vmatpush1.msra.mxu0 0.0
    %1583 = vmatprep.subr.mxu0 0.0
    %1584 = vmatpush1.msra.mxu0 0.0
    %1585 = vmatprep.subr.mxu0 0.0
    %1586 = vmatpush1.msra.mxu0 0.0
    %1587 = vmatprep.subr.mxu0 0.0
    %1588 = vmatpush1.msra.mxu0 0.0
    %1589 = vmatprep.subr.mxu0 0.0
    %1590 = vmatpush1.msra.mxu0 0.0
    %1591 = vmatprep.subr.mxu0 0.0
    %1592 = vmatpush1.msra.mxu0 0.0
    %1593 = vmatprep.subr.mxu0 0.0
    %1594 = vmatpush1.msra.mxu0 0.0
    %1595 = vmatprep.subr.mxu0 0.0
    %1596 = vmatpush1.msra.mxu0 0.0
    %1597 = vmatprep.subr.mxu0 0.0
    %1598 = vmatpush1.msra.mxu0 0.0
    %1599 = vmatprep.subr.mxu0 0.0
    %1600 = vmatpush1.msra.mxu0 0.0
    %1601 = vmatprep.subr.mxu0 0.0
    %1602 = vmatpush1.msra.mxu0 0.0
    %1603 = vmatprep.subr.mxu0 0.0
    %1604 = vmatpush1.msra.mxu0 0.0
    %1605 = vmatprep.subr.mxu0 0.0
    %1606 = vmatpush1.msra.mxu0 0.0
    %1607 = vmatprep.subr.mxu0 0.0
    %1608 = vmatpush1.msra.mxu0 0.0
    %1609 = vmatprep.subr.mxu0 0.0
    %1610 = vmatpush1.msra.mxu0 0.0
    %1611 = vmatprep.subr.mxu0 0.0
    %1612 = vmatpush1.msra.mxu0 0.0
    %1613 = vmatprep.subr.mxu0 0.0
    %1614 = vmatpush1.msra.mxu0 0.0
    %1615 = vmatprep.subr.mxu0 0.0
    %1616 = vmatpush1.msra.mxu0 0.0
    %1617 = vmatprep.subr.mxu0 0.0
    %1618 = vmatpush1.msra.mxu0 0.0
    %1619 = vmatprep.mubr.f32.mxu0 0.0
    %1620 = vmatmul.mubr.f32.gmra.mrb[0].mxu0 %v1553
    %v1621 = vpop.f32.mrb[0].mxu0
    %v1622 = vadd.f32 0.0, %v1621
    %v1623 = vpop.f32.mrb[0].mxu0
    %1624 = vdwg.mxu0
    %v1625 = vmul.f32 %v1622, %v310
    %v1626 = vadd.f32 %v1550, %v1625
    %v1627 = vmul.f32 %v1305, %v1322
    %v1629 = vsel %vm637, %v1627, 0
    %1631 = vmatprep.subr.mxu0 0.0
    %1632 = vmatpush1.msra.mxu0 %v643
    %1633 = vmatprep.subr.mxu0 0.0
    %1634 = vmatpush1.msra.mxu0 0.0
    %1635 = vmatprep.subr.mxu0 0.0
    %1636 = vmatpush1.msra.mxu0 0.0
    %1637 = vmatprep.subr.mxu0 0.0
    %1638 = vmatpush1.msra.mxu0 0.0
    %1639 = vmatprep.subr.mxu0 0.0
    %1640 = vmatpush1.msra.mxu0 0.0
    %1641 = vmatprep.subr.mxu0 0.0
    %1642 = vmatpush1.msra.mxu0 0.0
    %1643 = vmatprep.subr.mxu0 0.0
    %1644 = vmatpush1.msra.mxu0 0.0
    %1645 = vmatprep.subr.mxu0 0.0
    %1646 = vmatpush1.msra.mxu0 0.0
    %1647 = vmatprep.subr.mxu0 0.0
    %1648 = vmatpush1.msra.mxu0 0.0
    %1649 = vmatprep.subr.mxu0 0.0
    %1650 = vmatpush1.msra.mxu0 0.0
    %1651 = vmatprep.subr.mxu0 0.0
    %1652 = vmatpush1.msra.mxu0 0.0
    %1653 = vmatprep.subr.mxu0 0.0
    %1654 = vmatpush1.msra.mxu0 0.0
    %1655 = vmatprep.subr.mxu0 0.0
    %1656 = vmatpush1.msra.mxu0 0.0
    %1657 = vmatprep.subr.mxu0 0.0
    %1658 = vmatpush1.msra.mxu0 0.0
    %1659 = vmatprep.subr.mxu0 0.0
    %1660 = vmatpush1.msra.mxu0 0.0
    %1661 = vmatprep.subr.mxu0 0.0
    %1662 = vmatpush1.msra.mxu0 0.0
    %1663 = vmatprep.subr.mxu0 0.0
    %1664 = vmatpush1.msra.mxu0 0.0
    %1665 = vmatprep.subr.mxu0 0.0
    %1666 = vmatpush1.msra.mxu0 0.0
    %1667 = vmatprep.subr.mxu0 0.0
    %1668 = vmatpush1.msra.mxu0 0.0
    %1669 = vmatprep.subr.mxu0 0.0
    %1670 = vmatpush1.msra.mxu0 0.0
    %1671 = vmatprep.subr.mxu0 0.0
    %1672 = vmatpush1.msra.mxu0 0.0
    %1673 = vmatprep.subr.mxu0 0.0
    %1674 = vmatpush1.msra.mxu0 0.0
    %1675 = vmatprep.subr.mxu0 0.0
    %1676 = vmatpush1.msra.mxu0 0.0
    %1677 = vmatprep.subr.mxu0 0.0
    %1678 = vmatpush1.msra.mxu0 0.0
    %1679 = vmatprep.subr.mxu0 0.0
    %1680 = vmatpush1.msra.mxu0 0.0
    %1681 = vmatprep.subr.mxu0 0.0
    %1682 = vmatpush1.msra.mxu0 0.0
    %1683 = vmatprep.subr.mxu0 0.0
    %1684 = vmatpush1.msra.mxu0 0.0
    %1685 = vmatprep.subr.mxu0 0.0
    %1686 = vmatpush1.msra.mxu0 0.0
    %1687 = vmatprep.subr.mxu0 0.0
    %1688 = vmatpush1.msra.mxu0 0.0
    %1689 = vmatprep.subr.mxu0 0.0
    %1690 = vmatpush1.msra.mxu0 0.0
    %1691 = vmatprep.subr.mxu0 0.0
    %1692 = vmatpush1.msra.mxu0 0.0
    %1693 = vmatprep.subr.mxu0 0.0
    %1694 = vmatpush1.msra.mxu0 0.0
    %1695 = vmatprep.mubr.f32.mxu0 0.0
    %1696 = vmatmul.mubr.f32.gmra.mrb[0].mxu0 %v1629
    %v1697 = vpop.f32.mrb[0].mxu0
    %v1698 = vadd.f32 0.0, %v1697
    %v1699 = vpop.f32.mrb[0].mxu0
    %1700 = vdwg.mxu0
    %v1701 = vmul.f32 %v1698, %v379
    %v1702 = vadd.f32 %v1626, %v1701
    %v1703 = vmul.f32 %v1308, %v1322
    %v1705 = vsel %vm637, %v1703, 0
    %1707 = vmatprep.subr.mxu0 0.0
    %1708 = vmatpush1.msra.mxu0 %v643
    %1709 = vmatprep.subr.mxu0 0.0
    %1710 = vmatpush1.msra.mxu0 0.0
    %1711 = vmatprep.subr.mxu0 0.0
    %1712 = vmatpush1.msra.mxu0 0.0
    %1713 = vmatprep.subr.mxu0 0.0
    %1714 = vmatpush1.msra.mxu0 0.0
    %1715 = vmatprep.subr.mxu0 0.0
    %1716 = vmatpush1.msra.mxu0 0.0
    %1717 = vmatprep.subr.mxu0 0.0
    %1718 = vmatpush1.msra.mxu0 0.0
    %1719 = vmatprep.subr.mxu0 0.0
    %1720 = vmatpush1.msra.mxu0 0.0
    %1721 = vmatprep.subr.mxu0 0.0
    %1722 = vmatpush1.msra.mxu0 0.0
    %1723 = vmatprep.subr.mxu0 0.0
    %1724 = vmatpush1.msra.mxu0 0.0
    %1725 = vmatprep.subr.mxu0 0.0
    %1726 = vmatpush1.msra.mxu0 0.0
    %1727 = vmatprep.subr.mxu0 0.0
    %1728 = vmatpush1.msra.mxu0 0.0
    %1729 = vmatprep.subr.mxu0 0.0
    %1730 = vmatpush1.msra.mxu0 0.0
    %1731 = vmatprep.subr.mxu0 0.0
    %1732 = vmatpush1.msra.mxu0 0.0
    %1733 = vmatprep.subr.mxu0 0.0
    %1734 = vmatpush1.msra.mxu0 0.0
    %1735 = vmatprep.subr.mxu0 0.0
    %1736 = vmatpush1.msra.mxu0 0.0
    %1737 = vmatprep.subr.mxu0 0.0
    %1738 = vmatpush1.msra.mxu0 0.0
    %1739 = vmatprep.subr.mxu0 0.0
    %1740 = vmatpush1.msra.mxu0 0.0
    %1741 = vmatprep.subr.mxu0 0.0
    %1742 = vmatpush1.msra.mxu0 0.0
    %1743 = vmatprep.subr.mxu0 0.0
    %1744 = vmatpush1.msra.mxu0 0.0
    %1745 = vmatprep.subr.mxu0 0.0
    %1746 = vmatpush1.msra.mxu0 0.0
    %1747 = vmatprep.subr.mxu0 0.0
    %1748 = vmatpush1.msra.mxu0 0.0
    %1749 = vmatprep.subr.mxu0 0.0
    %1750 = vmatpush1.msra.mxu0 0.0
    %1751 = vmatprep.subr.mxu0 0.0
    %1752 = vmatpush1.msra.mxu0 0.0
    %1753 = vmatprep.subr.mxu0 0.0
    %1754 = vmatpush1.msra.mxu0 0.0
    %1755 = vmatprep.subr.mxu0 0.0
    %1756 = vmatpush1.msra.mxu0 0.0
    %1757 = vmatprep.subr.mxu0 0.0
    %1758 = vmatpush1.msra.mxu0 0.0
    %1759 = vmatprep.subr.mxu0 0.0
    %1760 = vmatpush1.msra.mxu0 0.0
    %1761 = vmatprep.subr.mxu0 0.0
    %1762 = vmatpush1.msra.mxu0 0.0
    %1763 = vmatprep.subr.mxu0 0.0
    %1764 = vmatpush1.msra.mxu0 0.0
    %1765 = vmatprep.subr.mxu0 0.0
    %1766 = vmatpush1.msra.mxu0 0.0
    %1767 = vmatprep.subr.mxu0 0.0
    %1768 = vmatpush1.msra.mxu0 0.0
    %1769 = vmatprep.subr.mxu0 0.0
    %1770 = vmatpush1.msra.mxu0 0.0
    %1771 = vmatprep.mubr.f32.mxu0 0.0
    %1772 = vmatmul.mubr.f32.gmra.mrb[0].mxu0 %v1705
    %v1773 = vpop.f32.mrb[0].mxu0
    %v1774 = vadd.f32 0.0, %v1773
    %v1775 = vpop.f32.mrb[0].mxu0
    %1776 = vdwg.mxu0
    %v1777 = vmul.f32 %v1774, %v381
    %v1778 = vadd.f32 %v1702, %v1777
    %v1779 = vmul.f32 %v1311, %v1322
    %v1781 = vsel %vm637, %v1779, 0
    %1783 = vmatprep.subr.mxu0 0.0
    %1784 = vmatpush1.msra.mxu0 %v643
    %1785 = vmatprep.subr.mxu0 0.0
    %1786 = vmatpush1.msra.mxu0 0.0
    %1787 = vmatprep.subr.mxu0 0.0
    %1788 = vmatpush1.msra.mxu0 0.0
    %1789 = vmatprep.subr.mxu0 0.0
    %1790 = vmatpush1.msra.mxu0 0.0
    %1791 = vmatprep.subr.mxu0 0.0
    %1792 = vmatpush1.msra.mxu0 0.0
    %1793 = vmatprep.subr.mxu0 0.0
    %1794 = vmatpush1.msra.mxu0 0.0
    %1795 = vmatprep.subr.mxu0 0.0
    %1796 = vmatpush1.msra.mxu0 0.0
    %1797 = vmatprep.subr.mxu0 0.0
    %1798 = vmatpush1.msra.mxu0 0.0
    %1799 = vmatprep.subr.mxu0 0.0
    %1800 = vmatpush1.msra.mxu0 0.0
    %1801 = vmatprep.subr.mxu0 0.0
    %1802 = vmatpush1.msra.mxu0 0.0
    %1803 = vmatprep.subr.mxu0 0.0
    %1804 = vmatpush1.msra.mxu0 0.0
    %1805 = vmatprep.subr.mxu0 0.0
    %1806 = vmatpush1.msra.mxu0 0.0
    %1807 = vmatprep.subr.mxu0 0.0
    %1808 = vmatpush1.msra.mxu0 0.0
    %1809 = vmatprep.subr.mxu0 0.0
    %1810 = vmatpush1.msra.mxu0 0.0
    %1811 = vmatprep.subr.mxu0 0.0
    %1812 = vmatpush1.msra.mxu0 0.0
    %1813 = vmatprep.subr.mxu0 0.0
    %1814 = vmatpush1.msra.mxu0 0.0
    %1815 = vmatprep.subr.mxu0 0.0
    %1816 = vmatpush1.msra.mxu0 0.0
    %1817 = vmatprep.subr.mxu0 0.0
    %1818 = vmatpush1.msra.mxu0 0.0
    %1819 = vmatprep.subr.mxu0 0.0
    %1820 = vmatpush1.msra.mxu0 0.0
    %1821 = vmatprep.subr.mxu0 0.0
    %1822 = vmatpush1.msra.mxu0 0.0
    %1823 = vmatprep.subr.mxu0 0.0
    %1824 = vmatpush1.msra.mxu0 0.0
    %1825 = vmatprep.subr.mxu0 0.0
    %1826 = vmatpush1.msra.mxu0 0.0
    %1827 = vmatprep.subr.mxu0 0.0
    %1828 = vmatpush1.msra.mxu0 0.0
    %1829 = vmatprep.subr.mxu0 0.0
    %1830 = vmatpush1.msra.mxu0 0.0
    %1831 = vmatprep.subr.mxu0 0.0
    %1832 = vmatpush1.msra.mxu0 0.0
    %1833 = vmatprep.subr.mxu0 0.0
    %1834 = vmatpush1.msra.mxu0 0.0
    %1835 = vmatprep.subr.mxu0 0.0
    %1836 = vmatpush1.msra.mxu0 0.0
    %1837 = vmatprep.subr.mxu0 0.0
    %1838 = vmatpush1.msra.mxu0 0.0
    %1839 = vmatprep.subr.mxu0 0.0
    %1840 = vmatpush1.msra.mxu0 0.0
    %1841 = vmatprep.subr.mxu0 0.0
    %1842 = vmatpush1.msra.mxu0 0.0
    %1843 = vmatprep.subr.mxu0 0.0
    %1844 = vmatpush1.msra.mxu0 0.0
    %1845 = vmatprep.subr.mxu0 0.0
    %1846 = vmatpush1.msra.mxu0 0.0
    %1847 = vmatprep.mubr.f32.mxu0 0.0
    %1848 = vmatmul.mubr.f32.gmra.mrb[0].mxu0 %v1781
    %v1849 = vpop.f32.mrb[0].mxu0
    %v1850 = vadd.f32 0.0, %v1849
    %v1851 = vpop.f32.mrb[0].mxu0
    %1852 = vdwg.mxu0
    %v1853 = vmul.f32 %v1850, %v450
    %v1854 = vadd.f32 %v1778, %v1853
    %v1855 = vmul.f32 %v1314, %v1322
    %v1857 = vsel %vm637, %v1855, 0
    %1859 = vmatprep.subr.mxu0 0.0
    %1860 = vmatpush1.msra.mxu0 %v643
    %1861 = vmatprep.subr.mxu0 0.0
    %1862 = vmatpush1.msra.mxu0 0.0
    %1863 = vmatprep.subr.mxu0 0.0
    %1864 = vmatpush1.msra.mxu0 0.0
    %1865 = vmatprep.subr.mxu0 0.0
    %1866 = vmatpush1.msra.mxu0 0.0
    %1867 = vmatprep.subr.mxu0 0.0
    %1868 = vmatpush1.msra.mxu0 0.0
    %1869 = vmatprep.subr.mxu0 0.0
    %1870 = vmatpush1.msra.mxu0 0.0
    %1871 = vmatprep.subr.mxu0 0.0
    %1872 = vmatpush1.msra.mxu0 0.0
    %1873 = vmatprep.subr.mxu0 0.0
    %1874 = vmatpush1.msra.mxu0 0.0
    %1875 = vmatprep.subr.mxu0 0.0
    %1876 = vmatpush1.msra.mxu0 0.0
    %1877 = vmatprep.subr.mxu0 0.0
    %1878 = vmatpush1.msra.mxu0 0.0
    %1879 = vmatprep.subr.mxu0 0.0
    %1880 = vmatpush1.msra.mxu0 0.0
    %1881 = vmatprep.subr.mxu0 0.0
    %1882 = vmatpush1.msra.mxu0 0.0
    %1883 = vmatprep.subr.mxu0 0.0
    %1884 = vmatpush1.msra.mxu0 0.0
    %1885 = vmatprep.subr.mxu0 0.0
    %1886 = vmatpush1.msra.mxu0 0.0
    %1887 = vmatprep.subr.mxu0 0.0
    %1888 = vmatpush1.msra.mxu0 0.0
    %1889 = vmatprep.subr.mxu0 0.0
    %1890 = vmatpush1.msra.mxu0 0.0
    %1891 = vmatprep.subr.mxu0 0.0
    %1892 = vmatpush1.msra.mxu0 0.0
    %1893 = vmatprep.subr.mxu0 0.0
    %1894 = vmatpush1.msra.mxu0 0.0
    %1895 = vmatprep.subr.mxu0 0.0
    %1896 = vmatpush1.msra.mxu0 0.0
    %1897 = vmatprep.subr.mxu0 0.0
    %1898 = vmatpush1.msra.mxu0 0.0
    %1899 = vmatprep.subr.mxu0 0.0
    %1900 = vmatpush1.msra.mxu0 0.0
    %1901 = vmatprep.subr.mxu0 0.0
    %1902 = vmatpush1.msra.mxu0 0.0
    %1903 = vmatprep.subr.mxu0 0.0
    %1904 = vmatpush1.msra.mxu0 0.0
    %1905 = vmatprep.subr.mxu0 0.0
    %1906 = vmatpush1.msra.mxu0 0.0
    %1907 = vmatprep.subr.mxu0 0.0
    %1908 = vmatpush1.msra.mxu0 0.0
    %1909 = vmatprep.subr.mxu0 0.0
    %1910 = vmatpush1.msra.mxu0 0.0
    %1911 = vmatprep.subr.mxu0 0.0
    %1912 = vmatpush1.msra.mxu0 0.0
    %1913 = vmatprep.subr.mxu0 0.0
    %1914 = vmatpush1.msra.mxu0 0.0
    %1915 = vmatprep.subr.mxu0 0.0
    %1916 = vmatpush1.msra.mxu0 0.0
    %1917 = vmatprep.subr.mxu0 0.0
    %1918 = vmatpush1.msra.mxu0 0.0
    %1919 = vmatprep.subr.mxu0 0.0
    %1920 = vmatpush1.msra.mxu0 0.0
    %1921 = vmatprep.subr.mxu0 0.0
    %1922 = vmatpush1.msra.mxu0 0.0
    %1923 = vmatprep.mubr.f32.mxu0 0.0
    %1924 = vmatmul.mubr.f32.gmra.mrb[0].mxu0 %v1857
    %v1925 = vpop.f32.mrb[0].mxu0
    %v1926 = vadd.f32 0.0, %v1925
    %v1927 = vpop.f32.mrb[0].mxu0
    %1928 = vdwg.mxu0
    %v1929 = vmul.f32 %v1926, %v452
    %v1930 = vadd.f32 %v1854, %v1929
    %v1931 = vmul.f32 %v1930, %v1930
    %1932 = vmatprep.subr.mxu0 0.0
    %1933 = vmatpush1.msra.mxu0 %v531
    %1934 = vmatprep.subr.mxu0 0.0
    %1935 = vmatpush1.msra.mxu0 %v532
    %1936 = vmatprep.subr.mxu0 0.0
    %1937 = vmatpush1.msra.mxu0 %v533
    %1938 = vmatprep.subr.mxu0 0.0
    %1939 = vmatpush1.msra.mxu0 %v534
    %1940 = vmatprep.subr.mxu0 0.0
    %1941 = vmatpush1.msra.mxu0 %v535
    %1942 = vmatprep.subr.mxu0 0.0
    %1943 = vmatpush1.msra.mxu0 %v536
    %1944 = vmatprep.subr.mxu0 0.0
    %1945 = vmatpush1.msra.mxu0 %v537
    %1946 = vmatprep.subr.mxu0 0.0
    %1947 = vmatpush1.msra.mxu0 %v538
    %1948 = vmatprep.subr.mxu0 0.0
    %1949 = vmatpush1.msra.mxu0 %v539
    %1950 = vmatprep.subr.mxu0 0.0
    %1951 = vmatpush1.msra.mxu0 %v540
    %1952 = vmatprep.subr.mxu0 0.0
    %1953 = vmatpush1.msra.mxu0 %v541
    %1954 = vmatprep.subr.mxu0 0.0
    %1955 = vmatpush1.msra.mxu0 %v542
    %1956 = vmatprep.subr.mxu0 0.0
    %1957 = vmatpush1.msra.mxu0 %v543
    %1958 = vmatprep.subr.mxu0 0.0
    %1959 = vmatpush1.msra.mxu0 %v544
    %1960 = vmatprep.subr.mxu0 0.0
    %1961 = vmatpush1.msra.mxu0 %v545
    %1962 = vmatprep.subr.mxu0 0.0
    %1963 = vmatpush1.msra.mxu0 %v546
    %1964 = vmatprep.subr.mxu0 0.0
    %1965 = vmatpush1.msra.mxu0 0.0
    %1966 = vmatprep.subr.mxu0 0.0
    %1967 = vmatpush1.msra.mxu0 0.0
    %1968 = vmatprep.subr.mxu0 0.0
    %1969 = vmatpush1.msra.mxu0 0.0
    %1970 = vmatprep.subr.mxu0 0.0
    %1971 = vmatpush1.msra.mxu0 0.0
    %1972 = vmatprep.subr.mxu0 0.0
    %1973 = vmatpush1.msra.mxu0 0.0
    %1974 = vmatprep.subr.mxu0 0.0
    %1975 = vmatpush1.msra.mxu0 0.0
    %1976 = vmatprep.subr.mxu0 0.0
    %1977 = vmatpush1.msra.mxu0 0.0
    %1978 = vmatprep.subr.mxu0 0.0
    %1979 = vmatpush1.msra.mxu0 0.0
    %1980 = vmatprep.subr.mxu0 0.0
    %1981 = vmatpush1.msra.mxu0 0.0
    %1982 = vmatprep.subr.mxu0 0.0
    %1983 = vmatpush1.msra.mxu0 0.0
    %1984 = vmatprep.subr.mxu0 0.0
    %1985 = vmatpush1.msra.mxu0 0.0
    %1986 = vmatprep.subr.mxu0 0.0
    %1987 = vmatpush1.msra.mxu0 0.0
    %1988 = vmatprep.subr.mxu0 0.0
    %1989 = vmatpush1.msra.mxu0 0.0
    %1990 = vmatprep.subr.mxu0 0.0
    %1991 = vmatpush1.msra.mxu0 0.0
    %1992 = vmatprep.subr.mxu0 0.0
    %1993 = vmatpush1.msra.mxu0 0.0
    %1994 = vmatprep.subr.mxu0 0.0
    %1995 = vmatpush1.msra.mxu0 0.0
    %1996 = vmatprep.mubr.f32.mxu0 0.0
    %1997 = vmatmul.mubr.f32.gmra.mrb[0].mxu0 %v1931
    %v1998 = vpop.f32.mrb[0].mxu0
    %v1999 = vadd.f32 0.0, %v1998
    %v2000 = vpop.f32.mrb[0].mxu0
    %2001 = vdwg.mxu0
    %v2002 = vrsqrt.pop %v1999
    %v2003 = vmul.f32 %v1999, %v2002
    %v2004 = vadd.f32 %v1999, 1.0
    %v2005 = vrcp.pop %v2004
    %v2006 = vmul.f32 %v2003, %v2005
    %v2008 = vsel %vm637, %v2006, 0
    %2010 = vmatprep.subr.mxu0 0.0
    %2011 = vmatpush1.msra.mxu0 %v643
    %2012 = vmatprep.subr.mxu0 0.0
    %2013 = vmatpush1.msra.mxu0 0.0
    %2014 = vmatprep.subr.mxu0 0.0
    %2015 = vmatpush1.msra.mxu0 0.0
    %2016 = vmatprep.subr.mxu0 0.0
    %2017 = vmatpush1.msra.mxu0 0.0
    %2018 = vmatprep.subr.mxu0 0.0
    %2019 = vmatpush1.msra.mxu0 0.0
    %2020 = vmatprep.subr.mxu0 0.0
    %2021 = vmatpush1.msra.mxu0 0.0
    %2022 = vmatprep.subr.mxu0 0.0
    %2023 = vmatpush1.msra.mxu0 0.0
    %2024 = vmatprep.subr.mxu0 0.0
    %2025 = vmatpush1.msra.mxu0 0.0
    %2026 = vmatprep.subr.mxu0 0.0
    %2027 = vmatpush1.msra.mxu0 0.0
    %2028 = vmatprep.subr.mxu0 0.0
    %2029 = vmatpush1.msra.mxu0 0.0
    %2030 = vmatprep.subr.mxu0 0.0
    %2031 = vmatpush1.msra.mxu0 0.0
    %2032 = vmatprep.subr.mxu0 0.0
    %2033 = vmatpush1.msra.mxu0 0.0
    %2034 = vmatprep.subr.mxu0 0.0
    %2035 = vmatpush1.msra.mxu0 0.0
    %2036 = vmatprep.subr.mxu0 0.0
    %2037 = vmatpush1.msra.mxu0 0.0
    %2038 = vmatprep.subr.mxu0 0.0
    %2039 = vmatpush1.msra.mxu0 0.0
    %2040 = vmatprep.subr.mxu0 0.0
    %2041 = vmatpush1.msra.mxu0 0.0
    %2042 = vmatprep.subr.mxu0 0.0
    %2043 = vmatpush1.msra.mxu0 0.0
    %2044 = vmatprep.subr.mxu0 0.0
    %2045 = vmatpush1.msra.mxu0 0.0
    %2046 = vmatprep.subr.mxu0 0.0
    %2047 = vmatpush1.msra.mxu0 0.0
    %2048 = vmatprep.subr.mxu0 0.0
    %2049 = vmatpush1.msra.mxu0 0.0
    %2050 = vmatprep.subr.mxu0 0.0
    %2051 = vmatpush1.msra.mxu0 0.0
    %2052 = vmatprep.subr.mxu0 0.0
    %2053 = vmatpush1.msra.mxu0 0.0
    %2054 = vmatprep.subr.mxu0 0.0
    %2055 = vmatpush1.msra.mxu0 0.0
    %2056 = vmatprep.subr.mxu0 0.0
    %2057 = vmatpush1.msra.mxu0 0.0
    %2058 = vmatprep.subr.mxu0 0.0
    %2059 = vmatpush1.msra.mxu0 0.0
    %2060 = vmatprep.subr.mxu0 0.0
    %2061 = vmatpush1.msra.mxu0 0.0
    %2062 = vmatprep.subr.mxu0 0.0
    %2063 = vmatpush1.msra.mxu0 0.0
    %2064 = vmatprep.subr.mxu0 0.0
    %2065 = vmatpush1.msra.mxu0 0.0
    %2066 = vmatprep.subr.mxu0 0.0
    %2067 = vmatpush1.msra.mxu0 0.0
    %2068 = vmatprep.subr.mxu0 0.0
    %2069 = vmatpush1.msra.mxu0 0.0
    %2070 = vmatprep.subr.mxu0 0.0
    %2071 = vmatpush1.msra.mxu0 0.0
    %2072 = vmatprep.subr.mxu0 0.0
    %2073 = vmatpush1.msra.mxu0 0.0
    %2074 = vmatprep.mubr.f32.mxu0 0.0
    %2075 = vmatmul.mubr.f32.gmra.mrb[0].mxu0 %v2008
    %v2076 = vpop.f32.mrb[0].mxu0
    %v2077 = vadd.f32 0.0, %v2076
    %v2078 = vpop.f32.mrb[0].mxu0
    %2079 = vdwg.mxu0
    %v2080 = vmul.f32 %v2077, %v1930
    %v2081 = vmul.f32 %v237, %v2080
    %2082 = vmatprep.subr.mxu0 0.0
    %2083 = vmatpush1.msra.mxu0 %v531
    %2084 = vmatprep.subr.mxu0 0.0
    %2085 = vmatpush1.msra.mxu0 %v532
    %2086 = vmatprep.subr.mxu0 0.0
    %2087 = vmatpush1.msra.mxu0 %v533
    %2088 = vmatprep.subr.mxu0 0.0
    %2089 = vmatpush1.msra.mxu0 %v534
    %2090 = vmatprep.subr.mxu0 0.0
    %2091 = vmatpush1.msra.mxu0 %v535
    %2092 = vmatprep.subr.mxu0 0.0
    %2093 = vmatpush1.msra.mxu0 %v536
    %2094 = vmatprep.subr.mxu0 0.0
    %2095 = vmatpush1.msra.mxu0 %v537
    %2096 = vmatprep.subr.mxu0 0.0
    %2097 = vmatpush1.msra.mxu0 %v538
    %2098 = vmatprep.subr.mxu0 0.0
    %2099 = vmatpush1.msra.mxu0 %v539
    %2100 = vmatprep.subr.mxu0 0.0
    %2101 = vmatpush1.msra.mxu0 %v540
    %2102 = vmatprep.subr.mxu0 0.0
    %2103 = vmatpush1.msra.mxu0 %v541
    %2104 = vmatprep.subr.mxu0 0.0
    %2105 = vmatpush1.msra.mxu0 %v542
    %2106 = vmatprep.subr.mxu0 0.0
    %2107 = vmatpush1.msra.mxu0 %v543
    %2108 = vmatprep.subr.mxu0 0.0
    %2109 = vmatpush1.msra.mxu0 %v544
    %2110 = vmatprep.subr.mxu0 0.0
    %2111 = vmatpush1.msra.mxu0 %v545
    %2112 = vmatprep.subr.mxu0 0.0
    %2113 = vmatpush1.msra.mxu0 %v546
    %2114 = vmatprep.subr.mxu0 0.0
    %2115 = vmatpush1.msra.mxu0 0.0
    %2116 = vmatprep.subr.mxu0 0.0
    %2117 = vmatpush1.msra.mxu0 0.0
    %2118 = vmatprep.subr.mxu0 0.0
    %2119 = vmatpush1.msra.mxu0 0.0
    %2120 = vmatprep.subr.mxu0 0.0
    %2121 = vmatpush1.msra.mxu0 0.0
    %2122 = vmatprep.subr.mxu0 0.0
    %2123 = vmatpush1.msra.mxu0 0.0
    %2124 = vmatprep.subr.mxu0 0.0
    %2125 = vmatpush1.msra.mxu0 0.0
    %2126 = vmatprep.subr.mxu0 0.0
    %2127 = vmatpush1.msra.mxu0 0.0
    %2128 = vmatprep.subr.mxu0 0.0
    %2129 = vmatpush1.msra.mxu0 0.0
    %2130 = vmatprep.subr.mxu0 0.0
    %2131 = vmatpush1.msra.mxu0 0.0
    %2132 = vmatprep.subr.mxu0 0.0
    %2133 = vmatpush1.msra.mxu0 0.0
    %2134 = vmatprep.subr.mxu0 0.0
    %2135 = vmatpush1.msra.mxu0 0.0
    %2136 = vmatprep.subr.mxu0 0.0
    %2137 = vmatpush1.msra.mxu0 0.0
    %2138 = vmatprep.subr.mxu0 0.0
    %2139 = vmatpush1.msra.mxu0 0.0
    %2140 = vmatprep.subr.mxu0 0.0
    %2141 = vmatpush1.msra.mxu0 0.0
    %2142 = vmatprep.subr.mxu0 0.0
    %2143 = vmatpush1.msra.mxu0 0.0
    %2144 = vmatprep.subr.mxu0 0.0
    %2145 = vmatpush1.msra.mxu0 0.0
    %2146 = vmatprep.mubr.f32.mxu0 0.0
    %2147 = vmatmul.mubr.f32.gmra.mrb[0].mxu0 %v2081
    %v2148 = vpop.f32.mrb[0].mxu0
    %v2149 = vadd.f32 0.0, %v2148
    %v2150 = vpop.f32.mrb[0].mxu0
    %2151 = vdwg.mxu0
    %v2152 = vadd.f32 %v784, %v2149
    %v2153 = vmul.f32 %v239, %v2080
    %2154 = vmatprep.subr.mxu0 0.0
    %2155 = vmatpush1.msra.mxu0 %v531
    %2156 = vmatprep.subr.mxu0 0.0
    %2157 = vmatpush1.msra.mxu0 %v532
    %2158 = vmatprep.subr.mxu0 0.0
    %2159 = vmatpush1.msra.mxu0 %v533
    %2160 = vmatprep.subr.mxu0 0.0
    %2161 = vmatpush1.msra.mxu0 %v534
    %2162 = vmatprep.subr.mxu0 0.0
    %2163 = vmatpush1.msra.mxu0 %v535
    %2164 = vmatprep.subr.mxu0 0.0
    %2165 = vmatpush1.msra.mxu0 %v536
    %2166 = vmatprep.subr.mxu0 0.0
    %2167 = vmatpush1.msra.mxu0 %v537
    %2168 = vmatprep.subr.mxu0 0.0
    %2169 = vmatpush1.msra.mxu0 %v538
    %2170 = vmatprep.subr.mxu0 0.0
    %2171 = vmatpush1.msra.mxu0 %v539
    %2172 = vmatprep.subr.mxu0 0.0
    %2173 = vmatpush1.msra.mxu0 %v540
    %2174 = vmatprep.subr.mxu0 0.0
    %2175 = vmatpush1.msra.mxu0 %v541
    %2176 = vmatprep.subr.mxu0 0.0
    %2177 = vmatpush1.msra.mxu0 %v542
    %2178 = vmatprep.subr.mxu0 0.0
    %2179 = vmatpush1.msra.mxu0 %v543
    %2180 = vmatprep.subr.mxu0 0.0
    %2181 = vmatpush1.msra.mxu0 %v544
    %2182 = vmatprep.subr.mxu0 0.0
    %2183 = vmatpush1.msra.mxu0 %v545
    %2184 = vmatprep.subr.mxu0 0.0
    %2185 = vmatpush1.msra.mxu0 %v546
    %2186 = vmatprep.subr.mxu0 0.0
    %2187 = vmatpush1.msra.mxu0 0.0
    %2188 = vmatprep.subr.mxu0 0.0
    %2189 = vmatpush1.msra.mxu0 0.0
    %2190 = vmatprep.subr.mxu0 0.0
    %2191 = vmatpush1.msra.mxu0 0.0
    %2192 = vmatprep.subr.mxu0 0.0
    %2193 = vmatpush1.msra.mxu0 0.0
    %2194 = vmatprep.subr.mxu0 0.0
    %2195 = vmatpush1.msra.mxu0 0.0
    %2196 = vmatprep.subr.mxu0 0.0
    %2197 = vmatpush1.msra.mxu0 0.0
    %2198 = vmatprep.subr.mxu0 0.0
    %2199 = vmatpush1.msra.mxu0 0.0
    %2200 = vmatprep.subr.mxu0 0.0
    %2201 = vmatpush1.msra.mxu0 0.0
    %2202 = vmatprep.subr.mxu0 0.0
    %2203 = vmatpush1.msra.mxu0 0.0
    %2204 = vmatprep.subr.mxu0 0.0
    %2205 = vmatpush1.msra.mxu0 0.0
    %2206 = vmatprep.subr.mxu0 0.0
    %2207 = vmatpush1.msra.mxu0 0.0
    %2208 = vmatprep.subr.mxu0 0.0
    %2209 = vmatpush1.msra.mxu0 0.0
    %2210 = vmatprep.subr.mxu0 0.0
    %2211 = vmatpush1.msra.mxu0 0.0
    %2212 = vmatprep.subr.mxu0 0.0
    %2213 = vmatpush1.msra.mxu0 0.0
    %2214 = vmatprep.subr.mxu0 0.0
    %2215 = vmatpush1.msra.mxu0 0.0
    %2216 = vmatprep.subr.mxu0 0.0
    %2217 = vmatpush1.msra.mxu0 0.0
    %2218 = vmatprep.mubr.f32.mxu0 0.0
    %2219 = vmatmul.mubr.f32.gmra.mrb[0].mxu0 %v2153
    %v2220 = vpop.f32.mrb[0].mxu0
    %v2221 = vadd.f32 0.0, %v2220
    %v2222 = vpop.f32.mrb[0].mxu0
    %2223 = vdwg.mxu0
    %v2224 = vadd.f32 %v855, %v2221
    %v2225 = vmul.f32 %v308, %v2080
    %2226 = vmatprep.subr.mxu0 0.0
    %2227 = vmatpush1.msra.mxu0 %v531
    %2228 = vmatprep.subr.mxu0 0.0
    %2229 = vmatpush1.msra.mxu0 %v532
    %2230 = vmatprep.subr.mxu0 0.0
    %2231 = vmatpush1.msra.mxu0 %v533
    %2232 = vmatprep.subr.mxu0 0.0
    %2233 = vmatpush1.msra.mxu0 %v534
    %2234 = vmatprep.subr.mxu0 0.0
    %2235 = vmatpush1.msra.mxu0 %v535
    %2236 = vmatprep.subr.mxu0 0.0
    %2237 = vmatpush1.msra.mxu0 %v536
    %2238 = vmatprep.subr.mxu0 0.0
    %2239 = vmatpush1.msra.mxu0 %v537
    %2240 = vmatprep.subr.mxu0 0.0
    %2241 = vmatpush1.msra.mxu0 %v538
    %2242 = vmatprep.subr.mxu0 0.0
    %2243 = vmatpush1.msra.mxu0 %v539
    %2244 = vmatprep.subr.mxu0 0.0
    %2245 = vmatpush1.msra.mxu0 %v540
    %2246 = vmatprep.subr.mxu0 0.0
    %2247 = vmatpush1.msra.mxu0 %v541
    %2248 = vmatprep.subr.mxu0 0.0
    %2249 = vmatpush1.msra.mxu0 %v542
    %2250 = vmatprep.subr.mxu0 0.0
    %2251 = vmatpush1.msra.mxu0 %v543
    %2252 = vmatprep.subr.mxu0 0.0
    %2253 = vmatpush1.msra.mxu0 %v544
    %2254 = vmatprep.subr.mxu0 0.0
    %2255 = vmatpush1.msra.mxu0 %v545
    %2256 = vmatprep.subr.mxu0 0.0
    %2257 = vmatpush1.msra.mxu0 %v546
    %2258 = vmatprep.subr.mxu0 0.0
    %2259 = vmatpush1.msra.mxu0 0.0
    %2260 = vmatprep.subr.mxu0 0.0
    %2261 = vmatpush1.msra.mxu0 0.0
    %2262 = vmatprep.subr.mxu0 0.0
    %2263 = vmatpush1.msra.mxu0 0.0
    %2264 = vmatprep.subr.mxu0 0.0
    %2265 = vmatpush1.msra.mxu0 0.0
    %2266 = vmatprep.subr.mxu0 0.0
    %2267 = vmatpush1.msra.mxu0 0.0
    %2268 = vmatprep.subr.mxu0 0.0
    %2269 = vmatpush1.msra.mxu0 0.0
    %2270 = vmatprep.subr.mxu0 0.0
    %2271 = vmatpush1.msra.mxu0 0.0
    %2272 = vmatprep.subr.mxu0 0.0
    %2273 = vmatpush1.msra.mxu0 0.0
    %2274 = vmatprep.subr.mxu0 0.0
    %2275 = vmatpush1.msra.mxu0 0.0
    %2276 = vmatprep.subr.mxu0 0.0
    %2277 = vmatpush1.msra.mxu0 0.0
    %2278 = vmatprep.subr.mxu0 0.0
    %2279 = vmatpush1.msra.mxu0 0.0
    %2280 = vmatprep.subr.mxu0 0.0
    %2281 = vmatpush1.msra.mxu0 0.0
    %2282 = vmatprep.subr.mxu0 0.0
    %2283 = vmatpush1.msra.mxu0 0.0
    %2284 = vmatprep.subr.mxu0 0.0
    %2285 = vmatpush1.msra.mxu0 0.0
    %2286 = vmatprep.subr.mxu0 0.0
    %2287 = vmatpush1.msra.mxu0 0.0
    %2288 = vmatprep.subr.mxu0 0.0
    %2289 = vmatpush1.msra.mxu0 0.0
    %2290 = vmatprep.mubr.f32.mxu0 0.0
    %2291 = vmatmul.mubr.f32.gmra.mrb[0].mxu0 %v2225
    %v2292 = vpop.f32.mrb[0].mxu0
    %v2293 = vadd.f32 0.0, %v2292
    %v2294 = vpop.f32.mrb[0].mxu0
    %2295 = vdwg.mxu0
    %v2296 = vadd.f32 %v926, %v2293
    %v2297 = vmul.f32 %v310, %v2080
    %2298 = vmatprep.subr.mxu0 0.0
    %2299 = vmatpush1.msra.mxu0 %v531
    %2300 = vmatprep.subr.mxu0 0.0
    %2301 = vmatpush1.msra.mxu0 %v532
    %2302 = vmatprep.subr.mxu0 0.0
    %2303 = vmatpush1.msra.mxu0 %v533
    %2304 = vmatprep.subr.mxu0 0.0
    %2305 = vmatpush1.msra.mxu0 %v534
    %2306 = vmatprep.subr.mxu0 0.0
    %2307 = vmatpush1.msra.mxu0 %v535
    %2308 = vmatprep.subr.mxu0 0.0
    %2309 = vmatpush1.msra.mxu0 %v536
    %2310 = vmatprep.subr.mxu0 0.0
    %2311 = vmatpush1.msra.mxu0 %v537
    %2312 = vmatprep.subr.mxu0 0.0
    %2313 = vmatpush1.msra.mxu0 %v538
    %2314 = vmatprep.subr.mxu0 0.0
    %2315 = vmatpush1.msra.mxu0 %v539
    %2316 = vmatprep.subr.mxu0 0.0
    %2317 = vmatpush1.msra.mxu0 %v540
    %2318 = vmatprep.subr.mxu0 0.0
    %2319 = vmatpush1.msra.mxu0 %v541
    %2320 = vmatprep.subr.mxu0 0.0
    %2321 = vmatpush1.msra.mxu0 %v542
    %2322 = vmatprep.subr.mxu0 0.0
    %2323 = vmatpush1.msra.mxu0 %v543
    %2324 = vmatprep.subr.mxu0 0.0
    %2325 = vmatpush1.msra.mxu0 %v544
    %2326 = vmatprep.subr.mxu0 0.0
    %2327 = vmatpush1.msra.mxu0 %v545
    %2328 = vmatprep.subr.mxu0 0.0
    %2329 = vmatpush1.msra.mxu0 %v546
    %2330 = vmatprep.subr.mxu0 0.0
    %2331 = vmatpush1.msra.mxu0 0.0
    %2332 = vmatprep.subr.mxu0 0.0
    %2333 = vmatpush1.msra.mxu0 0.0
    %2334 = vmatprep.subr.mxu0 0.0
    %2335 = vmatpush1.msra.mxu0 0.0
    %2336 = vmatprep.subr.mxu0 0.0
    %2337 = vmatpush1.msra.mxu0 0.0
    %2338 = vmatprep.subr.mxu0 0.0
    %2339 = vmatpush1.msra.mxu0 0.0
    %2340 = vmatprep.subr.mxu0 0.0
    %2341 = vmatpush1.msra.mxu0 0.0
    %2342 = vmatprep.subr.mxu0 0.0
    %2343 = vmatpush1.msra.mxu0 0.0
    %2344 = vmatprep.subr.mxu0 0.0
    %2345 = vmatpush1.msra.mxu0 0.0
    %2346 = vmatprep.subr.mxu0 0.0
    %2347 = vmatpush1.msra.mxu0 0.0
    %2348 = vmatprep.subr.mxu0 0.0
    %2349 = vmatpush1.msra.mxu0 0.0
    %2350 = vmatprep.subr.mxu0 0.0
    %2351 = vmatpush1.msra.mxu0 0.0
    %2352 = vmatprep.subr.mxu0 0.0
    %2353 = vmatpush1.msra.mxu0 0.0
    %2354 = vmatprep.subr.mxu0 0.0
    %2355 = vmatpush1.msra.mxu0 0.0
    %2356 = vmatprep.subr.mxu0 0.0
    %2357 = vmatpush1.msra.mxu0 0.0
    %2358 = vmatprep.subr.mxu0 0.0
    %2359 = vmatpush1.msra.mxu0 0.0
    %2360 = vmatprep.subr.mxu0 0.0
    %2361 = vmatpush1.msra.mxu0 0.0
    %2362 = vmatprep.mubr.f32.mxu0 0.0
    %2363 = vmatmul.mubr.f32.gmra.mrb[0].mxu0 %v2297
    %v2364 = vpop.f32.mrb[0].mxu0
    %v2365 = vadd.f32 0.0, %v2364
    %v2366 = vpop.f32.mrb[0].mxu0
    %2367 = vdwg.mxu0
    %v2368 = vadd.f32 %v997, %v2365
    %v2369 = vmul.f32 %v379, %v2080
    %2370 = vmatprep.subr.mxu0 0.0
    %2371 = vmatpush1.msra.mxu0 %v531
    %2372 = vmatprep.subr.mxu0 0.0
    %2373 = vmatpush1.msra.mxu0 %v532
    %2374 = vmatprep.subr.mxu0 0.0
    %2375 = vmatpush1.msra.mxu0 %v533
    %2376 = vmatprep.subr.mxu0 0.0
    %2377 = vmatpush1.msra.mxu0 %v534
    %2378 = vmatprep.subr.mxu0 0.0
    %2379 = vmatpush1.msra.mxu0 %v535
    %2380 = vmatprep.subr.mxu0 0.0
    %2381 = vmatpush1.msra.mxu0 %v536
    %2382 = vmatprep.subr.mxu0 0.0
    %2383 = vmatpush1.msra.mxu0 %v537
    %2384 = vmatprep.subr.mxu0 0.0
    %2385 = vmatpush1.msra.mxu0 %v538
    %2386 = vmatprep.subr.mxu0 0.0
    %2387 = vmatpush1.msra.mxu0 %v539
    %2388 = vmatprep.subr.mxu0 0.0
    %2389 = vmatpush1.msra.mxu0 %v540
    %2390 = vmatprep.subr.mxu0 0.0
    %2391 = vmatpush1.msra.mxu0 %v541
    %2392 = vmatprep.subr.mxu0 0.0
    %2393 = vmatpush1.msra.mxu0 %v542
    %2394 = vmatprep.subr.mxu0 0.0
    %2395 = vmatpush1.msra.mxu0 %v543
    %2396 = vmatprep.subr.mxu0 0.0
    %2397 = vmatpush1.msra.mxu0 %v544
    %2398 = vmatprep.subr.mxu0 0.0
    %2399 = vmatpush1.msra.mxu0 %v545
    %2400 = vmatprep.subr.mxu0 0.0
    %2401 = vmatpush1.msra.mxu0 %v546
    %2402 = vmatprep.subr.mxu0 0.0
    %2403 = vmatpush1.msra.mxu0 0.0
    %2404 = vmatprep.subr.mxu0 0.0
    %2405 = vmatpush1.msra.mxu0 0.0
    %2406 = vmatprep.subr.mxu0 0.0
    %2407 = vmatpush1.msra.mxu0 0.0
    %2408 = vmatprep.subr.mxu0 0.0
    %2409 = vmatpush1.msra.mxu0 0.0
    %2410 = vmatprep.subr.mxu0 0.0
    %2411 = vmatpush1.msra.mxu0 0.0
    %2412 = vmatprep.subr.mxu0 0.0
    %2413 = vmatpush1.msra.mxu0 0.0
    %2414 = vmatprep.subr.mxu0 0.0
    %2415 = vmatpush1.msra.mxu0 0.0
    %2416 = vmatprep.subr.mxu0 0.0
    %2417 = vmatpush1.msra.mxu0 0.0
    %2418 = vmatprep.subr.mxu0 0.0
    %2419 = vmatpush1.msra.mxu0 0.0
    %2420 = vmatprep.subr.mxu0 0.0
    %2421 = vmatpush1.msra.mxu0 0.0
    %2422 = vmatprep.subr.mxu0 0.0
    %2423 = vmatpush1.msra.mxu0 0.0
    %2424 = vmatprep.subr.mxu0 0.0
    %2425 = vmatpush1.msra.mxu0 0.0
    %2426 = vmatprep.subr.mxu0 0.0
    %2427 = vmatpush1.msra.mxu0 0.0
    %2428 = vmatprep.subr.mxu0 0.0
    %2429 = vmatpush1.msra.mxu0 0.0
    %2430 = vmatprep.subr.mxu0 0.0
    %2431 = vmatpush1.msra.mxu0 0.0
    %2432 = vmatprep.subr.mxu0 0.0
    %2433 = vmatpush1.msra.mxu0 0.0
    %2434 = vmatprep.mubr.f32.mxu0 0.0
    %2435 = vmatmul.mubr.f32.gmra.mrb[0].mxu0 %v2369
    %v2436 = vpop.f32.mrb[0].mxu0
    %v2437 = vadd.f32 0.0, %v2436
    %v2438 = vpop.f32.mrb[0].mxu0
    %2439 = vdwg.mxu0
    %v2440 = vadd.f32 %v1068, %v2437
    %v2441 = vmul.f32 %v381, %v2080
    %2442 = vmatprep.subr.mxu0 0.0
    %2443 = vmatpush1.msra.mxu0 %v531
    %2444 = vmatprep.subr.mxu0 0.0
    %2445 = vmatpush1.msra.mxu0 %v532
    %2446 = vmatprep.subr.mxu0 0.0
    %2447 = vmatpush1.msra.mxu0 %v533
    %2448 = vmatprep.subr.mxu0 0.0
    %2449 = vmatpush1.msra.mxu0 %v534
    %2450 = vmatprep.subr.mxu0 0.0
    %2451 = vmatpush1.msra.mxu0 %v535
    %2452 = vmatprep.subr.mxu0 0.0
    %2453 = vmatpush1.msra.mxu0 %v536
    %2454 = vmatprep.subr.mxu0 0.0
    %2455 = vmatpush1.msra.mxu0 %v537
    %2456 = vmatprep.subr.mxu0 0.0
    %2457 = vmatpush1.msra.mxu0 %v538
    %2458 = vmatprep.subr.mxu0 0.0
    %2459 = vmatpush1.msra.mxu0 %v539
    %2460 = vmatprep.subr.mxu0 0.0
    %2461 = vmatpush1.msra.mxu0 %v540
    %2462 = vmatprep.subr.mxu0 0.0
    %2463 = vmatpush1.msra.mxu0 %v541
    %2464 = vmatprep.subr.mxu0 0.0
    %2465 = vmatpush1.msra.mxu0 %v542
    %2466 = vmatprep.subr.mxu0 0.0
    %2467 = vmatpush1.msra.mxu0 %v543
    %2468 = vmatprep.subr.mxu0 0.0
    %2469 = vmatpush1.msra.mxu0 %v544
    %2470 = vmatprep.subr.mxu0 0.0
    %2471 = vmatpush1.msra.mxu0 %v545
    %2472 = vmatprep.subr.mxu0 0.0
    %2473 = vmatpush1.msra.mxu0 %v546
    %2474 = vmatprep.subr.mxu0 0.0
    %2475 = vmatpush1.msra.mxu0 0.0
    %2476 = vmatprep.subr.mxu0 0.0
    %2477 = vmatpush1.msra.mxu0 0.0
    %2478 = vmatprep.subr.mxu0 0.0
    %2479 = vmatpush1.msra.mxu0 0.0
    %2480 = vmatprep.subr.mxu0 0.0
    %2481 = vmatpush1.msra.mxu0 0.0
    %2482 = vmatprep.subr.mxu0 0.0
    %2483 = vmatpush1.msra.mxu0 0.0
    %2484 = vmatprep.subr.mxu0 0.0
    %2485 = vmatpush1.msra.mxu0 0.0
    %2486 = vmatprep.subr.mxu0 0.0
    %2487 = vmatpush1.msra.mxu0 0.0
    %2488 = vmatprep.subr.mxu0 0.0
    %2489 = vmatpush1.msra.mxu0 0.0
    %2490 = vmatprep.subr.mxu0 0.0
    %2491 = vmatpush1.msra.mxu0 0.0
    %2492 = vmatprep.subr.mxu0 0.0
    %2493 = vmatpush1.msra.mxu0 0.0
    %2494 = vmatprep.subr.mxu0 0.0
    %2495 = vmatpush1.msra.mxu0 0.0
    %2496 = vmatprep.subr.mxu0 0.0
    %2497 = vmatpush1.msra.mxu0 0.0
    %2498 = vmatprep.subr.mxu0 0.0
    %2499 = vmatpush1.msra.mxu0 0.0
    %2500 = vmatprep.subr.mxu0 0.0
    %2501 = vmatpush1.msra.mxu0 0.0
    %2502 = vmatprep.subr.mxu0 0.0
    %2503 = vmatpush1.msra.mxu0 0.0
    %2504 = vmatprep.subr.mxu0 0.0
    %2505 = vmatpush1.msra.mxu0 0.0
    %2506 = vmatprep.mubr.f32.mxu0 0.0
    %2507 = vmatmul.mubr.f32.gmra.mrb[0].mxu0 %v2441
    %v2508 = vpop.f32.mrb[0].mxu0
    %v2509 = vadd.f32 0.0, %v2508
    %v2510 = vpop.f32.mrb[0].mxu0
    %2511 = vdwg.mxu0
    %v2512 = vadd.f32 %v1139, %v2509
    %v2513 = vmul.f32 %v450, %v2080
    %2514 = vmatprep.subr.mxu0 0.0
    %2515 = vmatpush1.msra.mxu0 %v531
    %2516 = vmatprep.subr.mxu0 0.0
    %2517 = vmatpush1.msra.mxu0 %v532
    %2518 = vmatprep.subr.mxu0 0.0
    %2519 = vmatpush1.msra.mxu0 %v533
    %2520 = vmatprep.subr.mxu0 0.0
    %2521 = vmatpush1.msra.mxu0 %v534
    %2522 = vmatprep.subr.mxu0 0.0
    %2523 = vmatpush1.msra.mxu0 %v535
    %2524 = vmatprep.subr.mxu0 0.0
    %2525 = vmatpush1.msra.mxu0 %v536
    %2526 = vmatprep.subr.mxu0 0.0
    %2527 = vmatpush1.msra.mxu0 %v537
    %2528 = vmatprep.subr.mxu0 0.0
    %2529 = vmatpush1.msra.mxu0 %v538
    %2530 = vmatprep.subr.mxu0 0.0
    %2531 = vmatpush1.msra.mxu0 %v539
    %2532 = vmatprep.subr.mxu0 0.0
    %2533 = vmatpush1.msra.mxu0 %v540
    %2534 = vmatprep.subr.mxu0 0.0
    %2535 = vmatpush1.msra.mxu0 %v541
    %2536 = vmatprep.subr.mxu0 0.0
    %2537 = vmatpush1.msra.mxu0 %v542
    %2538 = vmatprep.subr.mxu0 0.0
    %2539 = vmatpush1.msra.mxu0 %v543
    %2540 = vmatprep.subr.mxu0 0.0
    %2541 = vmatpush1.msra.mxu0 %v544
    %2542 = vmatprep.subr.mxu0 0.0
    %2543 = vmatpush1.msra.mxu0 %v545
    %2544 = vmatprep.subr.mxu0 0.0
    %2545 = vmatpush1.msra.mxu0 %v546
    %2546 = vmatprep.subr.mxu0 0.0
    %2547 = vmatpush1.msra.mxu0 0.0
    %2548 = vmatprep.subr.mxu0 0.0
    %2549 = vmatpush1.msra.mxu0 0.0
    %2550 = vmatprep.subr.mxu0 0.0
    %2551 = vmatpush1.msra.mxu0 0.0
    %2552 = vmatprep.subr.mxu0 0.0
    %2553 = vmatpush1.msra.mxu0 0.0
    %2554 = vmatprep.subr.mxu0 0.0
    %2555 = vmatpush1.msra.mxu0 0.0
    %2556 = vmatprep.subr.mxu0 0.0
    %2557 = vmatpush1.msra.mxu0 0.0
    %2558 = vmatprep.subr.mxu0 0.0
    %2559 = vmatpush1.msra.mxu0 0.0
    %2560 = vmatprep.subr.mxu0 0.0
    %2561 = vmatpush1.msra.mxu0 0.0
    %2562 = vmatprep.subr.mxu0 0.0
    %2563 = vmatpush1.msra.mxu0 0.0
    %2564 = vmatprep.subr.mxu0 0.0
    %2565 = vmatpush1.msra.mxu0 0.0
    %2566 = vmatprep.subr.mxu0 0.0
    %2567 = vmatpush1.msra.mxu0 0.0
    %2568 = vmatprep.subr.mxu0 0.0
    %2569 = vmatpush1.msra.mxu0 0.0
    %2570 = vmatprep.subr.mxu0 0.0
    %2571 = vmatpush1.msra.mxu0 0.0
    %2572 = vmatprep.subr.mxu0 0.0
    %2573 = vmatpush1.msra.mxu0 0.0
    %2574 = vmatprep.subr.mxu0 0.0
    %2575 = vmatpush1.msra.mxu0 0.0
    %2576 = vmatprep.subr.mxu0 0.0
    %2577 = vmatpush1.msra.mxu0 0.0
    %2578 = vmatprep.mubr.f32.mxu0 0.0
    %2579 = vmatmul.mubr.f32.gmra.mrb[0].mxu0 %v2513
    %v2580 = vpop.f32.mrb[0].mxu0
    %v2581 = vadd.f32 0.0, %v2580
    %v2582 = vpop.f32.mrb[0].mxu0
    %2583 = vdwg.mxu0
    %v2584 = vadd.f32 %v1210, %v2581
    %v2585 = vmul.f32 %v452, %v2080
    %2586 = vmatprep.subr.mxu0 0.0
    %2587 = vmatpush1.msra.mxu0 %v531
    %2588 = vmatprep.subr.mxu0 0.0
    %2589 = vmatpush1.msra.mxu0 %v532
    %2590 = vmatprep.subr.mxu0 0.0
    %2591 = vmatpush1.msra.mxu0 %v533
    %2592 = vmatprep.subr.mxu0 0.0
    %2593 = vmatpush1.msra.mxu0 %v534
    %2594 = vmatprep.subr.mxu0 0.0
    %2595 = vmatpush1.msra.mxu0 %v535
    %2596 = vmatprep.subr.mxu0 0.0
    %2597 = vmatpush1.msra.mxu0 %v536
    %2598 = vmatprep.subr.mxu0 0.0
    %2599 = vmatpush1.msra.mxu0 %v537
    %2600 = vmatprep.subr.mxu0 0.0
    %2601 = vmatpush1.msra.mxu0 %v538
    %2602 = vmatprep.subr.mxu0 0.0
    %2603 = vmatpush1.msra.mxu0 %v539
    %2604 = vmatprep.subr.mxu0 0.0
    %2605 = vmatpush1.msra.mxu0 %v540
    %2606 = vmatprep.subr.mxu0 0.0
    %2607 = vmatpush1.msra.mxu0 %v541
    %2608 = vmatprep.subr.mxu0 0.0
    %2609 = vmatpush1.msra.mxu0 %v542
    %2610 = vmatprep.subr.mxu0 0.0
    %2611 = vmatpush1.msra.mxu0 %v543
    %2612 = vmatprep.subr.mxu0 0.0
    %2613 = vmatpush1.msra.mxu0 %v544
    %2614 = vmatprep.subr.mxu0 0.0
    %2615 = vmatpush1.msra.mxu0 %v545
    %2616 = vmatprep.subr.mxu0 0.0
    %2617 = vmatpush1.msra.mxu0 %v546
    %2618 = vmatprep.subr.mxu0 0.0
    %2619 = vmatpush1.msra.mxu0 0.0
    %2620 = vmatprep.subr.mxu0 0.0
    %2621 = vmatpush1.msra.mxu0 0.0
    %2622 = vmatprep.subr.mxu0 0.0
    %2623 = vmatpush1.msra.mxu0 0.0
    %2624 = vmatprep.subr.mxu0 0.0
    %2625 = vmatpush1.msra.mxu0 0.0
    %2626 = vmatprep.subr.mxu0 0.0
    %2627 = vmatpush1.msra.mxu0 0.0
    %2628 = vmatprep.subr.mxu0 0.0
    %2629 = vmatpush1.msra.mxu0 0.0
    %2630 = vmatprep.subr.mxu0 0.0
    %2631 = vmatpush1.msra.mxu0 0.0
    %2632 = vmatprep.subr.mxu0 0.0
    %2633 = vmatpush1.msra.mxu0 0.0
    %2634 = vmatprep.subr.mxu0 0.0
    %2635 = vmatpush1.msra.mxu0 0.0
    %2636 = vmatprep.subr.mxu0 0.0
    %2637 = vmatpush1.msra.mxu0 0.0
    %2638 = vmatprep.subr.mxu0 0.0
    %2639 = vmatpush1.msra.mxu0 0.0
    %2640 = vmatprep.subr.mxu0 0.0
    %2641 = vmatpush1.msra.mxu0 0.0
    %2642 = vmatprep.subr.mxu0 0.0
    %2643 = vmatpush1.msra.mxu0 0.0
    %2644 = vmatprep.subr.mxu0 0.0
    %2645 = vmatpush1.msra.mxu0 0.0
    %2646 = vmatprep.subr.mxu0 0.0
    %2647 = vmatpush1.msra.mxu0 0.0
    %2648 = vmatprep.subr.mxu0 0.0
    %2649 = vmatpush1.msra.mxu0 0.0
    %2650 = vmatprep.mubr.f32.mxu0 0.0
    %2651 = vmatmul.mubr.f32.gmra.mrb[0].mxu0 %v2585
    %v2652 = vpop.f32.mrb[0].mxu0
    %v2653 = vadd.f32 0.0, %v2652
    %v2654 = vpop.f32.mrb[0].mxu0
    %2655 = vdwg.mxu0
    %v2656 = vadd.f32 %v1281, %v2653
    %v2657 = vmax.f32 %v2152, %v2224
    %v2658 = vmax.f32 %v2657, %v2296
    %v2659 = vmax.f32 %v2658, %v2368
    %v2660 = vmax.f32 %v2659, %v2440
    %v2661 = vmax.f32 %v2660, %v2512
    %v2662 = vmax.f32 %v2661, %v2584
    %v2663 = vmax.f32 %v2662, %v2656
    %v2664 = vsub.f32 %v2152, %v2663
    %v2665 = vmul.f32 %v2664, 1.442695
    %v2666 = vpow.pop %v2665
    %v2667 = vsub.f32 %v2224, %v2663
    %v2668 = vmul.f32 %v2667, 1.442695
    %v2669 = vpow.pop %v2668
    %v2670 = vsub.f32 %v2296, %v2663
    %v2671 = vmul.f32 %v2670, 1.442695
    %v2672 = vpow.pop %v2671
    %v2673 = vsub.f32 %v2368, %v2663
    %v2674 = vmul.f32 %v2673, 1.442695
    %v2675 = vpow.pop %v2674
    %v2676 = vsub.f32 %v2440, %v2663
    %v2677 = vmul.f32 %v2676, 1.442695
    %v2678 = vpow.pop %v2677
    %v2679 = vsub.f32 %v2512, %v2663
    %v2680 = vmul.f32 %v2679, 1.442695
    %v2681 = vpow.pop %v2680
    %v2682 = vsub.f32 %v2584, %v2663
    %v2683 = vmul.f32 %v2682, 1.442695
    %v2684 = vpow.pop %v2683
    %v2685 = vsub.f32 %v2656, %v2663
    %v2686 = vmul.f32 %v2685, 1.442695
    %v2687 = vpow.pop %v2686
    %v2688 = vadd.f32 %v2666, %v2669
    %v2689 = vadd.f32 %v2688, %v2672
    %v2690 = vadd.f32 %v2689, %v2675
    %v2691 = vadd.f32 %v2690, %v2678
    %v2692 = vadd.f32 %v2691, %v2681
    %v2693 = vadd.f32 %v2692, %v2684
    %v2694 = vadd.f32 %v2693, %v2687
    %v2695 = vrcp.pop %v2694
    %v2696 = vmul.f32 %v2666, %v2695
    %v2698 = vsel %vm637, %v2696, 0
    %2700 = vmatprep.subr.mxu0 0.0
    %2701 = vmatpush1.msra.mxu0 %v643
    %2702 = vmatprep.subr.mxu0 0.0
    %2703 = vmatpush1.msra.mxu0 0.0
    %2704 = vmatprep.subr.mxu0 0.0
    %2705 = vmatpush1.msra.mxu0 0.0
    %2706 = vmatprep.subr.mxu0 0.0
    %2707 = vmatpush1.msra.mxu0 0.0
    %2708 = vmatprep.subr.mxu0 0.0
    %2709 = vmatpush1.msra.mxu0 0.0
    %2710 = vmatprep.subr.mxu0 0.0
    %2711 = vmatpush1.msra.mxu0 0.0
    %2712 = vmatprep.subr.mxu0 0.0
    %2713 = vmatpush1.msra.mxu0 0.0
    %2714 = vmatprep.subr.mxu0 0.0
    %2715 = vmatpush1.msra.mxu0 0.0
    %2716 = vmatprep.subr.mxu0 0.0
    %2717 = vmatpush1.msra.mxu0 0.0
    %2718 = vmatprep.subr.mxu0 0.0
    %2719 = vmatpush1.msra.mxu0 0.0
    %2720 = vmatprep.subr.mxu0 0.0
    %2721 = vmatpush1.msra.mxu0 0.0
    %2722 = vmatprep.subr.mxu0 0.0
    %2723 = vmatpush1.msra.mxu0 0.0
    %2724 = vmatprep.subr.mxu0 0.0
    %2725 = vmatpush1.msra.mxu0 0.0
    %2726 = vmatprep.subr.mxu0 0.0
    %2727 = vmatpush1.msra.mxu0 0.0
    %2728 = vmatprep.subr.mxu0 0.0
    %2729 = vmatpush1.msra.mxu0 0.0
    %2730 = vmatprep.subr.mxu0 0.0
    %2731 = vmatpush1.msra.mxu0 0.0
    %2732 = vmatprep.subr.mxu0 0.0
    %2733 = vmatpush1.msra.mxu0 0.0
    %2734 = vmatprep.subr.mxu0 0.0
    %2735 = vmatpush1.msra.mxu0 0.0
    %2736 = vmatprep.subr.mxu0 0.0
    %2737 = vmatpush1.msra.mxu0 0.0
    %2738 = vmatprep.subr.mxu0 0.0
    %2739 = vmatpush1.msra.mxu0 0.0
    %2740 = vmatprep.subr.mxu0 0.0
    %2741 = vmatpush1.msra.mxu0 0.0
    %2742 = vmatprep.subr.mxu0 0.0
    %2743 = vmatpush1.msra.mxu0 0.0
    %2744 = vmatprep.subr.mxu0 0.0
    %2745 = vmatpush1.msra.mxu0 0.0
    %2746 = vmatprep.subr.mxu0 0.0
    %2747 = vmatpush1.msra.mxu0 0.0
    %2748 = vmatprep.subr.mxu0 0.0
    %2749 = vmatpush1.msra.mxu0 0.0
    %2750 = vmatprep.subr.mxu0 0.0
    %2751 = vmatpush1.msra.mxu0 0.0
    %2752 = vmatprep.subr.mxu0 0.0
    %2753 = vmatpush1.msra.mxu0 0.0
    %2754 = vmatprep.subr.mxu0 0.0
    %2755 = vmatpush1.msra.mxu0 0.0
    %2756 = vmatprep.subr.mxu0 0.0
    %2757 = vmatpush1.msra.mxu0 0.0
    %2758 = vmatprep.subr.mxu0 0.0
    %2759 = vmatpush1.msra.mxu0 0.0
    %2760 = vmatprep.subr.mxu0 0.0
    %2761 = vmatpush1.msra.mxu0 0.0
    %2762 = vmatprep.subr.mxu0 0.0
    %2763 = vmatpush1.msra.mxu0 0.0
    %2764 = vmatprep.mubr.f32.mxu0 0.0
    %2765 = vmatmul.mubr.f32.gmra.mrb[0].mxu0 %v2698
    %v2766 = vpop.f32.mrb[0].mxu0
    %v2767 = vadd.f32 0.0, %v2766
    %v2768 = vpop.f32.mrb[0].mxu0
    %2769 = vdwg.mxu0
    %v2770 = vmul.f32 %v2767, %v237
    %v2771 = vadd.f32 %v2770, 0.0
    %v2772 = vmul.f32 %v2669, %v2695
    %v2774 = vsel %vm637, %v2772, 0
    %2776 = vmatprep.subr.mxu0 0.0
    %2777 = vmatpush1.msra.mxu0 %v643
    %2778 = vmatprep.subr.mxu0 0.0
    %2779 = vmatpush1.msra.mxu0 0.0
    %2780 = vmatprep.subr.mxu0 0.0
    %2781 = vmatpush1.msra.mxu0 0.0
    %2782 = vmatprep.subr.mxu0 0.0
    %2783 = vmatpush1.msra.mxu0 0.0
    %2784 = vmatprep.subr.mxu0 0.0
    %2785 = vmatpush1.msra.mxu0 0.0
    %2786 = vmatprep.subr.mxu0 0.0
    %2787 = vmatpush1.msra.mxu0 0.0
    %2788 = vmatprep.subr.mxu0 0.0
    %2789 = vmatpush1.msra.mxu0 0.0
    %2790 = vmatprep.subr.mxu0 0.0
    %2791 = vmatpush1.msra.mxu0 0.0
    %2792 = vmatprep.subr.mxu0 0.0
    %2793 = vmatpush1.msra.mxu0 0.0
    %2794 = vmatprep.subr.mxu0 0.0
    %2795 = vmatpush1.msra.mxu0 0.0
    %2796 = vmatprep.subr.mxu0 0.0
    %2797 = vmatpush1.msra.mxu0 0.0
    %2798 = vmatprep.subr.mxu0 0.0
    %2799 = vmatpush1.msra.mxu0 0.0
    %2800 = vmatprep.subr.mxu0 0.0
    %2801 = vmatpush1.msra.mxu0 0.0
    %2802 = vmatprep.subr.mxu0 0.0
    %2803 = vmatpush1.msra.mxu0 0.0
    %2804 = vmatprep.subr.mxu0 0.0
    %2805 = vmatpush1.msra.mxu0 0.0
    %2806 = vmatprep.subr.mxu0 0.0
    %2807 = vmatpush1.msra.mxu0 0.0
    %2808 = vmatprep.subr.mxu0 0.0
    %2809 = vmatpush1.msra.mxu0 0.0
    %2810 = vmatprep.subr.mxu0 0.0
    %2811 = vmatpush1.msra.mxu0 0.0
    %2812 = vmatprep.subr.mxu0 0.0
    %2813 = vmatpush1.msra.mxu0 0.0
    %2814 = vmatprep.subr.mxu0 0.0
    %2815 = vmatpush1.msra.mxu0 0.0
    %2816 = vmatprep.subr.mxu0 0.0
    %2817 = vmatpush1.msra.mxu0 0.0
    %2818 = vmatprep.subr.mxu0 0.0
    %2819 = vmatpush1.msra.mxu0 0.0
    %2820 = vmatprep.subr.mxu0 0.0
    %2821 = vmatpush1.msra.mxu0 0.0
    %2822 = vmatprep.subr.mxu0 0.0
    %2823 = vmatpush1.msra.mxu0 0.0
    %2824 = vmatprep.subr.mxu0 0.0
    %2825 = vmatpush1.msra.mxu0 0.0
    %2826 = vmatprep.subr.mxu0 0.0
    %2827 = vmatpush1.msra.mxu0 0.0
    %2828 = vmatprep.subr.mxu0 0.0
    %2829 = vmatpush1.msra.mxu0 0.0
    %2830 = vmatprep.subr.mxu0 0.0
    %2831 = vmatpush1.msra.mxu0 0.0
    %2832 = vmatprep.subr.mxu0 0.0
    %2833 = vmatpush1.msra.mxu0 0.0
    %2834 = vmatprep.subr.mxu0 0.0
    %2835 = vmatpush1.msra.mxu0 0.0
    %2836 = vmatprep.subr.mxu0 0.0
    %2837 = vmatpush1.msra.mxu0 0.0
    %2838 = vmatprep.subr.mxu0 0.0
    %2839 = vmatpush1.msra.mxu0 0.0
    %2840 = vmatprep.mubr.f32.mxu0 0.0
    %2841 = vmatmul.mubr.f32.gmra.mrb[0].mxu0 %v2774
    %v2842 = vpop.f32.mrb[0].mxu0
    %v2843 = vadd.f32 0.0, %v2842
    %v2844 = vpop.f32.mrb[0].mxu0
    %2845 = vdwg.mxu0
    %v2846 = vmul.f32 %v2843, %v239
    %v2847 = vadd.f32 %v2771, %v2846
    %v2848 = vmul.f32 %v2672, %v2695
    %v2850 = vsel %vm637, %v2848, 0
    %2852 = vmatprep.subr.mxu0 0.0
    %2853 = vmatpush1.msra.mxu0 %v643
    %2854 = vmatprep.subr.mxu0 0.0
    %2855 = vmatpush1.msra.mxu0 0.0
    %2856 = vmatprep.subr.mxu0 0.0
    %2857 = vmatpush1.msra.mxu0 0.0
    %2858 = vmatprep.subr.mxu0 0.0
    %2859 = vmatpush1.msra.mxu0 0.0
    %2860 = vmatprep.subr.mxu0 0.0
    %2861 = vmatpush1.msra.mxu0 0.0
    %2862 = vmatprep.subr.mxu0 0.0
    %2863 = vmatpush1.msra.mxu0 0.0
    %2864 = vmatprep.subr.mxu0 0.0
    %2865 = vmatpush1.msra.mxu0 0.0
    %2866 = vmatprep.subr.mxu0 0.0
    %2867 = vmatpush1.msra.mxu0 0.0
    %2868 = vmatprep.subr.mxu0 0.0
    %2869 = vmatpush1.msra.mxu0 0.0
    %2870 = vmatprep.subr.mxu0 0.0
    %2871 = vmatpush1.msra.mxu0 0.0
    %2872 = vmatprep.subr.mxu0 0.0
    %2873 = vmatpush1.msra.mxu0 0.0
    %2874 = vmatprep.subr.mxu0 0.0
    %2875 = vmatpush1.msra.mxu0 0.0
    %2876 = vmatprep.subr.mxu0 0.0
    %2877 = vmatpush1.msra.mxu0 0.0
    %2878 = vmatprep.subr.mxu0 0.0
    %2879 = vmatpush1.msra.mxu0 0.0
    %2880 = vmatprep.subr.mxu0 0.0
    %2881 = vmatpush1.msra.mxu0 0.0
    %2882 = vmatprep.subr.mxu0 0.0
    %2883 = vmatpush1.msra.mxu0 0.0
    %2884 = vmatprep.subr.mxu0 0.0
    %2885 = vmatpush1.msra.mxu0 0.0
    %2886 = vmatprep.subr.mxu0 0.0
    %2887 = vmatpush1.msra.mxu0 0.0
    %2888 = vmatprep.subr.mxu0 0.0
    %2889 = vmatpush1.msra.mxu0 0.0
    %2890 = vmatprep.subr.mxu0 0.0
    %2891 = vmatpush1.msra.mxu0 0.0
    %2892 = vmatprep.subr.mxu0 0.0
    %2893 = vmatpush1.msra.mxu0 0.0
    %2894 = vmatprep.subr.mxu0 0.0
    %2895 = vmatpush1.msra.mxu0 0.0
    %2896 = vmatprep.subr.mxu0 0.0
    %2897 = vmatpush1.msra.mxu0 0.0
    %2898 = vmatprep.subr.mxu0 0.0
    %2899 = vmatpush1.msra.mxu0 0.0
    %2900 = vmatprep.subr.mxu0 0.0
    %2901 = vmatpush1.msra.mxu0 0.0
    %2902 = vmatprep.subr.mxu0 0.0
    %2903 = vmatpush1.msra.mxu0 0.0
    %2904 = vmatprep.subr.mxu0 0.0
    %2905 = vmatpush1.msra.mxu0 0.0
    %2906 = vmatprep.subr.mxu0 0.0
    %2907 = vmatpush1.msra.mxu0 0.0
    %2908 = vmatprep.subr.mxu0 0.0
    %2909 = vmatpush1.msra.mxu0 0.0
    %2910 = vmatprep.subr.mxu0 0.0
    %2911 = vmatpush1.msra.mxu0 0.0
    %2912 = vmatprep.subr.mxu0 0.0
    %2913 = vmatpush1.msra.mxu0 0.0
    %2914 = vmatprep.subr.mxu0 0.0
    %2915 = vmatpush1.msra.mxu0 0.0
    %2916 = vmatprep.mubr.f32.mxu0 0.0
    %2917 = vmatmul.mubr.f32.gmra.mrb[0].mxu0 %v2850
    %v2918 = vpop.f32.mrb[0].mxu0
    %v2919 = vadd.f32 0.0, %v2918
    %v2920 = vpop.f32.mrb[0].mxu0
    %2921 = vdwg.mxu0
    %v2922 = vmul.f32 %v2919, %v308
    %v2923 = vadd.f32 %v2847, %v2922
    %v2924 = vmul.f32 %v2675, %v2695
    %v2926 = vsel %vm637, %v2924, 0
    %2928 = vmatprep.subr.mxu0 0.0
    %2929 = vmatpush1.msra.mxu0 %v643
    %2930 = vmatprep.subr.mxu0 0.0
    %2931 = vmatpush1.msra.mxu0 0.0
    %2932 = vmatprep.subr.mxu0 0.0
    %2933 = vmatpush1.msra.mxu0 0.0
    %2934 = vmatprep.subr.mxu0 0.0
    %2935 = vmatpush1.msra.mxu0 0.0
    %2936 = vmatprep.subr.mxu0 0.0
    %2937 = vmatpush1.msra.mxu0 0.0
    %2938 = vmatprep.subr.mxu0 0.0
    %2939 = vmatpush1.msra.mxu0 0.0
    %2940 = vmatprep.subr.mxu0 0.0
    %2941 = vmatpush1.msra.mxu0 0.0
    %2942 = vmatprep.subr.mxu0 0.0
    %2943 = vmatpush1.msra.mxu0 0.0
    %2944 = vmatprep.subr.mxu0 0.0
    %2945 = vmatpush1.msra.mxu0 0.0
    %2946 = vmatprep.subr.mxu0 0.0
    %2947 = vmatpush1.msra.mxu0 0.0
    %2948 = vmatprep.subr.mxu0 0.0
    %2949 = vmatpush1.msra.mxu0 0.0
    %2950 = vmatprep.subr.mxu0 0.0
    %2951 = vmatpush1.msra.mxu0 0.0
    %2952 = vmatprep.subr.mxu0 0.0
    %2953 = vmatpush1.msra.mxu0 0.0
    %2954 = vmatprep.subr.mxu0 0.0
    %2955 = vmatpush1.msra.mxu0 0.0
    %2956 = vmatprep.subr.mxu0 0.0
    %2957 = vmatpush1.msra.mxu0 0.0
    %2958 = vmatprep.subr.mxu0 0.0
    %2959 = vmatpush1.msra.mxu0 0.0
    %2960 = vmatprep.subr.mxu0 0.0
    %2961 = vmatpush1.msra.mxu0 0.0
    %2962 = vmatprep.subr.mxu0 0.0
    %2963 = vmatpush1.msra.mxu0 0.0
    %2964 = vmatprep.subr.mxu0 0.0
    %2965 = vmatpush1.msra.mxu0 0.0
    %2966 = vmatprep.subr.mxu0 0.0
    %2967 = vmatpush1.msra.mxu0 0.0
    %2968 = vmatprep.subr.mxu0 0.0
    %2969 = vmatpush1.msra.mxu0 0.0
    %2970 = vmatprep.subr.mxu0 0.0
    %2971 = vmatpush1.msra.mxu0 0.0
    %2972 = vmatprep.subr.mxu0 0.0
    %2973 = vmatpush1.msra.mxu0 0.0
    %2974 = vmatprep.subr.mxu0 0.0
    %2975 = vmatpush1.msra.mxu0 0.0
    %2976 = vmatprep.subr.mxu0 0.0
    %2977 = vmatpush1.msra.mxu0 0.0
    %2978 = vmatprep.subr.mxu0 0.0
    %2979 = vmatpush1.msra.mxu0 0.0
    %2980 = vmatprep.subr.mxu0 0.0
    %2981 = vmatpush1.msra.mxu0 0.0
    %2982 = vmatprep.subr.mxu0 0.0
    %2983 = vmatpush1.msra.mxu0 0.0
    %2984 = vmatprep.subr.mxu0 0.0
    %2985 = vmatpush1.msra.mxu0 0.0
    %2986 = vmatprep.subr.mxu0 0.0
    %2987 = vmatpush1.msra.mxu0 0.0
    %2988 = vmatprep.subr.mxu0 0.0
    %2989 = vmatpush1.msra.mxu0 0.0
    %2990 = vmatprep.subr.mxu0 0.0
    %2991 = vmatpush1.msra.mxu0 0.0
    %2992 = vmatprep.mubr.f32.mxu0 0.0
    %2993 = vmatmul.mubr.f32.gmra.mrb[0].mxu0 %v2926
    %v2994 = vpop.f32.mrb[0].mxu0
    %v2995 = vadd.f32 0.0, %v2994
    %v2996 = vpop.f32.mrb[0].mxu0
    %2997 = vdwg.mxu0
    %v2998 = vmul.f32 %v2995, %v310
    %v2999 = vadd.f32 %v2923, %v2998
    %v3000 = vmul.f32 %v2678, %v2695
    %v3002 = vsel %vm637, %v3000, 0
    %3004 = vmatprep.subr.mxu0 0.0
    %3005 = vmatpush1.msra.mxu0 %v643
    %3006 = vmatprep.subr.mxu0 0.0
    %3007 = vmatpush1.msra.mxu0 0.0
    %3008 = vmatprep.subr.mxu0 0.0
    %3009 = vmatpush1.msra.mxu0 0.0
    %3010 = vmatprep.subr.mxu0 0.0
    %3011 = vmatpush1.msra.mxu0 0.0
    %3012 = vmatprep.subr.mxu0 0.0
    %3013 = vmatpush1.msra.mxu0 0.0
    %3014 = vmatprep.subr.mxu0 0.0
    %3015 = vmatpush1.msra.mxu0 0.0
    %3016 = vmatprep.subr.mxu0 0.0
    %3017 = vmatpush1.msra.mxu0 0.0
    %3018 = vmatprep.subr.mxu0 0.0
    %3019 = vmatpush1.msra.mxu0 0.0
    %3020 = vmatprep.subr.mxu0 0.0
    %3021 = vmatpush1.msra.mxu0 0.0
    %3022 = vmatprep.subr.mxu0 0.0
    %3023 = vmatpush1.msra.mxu0 0.0
    %3024 = vmatprep.subr.mxu0 0.0
    %3025 = vmatpush1.msra.mxu0 0.0
    %3026 = vmatprep.subr.mxu0 0.0
    %3027 = vmatpush1.msra.mxu0 0.0
    %3028 = vmatprep.subr.mxu0 0.0
    %3029 = vmatpush1.msra.mxu0 0.0
    %3030 = vmatprep.subr.mxu0 0.0
    %3031 = vmatpush1.msra.mxu0 0.0
    %3032 = vmatprep.subr.mxu0 0.0
    %3033 = vmatpush1.msra.mxu0 0.0
    %3034 = vmatprep.subr.mxu0 0.0
    %3035 = vmatpush1.msra.mxu0 0.0
    %3036 = vmatprep.subr.mxu0 0.0
    %3037 = vmatpush1.msra.mxu0 0.0
    %3038 = vmatprep.subr.mxu0 0.0
    %3039 = vmatpush1.msra.mxu0 0.0
    %3040 = vmatprep.subr.mxu0 0.0
    %3041 = vmatpush1.msra.mxu0 0.0
    %3042 = vmatprep.subr.mxu0 0.0
    %3043 = vmatpush1.msra.mxu0 0.0
    %3044 = vmatprep.subr.mxu0 0.0
    %3045 = vmatpush1.msra.mxu0 0.0
    %3046 = vmatprep.subr.mxu0 0.0
    %3047 = vmatpush1.msra.mxu0 0.0
    %3048 = vmatprep.subr.mxu0 0.0
    %3049 = vmatpush1.msra.mxu0 0.0
    %3050 = vmatprep.subr.mxu0 0.0
    %3051 = vmatpush1.msra.mxu0 0.0
    %3052 = vmatprep.subr.mxu0 0.0
    %3053 = vmatpush1.msra.mxu0 0.0
    %3054 = vmatprep.subr.mxu0 0.0
    %3055 = vmatpush1.msra.mxu0 0.0
    %3056 = vmatprep.subr.mxu0 0.0
    %3057 = vmatpush1.msra.mxu0 0.0
    %3058 = vmatprep.subr.mxu0 0.0
    %3059 = vmatpush1.msra.mxu0 0.0
    %3060 = vmatprep.subr.mxu0 0.0
    %3061 = vmatpush1.msra.mxu0 0.0
    %3062 = vmatprep.subr.mxu0 0.0
    %3063 = vmatpush1.msra.mxu0 0.0
    %3064 = vmatprep.subr.mxu0 0.0
    %3065 = vmatpush1.msra.mxu0 0.0
    %3066 = vmatprep.subr.mxu0 0.0
    %3067 = vmatpush1.msra.mxu0 0.0
    %3068 = vmatprep.mubr.f32.mxu0 0.0
    %3069 = vmatmul.mubr.f32.gmra.mrb[0].mxu0 %v3002
    %v3070 = vpop.f32.mrb[0].mxu0
    %v3071 = vadd.f32 0.0, %v3070
    %v3072 = vpop.f32.mrb[0].mxu0
    %3073 = vdwg.mxu0
    %v3074 = vmul.f32 %v3071, %v379
    %v3075 = vadd.f32 %v2999, %v3074
    %v3076 = vmul.f32 %v2681, %v2695
    %v3078 = vsel %vm637, %v3076, 0
    %3080 = vmatprep.subr.mxu0 0.0
    %3081 = vmatpush1.msra.mxu0 %v643
    %3082 = vmatprep.subr.mxu0 0.0
    %3083 = vmatpush1.msra.mxu0 0.0
    %3084 = vmatprep.subr.mxu0 0.0
    %3085 = vmatpush1.msra.mxu0 0.0
    %3086 = vmatprep.subr.mxu0 0.0
    %3087 = vmatpush1.msra.mxu0 0.0
    %3088 = vmatprep.subr.mxu0 0.0
    %3089 = vmatpush1.msra.mxu0 0.0
    %3090 = vmatprep.subr.mxu0 0.0
    %3091 = vmatpush1.msra.mxu0 0.0
    %3092 = vmatprep.subr.mxu0 0.0
    %3093 = vmatpush1.msra.mxu0 0.0
    %3094 = vmatprep.subr.mxu0 0.0
    %3095 = vmatpush1.msra.mxu0 0.0
    %3096 = vmatprep.subr.mxu0 0.0
    %3097 = vmatpush1.msra.mxu0 0.0
    %3098 = vmatprep.subr.mxu0 0.0
    %3099 = vmatpush1.msra.mxu0 0.0
    %3100 = vmatprep.subr.mxu0 0.0
    %3101 = vmatpush1.msra.mxu0 0.0
    %3102 = vmatprep.subr.mxu0 0.0
    %3103 = vmatpush1.msra.mxu0 0.0
    %3104 = vmatprep.subr.mxu0 0.0
    %3105 = vmatpush1.msra.mxu0 0.0
    %3106 = vmatprep.subr.mxu0 0.0
    %3107 = vmatpush1.msra.mxu0 0.0
    %3108 = vmatprep.subr.mxu0 0.0
    %3109 = vmatpush1.msra.mxu0 0.0
    %3110 = vmatprep.subr.mxu0 0.0
    %3111 = vmatpush1.msra.mxu0 0.0
    %3112 = vmatprep.subr.mxu0 0.0
    %3113 = vmatpush1.msra.mxu0 0.0
    %3114 = vmatprep.subr.mxu0 0.0
    %3115 = vmatpush1.msra.mxu0 0.0
    %3116 = vmatprep.subr.mxu0 0.0
    %3117 = vmatpush1.msra.mxu0 0.0
    %3118 = vmatprep.subr.mxu0 0.0
    %3119 = vmatpush1.msra.mxu0 0.0
    %3120 = vmatprep.subr.mxu0 0.0
    %3121 = vmatpush1.msra.mxu0 0.0
    %3122 = vmatprep.subr.mxu0 0.0
    %3123 = vmatpush1.msra.mxu0 0.0
    %3124 = vmatprep.subr.mxu0 0.0
    %3125 = vmatpush1.msra.mxu0 0.0
    %3126 = vmatprep.subr.mxu0 0.0
    %3127 = vmatpush1.msra.mxu0 0.0
    %3128 = vmatprep.subr.mxu0 0.0
    %3129 = vmatpush1.msra.mxu0 0.0
    %3130 = vmatprep.subr.mxu0 0.0
    %3131 = vmatpush1.msra.mxu0 0.0
    %3132 = vmatprep.subr.mxu0 0.0
    %3133 = vmatpush1.msra.mxu0 0.0
    %3134 = vmatprep.subr.mxu0 0.0
    %3135 = vmatpush1.msra.mxu0 0.0
    %3136 = vmatprep.subr.mxu0 0.0
    %3137 = vmatpush1.msra.mxu0 0.0
    %3138 = vmatprep.subr.mxu0 0.0
    %3139 = vmatpush1.msra.mxu0 0.0
    %3140 = vmatprep.subr.mxu0 0.0
    %3141 = vmatpush1.msra.mxu0 0.0
    %3142 = vmatprep.subr.mxu0 0.0
    %3143 = vmatpush1.msra.mxu0 0.0
    %3144 = vmatprep.mubr.f32.mxu0 0.0
    %3145 = vmatmul.mubr.f32.gmra.mrb[0].mxu0 %v3078
    %v3146 = vpop.f32.mrb[0].mxu0
    %v3147 = vadd.f32 0.0, %v3146
    %v3148 = vpop.f32.mrb[0].mxu0
    %3149 = vdwg.mxu0
    %v3150 = vmul.f32 %v3147, %v381
    %v3151 = vadd.f32 %v3075, %v3150
    %v3152 = vmul.f32 %v2684, %v2695
    %v3154 = vsel %vm637, %v3152, 0
    %3156 = vmatprep.subr.mxu0 0.0
    %3157 = vmatpush1.msra.mxu0 %v643
    %3158 = vmatprep.subr.mxu0 0.0
    %3159 = vmatpush1.msra.mxu0 0.0
    %3160 = vmatprep.subr.mxu0 0.0
    %3161 = vmatpush1.msra.mxu0 0.0
    %3162 = vmatprep.subr.mxu0 0.0
    %3163 = vmatpush1.msra.mxu0 0.0
    %3164 = vmatprep.subr.mxu0 0.0
    %3165 = vmatpush1.msra.mxu0 0.0
    %3166 = vmatprep.subr.mxu0 0.0
    %3167 = vmatpush1.msra.mxu0 0.0
    %3168 = vmatprep.subr.mxu0 0.0
    %3169 = vmatpush1.msra.mxu0 0.0
    %3170 = vmatprep.subr.mxu0 0.0
    %3171 = vmatpush1.msra.mxu0 0.0
    %3172 = vmatprep.subr.mxu0 0.0
    %3173 = vmatpush1.msra.mxu0 0.0
    %3174 = vmatprep.subr.mxu0 0.0
    %3175 = vmatpush1.msra.mxu0 0.0
    %3176 = vmatprep.subr.mxu0 0.0
    %3177 = vmatpush1.msra.mxu0 0.0
    %3178 = vmatprep.subr.mxu0 0.0
    %3179 = vmatpush1.msra.mxu0 0.0
    %3180 = vmatprep.subr.mxu0 0.0
    %3181 = vmatpush1.msra.mxu0 0.0
    %3182 = vmatprep.subr.mxu0 0.0
    %3183 = vmatpush1.msra.mxu0 0.0
    %3184 = vmatprep.subr.mxu0 0.0
    %3185 = vmatpush1.msra.mxu0 0.0
    %3186 = vmatprep.subr.mxu0 0.0
    %3187 = vmatpush1.msra.mxu0 0.0
    %3188 = vmatprep.subr.mxu0 0.0
    %3189 = vmatpush1.msra.mxu0 0.0
    %3190 = vmatprep.subr.mxu0 0.0
    %3191 = vmatpush1.msra.mxu0 0.0
    %3192 = vmatprep.subr.mxu0 0.0
    %3193 = vmatpush1.msra.mxu0 0.0
    %3194 = vmatprep.subr.mxu0 0.0
    %3195 = vmatpush1.msra.mxu0 0.0
    %3196 = vmatprep.subr.mxu0 0.0
    %3197 = vmatpush1.msra.mxu0 0.0
    %3198 = vmatprep.subr.mxu0 0.0
    %3199 = vmatpush1.msra.mxu0 0.0
    %3200 = vmatprep.subr.mxu0 0.0
    %3201 = vmatpush1.msra.mxu0 0.0
    %3202 = vmatprep.subr.mxu0 0.0
    %3203 = vmatpush1.msra.mxu0 0.0
    %3204 = vmatprep.subr.mxu0 0.0
    %3205 = vmatpush1.msra.mxu0 0.0
    %3206 = vmatprep.subr.mxu0 0.0
    %3207 = vmatpush1.msra.mxu0 0.0
    %3208 = vmatprep.subr.mxu0 0.0
    %3209 = vmatpush1.msra.mxu0 0.0
    %3210 = vmatprep.subr.mxu0 0.0
    %3211 = vmatpush1.msra.mxu0 0.0
    %3212 = vmatprep.subr.mxu0 0.0
    %3213 = vmatpush1.msra.mxu0 0.0
    %3214 = vmatprep.subr.mxu0 0.0
    %3215 = vmatpush1.msra.mxu0 0.0
    %3216 = vmatprep.subr.mxu0 0.0
    %3217 = vmatpush1.msra.mxu0 0.0
    %3218 = vmatprep.subr.mxu0 0.0
    %3219 = vmatpush1.msra.mxu0 0.0
    %3220 = vmatprep.mubr.f32.mxu0 0.0
    %3221 = vmatmul.mubr.f32.gmra.mrb[0].mxu0 %v3154
    %v3222 = vpop.f32.mrb[0].mxu0
    %v3223 = vadd.f32 0.0, %v3222
    %v3224 = vpop.f32.mrb[0].mxu0
    %3225 = vdwg.mxu0
    %v3226 = vmul.f32 %v3223, %v450
    %v3227 = vadd.f32 %v3151, %v3226
    %v3228 = vmul.f32 %v2687, %v2695
    %v3230 = vsel %vm637, %v3228, 0
    %3232 = vmatprep.subr.mxu0 0.0
    %3233 = vmatpush1.msra.mxu0 %v643
    %3234 = vmatprep.subr.mxu0 0.0
    %3235 = vmatpush1.msra.mxu0 0.0
    %3236 = vmatprep.subr.mxu0 0.0
    %3237 = vmatpush1.msra.mxu0 0.0
    %3238 = vmatprep.subr.mxu0 0.0
    %3239 = vmatpush1.msra.mxu0 0.0
    %3240 = vmatprep.subr.mxu0 0.0
    %3241 = vmatpush1.msra.mxu0 0.0
    %3242 = vmatprep.subr.mxu0 0.0
    %3243 = vmatpush1.msra.mxu0 0.0
    %3244 = vmatprep.subr.mxu0 0.0
    %3245 = vmatpush1.msra.mxu0 0.0
    %3246 = vmatprep.subr.mxu0 0.0
    %3247 = vmatpush1.msra.mxu0 0.0
    %3248 = vmatprep.subr.mxu0 0.0
    %3249 = vmatpush1.msra.mxu0 0.0
    %3250 = vmatprep.subr.mxu0 0.0
    %3251 = vmatpush1.msra.mxu0 0.0
    %3252 = vmatprep.subr.mxu0 0.0
    %3253 = vmatpush1.msra.mxu0 0.0
    %3254 = vmatprep.subr.mxu0 0.0
    %3255 = vmatpush1.msra.mxu0 0.0
    %3256 = vmatprep.subr.mxu0 0.0
    %3257 = vmatpush1.msra.mxu0 0.0
    %3258 = vmatprep.subr.mxu0 0.0
    %3259 = vmatpush1.msra.mxu0 0.0
    %3260 = vmatprep.subr.mxu0 0.0
    %3261 = vmatpush1.msra.mxu0 0.0
    %3262 = vmatprep.subr.mxu0 0.0
    %3263 = vmatpush1.msra.mxu0 0.0
    %3264 = vmatprep.subr.mxu0 0.0
    %3265 = vmatpush1.msra.mxu0 0.0
    %3266 = vmatprep.subr.mxu0 0.0
    %3267 = vmatpush1.msra.mxu0 0.0
    %3268 = vmatprep.subr.mxu0 0.0
    %3269 = vmatpush1.msra.mxu0 0.0
    %3270 = vmatprep.subr.mxu0 0.0
    %3271 = vmatpush1.msra.mxu0 0.0
    %3272 = vmatprep.subr.mxu0 0.0
    %3273 = vmatpush1.msra.mxu0 0.0
    %3274 = vmatprep.subr.mxu0 0.0
    %3275 = vmatpush1.msra.mxu0 0.0
    %3276 = vmatprep.subr.mxu0 0.0
    %3277 = vmatpush1.msra.mxu0 0.0
    %3278 = vmatprep.subr.mxu0 0.0
    %3279 = vmatpush1.msra.mxu0 0.0
    %3280 = vmatprep.subr.mxu0 0.0
    %3281 = vmatpush1.msra.mxu0 0.0
    %3282 = vmatprep.subr.mxu0 0.0
    %3283 = vmatpush1.msra.mxu0 0.0
    %3284 = vmatprep.subr.mxu0 0.0
    %3285 = vmatpush1.msra.mxu0 0.0
    %3286 = vmatprep.subr.mxu0 0.0
    %3287 = vmatpush1.msra.mxu0 0.0
    %3288 = vmatprep.subr.mxu0 0.0
    %3289 = vmatpush1.msra.mxu0 0.0
    %3290 = vmatprep.subr.mxu0 0.0
    %3291 = vmatpush1.msra.mxu0 0.0
    %3292 = vmatprep.subr.mxu0 0.0
    %3293 = vmatpush1.msra.mxu0 0.0
    %3294 = vmatprep.subr.mxu0 0.0
    %3295 = vmatpush1.msra.mxu0 0.0
    %3296 = vmatprep.mubr.f32.mxu0 0.0
    %3297 = vmatmul.mubr.f32.gmra.mrb[0].mxu0 %v3230
    %v3298 = vpop.f32.mrb[0].mxu0
    %v3299 = vadd.f32 0.0, %v3298
    %v3300 = vpop.f32.mrb[0].mxu0
    %3301 = vdwg.mxu0
    %v3302 = vmul.f32 %v3299, %v452
    %v3303 = vadd.f32 %v3227, %v3302
    %v3304 = vmul.f32 %v3303, %v3303
    %3305 = vmatprep.subr.mxu0 0.0
    %3306 = vmatpush1.msra.mxu0 %v531
    %3307 = vmatprep.subr.mxu0 0.0
    %3308 = vmatpush1.msra.mxu0 %v532
    %3309 = vmatprep.subr.mxu0 0.0
    %3310 = vmatpush1.msra.mxu0 %v533
    %3311 = vmatprep.subr.mxu0 0.0
    %3312 = vmatpush1.msra.mxu0 %v534
    %3313 = vmatprep.subr.mxu0 0.0
    %3314 = vmatpush1.msra.mxu0 %v535
    %3315 = vmatprep.subr.mxu0 0.0
    %3316 = vmatpush1.msra.mxu0 %v536
    %3317 = vmatprep.subr.mxu0 0.0
    %3318 = vmatpush1.msra.mxu0 %v537
    %3319 = vmatprep.subr.mxu0 0.0
    %3320 = vmatpush1.msra.mxu0 %v538
    %3321 = vmatprep.subr.mxu0 0.0
    %3322 = vmatpush1.msra.mxu0 %v539
    %3323 = vmatprep.subr.mxu0 0.0
    %3324 = vmatpush1.msra.mxu0 %v540
    %3325 = vmatprep.subr.mxu0 0.0
    %3326 = vmatpush1.msra.mxu0 %v541
    %3327 = vmatprep.subr.mxu0 0.0
    %3328 = vmatpush1.msra.mxu0 %v542
    %3329 = vmatprep.subr.mxu0 0.0
    %3330 = vmatpush1.msra.mxu0 %v543
    %3331 = vmatprep.subr.mxu0 0.0
    %3332 = vmatpush1.msra.mxu0 %v544
    %3333 = vmatprep.subr.mxu0 0.0
    %3334 = vmatpush1.msra.mxu0 %v545
    %3335 = vmatprep.subr.mxu0 0.0
    %3336 = vmatpush1.msra.mxu0 %v546
    %3337 = vmatprep.subr.mxu0 0.0
    %3338 = vmatpush1.msra.mxu0 0.0
    %3339 = vmatprep.subr.mxu0 0.0
    %3340 = vmatpush1.msra.mxu0 0.0
    %3341 = vmatprep.subr.mxu0 0.0
    %3342 = vmatpush1.msra.mxu0 0.0
    %3343 = vmatprep.subr.mxu0 0.0
    %3344 = vmatpush1.msra.mxu0 0.0
    %3345 = vmatprep.subr.mxu0 0.0
    %3346 = vmatpush1.msra.mxu0 0.0
    %3347 = vmatprep.subr.mxu0 0.0
    %3348 = vmatpush1.msra.mxu0 0.0
    %3349 = vmatprep.subr.mxu0 0.0
    %3350 = vmatpush1.msra.mxu0 0.0
    %3351 = vmatprep.subr.mxu0 0.0
    %3352 = vmatpush1.msra.mxu0 0.0
    %3353 = vmatprep.subr.mxu0 0.0
    %3354 = vmatpush1.msra.mxu0 0.0
    %3355 = vmatprep.subr.mxu0 0.0
    %3356 = vmatpush1.msra.mxu0 0.0
    %3357 = vmatprep.subr.mxu0 0.0
    %3358 = vmatpush1.msra.mxu0 0.0
    %3359 = vmatprep.subr.mxu0 0.0
    %3360 = vmatpush1.msra.mxu0 0.0
    %3361 = vmatprep.subr.mxu0 0.0
    %3362 = vmatpush1.msra.mxu0 0.0
    %3363 = vmatprep.subr.mxu0 0.0
    %3364 = vmatpush1.msra.mxu0 0.0
    %3365 = vmatprep.subr.mxu0 0.0
    %3366 = vmatpush1.msra.mxu0 0.0
    %3367 = vmatprep.subr.mxu0 0.0
    %3368 = vmatpush1.msra.mxu0 0.0
    %3369 = vmatprep.mubr.f32.mxu0 0.0
    %3370 = vmatmul.mubr.f32.gmra.mrb[0].mxu0 %v3304
    %v3371 = vpop.f32.mrb[0].mxu0
    %v3372 = vadd.f32 0.0, %v3371
    %v3373 = vpop.f32.mrb[0].mxu0
    %3374 = vdwg.mxu0
    %v3375 = vrsqrt.pop %v3372
    %v3376 = vmul.f32 %v3372, %v3375
    %v3377 = vadd.f32 %v3372, 1.0
    %v3378 = vrcp.pop %v3377
    %v3379 = vmul.f32 %v3376, %v3378
    %v3381 = vsel %vm637, %v3379, 0
    %3383 = vmatprep.subr.mxu0 0.0
    %3384 = vmatpush1.msra.mxu0 %v643
    %3385 = vmatprep.subr.mxu0 0.0
    %3386 = vmatpush1.msra.mxu0 0.0
    %3387 = vmatprep.subr.mxu0 0.0
    %3388 = vmatpush1.msra.mxu0 0.0
    %3389 = vmatprep.subr.mxu0 0.0
    %3390 = vmatpush1.msra.mxu0 0.0
    %3391 = vmatprep.subr.mxu0 0.0
    %3392 = vmatpush1.msra.mxu0 0.0
    %3393 = vmatprep.subr.mxu0 0.0
    %3394 = vmatpush1.msra.mxu0 0.0
    %3395 = vmatprep.subr.mxu0 0.0
    %3396 = vmatpush1.msra.mxu0 0.0
    %3397 = vmatprep.subr.mxu0 0.0
    %3398 = vmatpush1.msra.mxu0 0.0
    %3399 = vmatprep.subr.mxu0 0.0
    %3400 = vmatpush1.msra.mxu0 0.0
    %3401 = vmatprep.subr.mxu0 0.0
    %3402 = vmatpush1.msra.mxu0 0.0
    %3403 = vmatprep.subr.mxu0 0.0
    %3404 = vmatpush1.msra.mxu0 0.0
    %3405 = vmatprep.subr.mxu0 0.0
    %3406 = vmatpush1.msra.mxu0 0.0
    %3407 = vmatprep.subr.mxu0 0.0
    %3408 = vmatpush1.msra.mxu0 0.0
    %3409 = vmatprep.subr.mxu0 0.0
    %3410 = vmatpush1.msra.mxu0 0.0
    %3411 = vmatprep.subr.mxu0 0.0
    %3412 = vmatpush1.msra.mxu0 0.0
    %3413 = vmatprep.subr.mxu0 0.0
    %3414 = vmatpush1.msra.mxu0 0.0
    %3415 = vmatprep.subr.mxu0 0.0
    %3416 = vmatpush1.msra.mxu0 0.0
    %3417 = vmatprep.subr.mxu0 0.0
    %3418 = vmatpush1.msra.mxu0 0.0
    %3419 = vmatprep.subr.mxu0 0.0
    %3420 = vmatpush1.msra.mxu0 0.0
    %3421 = vmatprep.subr.mxu0 0.0
    %3422 = vmatpush1.msra.mxu0 0.0
    %3423 = vmatprep.subr.mxu0 0.0
    %3424 = vmatpush1.msra.mxu0 0.0
    %3425 = vmatprep.subr.mxu0 0.0
    %3426 = vmatpush1.msra.mxu0 0.0
    %3427 = vmatprep.subr.mxu0 0.0
    %3428 = vmatpush1.msra.mxu0 0.0
    %3429 = vmatprep.subr.mxu0 0.0
    %3430 = vmatpush1.msra.mxu0 0.0
    %3431 = vmatprep.subr.mxu0 0.0
    %3432 = vmatpush1.msra.mxu0 0.0
    %3433 = vmatprep.subr.mxu0 0.0
    %3434 = vmatpush1.msra.mxu0 0.0
    %3435 = vmatprep.subr.mxu0 0.0
    %3436 = vmatpush1.msra.mxu0 0.0
    %3437 = vmatprep.subr.mxu0 0.0
    %3438 = vmatpush1.msra.mxu0 0.0
    %3439 = vmatprep.subr.mxu0 0.0
    %3440 = vmatpush1.msra.mxu0 0.0
    %3441 = vmatprep.subr.mxu0 0.0
    %3442 = vmatpush1.msra.mxu0 0.0
    %3443 = vmatprep.subr.mxu0 0.0
    %3444 = vmatpush1.msra.mxu0 0.0
    %3445 = vmatprep.subr.mxu0 0.0
    %3446 = vmatpush1.msra.mxu0 0.0
    %3447 = vmatprep.mubr.f32.mxu0 0.0
    %3448 = vmatmul.mubr.f32.gmra.mrb[0].mxu0 %v3381
    %v3449 = vpop.f32.mrb[0].mxu0
    %v3450 = vadd.f32 0.0, %v3449
    %v3451 = vpop.f32.mrb[0].mxu0
    %3452 = vdwg.mxu0
    %v3453 = vmul.f32 %v3450, %v3303
    %3454 = vst [vmem:[#allocation7] sm:$0xff] %v3453
    // Predicated region
    $region18: #{tpu_custom_call.1} parent=1 // pred_check
      _
    $region19: #{tpu_custom_call.1} parent=1 // pred_check_branch
      %3456 = sbr.rel (0) target = $region21
    $region20: #{tpu_custom_call.1} parent=1 // pred_region
      %s3458 = ssub.s32 128, 128
      %3459 = vsyncadd [#allocation4], %s3458
      %s3461 = sshll.u32 [#allocation7], 4
      %s3462 = int_to_ptr.vmem [resolvable:$true] %s3461
      %3464 = dma.vmem_to_hbm [thread:$0]  %s3462, 128, %s2, [#allocation4]
    $region21: #{tpu_custom_call.1} parent=1 // pred_fallthru
      _
    // Predicated region
    $region22: #{tpu_custom_call.1} parent=1 // pred_check
      _
    $region23: #{tpu_custom_call.1} parent=1 // pred_check_branch
      %3466 = sbr.rel (0) target = $region25
    $region24: #{tpu_custom_call.1} parent=1 // pred_region
      %s3468 = ssub.s32 1024, 1024
      %3469 = vsyncadd [#allocation9], %s3468
      %s3471 = sshll.u32 [#allocation8], 4
      %s3472 = int_to_ptr.vmem [resolvable:$true] %s3471
      %3474 = dma.vmem_to_hbm [thread:$0]  %s3472, 1024, %s3, [#allocation9]
    $region25: #{tpu_custom_call.1} parent=1 // pred_fallthru
      _
    // Predicated region
    $region26: #{tpu_custom_call.1} parent=1 // pred_check
      _
    $region27: #{tpu_custom_call.1} parent=1 // pred_check_branch
      %3476 = sbr.rel (0) target = $region29
    $region28: #{tpu_custom_call.1} parent=1 // pred_region
      %3477 = dma.done [#allocation4], 128
    $region29: #{tpu_custom_call.1} parent=1 // pred_fallthru
      _
    // Predicated region
    $region30: #{tpu_custom_call.1} parent=1 // pred_check
      _
    $region31: #{tpu_custom_call.1} parent=1 // pred_check_branch
      %3479 = sbr.rel (0) target = $region33
    $region32: #{tpu_custom_call.1} parent=1 // pred_region
      %3480 = dma.done [#allocation9], 1024
    $region33: #{tpu_custom_call.1} parent=1 // pred_fallthru
      _
    %3481 = vsyncpa [#allocation3], 1
    %3482 = vsyncpa [#allocation6], 1
    %3483 = vsyncpa [#allocation4], 1
    %3484 = vsyncpa [#allocation9], 1

</llo_original>
